<compile_context>
chip_gen: v7x
topology: tpu7x:2x2x1
jax: 0.10.0
libtpu: 0.0.40
codegen_flags: <defaults>
</compile_context>

<pallas_src>
import math

import jax
import jax.numpy as jnp
from jax.experimental import pallas as pl
from jax.experimental.pallas import tpu as pltpu

_VMEM_LIMIT = 32 * 1024 * 1024  # safe on v5e/v6e/v7x


def _pick_bm(M):
    """Row-tile for the GEMM grid: big enough to amortize per-step overhead,
    small enough to leave >=2-4 parallel blocks for megacore at real sizes."""
    if M <= 128:
        return M
    if M >= 4096:
        return 512
    if M >= 1024:
        return 256
    return 128


# ----------------------------------------------------------------------------
# Pallas kernels
# ----------------------------------------------------------------------------
def _mm_kernel_none(x_ref, w_ref, b_ref, o_ref):
    acc = jnp.dot(x_ref[...], w_ref[...], preferred_element_type=jnp.float32)
    o_ref[...] = (acc + b_ref[...]).astype(o_ref.dtype)


def _mm_kernel_relu(x_ref, w_ref, b_ref, o_ref):
    acc = jnp.dot(x_ref[...], w_ref[...], preferred_element_type=jnp.float32)
    acc = acc + b_ref[...]
    o_ref[...] = jnp.maximum(acc, 0.0).astype(o_ref.dtype)


_MM_KERNELS = {"none": _mm_kernel_none, "relu": _mm_kernel_relu}


def _sft_kernel(cond_ref, x0_ref, ws0, bs0, ws1, bs1, wt0, bt0, wt1, bt1, o_ref):
    """Fused SFT: scale0->lrelu(0.1)->scale1, shift0->lrelu(0.1)->shift1,
    then x0 * (scale + 1) + shift.  cond tile stays resident in VMEM."""
    cond = cond_ref[...]                                   # bf16 (bm, nC)
    hs = jnp.dot(cond, ws0[...], preferred_element_type=jnp.float32) + bs0[...]
    hs = jnp.where(hs >= 0.0, hs, 0.1 * hs).astype(jnp.bfloat16)
    scale = jnp.dot(hs, ws1[...], preferred_element_type=jnp.float32) + bs1[...]
    ht = jnp.dot(cond, wt0[...], preferred_element_type=jnp.float32) + bt0[...]
    ht = jnp.where(ht >= 0.0, ht, 0.1 * ht).astype(jnp.bfloat16)
    shift = jnp.dot(ht, wt1[...], preferred_element_type=jnp.float32) + bt1[...]
    o_ref[...] = (x0_ref[...] * (scale + 1.0) + shift).astype(o_ref.dtype)


# ----------------------------------------------------------------------------
# Pallas wrappers
# ----------------------------------------------------------------------------
def matmul_bias_act(a, wmat, b2, act="none"):
    """(M,K)bf16 @ (K,Ncol)bf16 + bias, fused activation, tiled over M."""
    M, K = a.shape
    Ncol = wmat.shape[1]
    a = a.astype(jnp.bfloat16)
    bm = _pick_bm(M)
    grid_m = pl.cdiv(M, bm)
    return pl.pallas_call(
        _MM_KERNELS[act],
        out_shape=jax.ShapeDtypeStruct((M, Ncol), jnp.float32),
        grid=(grid_m,),
        in_specs=[
            pl.BlockSpec((bm, K), lambda i: (i, 0)),
            pl.BlockSpec((K, Ncol), lambda i: (0, 0)),
            pl.BlockSpec((1, Ncol), lambda i: (0, 0)),
        ],
        out_specs=pl.BlockSpec((bm, Ncol), lambda i: (i, 0)),
        compiler_params=pltpu.CompilerParams(
            dimension_semantics=("parallel",),
            vmem_limit_bytes=_VMEM_LIMIT),
    )(a, wmat, b2)


def sft_fused(cond2, x02, p):
    """cond2: (M, nC) bf16, x02: (M, C0) f32 -> (M, C0) f32."""
    M, nC = cond2.shape
    C0 = x02.shape[1]
    bm = _pick_bm(M)
    grid_m = pl.cdiv(M, bm)
    return pl.pallas_call(
        _sft_kernel,
        out_shape=jax.ShapeDtypeStruct((M, C0), jnp.float32),
        grid=(grid_m,),
        in_specs=[
            pl.BlockSpec((bm, nC), lambda i: (i, 0)),
            pl.BlockSpec((bm, C0), lambda i: (i, 0)),
            pl.BlockSpec((nC, nC), lambda i: (0, 0)),
            pl.BlockSpec((1, nC), lambda i: (0, 0)),
            pl.BlockSpec((nC, C0), lambda i: (0, 0)),
            pl.BlockSpec((1, C0), lambda i: (0, 0)),
            pl.BlockSpec((nC, nC), lambda i: (0, 0)),
            pl.BlockSpec((1, nC), lambda i: (0, 0)),
            pl.BlockSpec((nC, C0), lambda i: (0, 0)),
            pl.BlockSpec((1, C0), lambda i: (0, 0)),
        ],
        out_specs=pl.BlockSpec((bm, C0), lambda i: (i, 0)),
        compiler_params=pltpu.CompilerParams(
            dimension_semantics=("parallel",),
            vmem_limit_bytes=_VMEM_LIMIT),
    )(cond2, x02,
      p["s0"]["wmat"], p["s0"]["b"], p["s1"]["wmat"], p["s1"]["b"],
      p["t0"]["wmat"], p["t0"]["b"], p["t1"]["wmat"], p["t1"]["b"])


# ----------------------------------------------------------------------------
# Conv / deconv front-ends (channels-last glue + Pallas GEMM)
# ----------------------------------------------------------------------------
def conv2d(x, p, *, k, stride=1, pad=0, act="none"):
    """NHWC conv.  p['wmat'] is (k*k*Cin, Cout) bf16 (tap-major, cin-minor)."""
    N, H, W, Cin = x.shape
    Ho = (H + 2 * pad - k) // stride + 1
    Wo = (W + 2 * pad - k) // stride + 1
    Cout = p["wmat"].shape[1]
    if k == 1 and stride == 1 and pad == 0:
        a = x.reshape(N * H * W, Cin)
    else:
        xb = jnp.pad(x.astype(jnp.bfloat16),
                     ((0, 0), (pad, pad), (pad, pad), (0, 0)))
        cols = [xb[:, i:i + stride * (Ho - 1) + 1:stride,
                   j:j + stride * (Wo - 1) + 1:stride, :]
                for i in range(k) for j in range(k)]
        a = jnp.concatenate(cols, axis=-1).reshape(N * Ho * Wo, k * k * Cin)
    out = matmul_bias_act(a, p["wmat"], p["b"], act)
    return out.reshape(N, Ho, Wo, Cout)


def _pixel_shuffle2(y, N, H, W, Cout):
    """(N*H*W, 4*Cout) with column order (py, px, c) -> (N, 2H, 2W, Cout)."""
    y = y.reshape(N, H, W, 2, 2, Cout)
    return y.transpose(0, 1, 3, 2, 4, 5).reshape(N, 2 * H, 2 * W, Cout)


def conv_transpose2x2(x, p):
    """ConvTranspose2d(k=2, s=2, p=0): single lane-dense GEMM + pixel shuffle."""
    N, H, W, Cin = x.shape
    Cout = p["wmat"].shape[1] // 4
    y = matmul_bias_act(x.reshape(N * H * W, Cin), p["wmat"], p["b"], "none")
    return _pixel_shuffle2(y, N, H, W, Cout)


def conv_transpose4x4s2p1(x, p):
    """ConvTranspose2d(k=4, s=2, p=1): 3x3 neighborhood patch GEMM against a
    packed (9*Cin, 4*Cout) weight, then pixel shuffle.  Exact, no zero-dilation."""
    N, H, W, Cin = x.shape
    Cout = p["wmat"].shape[1] // 4
    xb = jnp.pad(x.astype(jnp.bfloat16), ((0, 0), (1, 1), (1, 1), (0, 0)))
    cols = [xb[:, 1 + dy:1 + dy + H, 1 + dx:1 + dx + W, :]
            for dy in (-1, 0, 1) for dx in (-1, 0, 1)]
    a = jnp.concatenate(cols, axis=-1).reshape(N * H * W, 9 * Cin)
    y = matmul_bias_act(a, p["wmat"], p["b"], "none")
    return _pixel_shuffle2(y, N, H, W, Cout)


def avg_pool2(x):
    N, H, W, C = x.shape
    return x.reshape(N, H // 2, 2, W // 2, 2, C).mean(axis=(2, 4))


# ----------------------------------------------------------------------------
# Deterministic parameter construction (weights pre-reshaped + bf16)
# ----------------------------------------------------------------------------
class KeyGen:
    def __init__(self, seed=0):
        self.base = jax.random.PRNGKey(seed)
        self.i = 0

    def __call__(self):
        self.i += 1
        return jax.random.fold_in(self.base, self.i)


def conv_params(kg, cin, cout, k, bias=True):
    s = 1.0 / math.sqrt(cin * k * k)
    w = jax.random.uniform(kg(), (cout, cin, k, k), jnp.float32, -s, s)
    wmat = jnp.transpose(w, (2, 3, 1, 0)).reshape(k * k * cin, cout)
    if bias:
        b = jax.random.uniform(kg(), (cout,), jnp.float32, -s, s)
    else:
        b = jnp.zeros((cout,), jnp.float32)
    return {"wmat": wmat.astype(jnp.bfloat16), "b": b.reshape(1, cout)}


def convT2_params(kg, cin, cout):
    s = 1.0 / math.sqrt(cin * 4)
    w = jax.random.uniform(kg(), (cin, cout, 2, 2), jnp.float32, -s, s)
    b = jax.random.uniform(kg(), (cout,), jnp.float32, -s, s)
    wmat = jnp.transpose(w, (0, 2, 3, 1)).reshape(cin, 4 * cout)  # (cin, py,px,c)
    return {"wmat": wmat.astype(jnp.bfloat16),
            "b": jnp.tile(b, 4).reshape(1, 4 * cout)}


def convT4_params(kg, cin, cout):
    s = 1.0 / math.sqrt(cin * 16)
    w = jax.random.uniform(kg(), (cin, cout, 4, 4), jnp.float32, -s, s)
    b = jax.random.uniform(kg(), (cout,), jnp.float32, -s, s)
    # Sub-pixel phase decomposition: output phase (py,px) pulls taps
    # (dy,ky)/(dx,kx) pairs from the 3x3 input neighborhood.
    taps = {0: ((0, 1), (-1, 3)), 1: ((1, 0), (0, 2))}
    wp = jnp.zeros((9, cin, 4, cout), jnp.float32)
    for py in (0, 1):
        for px in (0, 1):
            ph = py * 2 + px
            for dy, ky in taps[py]:
                for dx, kx in taps[px]:
                    q = (dy + 1) * 3 + (dx + 1)
                    wp = wp.at[q, :, ph, :].set(w[:, :, ky, kx])
    wmat = wp.reshape(9 * cin, 4 * cout)
    return {"wmat": wmat.astype(jnp.bfloat16),
            "b": jnp.tile(b, 4).reshape(1, 4 * cout)}


def sft_params(kg, nC, nC_):
    return {"s0": conv_params(kg, nC, nC, 1), "s1": conv_params(kg, nC, nC_, 1),
            "t0": conv_params(kg, nC, nC, 1), "t1": conv_params(kg, nC, nC_, 1)}


def rdb3_params(kg, nChannels, nDlayer, growthRate):
    nC_ = nChannels
    dense = []
    for _ in range(nDlayer):
        dense.append({"sft": sft_params(kg, nChannels, nC_),
                      "conv": conv_params(kg, nC_, growthRate, 3, bias=False)})
        nC_ += growthRate
    return {"dense": dense,
            "final_sft": sft_params(kg, nChannels, nC_),
            "conv1x1": conv_params(kg, nC_, nChannels, 1, bias=False)}


def rdb_params(kg, nChannels, nDlayer, growthRate):
    nC_ = nChannels
    dense = []
    for _ in range(nDlayer):
        dense.append(conv_params(kg, nC_, growthRate, 3, bias=False))
        nC_ += growthRate
    return {"dense": dense,
            "conv1x1": conv_params(kg, nC_, nChannels, 1, bias=False)}


def mainnet_params(kg, in_nc, nDlayer, growthRate):
    return {
        "inc": rdb3_params(kg, in_nc, nDlayer, growthRate),
        "sc1": conv_params(kg, in_nc, in_nc * 2, 3),
        "rdb1": rdb_params(kg, in_nc * 2, nDlayer, growthRate),
        "sc2": conv_params(kg, in_nc * 2, in_nc * 4, 3),
        "rdb2": rdb_params(kg, in_nc * 4, nDlayer, growthRate),
        "up1": convT2_params(kg, in_nc * 4, in_nc * 2),
        "rdb3": rdb_params(kg, in_nc * 2, nDlayer, growthRate),
        "up2": convT2_params(kg, in_nc * 2, in_nc),
        "rdb4": rdb_params(kg, in_nc, nDlayer, growthRate),
        "outc": conv_params(kg, in_nc, in_nc, 1),
    }


def urdnet_params(kg, in_chs, out_chs, mid_feats, num_fb, nDlayer, growthRate):
    return {
        "inx0": conv_params(kg, in_chs, mid_feats, 3),
        "inx1": conv_params(kg, mid_feats, mid_feats, 4),
        "mains": [mainnet_params(kg, mid_feats, nDlayer, growthRate)
                  for _ in range(num_fb)],
        "c1x1": conv_params(kg, mid_feats * num_fb, mid_feats, 1),
        "out0": convT4_params(kg, mid_feats, mid_feats),
        "out1": conv_params(kg, mid_feats, out_chs, 3),
    }


# ----------------------------------------------------------------------------
# Forward pass (channels-last, mirrors the PyTorch modules)
# ----------------------------------------------------------------------------
def sft_layer3(p, x0, cond):
    N, H, W, C0 = x0.shape
    nC = cond.shape[-1]
    M = N * H * W
    out = sft_fused(cond.reshape(M, nC).astype(jnp.bfloat16),
                    x0.reshape(M, C0), p)
    return out.reshape(N, H, W, C0)


def feedback_rdb3(p, fea, cond):
    x0 = fea
    for lp in p["dense"]:
        mod = sft_layer3(lp["sft"], fea, cond)
        g = conv2d(mod, lp["conv"], k=3, pad=1, act="relu")
        fea = jnp.concatenate([fea, g], axis=-1)
    fea = sft_layer3(p["final_sft"], fea, cond)
    fea = conv2d(fea, p["conv1x1"], k=1)
    return fea + x0


def rdb(p, x):
    fea = x
    for lp in p["dense"]:
        g = conv2d(fea, lp, k=3, pad=1, act="relu")
        fea = jnp.concatenate([fea, g], axis=-1)
    out = conv2d(fea, p["conv1x1"], k=1)
    return out + x


def up_block(p, x1, x2):
    x1 = conv_transpose2x2(x1, p)
    dY = x2.shape[1] - x1.shape[1]
    dX = x2.shape[2] - x1.shape[2]
    x1 = jnp.pad(x1, ((0, 0), (dY // 2, dY - dY // 2),
                      (dX // 2, dX - dX // 2), (0, 0)))
    return x2 + x1


def feedback_mainnet(p, fea, cond):
    inx = feedback_rdb3(p["inc"], fea, cond)
    down1 = avg_pool2(inx)
    conv1 = rdb(p["rdb1"], conv2d(down1, p["sc1"], k=3, pad=1, act="relu"))
    down2 = avg_pool2(conv1)
    conv2 = rdb(p["rdb2"], conv2d(down2, p["sc2"], k=3, pad=1, act="relu"))
    up1 = up_block(p["up1"], conv2, conv1)
    conv3 = rdb(p["rdb3"], up1)
    up2 = up_block(p["up2"], conv3, inx)
    conv4 = rdb(p["rdb4"], up2)
    return conv2d(conv4, p["outc"], k=1)


def feedback_urdnet(p, x_nchw, seg_nchw):
    x = jnp.transpose(x_nchw, (0, 2, 3, 1))      # -> NHWC, once
    seg = jnp.transpose(seg_nchw, (0, 2, 3, 1))

    def inx_fn(t):
        t = conv2d(t, p["inx0"], k=3, pad=1)
        return conv2d(t, p["inx1"], k=4, stride=2, pad=1)

    fea0 = inx_fn(x)
    cond = inx_fn(seg)
    fea = fea0
    outs = []
    for mp in p["mains"]:
        fea = feedback_mainnet(mp, fea, cond)
        outs.append(fea)
    concat = jnp.concatenate(outs, axis=-1)
    fea = fea0 + conv2d(concat, p["c1x1"], k=1)
    out = conv_transpose4x4s2p1(fea, p["out0"])
    out = conv2d(out, p["out1"], k=3, pad=1)
    return jnp.transpose(out, (0, 3, 1, 2)) + x_nchw   # back to NCHW, once


# ----------------------------------------------------------------------------
if __name__ == "__main__":
    # Small but structure-faithful hyper-parameters.
    in_chs, out_chs = 1, 1
    mid_feats, num_fb, nDlayer, growthRate = 8, 2, 2, 4
    N, H, W = 2, 16, 16

    kg = KeyGen(0)
    params = urdnet_params(kg, in_chs, out_chs, mid_feats, num_fb,
                           nDlayer, growthRate)

    kx, ks = jax.random.split(jax.random.PRNGKey(0))
    x = jax.random.normal(kx, (N, in_chs, H, W), jnp.float32)
    seg = jax.random.normal(ks, (N, in_chs, H, W), jnp.float32)

    forward = jax.jit(feedback_urdnet)
    out = forward(params, x, seg)
    out = jax.block_until_ready(out)
    assert out.shape == (N, out_chs, H, W)
    assert bool(jnp.all(jnp.isfinite(out)))
    print("KERNEL_OK")
</pallas_src>

<mosaic_0001>
module attributes {stable_mosaic.version = 11 : i64} {
  func.func @_mm_kernel_none(%arg0: i32, %arg1: memref<128x9xbf16, #tpu.memory_space<vmem>>, %arg2: memref<9x8xbf16, #tpu.memory_space<vmem>>, %arg3: memref<1x8xf32, #tpu.memory_space<vmem>>, %arg4: memref<128x8xf32, #tpu.memory_space<vmem>>) attributes {dimension_semantics = [#tpu.dimension_semantics<parallel>], iteration_bounds = array<i64: 4>, scalar_prefetch = 0 : i64, scratch_operands = 0 : i64, tpu.core_type = #tpu.core_type<tc>, window_params = [{transform_indices = @transform_0, window_bounds = array<i64: 128, 9>}, {pipeline_mode = #tpu.pipeline_mode<synchronous>, transform_indices = @transform_1, window_bounds = array<i64: 9, 8>}, {pipeline_mode = #tpu.pipeline_mode<synchronous>, transform_indices = @transform_2, window_bounds = array<i64: 1, 8>}, {transform_indices = @transform_3, window_bounds = array<i64: 128, 8>}]} {
    %c0 = arith.constant 0 : index
    %c0_0 = arith.constant 0 : index
    %0 = vector.load %arg1[%c0, %c0_0] : memref<128x9xbf16, #tpu.memory_space<vmem>>, vector<128x9xbf16>
    %c0_1 = arith.constant 0 : index
    %c0_2 = arith.constant 0 : index
    %1 = vector.load %arg2[%c0_1, %c0_2] : memref<9x8xbf16, #tpu.memory_space<vmem>>, vector<9x8xbf16>
    %cst = arith.constant dense<0.000000e+00> : vector<128x8xf32>
    %2 = tpu.matmul %0, %1, %cst {dimension_numbers = #tpu.dot_dimension_numbers<[1], [0], [0], [1], [0, 0, 1, 1], [], []>} : vector<128x9xbf16>, vector<9x8xbf16>, vector<128x8xf32> -> vector<128x8xf32>
    %c0_3 = arith.constant 0 : index
    %c0_4 = arith.constant 0 : index
    %3 = vector.load %arg3[%c0_3, %c0_4] : memref<1x8xf32, #tpu.memory_space<vmem>>, vector<1x8xf32>
    %4 = vector.broadcast %3 : vector<1x8xf32> to vector<128x8xf32>
    %5 = arith.addf %2, %4 : vector<128x8xf32>
    %c0_5 = arith.constant 0 : index
    %c0_6 = arith.constant 0 : index
    %6 = vector.load %arg4[%c0_5, %c0_6] : memref<128x8xf32, #tpu.memory_space<vmem>>, vector<128x8xf32>
    tpu.vector_store %arg4[%c0_5, %c0_6], %5 {strides = array<i32>} : memref<128x8xf32, #tpu.memory_space<vmem>>, vector<128x8xf32>,
    return
  }
  func.func @transform_0(%arg0: i32) -> (i32, i32) {
    %c0_i32 = arith.constant 0 : i32
    %c0_i32_0 = arith.constant 0 : i32
    return %arg0, %c0_i32 : i32, i32
  }
  func.func @transform_1(%arg0: i32) -> (i32, i32) {
    %c0_i32 = arith.constant 0 : i32
    %c0_i32_0 = arith.constant 0 : i32
    %c0_i32_1 = arith.constant 0 : i32
    return %c0_i32, %c0_i32_0 : i32, i32
  }
  func.func @transform_2(%arg0: i32) -> (i32, i32) {
    %c0_i32 = arith.constant 0 : i32
    %c0_i32_0 = arith.constant 0 : i32
    %c0_i32_1 = arith.constant 0 : i32
    return %c0_i32, %c0_i32_0 : i32, i32
  }
  func.func @transform_3(%arg0: i32) -> (i32, i32) {
    %c0_i32 = arith.constant 0 : i32
    %c0_i32_0 = arith.constant 0 : i32
    return %arg0, %c0_i32 : i32, i32
  }
}

module attributes {stable_mosaic.version = 11 : i64} {
  func.func @_mm_kernel_none(%arg0: i32, %arg1: memref<128x128xbf16, #tpu.memory_space<vmem>>, %arg2: memref<128x8xbf16, #tpu.memory_space<vmem>>, %arg3: memref<1x8xf32, #tpu.memory_space<vmem>>, %arg4: memref<128x8xf32, #tpu.memory_space<vmem>>) attributes {dimension_semantics = [#tpu.dimension_semantics<parallel>], iteration_bounds = array<i64: 1>, scalar_prefetch = 0 : i64, scratch_operands = 0 : i64, tpu.core_type = #tpu.core_type<tc>, window_params = [{transform_indices = @transform_0, window_bounds = array<i64: 128, 128>}, {pipeline_mode = #tpu.pipeline_mode<synchronous>, transform_indices = @transform_1, window_bounds = array<i64: 128, 8>}, {pipeline_mode = #tpu.pipeline_mode<synchronous>, transform_indices = @transform_2, window_bounds = array<i64: 1, 8>}, {transform_indices = @transform_3, window_bounds = array<i64: 128, 8>}]} {
    %c0 = arith.constant 0 : index
    %c0_0 = arith.constant 0 : index
    %0 = vector.load %arg1[%c0, %c0_0] : memref<128x128xbf16, #tpu.memory_space<vmem>>, vector<128x128xbf16>
    %c0_1 = arith.constant 0 : index
    %c0_2 = arith.constant 0 : index
    %1 = vector.load %arg2[%c0_1, %c0_2] : memref<128x8xbf16, #tpu.memory_space<vmem>>, vector<128x8xbf16>
    %cst = arith.constant dense<0.000000e+00> : vector<128x8xf32>
    %2 = tpu.matmul %0, %1, %cst {dimension_numbers = #tpu.dot_dimension_numbers<[1], [0], [0], [1], [0, 0, 1, 1], [], []>} : vector<128x128xbf16>, vector<128x8xbf16>, vector<128x8xf32> -> vector<128x8xf32>
    %c0_3 = arith.constant 0 : index
    %c0_4 = arith.constant 0 : index
    %3 = vector.load %arg3[%c0_3, %c0_4] : memref<1x8xf32, #tpu.memory_space<vmem>>, vector<1x8xf32>
    %4 = vector.broadcast %3 : vector<1x8xf32> to vector<128x8xf32>
    %5 = arith.addf %2, %4 : vector<128x8xf32>
    %c0_5 = arith.constant 0 : index
    %c0_6 = arith.constant 0 : index
    %6 = vector.load %arg4[%c0_5, %c0_6] : memref<128x8xf32, #tpu.memory_space<vmem>>, vector<128x8xf32>
    tpu.vector_store %arg4[%c0_5, %c0_6], %5 {strides = array<i32>} : memref<128x8xf32, #tpu.memory_space<vmem>>, vector<128x8xf32>,
    return
  }
  func.func @transform_0(%arg0: i32) -> (i32, i32) {
    %c0_i32 = arith.constant 0 : i32
    %c0_i32_0 = arith.constant 0 : i32
    return %arg0, %c0_i32 : i32, i32
  }
  func.func @transform_1(%arg0: i32) -> (i32, i32) {
    %c0_i32 = arith.constant 0 : i32
    %c0_i32_0 = arith.constant 0 : i32
    %c0_i32_1 = arith.constant 0 : i32
    return %c0_i32, %c0_i32_0 : i32, i32
  }
  func.func @transform_2(%arg0: i32) -> (i32, i32) {
    %c0_i32 = arith.constant 0 : i32
    %c0_i32_0 = arith.constant 0 : i32
    %c0_i32_1 = arith.constant 0 : i32
    return %c0_i32, %c0_i32_0 : i32, i32
  }
  func.func @transform_3(%arg0: i32) -> (i32, i32) {
    %c0_i32 = arith.constant 0 : i32
    %c0_i32_0 = arith.constant 0 : i32
    return %arg0, %c0_i32 : i32, i32
  }
}

module attributes {stable_mosaic.version = 11 : i64} {
  func.func @_sft_kernel(%arg0: i32, %arg1: memref<128x8xbf16, #tpu.memory_space<vmem>>, %arg2: memref<128x8xf32, #tpu.memory_space<vmem>>, %arg3: memref<8x8xbf16, #tpu.memory_space<vmem>>, %arg4: memref<1x8xf32, #tpu.memory_space<vmem>>, %arg5: memref<8x8xbf16, #tpu.memory_space<vmem>>, %arg6: memref<1x8xf32, #tpu.memory_space<vmem>>, %arg7: memref<8x8xbf16, #tpu.memory_space<vmem>>, %arg8: memref<1x8xf32, #tpu.memory_space<vmem>>, %arg9: memref<8x8xbf16, #tpu.memory_space<vmem>>, %arg10: memref<1x8xf32, #tpu.memory_space<vmem>>, %arg11: memref<128x8xf32, #tpu.memory_space<vmem>>) attributes {dimension_semantics = [#tpu.dimension_semantics<parallel>], iteration_bounds = array<i64: 1>, scalar_prefetch = 0 : i64, scratch_operands = 0 : i64, tpu.core_type = #tpu.core_type<tc>, window_params = [{transform_indices = @transform_0, window_bounds = array<i64: 128, 8>}, {transform_indices = @transform_1, window_bounds = array<i64: 128, 8>}, {pipeline_mode = #tpu.pipeline_mode<synchronous>, transform_indices = @transform_2, window_bounds = array<i64: 8, 8>}, {pipeline_mode = #tpu.pipeline_mode<synchronous>, transform_indices = @transform_3, window_bounds = array<i64: 1, 8>}, {pipeline_mode = #tpu.pipeline_mode<synchronous>, transform_indices = @transform_4, window_bounds = array<i64: 8, 8>}, {pipeline_mode = #tpu.pipeline_mode<synchronous>, transform_indices = @transform_5, window_bounds = array<i64: 1, 8>}, {pipeline_mode = #tpu.pipeline_mode<synchronous>, transform_indices = @transform_6, window_bounds = array<i64: 8, 8>}, {pipeline_mode = #tpu.pipeline_mode<synchronous>, transform_indices = @transform_7, window_bounds = array<i64: 1, 8>}, {pipeline_mode = #tpu.pipeline_mode<synchronous>, transform_indices = @transform_8, window_bounds = array<i64: 8, 8>}, {pipeline_mode = #tpu.pipeline_mode<synchronous>, transform_indices = @transform_9, window_bounds = array<i64: 1, 8>}, {transform_indices = @transform_10, window_bounds = array<i64: 128, 8>}]} {
    %c0 = arith.constant 0 : index
    %c0_0 = arith.constant 0 : index
    %0 = vector.load %arg1[%c0, %c0_0] : memref<128x8xbf16, #tpu.memory_space<vmem>>, vector<128x8xbf16>
    %c0_1 = arith.constant 0 : index
    %c0_2 = arith.constant 0 : index
    %1 = vector.load %arg3[%c0_1, %c0_2] : memref<8x8xbf16, #tpu.memory_space<vmem>>, vector<8x8xbf16>
    %cst = arith.constant dense<0.000000e+00> : vector<128x8xf32>
    %2 = tpu.matmul %0, %1, %cst {dimension_numbers = #tpu.dot_dimension_numbers<[1], [0], [0], [1], [0, 0, 1, 1], [], []>} : vector<128x8xbf16>, vector<8x8xbf16>, vector<128x8xf32> -> vector<128x8xf32>
    %c0_3 = arith.constant 0 : index
    %c0_4 = arith.constant 0 : index
    %3 = vector.load %arg4[%c0_3, %c0_4] : memref<1x8xf32, #tpu.memory_space<vmem>>, vector<1x8xf32>
    %4 = vector.broadcast %3 : vector<1x8xf32> to vector<128x8xf32>
    %5 = arith.addf %2, %4 : vector<128x8xf32>
    %cst_5 = arith.constant 0.000000e+00 : f32
    %6 = vector.broadcast %cst_5 : f32 to vector<128x8xf32>
    %7 = arith.cmpf oge, %5, %6 : vector<128x8xf32>
    %cst_6 = arith.constant 1.000000e-01 : f32
    %8 = vector.broadcast %cst_6 : f32 to vector<128x8xf32>
    %9 = arith.mulf %8, %5 : vector<128x8xf32>
    %10 = arith.select %7, %5, %9 : vector<128x8xi1>, vector<128x8xf32>
    %11 = arith.truncf %10 : vector<128x8xf32> to vector<128x8xbf16>
    %c0_7 = arith.constant 0 : index
    %c0_8 = arith.constant 0 : index
    %12 = vector.load %arg5[%c0_7, %c0_8] : memref<8x8xbf16, #tpu.memory_space<vmem>>, vector<8x8xbf16>
    %cst_9 = arith.constant dense<0.000000e+00> : vector<128x8xf32>
    %13 = tpu.matmul %11, %12, %cst_9 {dimension_numbers = #tpu.dot_dimension_numbers<[1], [0], [0], [1], [0, 0, 1, 1], [], []>} : vector<128x8xbf16>, vector<8x8xbf16>, vector<128x8xf32> -> vector<128x8xf32>
    %c0_10 = arith.constant 0 : index
    %c0_11 = arith.constant 0 : index
    %14 = vector.load %arg6[%c0_10, %c0_11] : memref<1x8xf32, #tpu.memory_space<vmem>>, vector<1x8xf32>
    %15 = vector.broadcast %14 : vector<1x8xf32> to vector<128x8xf32>
    %16 = arith.addf %13, %15 : vector<128x8xf32>
    %c0_12 = arith.constant 0 : index
    %c0_13 = arith.constant 0 : index
    %17 = vector.load %arg7[%c0_12, %c0_13] : memref<8x8xbf16, #tpu.memory_space<vmem>>, vector<8x8xbf16>
    %cst_14 = arith.constant dense<0.000000e+00> : vector<128x8xf32>
    %18 = tpu.matmul %0, %17, %cst_14 {dimension_numbers = #tpu.dot_dimension_numbers<[1], [0], [0], [1], [0, 0, 1, 1], [], []>} : vector<128x8xbf16>, vector<8x8xbf16>, vector<128x8xf32> -> vector<128x8xf32>
    %c0_15 = arith.constant 0 : index
    %c0_16 = arith.constant 0 : index
    %19 = vector.load %arg8[%c0_15, %c0_16] : memref<1x8xf32, #tpu.memory_space<vmem>>, vector<1x8xf32>
    %20 = vector.broadcast %19 : vector<1x8xf32> to vector<128x8xf32>
    %21 = arith.addf %18, %20 : vector<128x8xf32>
    %cst_17 = arith.constant 0.000000e+00 : f32
    %22 = vector.broadcast %cst_17 : f32 to vector<128x8xf32>
    %23 = arith.cmpf oge, %21, %22 : vector<128x8xf32>
    %cst_18 = arith.constant 1.000000e-01 : f32
    %24 = vector.broadcast %cst_18 : f32 to vector<128x8xf32>
    %25 = arith.mulf %24, %21 : vector<128x8xf32>
    %26 = arith.select %23, %21, %25 : vector<128x8xi1>, vector<128x8xf32>
    %27 = arith.truncf %26 : vector<128x8xf32> to vector<128x8xbf16>
    %c0_19 = arith.constant 0 : index
    %c0_20 = arith.constant 0 : index
    %28 = vector.load %arg9[%c0_19, %c0_20] : memref<8x8xbf16, #tpu.memory_space<vmem>>, vector<8x8xbf16>
    %cst_21 = arith.constant dense<0.000000e+00> : vector<128x8xf32>
    %29 = tpu.matmul %27, %28, %cst_21 {dimension_numbers = #tpu.dot_dimension_numbers<[1], [0], [0], [1], [0, 0, 1, 1], [], []>} : vector<128x8xbf16>, vector<8x8xbf16>, vector<128x8xf32> -> vector<128x8xf32>
    %c0_22 = arith.constant 0 : index
    %c0_23 = arith.constant 0 : index
    %30 = vector.load %arg10[%c0_22, %c0_23] : memref<1x8xf32, #tpu.memory_space<vmem>>, vector<1x8xf32>
    %31 = vector.broadcast %30 : vector<1x8xf32> to vector<128x8xf32>
    %32 = arith.addf %29, %31 : vector<128x8xf32>
    %c0_24 = arith.constant 0 : index
    %c0_25 = arith.constant 0 : index
    %33 = vector.load %arg2[%c0_24, %c0_25] : memref<128x8xf32, #tpu.memory_space<vmem>>, vector<128x8xf32>
    %cst_26 = arith.constant 1.000000e+00 : f32
    %34 = vector.broadcast %cst_26 : f32 to vector<128x8xf32>
    %35 = arith.addf %16, %34 : vector<128x8xf32>
    %36 = arith.mulf %33, %35 : vector<128x8xf32>
    %37 = arith.addf %36, %32 : vector<128x8xf32>
    %c0_27 = arith.constant 0 : index
    %c0_28 = arith.constant 0 : index
    %38 = vector.load %arg11[%c0_27, %c0_28] : memref<128x8xf32, #tpu.memory_space<vmem>>, vector<128x8xf32>
    tpu.vector_store %arg11[%c0_27, %c0_28], %37 {strides = array<i32>} : memref<128x8xf32, #tpu.memory_space<vmem>>, vector<128x8xf32>,
    return
  }
  func.func @transform_0(%arg0: i32) -> (i32, i32) {
    %c0_i32 = arith.constant 0 : i32
    %c0_i32_0 = arith.constant 0 : i32
    return %arg0, %c0_i32 : i32, i32
  }
  func.func @transform_1(%arg0: i32) -> (i32, i32) {
    %c0_i32 = arith.constant 0 : i32
    %c0_i32_0 = arith.constant 0 : i32
    return %arg0, %c0_i32 : i32, i32
  }
  func.func @transform_2(%arg0: i32) -> (i32, i32) {
    %c0_i32 = arith.constant 0 : i32
    %c0_i32_0 = arith.constant 0 : i32
    %c0_i32_1 = arith.constant 0 : i32
    return %c0_i32, %c0_i32_0 : i32, i32
  }
  func.func @transform_3(%arg0: i32) -> (i32, i32) {
    %c0_i32 = arith.constant 0 : i32
    %c0_i32_0 = arith.constant 0 : i32
    %c0_i32_1 = arith.constant 0 : i32
    return %c0_i32, %c0_i32_0 : i32, i32
  }
  func.func @transform_4(%arg0: i32) -> (i32, i32) {
    %c0_i32 = arith.constant 0 : i32
    %c0_i32_0 = arith.constant 0 : i32
    %c0_i32_1 = arith.constant 0 : i32
    return %c0_i32, %c0_i32_0 : i32, i32
  }
  func.func @transform_5(%arg0: i32) -> (i32, i32) {
    %c0_i32 = arith.constant 0 : i32
    %c0_i32_0 = arith.constant 0 : i32
    %c0_i32_1 = arith.constant 0 : i32
    return %c0_i32, %c0_i32_0 : i32, i32
  }
  func.func @transform_6(%arg0: i32) -> (i32, i32) {
    %c0_i32 = arith.constant 0 : i32
    %c0_i32_0 = arith.constant 0 : i32
    %c0_i32_1 = arith.constant 0 : i32
    return %c0_i32, %c0_i32_0 : i32, i32
  }
  func.func @transform_7(%arg0: i32) -> (i32, i32) {
    %c0_i32 = arith.constant 0 : i32
    %c0_i32_0 = arith.constant 0 : i32
    %c0_i32_1 = arith.constant 0 : i32
    return %c0_i32, %c0_i32_0 : i32, i32
  }
  func.func @transform_8(%arg0: i32) -> (i32, i32) {
    %c0_i32 = arith.constant 0 : i32
    %c0_i32_0 = arith.constant 0 : i32
    %c0_i32_1 = arith.constant 0 : i32
    return %c0_i32, %c0_i32_0 : i32, i32
  }
  func.func @transform_9(%arg0: i32) -> (i32, i32) {
    %c0_i32 = arith.constant 0 : i32
    %c0_i32_0 = arith.constant 0 : i32
    %c0_i32_1 = arith.constant 0 : i32
    return %c0_i32, %c0_i32_0 : i32, i32
  }
  func.func @transform_10(%arg0: i32) -> (i32, i32) {
    %c0_i32 = arith.constant 0 : i32
    %c0_i32_0 = arith.constant 0 : i32
    return %arg0, %c0_i32 : i32, i32
  }
}

module attributes {stable_mosaic.version = 11 : i64} {
  func.func @_mm_kernel_relu(%arg0: i32, %arg1: memref<128x72xbf16, #tpu.memory_space<vmem>>, %arg2: memref<72x4xbf16, #tpu.memory_space<vmem>>, %arg3: memref<1x4xf32, #tpu.memory_space<vmem>>, %arg4: memref<128x4xf32, #tpu.memory_space<vmem>>) attributes {dimension_semantics = [#tpu.dimension_semantics<parallel>], iteration_bounds = array<i64: 1>, scalar_prefetch = 0 : i64, scratch_operands = 0 : i64, tpu.core_type = #tpu.core_type<tc>, window_params = [{transform_indices = @transform_0, window_bounds = array<i64: 128, 72>}, {pipeline_mode = #tpu.pipeline_mode<synchronous>, transform_indices = @transform_1, window_bounds = array<i64: 72, 4>}, {pipeline_mode = #tpu.pipeline_mode<synchronous>, transform_indices = @transform_2, window_bounds = array<i64: 1, 4>}, {transform_indices = @transform_3, window_bounds = array<i64: 128, 4>}]} {
    %c0 = arith.constant 0 : index
    %c0_0 = arith.constant 0 : index
    %0 = vector.load %arg1[%c0, %c0_0] : memref<128x72xbf16, #tpu.memory_space<vmem>>, vector<128x72xbf16>
    %c0_1 = arith.constant 0 : index
    %c0_2 = arith.constant 0 : index
    %1 = vector.load %arg2[%c0_1, %c0_2] : memref<72x4xbf16, #tpu.memory_space<vmem>>, vector<72x4xbf16>
    %cst = arith.constant dense<0.000000e+00> : vector<128x4xf32>
    %2 = tpu.matmul %0, %1, %cst {dimension_numbers = #tpu.dot_dimension_numbers<[1], [0], [0], [1], [0, 0, 1, 1], [], []>} : vector<128x72xbf16>, vector<72x4xbf16>, vector<128x4xf32> -> vector<128x4xf32>
    %c0_3 = arith.constant 0 : index
    %c0_4 = arith.constant 0 : index
    %3 = vector.load %arg3[%c0_3, %c0_4] : memref<1x4xf32, #tpu.memory_space<vmem>>, vector<1x4xf32>
    %4 = vector.broadcast %3 : vector<1x4xf32> to vector<128x4xf32>
    %5 = arith.addf %2, %4 : vector<128x4xf32>
    %cst_5 = arith.constant 0.000000e+00 : f32
    %6 = vector.broadcast %cst_5 : f32 to vector<128x4xf32>
    %7 = arith.maximumf %5, %6 : vector<128x4xf32>
    %c0_6 = arith.constant 0 : index
    %c0_7 = arith.constant 0 : index
    %8 = vector.load %arg4[%c0_6, %c0_7] : memref<128x4xf32, #tpu.memory_space<vmem>>, vector<128x4xf32>
    tpu.vector_store %arg4[%c0_6, %c0_7], %7 {strides = array<i32>} : memref<128x4xf32, #tpu.memory_space<vmem>>, vector<128x4xf32>,
    return
  }
  func.func @transform_0(%arg0: i32) -> (i32, i32) {
    %c0_i32 = arith.constant 0 : i32
    %c0_i32_0 = arith.constant 0 : i32
    return %arg0, %c0_i32 : i32, i32
  }
  func.func @transform_1(%arg0: i32) -> (i32, i32) {
    %c0_i32 = arith.constant 0 : i32
    %c0_i32_0 = arith.constant 0 : i32
    %c0_i32_1 = arith.constant 0 : i32
    return %c0_i32, %c0_i32_0 : i32, i32
  }
  func.func @transform_2(%arg0: i32) -> (i32, i32) {
    %c0_i32 = arith.constant 0 : i32
    %c0_i32_0 = arith.constant 0 : i32
    %c0_i32_1 = arith.constant 0 : i32
    return %c0_i32, %c0_i32_0 : i32, i32
  }
  func.func @transform_3(%arg0: i32) -> (i32, i32) {
    %c0_i32 = arith.constant 0 : i32
    %c0_i32_0 = arith.constant 0 : i32
    return %arg0, %c0_i32 : i32, i32
  }
}

module attributes {stable_mosaic.version = 11 : i64} {
  func.func @_sft_kernel(%arg0: i32, %arg1: memref<128x8xbf16, #tpu.memory_space<vmem>>, %arg2: memref<128x12xf32, #tpu.memory_space<vmem>>, %arg3: memref<8x8xbf16, #tpu.memory_space<vmem>>, %arg4: memref<1x8xf32, #tpu.memory_space<vmem>>, %arg5: memref<8x12xbf16, #tpu.memory_space<vmem>>, %arg6: memref<1x12xf32, #tpu.memory_space<vmem>>, %arg7: memref<8x8xbf16, #tpu.memory_space<vmem>>, %arg8: memref<1x8xf32, #tpu.memory_space<vmem>>, %arg9: memref<8x12xbf16, #tpu.memory_space<vmem>>, %arg10: memref<1x12xf32, #tpu.memory_space<vmem>>, %arg11: memref<128x12xf32, #tpu.memory_space<vmem>>) attributes {dimension_semantics = [#tpu.dimension_semantics<parallel>], iteration_bounds = array<i64: 1>, scalar_prefetch = 0 : i64, scratch_operands = 0 : i64, tpu.core_type = #tpu.core_type<tc>, window_params = [{transform_indices = @transform_0, window_bounds = array<i64: 128, 8>}, {transform_indices = @transform_1, window_bounds = array<i64: 128, 12>}, {pipeline_mode = #tpu.pipeline_mode<synchronous>, transform_indices = @transform_2, window_bounds = array<i64: 8, 8>}, {pipeline_mode = #tpu.pipeline_mode<synchronous>, transform_indices = @transform_3, window_bounds = array<i64: 1, 8>}, {pipeline_mode = #tpu.pipeline_mode<synchronous>, transform_indices = @transform_4, window_bounds = array<i64: 8, 12>}, {pipeline_mode = #tpu.pipeline_mode<synchronous>, transform_indices = @transform_5, window_bounds = array<i64: 1, 12>}, {pipeline_mode = #tpu.pipeline_mode<synchronous>, transform_indices = @transform_6, window_bounds = array<i64: 8, 8>}, {pipeline_mode = #tpu.pipeline_mode<synchronous>, transform_indices = @transform_7, window_bounds = array<i64: 1, 8>}, {pipeline_mode = #tpu.pipeline_mode<synchronous>, transform_indices = @transform_8, window_bounds = array<i64: 8, 12>}, {pipeline_mode = #tpu.pipeline_mode<synchronous>, transform_indices = @transform_9, window_bounds = array<i64: 1, 12>}, {transform_indices = @transform_10, window_bounds = array<i64: 128, 12>}]} {
    %c0 = arith.constant 0 : index
    %c0_0 = arith.constant 0 : index
    %0 = vector.load %arg1[%c0, %c0_0] : memref<128x8xbf16, #tpu.memory_space<vmem>>, vector<128x8xbf16>
    %c0_1 = arith.constant 0 : index
    %c0_2 = arith.constant 0 : index
    %1 = vector.load %arg3[%c0_1, %c0_2] : memref<8x8xbf16, #tpu.memory_space<vmem>>, vector<8x8xbf16>
    %cst = arith.constant dense<0.000000e+00> : vector<128x8xf32>
    %2 = tpu.matmul %0, %1, %cst {dimension_numbers = #tpu.dot_dimension_numbers<[1], [0], [0], [1], [0, 0, 1, 1], [], []>} : vector<128x8xbf16>, vector<8x8xbf16>, vector<128x8xf32> -> vector<128x8xf32>
    %c0_3 = arith.constant 0 : index
    %c0_4 = arith.constant 0 : index
    %3 = vector.load %arg4[%c0_3, %c0_4] : memref<1x8xf32, #tpu.memory_space<vmem>>, vector<1x8xf32>
    %4 = vector.broadcast %3 : vector<1x8xf32> to vector<128x8xf32>
    %5 = arith.addf %2, %4 : vector<128x8xf32>
    %cst_5 = arith.constant 0.000000e+00 : f32
    %6 = vector.broadcast %cst_5 : f32 to vector<128x8xf32>
    %7 = arith.cmpf oge, %5, %6 : vector<128x8xf32>
    %cst_6 = arith.constant 1.000000e-01 : f32
    %8 = vector.broadcast %cst_6 : f32 to vector<128x8xf32>
    %9 = arith.mulf %8, %5 : vector<128x8xf32>
    %10 = arith.select %7, %5, %9 : vector<128x8xi1>, vector<128x8xf32>
    %11 = arith.truncf %10 : vector<128x8xf32> to vector<128x8xbf16>
    %c0_7 = arith.constant 0 : index
    %c0_8 = arith.constant 0 : index
    %12 = vector.load %arg5[%c0_7, %c0_8] : memref<8x12xbf16, #tpu.memory_space<vmem>>, vector<8x12xbf16>
    %cst_9 = arith.constant dense<0.000000e+00> : vector<128x12xf32>
    %13 = tpu.matmul %11, %12, %cst_9 {dimension_numbers = #tpu.dot_dimension_numbers<[1], [0], [0], [1], [0, 0, 1, 1], [], []>} : vector<128x8xbf16>, vector<8x12xbf16>, vector<128x12xf32> -> vector<128x12xf32>
    %c0_10 = arith.constant 0 : index
    %c0_11 = arith.constant 0 : index
    %14 = vector.load %arg6[%c0_10, %c0_11] : memref<1x12xf32, #tpu.memory_space<vmem>>, vector<1x12xf32>
    %15 = vector.broadcast %14 : vector<1x12xf32> to vector<128x12xf32>
    %16 = arith.addf %13, %15 : vector<128x12xf32>
    %c0_12 = arith.constant 0 : index
    %c0_13 = arith.constant 0 : index
    %17 = vector.load %arg7[%c0_12, %c0_13] : memref<8x8xbf16, #tpu.memory_space<vmem>>, vector<8x8xbf16>
    %cst_14 = arith.constant dense<0.000000e+00> : vector<128x8xf32>
    %18 = tpu.matmul %0, %17, %cst_14 {dimension_numbers = #tpu.dot_dimension_numbers<[1], [0], [0], [1], [0, 0, 1, 1], [], []>} : vector<128x8xbf16>, vector<8x8xbf16>, vector<128x8xf32> -> vector<128x8xf32>
    %c0_15 = arith.constant 0 : index
    %c0_16 = arith.constant 0 : index
    %19 = vector.load %arg8[%c0_15, %c0_16] : memref<1x8xf32, #tpu.memory_space<vmem>>, vector<1x8xf32>
    %20 = vector.broadcast %19 : vector<1x8xf32> to vector<128x8xf32>
    %21 = arith.addf %18, %20 : vector<128x8xf32>
    %cst_17 = arith.constant 0.000000e+00 : f32
    %22 = vector.broadcast %cst_17 : f32 to vector<128x8xf32>
    %23 = arith.cmpf oge, %21, %22 : vector<128x8xf32>
    %cst_18 = arith.constant 1.000000e-01 : f32
    %24 = vector.broadcast %cst_18 : f32 to vector<128x8xf32>
    %25 = arith.mulf %24, %21 : vector<128x8xf32>
    %26 = arith.select %23, %21, %25 : vector<128x8xi1>, vector<128x8xf32>
    %27 = arith.truncf %26 : vector<128x8xf32> to vector<128x8xbf16>
    %c0_19 = arith.constant 0 : index
    %c0_20 = arith.constant 0 : index
    %28 = vector.load %arg9[%c0_19, %c0_20] : memref<8x12xbf16, #tpu.memory_space<vmem>>, vector<8x12xbf16>
    %cst_21 = arith.constant dense<0.000000e+00> : vector<128x12xf32>
    %29 = tpu.matmul %27, %28, %cst_21 {dimension_numbers = #tpu.dot_dimension_numbers<[1], [0], [0], [1], [0, 0, 1, 1], [], []>} : vector<128x8xbf16>, vector<8x12xbf16>, vector<128x12xf32> -> vector<128x12xf32>
    %c0_22 = arith.constant 0 : index
    %c0_23 = arith.constant 0 : index
    %30 = vector.load %arg10[%c0_22, %c0_23] : memref<1x12xf32, #tpu.memory_space<vmem>>, vector<1x12xf32>
    %31 = vector.broadcast %30 : vector<1x12xf32> to vector<128x12xf32>
    %32 = arith.addf %29, %31 : vector<128x12xf32>
    %c0_24 = arith.constant 0 : index
    %c0_25 = arith.constant 0 : index
    %33 = vector.load %arg2[%c0_24, %c0_25] : memref<128x12xf32, #tpu.memory_space<vmem>>, vector<128x12xf32>
    %cst_26 = arith.constant 1.000000e+00 : f32
    %34 = vector.broadcast %cst_26 : f32 to vector<128x12xf32>
    %35 = arith.addf %16, %34 : vector<128x12xf32>
    %36 = arith.mulf %33, %35 : vector<128x12xf32>
    %37 = arith.addf %36, %32 : vector<128x12xf32>
    %c0_27 = arith.constant 0 : index
    %c0_28 = arith.constant 0 : index
    %38 = vector.load %arg11[%c0_27, %c0_28] : memref<128x12xf32, #tpu.memory_space<vmem>>, vector<128x12xf32>
    tpu.vector_store %arg11[%c0_27, %c0_28], %37 {strides = array<i32>} : memref<128x12xf32, #tpu.memory_space<vmem>>, vector<128x12xf32>,
    return
  }
  func.func @transform_0(%arg0: i32) -> (i32, i32) {
    %c0_i32 = arith.constant 0 : i32
    %c0_i32_0 = arith.constant 0 : i32
    return %arg0, %c0_i32 : i32, i32
  }
  func.func @transform_1(%arg0: i32) -> (i32, i32) {
    %c0_i32 = arith.constant 0 : i32
    %c0_i32_0 = arith.constant 0 : i32
    return %arg0, %c0_i32 : i32, i32
  }
  func.func @transform_2(%arg0: i32) -> (i32, i32) {
    %c0_i32 = arith.constant 0 : i32
    %c0_i32_0 = arith.constant 0 : i32
    %c0_i32_1 = arith.constant 0 : i32
    return %c0_i32, %c0_i32_0 : i32, i32
  }
  func.func @transform_3(%arg0: i32) -> (i32, i32) {
    %c0_i32 = arith.constant 0 : i32
    %c0_i32_0 = arith.constant 0 : i32
    %c0_i32_1 = arith.constant 0 : i32
    return %c0_i32, %c0_i32_0 : i32, i32
  }
  func.func @transform_4(%arg0: i32) -> (i32, i32) {
    %c0_i32 = arith.constant 0 : i32
    %c0_i32_0 = arith.constant 0 : i32
    %c0_i32_1 = arith.constant 0 : i32
    return %c0_i32, %c0_i32_0 : i32, i32
  }
  func.func @transform_5(%arg0: i32) -> (i32, i32) {
    %c0_i32 = arith.constant 0 : i32
    %c0_i32_0 = arith.constant 0 : i32
    %c0_i32_1 = arith.constant 0 : i32
    return %c0_i32, %c0_i32_0 : i32, i32
  }
  func.func @transform_6(%arg0: i32) -> (i32, i32) {
    %c0_i32 = arith.constant 0 : i32
    %c0_i32_0 = arith.constant 0 : i32
    %c0_i32_1 = arith.constant 0 : i32
    return %c0_i32, %c0_i32_0 : i32, i32
  }
  func.func @transform_7(%arg0: i32) -> (i32, i32) {
    %c0_i32 = arith.constant 0 : i32
    %c0_i32_0 = arith.constant 0 : i32
    %c0_i32_1 = arith.constant 0 : i32
    return %c0_i32, %c0_i32_0 : i32, i32
  }
  func.func @transform_8(%arg0: i32) -> (i32, i32) {
    %c0_i32 = arith.constant 0 : i32
    %c0_i32_0 = arith.constant 0 : i32
    %c0_i32_1 = arith.constant 0 : i32
    return %c0_i32, %c0_i32_0 : i32, i32
  }
  func.func @transform_9(%arg0: i32) -> (i32, i32) {
    %c0_i32 = arith.constant 0 : i32
    %c0_i32_0 = arith.constant 0 : i32
    %c0_i32_1 = arith.constant 0 : i32
    return %c0_i32, %c0_i32_0 : i32, i32
  }
  func.func @transform_10(%arg0: i32) -> (i32, i32) {
    %c0_i32 = arith.constant 0 : i32
    %c0_i32_0 = arith.constant 0 : i32
    return %arg0, %c0_i32 : i32, i32
  }
}

module attributes {stable_mosaic.version = 11 : i64} {
  func.func @_mm_kernel_relu(%arg0: i32, %arg1: memref<128x108xbf16, #tpu.memory_space<vmem>>, %arg2: memref<108x4xbf16, #tpu.memory_space<vmem>>, %arg3: memref<1x4xf32, #tpu.memory_space<vmem>>, %arg4: memref<128x4xf32, #tpu.memory_space<vmem>>) attributes {dimension_semantics = [#tpu.dimension_semantics<parallel>], iteration_bounds = array<i64: 1>, scalar_prefetch = 0 : i64, scratch_operands = 0 : i64, tpu.core_type = #tpu.core_type<tc>, window_params = [{transform_indices = @transform_0, window_bounds = array<i64: 128, 108>}, {pipeline_mode = #tpu.pipeline_mode<synchronous>, transform_indices = @transform_1, window_bounds = array<i64: 108, 4>}, {pipeline_mode = #tpu.pipeline_mode<synchronous>, transform_indices = @transform_2, window_bounds = array<i64: 1, 4>}, {transform_indices = @transform_3, window_bounds = array<i64: 128, 4>}]} {
    %c0 = arith.constant 0 : index
    %c0_0 = arith.constant 0 : index
    %0 = vector.load %arg1[%c0, %c0_0] : memref<128x108xbf16, #tpu.memory_space<vmem>>, vector<128x108xbf16>
    %c0_1 = arith.constant 0 : index
    %c0_2 = arith.constant 0 : index
    %1 = vector.load %arg2[%c0_1, %c0_2] : memref<108x4xbf16, #tpu.memory_space<vmem>>, vector<108x4xbf16>
    %cst = arith.constant dense<0.000000e+00> : vector<128x4xf32>
    %2 = tpu.matmul %0, %1, %cst {dimension_numbers = #tpu.dot_dimension_numbers<[1], [0], [0], [1], [0, 0, 1, 1], [], []>} : vector<128x108xbf16>, vector<108x4xbf16>, vector<128x4xf32> -> vector<128x4xf32>
    %c0_3 = arith.constant 0 : index
    %c0_4 = arith.constant 0 : index
    %3 = vector.load %arg3[%c0_3, %c0_4] : memref<1x4xf32, #tpu.memory_space<vmem>>, vector<1x4xf32>
    %4 = vector.broadcast %3 : vector<1x4xf32> to vector<128x4xf32>
    %5 = arith.addf %2, %4 : vector<128x4xf32>
    %cst_5 = arith.constant 0.000000e+00 : f32
    %6 = vector.broadcast %cst_5 : f32 to vector<128x4xf32>
    %7 = arith.maximumf %5, %6 : vector<128x4xf32>
    %c0_6 = arith.constant 0 : index
    %c0_7 = arith.constant 0 : index
    %8 = vector.load %arg4[%c0_6, %c0_7] : memref<128x4xf32, #tpu.memory_space<vmem>>, vector<128x4xf32>
    tpu.vector_store %arg4[%c0_6, %c0_7], %7 {strides = array<i32>} : memref<128x4xf32, #tpu.memory_space<vmem>>, vector<128x4xf32>,
    return
  }
  func.func @transform_0(%arg0: i32) -> (i32, i32) {
    %c0_i32 = arith.constant 0 : i32
    %c0_i32_0 = arith.constant 0 : i32
    return %arg0, %c0_i32 : i32, i32
  }
  func.func @transform_1(%arg0: i32) -> (i32, i32) {
    %c0_i32 = arith.constant 0 : i32
    %c0_i32_0 = arith.constant 0 : i32
    %c0_i32_1 = arith.constant 0 : i32
    return %c0_i32, %c0_i32_0 : i32, i32
  }
  func.func @transform_2(%arg0: i32) -> (i32, i32) {
    %c0_i32 = arith.constant 0 : i32
    %c0_i32_0 = arith.constant 0 : i32
    %c0_i32_1 = arith.constant 0 : i32
    return %c0_i32, %c0_i32_0 : i32, i32
  }
  func.func @transform_3(%arg0: i32) -> (i32, i32) {
    %c0_i32 = arith.constant 0 : i32
    %c0_i32_0 = arith.constant 0 : i32
    return %arg0, %c0_i32 : i32, i32
  }
}

module attributes {stable_mosaic.version = 11 : i64} {
  func.func @_sft_kernel(%arg0: i32, %arg1: memref<128x8xbf16, #tpu.memory_space<vmem>>, %arg2: memref<128x16xf32, #tpu.memory_space<vmem>>, %arg3: memref<8x8xbf16, #tpu.memory_space<vmem>>, %arg4: memref<1x8xf32, #tpu.memory_space<vmem>>, %arg5: memref<8x16xbf16, #tpu.memory_space<vmem>>, %arg6: memref<1x16xf32, #tpu.memory_space<vmem>>, %arg7: memref<8x8xbf16, #tpu.memory_space<vmem>>, %arg8: memref<1x8xf32, #tpu.memory_space<vmem>>, %arg9: memref<8x16xbf16, #tpu.memory_space<vmem>>, %arg10: memref<1x16xf32, #tpu.memory_space<vmem>>, %arg11: memref<128x16xf32, #tpu.memory_space<vmem>>) attributes {dimension_semantics = [#tpu.dimension_semantics<parallel>], iteration_bounds = array<i64: 1>, scalar_prefetch = 0 : i64, scratch_operands = 0 : i64, tpu.core_type = #tpu.core_type<tc>, window_params = [{transform_indices = @transform_0, window_bounds = array<i64: 128, 8>}, {transform_indices = @transform_1, window_bounds = array<i64: 128, 16>}, {pipeline_mode = #tpu.pipeline_mode<synchronous>, transform_indices = @transform_2, window_bounds = array<i64: 8, 8>}, {pipeline_mode = #tpu.pipeline_mode<synchronous>, transform_indices = @transform_3, window_bounds = array<i64: 1, 8>}, {pipeline_mode = #tpu.pipeline_mode<synchronous>, transform_indices = @transform_4, window_bounds = array<i64: 8, 16>}, {pipeline_mode = #tpu.pipeline_mode<synchronous>, transform_indices = @transform_5, window_bounds = array<i64: 1, 16>}, {pipeline_mode = #tpu.pipeline_mode<synchronous>, transform_indices = @transform_6, window_bounds = array<i64: 8, 8>}, {pipeline_mode = #tpu.pipeline_mode<synchronous>, transform_indices = @transform_7, window_bounds = array<i64: 1, 8>}, {pipeline_mode = #tpu.pipeline_mode<synchronous>, transform_indices = @transform_8, window_bounds = array<i64: 8, 16>}, {pipeline_mode = #tpu.pipeline_mode<synchronous>, transform_indices = @transform_9, window_bounds = array<i64: 1, 16>}, {transform_indices = @transform_10, window_bounds = array<i64: 128, 16>}]} {
    %c0 = arith.constant 0 : index
    %c0_0 = arith.constant 0 : index
    %0 = vector.load %arg1[%c0, %c0_0] : memref<128x8xbf16, #tpu.memory_space<vmem>>, vector<128x8xbf16>
    %c0_1 = arith.constant 0 : index
    %c0_2 = arith.constant 0 : index
    %1 = vector.load %arg3[%c0_1, %c0_2] : memref<8x8xbf16, #tpu.memory_space<vmem>>, vector<8x8xbf16>
    %cst = arith.constant dense<0.000000e+00> : vector<128x8xf32>
    %2 = tpu.matmul %0, %1, %cst {dimension_numbers = #tpu.dot_dimension_numbers<[1], [0], [0], [1], [0, 0, 1, 1], [], []>} : vector<128x8xbf16>, vector<8x8xbf16>, vector<128x8xf32> -> vector<128x8xf32>
    %c0_3 = arith.constant 0 : index
    %c0_4 = arith.constant 0 : index
    %3 = vector.load %arg4[%c0_3, %c0_4] : memref<1x8xf32, #tpu.memory_space<vmem>>, vector<1x8xf32>
    %4 = vector.broadcast %3 : vector<1x8xf32> to vector<128x8xf32>
    %5 = arith.addf %2, %4 : vector<128x8xf32>
    %cst_5 = arith.constant 0.000000e+00 : f32
    %6 = vector.broadcast %cst_5 : f32 to vector<128x8xf32>
    %7 = arith.cmpf oge, %5, %6 : vector<128x8xf32>
    %cst_6 = arith.constant 1.000000e-01 : f32
    %8 = vector.broadcast %cst_6 : f32 to vector<128x8xf32>
    %9 = arith.mulf %8, %5 : vector<128x8xf32>
    %10 = arith.select %7, %5, %9 : vector<128x8xi1>, vector<128x8xf32>
    %11 = arith.truncf %10 : vector<128x8xf32> to vector<128x8xbf16>
    %c0_7 = arith.constant 0 : index
    %c0_8 = arith.constant 0 : index
    %12 = vector.load %arg5[%c0_7, %c0_8] : memref<8x16xbf16, #tpu.memory_space<vmem>>, vector<8x16xbf16>
    %cst_9 = arith.constant dense<0.000000e+00> : vector<128x16xf32>
    %13 = tpu.matmul %11, %12, %cst_9 {dimension_numbers = #tpu.dot_dimension_numbers<[1], [0], [0], [1], [0, 0, 1, 1], [], []>} : vector<128x8xbf16>, vector<8x16xbf16>, vector<128x16xf32> -> vector<128x16xf32>
    %c0_10 = arith.constant 0 : index
    %c0_11 = arith.constant 0 : index
    %14 = vector.load %arg6[%c0_10, %c0_11] : memref<1x16xf32, #tpu.memory_space<vmem>>, vector<1x16xf32>
    %15 = vector.broadcast %14 : vector<1x16xf32> to vector<128x16xf32>
    %16 = arith.addf %13, %15 : vector<128x16xf32>
    %c0_12 = arith.constant 0 : index
    %c0_13 = arith.constant 0 : index
    %17 = vector.load %arg7[%c0_12, %c0_13] : memref<8x8xbf16, #tpu.memory_space<vmem>>, vector<8x8xbf16>
    %cst_14 = arith.constant dense<0.000000e+00> : vector<128x8xf32>
    %18 = tpu.matmul %0, %17, %cst_14 {dimension_numbers = #tpu.dot_dimension_numbers<[1], [0], [0], [1], [0, 0, 1, 1], [], []>} : vector<128x8xbf16>, vector<8x8xbf16>, vector<128x8xf32> -> vector<128x8xf32>
    %c0_15 = arith.constant 0 : index
    %c0_16 = arith.constant 0 : index
    %19 = vector.load %arg8[%c0_15, %c0_16] : memref<1x8xf32, #tpu.memory_space<vmem>>, vector<1x8xf32>
    %20 = vector.broadcast %19 : vector<1x8xf32> to vector<128x8xf32>
    %21 = arith.addf %18, %20 : vector<128x8xf32>
    %cst_17 = arith.constant 0.000000e+00 : f32
    %22 = vector.broadcast %cst_17 : f32 to vector<128x8xf32>
    %23 = arith.cmpf oge, %21, %22 : vector<128x8xf32>
    %cst_18 = arith.constant 1.000000e-01 : f32
    %24 = vector.broadcast %cst_18 : f32 to vector<128x8xf32>
    %25 = arith.mulf %24, %21 : vector<128x8xf32>
    %26 = arith.select %23, %21, %25 : vector<128x8xi1>, vector<128x8xf32>
    %27 = arith.truncf %26 : vector<128x8xf32> to vector<128x8xbf16>
    %c0_19 = arith.constant 0 : index
    %c0_20 = arith.constant 0 : index
    %28 = vector.load %arg9[%c0_19, %c0_20] : memref<8x16xbf16, #tpu.memory_space<vmem>>, vector<8x16xbf16>
    %cst_21 = arith.constant dense<0.000000e+00> : vector<128x16xf32>
    %29 = tpu.matmul %27, %28, %cst_21 {dimension_numbers = #tpu.dot_dimension_numbers<[1], [0], [0], [1], [0, 0, 1, 1], [], []>} : vector<128x8xbf16>, vector<8x16xbf16>, vector<128x16xf32> -> vector<128x16xf32>
    %c0_22 = arith.constant 0 : index
    %c0_23 = arith.constant 0 : index
    %30 = vector.load %arg10[%c0_22, %c0_23] : memref<1x16xf32, #tpu.memory_space<vmem>>, vector<1x16xf32>
    %31 = vector.broadcast %30 : vector<1x16xf32> to vector<128x16xf32>
    %32 = arith.addf %29, %31 : vector<128x16xf32>
    %c0_24 = arith.constant 0 : index
    %c0_25 = arith.constant 0 : index
    %33 = vector.load %arg2[%c0_24, %c0_25] : memref<128x16xf32, #tpu.memory_space<vmem>>, vector<128x16xf32>
    %cst_26 = arith.constant 1.000000e+00 : f32
    %34 = vector.broadcast %cst_26 : f32 to vector<128x16xf32>
    %35 = arith.addf %16, %34 : vector<128x16xf32>
    %36 = arith.mulf %33, %35 : vector<128x16xf32>
    %37 = arith.addf %36, %32 : vector<128x16xf32>
    %c0_27 = arith.constant 0 : index
    %c0_28 = arith.constant 0 : index
    %38 = vector.load %arg11[%c0_27, %c0_28] : memref<128x16xf32, #tpu.memory_space<vmem>>, vector<128x16xf32>
    tpu.vector_store %arg11[%c0_27, %c0_28], %37 {strides = array<i32>} : memref<128x16xf32, #tpu.memory_space<vmem>>, vector<128x16xf32>,
    return
  }
  func.func @transform_0(%arg0: i32) -> (i32, i32) {
    %c0_i32 = arith.constant 0 : i32
    %c0_i32_0 = arith.constant 0 : i32
    return %arg0, %c0_i32 : i32, i32
  }
  func.func @transform_1(%arg0: i32) -> (i32, i32) {
    %c0_i32 = arith.constant 0 : i32
    %c0_i32_0 = arith.constant 0 : i32
    return %arg0, %c0_i32 : i32, i32
  }
  func.func @transform_2(%arg0: i32) -> (i32, i32) {
    %c0_i32 = arith.constant 0 : i32
    %c0_i32_0 = arith.constant 0 : i32
    %c0_i32_1 = arith.constant 0 : i32
    return %c0_i32, %c0_i32_0 : i32, i32
  }
  func.func @transform_3(%arg0: i32) -> (i32, i32) {
    %c0_i32 = arith.constant 0 : i32
    %c0_i32_0 = arith.constant 0 : i32
    %c0_i32_1 = arith.constant 0 : i32
    return %c0_i32, %c0_i32_0 : i32, i32
  }
  func.func @transform_4(%arg0: i32) -> (i32, i32) {
    %c0_i32 = arith.constant 0 : i32
    %c0_i32_0 = arith.constant 0 : i32
    %c0_i32_1 = arith.constant 0 : i32
    return %c0_i32, %c0_i32_0 : i32, i32
  }
  func.func @transform_5(%arg0: i32) -> (i32, i32) {
    %c0_i32 = arith.constant 0 : i32
    %c0_i32_0 = arith.constant 0 : i32
    %c0_i32_1 = arith.constant 0 : i32
    return %c0_i32, %c0_i32_0 : i32, i32
  }
  func.func @transform_6(%arg0: i32) -> (i32, i32) {
    %c0_i32 = arith.constant 0 : i32
    %c0_i32_0 = arith.constant 0 : i32
    %c0_i32_1 = arith.constant 0 : i32
    return %c0_i32, %c0_i32_0 : i32, i32
  }
  func.func @transform_7(%arg0: i32) -> (i32, i32) {
    %c0_i32 = arith.constant 0 : i32
    %c0_i32_0 = arith.constant 0 : i32
    %c0_i32_1 = arith.constant 0 : i32
    return %c0_i32, %c0_i32_0 : i32, i32
  }
  func.func @transform_8(%arg0: i32) -> (i32, i32) {
    %c0_i32 = arith.constant 0 : i32
    %c0_i32_0 = arith.constant 0 : i32
    %c0_i32_1 = arith.constant 0 : i32
    return %c0_i32, %c0_i32_0 : i32, i32
  }
  func.func @transform_9(%arg0: i32) -> (i32, i32) {
    %c0_i32 = arith.constant 0 : i32
    %c0_i32_0 = arith.constant 0 : i32
    %c0_i32_1 = arith.constant 0 : i32
    return %c0_i32, %c0_i32_0 : i32, i32
  }
  func.func @transform_10(%arg0: i32) -> (i32, i32) {
    %c0_i32 = arith.constant 0 : i32
    %c0_i32_0 = arith.constant 0 : i32
    return %arg0, %c0_i32 : i32, i32
  }
}

module attributes {stable_mosaic.version = 11 : i64} {
  func.func @_mm_kernel_none(%arg0: i32, %arg1: memref<128x16xbf16, #tpu.memory_space<vmem>>, %arg2: memref<16x8xbf16, #tpu.memory_space<vmem>>, %arg3: memref<1x8xf32, #tpu.memory_space<vmem>>, %arg4: memref<128x8xf32, #tpu.memory_space<vmem>>) attributes {dimension_semantics = [#tpu.dimension_semantics<parallel>], iteration_bounds = array<i64: 1>, scalar_prefetch = 0 : i64, scratch_operands = 0 : i64, tpu.core_type = #tpu.core_type<tc>, window_params = [{transform_indices = @transform_0, window_bounds = array<i64: 128, 16>}, {pipeline_mode = #tpu.pipeline_mode<synchronous>, transform_indices = @transform_1, window_bounds = array<i64: 16, 8>}, {pipeline_mode = #tpu.pipeline_mode<synchronous>, transform_indices = @transform_2, window_bounds = array<i64: 1, 8>}, {transform_indices = @transform_3, window_bounds = array<i64: 128, 8>}]} {
    %c0 = arith.constant 0 : index
    %c0_0 = arith.constant 0 : index
    %0 = vector.load %arg1[%c0, %c0_0] : memref<128x16xbf16, #tpu.memory_space<vmem>>, vector<128x16xbf16>
    %c0_1 = arith.constant 0 : index
    %c0_2 = arith.constant 0 : index
    %1 = vector.load %arg2[%c0_1, %c0_2] : memref<16x8xbf16, #tpu.memory_space<vmem>>, vector<16x8xbf16>
    %cst = arith.constant dense<0.000000e+00> : vector<128x8xf32>
    %2 = tpu.matmul %0, %1, %cst {dimension_numbers = #tpu.dot_dimension_numbers<[1], [0], [0], [1], [0, 0, 1, 1], [], []>} : vector<128x16xbf16>, vector<16x8xbf16>, vector<128x8xf32> -> vector<128x8xf32>
    %c0_3 = arith.constant 0 : index
    %c0_4 = arith.constant 0 : index
    %3 = vector.load %arg3[%c0_3, %c0_4] : memref<1x8xf32, #tpu.memory_space<vmem>>, vector<1x8xf32>
    %4 = vector.broadcast %3 : vector<1x8xf32> to vector<128x8xf32>
    %5 = arith.addf %2, %4 : vector<128x8xf32>
    %c0_5 = arith.constant 0 : index
    %c0_6 = arith.constant 0 : index
    %6 = vector.load %arg4[%c0_5, %c0_6] : memref<128x8xf32, #tpu.memory_space<vmem>>, vector<128x8xf32>
    tpu.vector_store %arg4[%c0_5, %c0_6], %5 {strides = array<i32>} : memref<128x8xf32, #tpu.memory_space<vmem>>, vector<128x8xf32>,
    return
  }
  func.func @transform_0(%arg0: i32) -> (i32, i32) {
    %c0_i32 = arith.constant 0 : i32
    %c0_i32_0 = arith.constant 0 : i32
    return %arg0, %c0_i32 : i32, i32
  }
  func.func @transform_1(%arg0: i32) -> (i32, i32) {
    %c0_i32 = arith.constant 0 : i32
    %c0_i32_0 = arith.constant 0 : i32
    %c0_i32_1 = arith.constant 0 : i32
    return %c0_i32, %c0_i32_0 : i32, i32
  }
  func.func @transform_2(%arg0: i32) -> (i32, i32) {
    %c0_i32 = arith.constant 0 : i32
    %c0_i32_0 = arith.constant 0 : i32
    %c0_i32_1 = arith.constant 0 : i32
    return %c0_i32, %c0_i32_0 : i32, i32
  }
  func.func @transform_3(%arg0: i32) -> (i32, i32) {
    %c0_i32 = arith.constant 0 : i32
    %c0_i32_0 = arith.constant 0 : i32
    return %arg0, %c0_i32 : i32, i32
  }
}

module attributes {stable_mosaic.version = 11 : i64} {
  func.func @_mm_kernel_relu(%arg0: i32, %arg1: memref<32x72xbf16, #tpu.memory_space<vmem>>, %arg2: memref<72x16xbf16, #tpu.memory_space<vmem>>, %arg3: memref<1x16xf32, #tpu.memory_space<vmem>>, %arg4: memref<32x16xf32, #tpu.memory_space<vmem>>) attributes {dimension_semantics = [#tpu.dimension_semantics<parallel>], iteration_bounds = array<i64: 1>, scalar_prefetch = 0 : i64, scratch_operands = 0 : i64, tpu.core_type = #tpu.core_type<tc>, window_params = [{transform_indices = @transform_0, window_bounds = array<i64: 32, 72>}, {pipeline_mode = #tpu.pipeline_mode<synchronous>, transform_indices = @transform_1, window_bounds = array<i64: 72, 16>}, {pipeline_mode = #tpu.pipeline_mode<synchronous>, transform_indices = @transform_2, window_bounds = array<i64: 1, 16>}, {transform_indices = @transform_3, window_bounds = array<i64: 32, 16>}]} {
    %c0 = arith.constant 0 : index
    %c0_0 = arith.constant 0 : index
    %0 = vector.load %arg1[%c0, %c0_0] : memref<32x72xbf16, #tpu.memory_space<vmem>>, vector<32x72xbf16>
    %c0_1 = arith.constant 0 : index
    %c0_2 = arith.constant 0 : index
    %1 = vector.load %arg2[%c0_1, %c0_2] : memref<72x16xbf16, #tpu.memory_space<vmem>>, vector<72x16xbf16>
    %cst = arith.constant dense<0.000000e+00> : vector<32x16xf32>
    %2 = tpu.matmul %0, %1, %cst {dimension_numbers = #tpu.dot_dimension_numbers<[1], [0], [0], [1], [0, 0, 1, 1], [], []>} : vector<32x72xbf16>, vector<72x16xbf16>, vector<32x16xf32> -> vector<32x16xf32>
    %c0_3 = arith.constant 0 : index
    %c0_4 = arith.constant 0 : index
    %3 = vector.load %arg3[%c0_3, %c0_4] : memref<1x16xf32, #tpu.memory_space<vmem>>, vector<1x16xf32>
    %4 = vector.broadcast %3 : vector<1x16xf32> to vector<32x16xf32>
    %5 = arith.addf %2, %4 : vector<32x16xf32>
    %cst_5 = arith.constant 0.000000e+00 : f32
    %6 = vector.broadcast %cst_5 : f32 to vector<32x16xf32>
    %7 = arith.maximumf %5, %6 : vector<32x16xf32>
    %c0_6 = arith.constant 0 : index
    %c0_7 = arith.constant 0 : index
    %8 = vector.load %arg4[%c0_6, %c0_7] : memref<32x16xf32, #tpu.memory_space<vmem>>, vector<32x16xf32>
    tpu.vector_store %arg4[%c0_6, %c0_7], %7 {strides = array<i32>} : memref<32x16xf32, #tpu.memory_space<vmem>>, vector<32x16xf32>,
    return
  }
  func.func @transform_0(%arg0: i32) -> (i32, i32) {
    %c0_i32 = arith.constant 0 : i32
    %c0_i32_0 = arith.constant 0 : i32
    return %arg0, %c0_i32 : i32, i32
  }
  func.func @transform_1(%arg0: i32) -> (i32, i32) {
    %c0_i32 = arith.constant 0 : i32
    %c0_i32_0 = arith.constant 0 : i32
    %c0_i32_1 = arith.constant 0 : i32
    return %c0_i32, %c0_i32_0 : i32, i32
  }
  func.func @transform_2(%arg0: i32) -> (i32, i32) {
    %c0_i32 = arith.constant 0 : i32
    %c0_i32_0 = arith.constant 0 : i32
    %c0_i32_1 = arith.constant 0 : i32
    return %c0_i32, %c0_i32_0 : i32, i32
  }
  func.func @transform_3(%arg0: i32) -> (i32, i32) {
    %c0_i32 = arith.constant 0 : i32
    %c0_i32_0 = arith.constant 0 : i32
    return %arg0, %c0_i32 : i32, i32
  }
}

module attributes {stable_mosaic.version = 11 : i64} {
  func.func @_mm_kernel_relu(%arg0: i32, %arg1: memref<32x144xbf16, #tpu.memory_space<vmem>>, %arg2: memref<144x4xbf16, #tpu.memory_space<vmem>>, %arg3: memref<1x4xf32, #tpu.memory_space<vmem>>, %arg4: memref<32x4xf32, #tpu.memory_space<vmem>>) attributes {dimension_semantics = [#tpu.dimension_semantics<parallel>], iteration_bounds = array<i64: 1>, scalar_prefetch = 0 : i64, scratch_operands = 0 : i64, tpu.core_type = #tpu.core_type<tc>, window_params = [{transform_indices = @transform_0, window_bounds = array<i64: 32, 144>}, {pipeline_mode = #tpu.pipeline_mode<synchronous>, transform_indices = @transform_1, window_bounds = array<i64: 144, 4>}, {pipeline_mode = #tpu.pipeline_mode<synchronous>, transform_indices = @transform_2, window_bounds = array<i64: 1, 4>}, {transform_indices = @transform_3, window_bounds = array<i64: 32, 4>}]} {
    %c0 = arith.constant 0 : index
    %c0_0 = arith.constant 0 : index
    %0 = vector.load %arg1[%c0, %c0_0] : memref<32x144xbf16, #tpu.memory_space<vmem>>, vector<32x144xbf16>
    %c0_1 = arith.constant 0 : index
    %c0_2 = arith.constant 0 : index
    %1 = vector.load %arg2[%c0_1, %c0_2] : memref<144x4xbf16, #tpu.memory_space<vmem>>, vector<144x4xbf16>
    %cst = arith.constant dense<0.000000e+00> : vector<32x4xf32>
    %2 = tpu.matmul %0, %1, %cst {dimension_numbers = #tpu.dot_dimension_numbers<[1], [0], [0], [1], [0, 0, 1, 1], [], []>} : vector<32x144xbf16>, vector<144x4xbf16>, vector<32x4xf32> -> vector<32x4xf32>
    %c0_3 = arith.constant 0 : index
    %c0_4 = arith.constant 0 : index
    %3 = vector.load %arg3[%c0_3, %c0_4] : memref<1x4xf32, #tpu.memory_space<vmem>>, vector<1x4xf32>
    %4 = vector.broadcast %3 : vector<1x4xf32> to vector<32x4xf32>
    %5 = arith.addf %2, %4 : vector<32x4xf32>
    %cst_5 = arith.constant 0.000000e+00 : f32
    %6 = vector.broadcast %cst_5 : f32 to vector<32x4xf32>
    %7 = arith.maximumf %5, %6 : vector<32x4xf32>
    %c0_6 = arith.constant 0 : index
    %c0_7 = arith.constant 0 : index
    %8 = vector.load %arg4[%c0_6, %c0_7] : memref<32x4xf32, #tpu.memory_space<vmem>>, vector<32x4xf32>
    tpu.vector_store %arg4[%c0_6, %c0_7], %7 {strides = array<i32>} : memref<32x4xf32, #tpu.memory_space<vmem>>, vector<32x4xf32>,
    return
  }
  func.func @transform_0(%arg0: i32) -> (i32, i32) {
    %c0_i32 = arith.constant 0 : i32
    %c0_i32_0 = arith.constant 0 : i32
    return %arg0, %c0_i32 : i32, i32
  }
  func.func @transform_1(%arg0: i32) -> (i32, i32) {
    %c0_i32 = arith.constant 0 : i32
    %c0_i32_0 = arith.constant 0 : i32
    %c0_i32_1 = arith.constant 0 : i32
    return %c0_i32, %c0_i32_0 : i32, i32
  }
  func.func @transform_2(%arg0: i32) -> (i32, i32) {
    %c0_i32 = arith.constant 0 : i32
    %c0_i32_0 = arith.constant 0 : i32
    %c0_i32_1 = arith.constant 0 : i32
    return %c0_i32, %c0_i32_0 : i32, i32
  }
  func.func @transform_3(%arg0: i32) -> (i32, i32) {
    %c0_i32 = arith.constant 0 : i32
    %c0_i32_0 = arith.constant 0 : i32
    return %arg0, %c0_i32 : i32, i32
  }
}

module attributes {stable_mosaic.version = 11 : i64} {
  func.func @_mm_kernel_relu(%arg0: i32, %arg1: memref<32x180xbf16, #tpu.memory_space<vmem>>, %arg2: memref<180x4xbf16, #tpu.memory_space<vmem>>, %arg3: memref<1x4xf32, #tpu.memory_space<vmem>>, %arg4: memref<32x4xf32, #tpu.memory_space<vmem>>) attributes {dimension_semantics = [#tpu.dimension_semantics<parallel>], iteration_bounds = array<i64: 1>, scalar_prefetch = 0 : i64, scratch_operands = 0 : i64, tpu.core_type = #tpu.core_type<tc>, window_params = [{transform_indices = @transform_0, window_bounds = array<i64: 32, 180>}, {pipeline_mode = #tpu.pipeline_mode<synchronous>, transform_indices = @transform_1, window_bounds = array<i64: 180, 4>}, {pipeline_mode = #tpu.pipeline_mode<synchronous>, transform_indices = @transform_2, window_bounds = array<i64: 1, 4>}, {transform_indices = @transform_3, window_bounds = array<i64: 32, 4>}]} {
    %c0 = arith.constant 0 : index
    %c0_0 = arith.constant 0 : index
    %0 = vector.load %arg1[%c0, %c0_0] : memref<32x180xbf16, #tpu.memory_space<vmem>>, vector<32x180xbf16>
    %c0_1 = arith.constant 0 : index
    %c0_2 = arith.constant 0 : index
    %1 = vector.load %arg2[%c0_1, %c0_2] : memref<180x4xbf16, #tpu.memory_space<vmem>>, vector<180x4xbf16>
    %cst = arith.constant dense<0.000000e+00> : vector<32x4xf32>
    %2 = tpu.matmul %0, %1, %cst {dimension_numbers = #tpu.dot_dimension_numbers<[1], [0], [0], [1], [0, 0, 1, 1], [], []>} : vector<32x180xbf16>, vector<180x4xbf16>, vector<32x4xf32> -> vector<32x4xf32>
    %c0_3 = arith.constant 0 : index
    %c0_4 = arith.constant 0 : index
    %3 = vector.load %arg3[%c0_3, %c0_4] : memref<1x4xf32, #tpu.memory_space<vmem>>, vector<1x4xf32>
    %4 = vector.broadcast %3 : vector<1x4xf32> to vector<32x4xf32>
    %5 = arith.addf %2, %4 : vector<32x4xf32>
    %cst_5 = arith.constant 0.000000e+00 : f32
    %6 = vector.broadcast %cst_5 : f32 to vector<32x4xf32>
    %7 = arith.maximumf %5, %6 : vector<32x4xf32>
    %c0_6 = arith.constant 0 : index
    %c0_7 = arith.constant 0 : index
    %8 = vector.load %arg4[%c0_6, %c0_7] : memref<32x4xf32, #tpu.memory_space<vmem>>, vector<32x4xf32>
    tpu.vector_store %arg4[%c0_6, %c0_7], %7 {strides = array<i32>} : memref<32x4xf32, #tpu.memory_space<vmem>>, vector<32x4xf32>,
    return
  }
  func.func @transform_0(%arg0: i32) -> (i32, i32) {
    %c0_i32 = arith.constant 0 : i32
    %c0_i32_0 = arith.constant 0 : i32
    return %arg0, %c0_i32 : i32, i32
  }
  func.func @transform_1(%arg0: i32) -> (i32, i32) {
    %c0_i32 = arith.constant 0 : i32
    %c0_i32_0 = arith.constant 0 : i32
    %c0_i32_1 = arith.constant 0 : i32
    return %c0_i32, %c0_i32_0 : i32, i32
  }
  func.func @transform_2(%arg0: i32) -> (i32, i32) {
    %c0_i32 = arith.constant 0 : i32
    %c0_i32_0 = arith.constant 0 : i32
    %c0_i32_1 = arith.constant 0 : i32
    return %c0_i32, %c0_i32_0 : i32, i32
  }
  func.func @transform_3(%arg0: i32) -> (i32, i32) {
    %c0_i32 = arith.constant 0 : i32
    %c0_i32_0 = arith.constant 0 : i32
    return %arg0, %c0_i32 : i32, i32
  }
}

module attributes {stable_mosaic.version = 11 : i64} {
  func.func @_mm_kernel_none(%arg0: i32, %arg1: memref<32x24xbf16, #tpu.memory_space<vmem>>, %arg2: memref<24x16xbf16, #tpu.memory_space<vmem>>, %arg3: memref<1x16xf32, #tpu.memory_space<vmem>>, %arg4: memref<32x16xf32, #tpu.memory_space<vmem>>) attributes {dimension_semantics = [#tpu.dimension_semantics<parallel>], iteration_bounds = array<i64: 1>, scalar_prefetch = 0 : i64, scratch_operands = 0 : i64, tpu.core_type = #tpu.core_type<tc>, window_params = [{transform_indices = @transform_0, window_bounds = array<i64: 32, 24>}, {pipeline_mode = #tpu.pipeline_mode<synchronous>, transform_indices = @transform_1, window_bounds = array<i64: 24, 16>}, {pipeline_mode = #tpu.pipeline_mode<synchronous>, transform_indices = @transform_2, window_bounds = array<i64: 1, 16>}, {transform_indices = @transform_3, window_bounds = array<i64: 32, 16>}]} {
    %c0 = arith.constant 0 : index
    %c0_0 = arith.constant 0 : index
    %0 = vector.load %arg1[%c0, %c0_0] : memref<32x24xbf16, #tpu.memory_space<vmem>>, vector<32x24xbf16>
    %c0_1 = arith.constant 0 : index
    %c0_2 = arith.constant 0 : index
    %1 = vector.load %arg2[%c0_1, %c0_2] : memref<24x16xbf16, #tpu.memory_space<vmem>>, vector<24x16xbf16>
    %cst = arith.constant dense<0.000000e+00> : vector<32x16xf32>
    %2 = tpu.matmul %0, %1, %cst {dimension_numbers = #tpu.dot_dimension_numbers<[1], [0], [0], [1], [0, 0, 1, 1], [], []>} : vector<32x24xbf16>, vector<24x16xbf16>, vector<32x16xf32> -> vector<32x16xf32>
    %c0_3 = arith.constant 0 : index
    %c0_4 = arith.constant 0 : index
    %3 = vector.load %arg3[%c0_3, %c0_4] : memref<1x16xf32, #tpu.memory_space<vmem>>, vector<1x16xf32>
    %4 = vector.broadcast %3 : vector<1x16xf32> to vector<32x16xf32>
    %5 = arith.addf %2, %4 : vector<32x16xf32>
    %c0_5 = arith.constant 0 : index
    %c0_6 = arith.constant 0 : index
    %6 = vector.load %arg4[%c0_5, %c0_6] : memref<32x16xf32, #tpu.memory_space<vmem>>, vector<32x16xf32>
    tpu.vector_store %arg4[%c0_5, %c0_6], %5 {strides = array<i32>} : memref<32x16xf32, #tpu.memory_space<vmem>>, vector<32x16xf32>,
    return
  }
  func.func @transform_0(%arg0: i32) -> (i32, i32) {
    %c0_i32 = arith.constant 0 : i32
    %c0_i32_0 = arith.constant 0 : i32
    return %arg0, %c0_i32 : i32, i32
  }
  func.func @transform_1(%arg0: i32) -> (i32, i32) {
    %c0_i32 = arith.constant 0 : i32
    %c0_i32_0 = arith.constant 0 : i32
    %c0_i32_1 = arith.constant 0 : i32
    return %c0_i32, %c0_i32_0 : i32, i32
  }
  func.func @transform_2(%arg0: i32) -> (i32, i32) {
    %c0_i32 = arith.constant 0 : i32
    %c0_i32_0 = arith.constant 0 : i32
    %c0_i32_1 = arith.constant 0 : i32
    return %c0_i32, %c0_i32_0 : i32, i32
  }
  func.func @transform_3(%arg0: i32) -> (i32, i32) {
    %c0_i32 = arith.constant 0 : i32
    %c0_i32_0 = arith.constant 0 : i32
    return %arg0, %c0_i32 : i32, i32
  }
}

module attributes {stable_mosaic.version = 11 : i64} {
  func.func @_mm_kernel_relu(%arg0: i32, %arg1: memref<8x144xbf16, #tpu.memory_space<vmem>>, %arg2: memref<144x32xbf16, #tpu.memory_space<vmem>>, %arg3: memref<1x32xf32, #tpu.memory_space<vmem>>, %arg4: memref<8x32xf32, #tpu.memory_space<vmem>>) attributes {dimension_semantics = [#tpu.dimension_semantics<parallel>], iteration_bounds = array<i64: 1>, scalar_prefetch = 0 : i64, scratch_operands = 0 : i64, tpu.core_type = #tpu.core_type<tc>, window_params = [{transform_indices = @transform_0, window_bounds = array<i64: 8, 144>}, {pipeline_mode = #tpu.pipeline_mode<synchronous>, transform_indices = @transform_1, window_bounds = array<i64: 144, 32>}, {pipeline_mode = #tpu.pipeline_mode<synchronous>, transform_indices = @transform_2, window_bounds = array<i64: 1, 32>}, {transform_indices = @transform_3, window_bounds = array<i64: 8, 32>}]} {
    %c0 = arith.constant 0 : index
    %c0_0 = arith.constant 0 : index
    %0 = vector.load %arg1[%c0, %c0_0] : memref<8x144xbf16, #tpu.memory_space<vmem>>, vector<8x144xbf16>
    %c0_1 = arith.constant 0 : index
    %c0_2 = arith.constant 0 : index
    %1 = vector.load %arg2[%c0_1, %c0_2] : memref<144x32xbf16, #tpu.memory_space<vmem>>, vector<144x32xbf16>
    %cst = arith.constant dense<0.000000e+00> : vector<8x32xf32>
    %2 = tpu.matmul %0, %1, %cst {dimension_numbers = #tpu.dot_dimension_numbers<[1], [0], [0], [1], [0, 0, 1, 1], [], []>} : vector<8x144xbf16>, vector<144x32xbf16>, vector<8x32xf32> -> vector<8x32xf32>
    %c0_3 = arith.constant 0 : index
    %c0_4 = arith.constant 0 : index
    %3 = vector.load %arg3[%c0_3, %c0_4] : memref<1x32xf32, #tpu.memory_space<vmem>>, vector<1x32xf32>
    %4 = vector.broadcast %3 : vector<1x32xf32> to vector<8x32xf32>
    %5 = arith.addf %2, %4 : vector<8x32xf32>
    %cst_5 = arith.constant 0.000000e+00 : f32
    %6 = vector.broadcast %cst_5 : f32 to vector<8x32xf32>
    %7 = arith.maximumf %5, %6 : vector<8x32xf32>
    %c0_6 = arith.constant 0 : index
    %c0_7 = arith.constant 0 : index
    %8 = vector.load %arg4[%c0_6, %c0_7] : memref<8x32xf32, #tpu.memory_space<vmem>>, vector<8x32xf32>
    tpu.vector_store %arg4[%c0_6, %c0_7], %7 {strides = array<i32>} : memref<8x32xf32, #tpu.memory_space<vmem>>, vector<8x32xf32>,
    return
  }
  func.func @transform_0(%arg0: i32) -> (i32, i32) {
    %c0_i32 = arith.constant 0 : i32
    %c0_i32_0 = arith.constant 0 : i32
    return %arg0, %c0_i32 : i32, i32
  }
  func.func @transform_1(%arg0: i32) -> (i32, i32) {
    %c0_i32 = arith.constant 0 : i32
    %c0_i32_0 = arith.constant 0 : i32
    %c0_i32_1 = arith.constant 0 : i32
    return %c0_i32, %c0_i32_0 : i32, i32
  }
  func.func @transform_2(%arg0: i32) -> (i32, i32) {
    %c0_i32 = arith.constant 0 : i32
    %c0_i32_0 = arith.constant 0 : i32
    %c0_i32_1 = arith.constant 0 : i32
    return %c0_i32, %c0_i32_0 : i32, i32
  }
  func.func @transform_3(%arg0: i32) -> (i32, i32) {
    %c0_i32 = arith.constant 0 : i32
    %c0_i32_0 = arith.constant 0 : i32
    return %arg0, %c0_i32 : i32, i32
  }
}

module attributes {stable_mosaic.version = 11 : i64} {
  func.func @_mm_kernel_relu(%arg0: i32, %arg1: memref<8x288xbf16, #tpu.memory_space<vmem>>, %arg2: memref<288x4xbf16, #tpu.memory_space<vmem>>, %arg3: memref<1x4xf32, #tpu.memory_space<vmem>>, %arg4: memref<8x4xf32, #tpu.memory_space<vmem>>) attributes {dimension_semantics = [#tpu.dimension_semantics<parallel>], iteration_bounds = array<i64: 1>, scalar_prefetch = 0 : i64, scratch_operands = 0 : i64, tpu.core_type = #tpu.core_type<tc>, window_params = [{transform_indices = @transform_0, window_bounds = array<i64: 8, 288>}, {pipeline_mode = #tpu.pipeline_mode<synchronous>, transform_indices = @transform_1, window_bounds = array<i64: 288, 4>}, {pipeline_mode = #tpu.pipeline_mode<synchronous>, transform_indices = @transform_2, window_bounds = array<i64: 1, 4>}, {transform_indices = @transform_3, window_bounds = array<i64: 8, 4>}]} {
    %c0 = arith.constant 0 : index
    %c0_0 = arith.constant 0 : index
    %0 = vector.load %arg1[%c0, %c0_0] : memref<8x288xbf16, #tpu.memory_space<vmem>>, vector<8x288xbf16>
    %c0_1 = arith.constant 0 : index
    %c0_2 = arith.constant 0 : index
    %1 = vector.load %arg2[%c0_1, %c0_2] : memref<288x4xbf16, #tpu.memory_space<vmem>>, vector<288x4xbf16>
    %cst = arith.constant dense<0.000000e+00> : vector<8x4xf32>
    %2 = tpu.matmul %0, %1, %cst {dimension_numbers = #tpu.dot_dimension_numbers<[1], [0], [0], [1], [0, 0, 1, 1], [], []>} : vector<8x288xbf16>, vector<288x4xbf16>, vector<8x4xf32> -> vector<8x4xf32>
    %c0_3 = arith.constant 0 : index
    %c0_4 = arith.constant 0 : index
    %3 = vector.load %arg3[%c0_3, %c0_4] : memref<1x4xf32, #tpu.memory_space<vmem>>, vector<1x4xf32>
    %4 = vector.broadcast %3 : vector<1x4xf32> to vector<8x4xf32>
    %5 = arith.addf %2, %4 : vector<8x4xf32>
    %cst_5 = arith.constant 0.000000e+00 : f32
    %6 = vector.broadcast %cst_5 : f32 to vector<8x4xf32>
    %7 = arith.maximumf %5, %6 : vector<8x4xf32>
    %c0_6 = arith.constant 0 : index
    %c0_7 = arith.constant 0 : index
    %8 = vector.load %arg4[%c0_6, %c0_7] : memref<8x4xf32, #tpu.memory_space<vmem>>, vector<8x4xf32>
    tpu.vector_store %arg4[%c0_6, %c0_7], %7 {strides = array<i32>} : memref<8x4xf32, #tpu.memory_space<vmem>>, vector<8x4xf32>,
    return
  }
  func.func @transform_0(%arg0: i32) -> (i32, i32) {
    %c0_i32 = arith.constant 0 : i32
    %c0_i32_0 = arith.constant 0 : i32
    return %arg0, %c0_i32 : i32, i32
  }
  func.func @transform_1(%arg0: i32) -> (i32, i32) {
    %c0_i32 = arith.constant 0 : i32
    %c0_i32_0 = arith.constant 0 : i32
    %c0_i32_1 = arith.constant 0 : i32
    return %c0_i32, %c0_i32_0 : i32, i32
  }
  func.func @transform_2(%arg0: i32) -> (i32, i32) {
    %c0_i32 = arith.constant 0 : i32
    %c0_i32_0 = arith.constant 0 : i32
    %c0_i32_1 = arith.constant 0 : i32
    return %c0_i32, %c0_i32_0 : i32, i32
  }
  func.func @transform_3(%arg0: i32) -> (i32, i32) {
    %c0_i32 = arith.constant 0 : i32
    %c0_i32_0 = arith.constant 0 : i32
    return %arg0, %c0_i32 : i32, i32
  }
}

module attributes {stable_mosaic.version = 11 : i64} {
  func.func @_mm_kernel_relu(%arg0: i32, %arg1: memref<8x324xbf16, #tpu.memory_space<vmem>>, %arg2: memref<324x4xbf16, #tpu.memory_space<vmem>>, %arg3: memref<1x4xf32, #tpu.memory_space<vmem>>, %arg4: memref<8x4xf32, #tpu.memory_space<vmem>>) attributes {dimension_semantics = [#tpu.dimension_semantics<parallel>], iteration_bounds = array<i64: 1>, scalar_prefetch = 0 : i64, scratch_operands = 0 : i64, tpu.core_type = #tpu.core_type<tc>, window_params = [{transform_indices = @transform_0, window_bounds = array<i64: 8, 324>}, {pipeline_mode = #tpu.pipeline_mode<synchronous>, transform_indices = @transform_1, window_bounds = array<i64: 324, 4>}, {pipeline_mode = #tpu.pipeline_mode<synchronous>, transform_indices = @transform_2, window_bounds = array<i64: 1, 4>}, {transform_indices = @transform_3, window_bounds = array<i64: 8, 4>}]} {
    %c0 = arith.constant 0 : index
    %c0_0 = arith.constant 0 : index
    %0 = vector.load %arg1[%c0, %c0_0] : memref<8x324xbf16, #tpu.memory_space<vmem>>, vector<8x324xbf16>
    %c0_1 = arith.constant 0 : index
    %c0_2 = arith.constant 0 : index
    %1 = vector.load %arg2[%c0_1, %c0_2] : memref<324x4xbf16, #tpu.memory_space<vmem>>, vector<324x4xbf16>
    %cst = arith.constant dense<0.000000e+00> : vector<8x4xf32>
    %2 = tpu.matmul %0, %1, %cst {dimension_numbers = #tpu.dot_dimension_numbers<[1], [0], [0], [1], [0, 0, 1, 1], [], []>} : vector<8x324xbf16>, vector<324x4xbf16>, vector<8x4xf32> -> vector<8x4xf32>
    %c0_3 = arith.constant 0 : index
    %c0_4 = arith.constant 0 : index
    %3 = vector.load %arg3[%c0_3, %c0_4] : memref<1x4xf32, #tpu.memory_space<vmem>>, vector<1x4xf32>
    %4 = vector.broadcast %3 : vector<1x4xf32> to vector<8x4xf32>
    %5 = arith.addf %2, %4 : vector<8x4xf32>
    %cst_5 = arith.constant 0.000000e+00 : f32
    %6 = vector.broadcast %cst_5 : f32 to vector<8x4xf32>
    %7 = arith.maximumf %5, %6 : vector<8x4xf32>
    %c0_6 = arith.constant 0 : index
    %c0_7 = arith.constant 0 : index
    %8 = vector.load %arg4[%c0_6, %c0_7] : memref<8x4xf32, #tpu.memory_space<vmem>>, vector<8x4xf32>
    tpu.vector_store %arg4[%c0_6, %c0_7], %7 {strides = array<i32>} : memref<8x4xf32, #tpu.memory_space<vmem>>, vector<8x4xf32>,
    return
  }
  func.func @transform_0(%arg0: i32) -> (i32, i32) {
    %c0_i32 = arith.constant 0 : i32
    %c0_i32_0 = arith.constant 0 : i32
    return %arg0, %c0_i32 : i32, i32
  }
  func.func @transform_1(%arg0: i32) -> (i32, i32) {
    %c0_i32 = arith.constant 0 : i32
    %c0_i32_0 = arith.constant 0 : i32
    %c0_i32_1 = arith.constant 0 : i32
    return %c0_i32, %c0_i32_0 : i32, i32
  }
  func.func @transform_2(%arg0: i32) -> (i32, i32) {
    %c0_i32 = arith.constant 0 : i32
    %c0_i32_0 = arith.constant 0 : i32
    %c0_i32_1 = arith.constant 0 : i32
    return %c0_i32, %c0_i32_0 : i32, i32
  }
  func.func @transform_3(%arg0: i32) -> (i32, i32) {
    %c0_i32 = arith.constant 0 : i32
    %c0_i32_0 = arith.constant 0 : i32
    return %arg0, %c0_i32 : i32, i32
  }
}

module attributes {stable_mosaic.version = 11 : i64} {
  func.func @_mm_kernel_none(%arg0: i32, %arg1: memref<8x40xbf16, #tpu.memory_space<vmem>>, %arg2: memref<40x32xbf16, #tpu.memory_space<vmem>>, %arg3: memref<1x32xf32, #tpu.memory_space<vmem>>, %arg4: memref<8x32xf32, #tpu.memory_space<vmem>>) attributes {dimension_semantics = [#tpu.dimension_semantics<parallel>], iteration_bounds = array<i64: 1>, scalar_prefetch = 0 : i64, scratch_operands = 0 : i64, tpu.core_type = #tpu.core_type<tc>, window_params = [{transform_indices = @transform_0, window_bounds = array<i64: 8, 40>}, {pipeline_mode = #tpu.pipeline_mode<synchronous>, transform_indices = @transform_1, window_bounds = array<i64: 40, 32>}, {pipeline_mode = #tpu.pipeline_mode<synchronous>, transform_indices = @transform_2, window_bounds = array<i64: 1, 32>}, {transform_indices = @transform_3, window_bounds = array<i64: 8, 32>}]} {
    %c0 = arith.constant 0 : index
    %c0_0 = arith.constant 0 : index
    %0 = vector.load %arg1[%c0, %c0_0] : memref<8x40xbf16, #tpu.memory_space<vmem>>, vector<8x40xbf16>
    %c0_1 = arith.constant 0 : index
    %c0_2 = arith.constant 0 : index
    %1 = vector.load %arg2[%c0_1, %c0_2] : memref<40x32xbf16, #tpu.memory_space<vmem>>, vector<40x32xbf16>
    %cst = arith.constant dense<0.000000e+00> : vector<8x32xf32>
    %2 = tpu.matmul %0, %1, %cst {dimension_numbers = #tpu.dot_dimension_numbers<[1], [0], [0], [1], [0, 0, 1, 1], [], []>} : vector<8x40xbf16>, vector<40x32xbf16>, vector<8x32xf32> -> vector<8x32xf32>
    %c0_3 = arith.constant 0 : index
    %c0_4 = arith.constant 0 : index
    %3 = vector.load %arg3[%c0_3, %c0_4] : memref<1x32xf32, #tpu.memory_space<vmem>>, vector<1x32xf32>
    %4 = vector.broadcast %3 : vector<1x32xf32> to vector<8x32xf32>
    %5 = arith.addf %2, %4 : vector<8x32xf32>
    %c0_5 = arith.constant 0 : index
    %c0_6 = arith.constant 0 : index
    %6 = vector.load %arg4[%c0_5, %c0_6] : memref<8x32xf32, #tpu.memory_space<vmem>>, vector<8x32xf32>
    tpu.vector_store %arg4[%c0_5, %c0_6], %5 {strides = array<i32>} : memref<8x32xf32, #tpu.memory_space<vmem>>, vector<8x32xf32>,
    return
  }
  func.func @transform_0(%arg0: i32) -> (i32, i32) {
    %c0_i32 = arith.constant 0 : i32
    %c0_i32_0 = arith.constant 0 : i32
    return %arg0, %c0_i32 : i32, i32
  }
  func.func @transform_1(%arg0: i32) -> (i32, i32) {
    %c0_i32 = arith.constant 0 : i32
    %c0_i32_0 = arith.constant 0 : i32
    %c0_i32_1 = arith.constant 0 : i32
    return %c0_i32, %c0_i32_0 : i32, i32
  }
  func.func @transform_2(%arg0: i32) -> (i32, i32) {
    %c0_i32 = arith.constant 0 : i32
    %c0_i32_0 = arith.constant 0 : i32
    %c0_i32_1 = arith.constant 0 : i32
    return %c0_i32, %c0_i32_0 : i32, i32
  }
  func.func @transform_3(%arg0: i32) -> (i32, i32) {
    %c0_i32 = arith.constant 0 : i32
    %c0_i32_0 = arith.constant 0 : i32
    return %arg0, %c0_i32 : i32, i32
  }
}

module attributes {stable_mosaic.version = 11 : i64} {
  func.func @_mm_kernel_none(%arg0: i32, %arg1: memref<8x32xbf16, #tpu.memory_space<vmem>>, %arg2: memref<32x64xbf16, #tpu.memory_space<vmem>>, %arg3: memref<1x64xf32, #tpu.memory_space<vmem>>, %arg4: memref<8x64xf32, #tpu.memory_space<vmem>>) attributes {dimension_semantics = [#tpu.dimension_semantics<parallel>], iteration_bounds = array<i64: 1>, scalar_prefetch = 0 : i64, scratch_operands = 0 : i64, tpu.core_type = #tpu.core_type<tc>, window_params = [{transform_indices = @transform_0, window_bounds = array<i64: 8, 32>}, {pipeline_mode = #tpu.pipeline_mode<synchronous>, transform_indices = @transform_1, window_bounds = array<i64: 32, 64>}, {pipeline_mode = #tpu.pipeline_mode<synchronous>, transform_indices = @transform_2, window_bounds = array<i64: 1, 64>}, {transform_indices = @transform_3, window_bounds = array<i64: 8, 64>}]} {
    %c0 = arith.constant 0 : index
    %c0_0 = arith.constant 0 : index
    %0 = vector.load %arg1[%c0, %c0_0] : memref<8x32xbf16, #tpu.memory_space<vmem>>, vector<8x32xbf16>
    %c0_1 = arith.constant 0 : index
    %c0_2 = arith.constant 0 : index
    %1 = vector.load %arg2[%c0_1, %c0_2] : memref<32x64xbf16, #tpu.memory_space<vmem>>, vector<32x64xbf16>
    %cst = arith.constant dense<0.000000e+00> : vector<8x64xf32>
    %2 = tpu.matmul %0, %1, %cst {dimension_numbers = #tpu.dot_dimension_numbers<[1], [0], [0], [1], [0, 0, 1, 1], [], []>} : vector<8x32xbf16>, vector<32x64xbf16>, vector<8x64xf32> -> vector<8x64xf32>
    %c0_3 = arith.constant 0 : index
    %c0_4 = arith.constant 0 : index
    %3 = vector.load %arg3[%c0_3, %c0_4] : memref<1x64xf32, #tpu.memory_space<vmem>>, vector<1x64xf32>
    %4 = vector.broadcast %3 : vector<1x64xf32> to vector<8x64xf32>
    %5 = arith.addf %2, %4 : vector<8x64xf32>
    %c0_5 = arith.constant 0 : index
    %c0_6 = arith.constant 0 : index
    %6 = vector.load %arg4[%c0_5, %c0_6] : memref<8x64xf32, #tpu.memory_space<vmem>>, vector<8x64xf32>
    tpu.vector_store %arg4[%c0_5, %c0_6], %5 {strides = array<i32>} : memref<8x64xf32, #tpu.memory_space<vmem>>, vector<8x64xf32>,
    return
  }
  func.func @transform_0(%arg0: i32) -> (i32, i32) {
    %c0_i32 = arith.constant 0 : i32
    %c0_i32_0 = arith.constant 0 : i32
    return %arg0, %c0_i32 : i32, i32
  }
  func.func @transform_1(%arg0: i32) -> (i32, i32) {
    %c0_i32 = arith.constant 0 : i32
    %c0_i32_0 = arith.constant 0 : i32
    %c0_i32_1 = arith.constant 0 : i32
    return %c0_i32, %c0_i32_0 : i32, i32
  }
  func.func @transform_2(%arg0: i32) -> (i32, i32) {
    %c0_i32 = arith.constant 0 : i32
    %c0_i32_0 = arith.constant 0 : i32
    %c0_i32_1 = arith.constant 0 : i32
    return %c0_i32, %c0_i32_0 : i32, i32
  }
  func.func @transform_3(%arg0: i32) -> (i32, i32) {
    %c0_i32 = arith.constant 0 : i32
    %c0_i32_0 = arith.constant 0 : i32
    return %arg0, %c0_i32 : i32, i32
  }
}

module attributes {stable_mosaic.version = 11 : i64} {
  func.func @_mm_kernel_none(%arg0: i32, %arg1: memref<32x16xbf16, #tpu.memory_space<vmem>>, %arg2: memref<16x32xbf16, #tpu.memory_space<vmem>>, %arg3: memref<1x32xf32, #tpu.memory_space<vmem>>, %arg4: memref<32x32xf32, #tpu.memory_space<vmem>>) attributes {dimension_semantics = [#tpu.dimension_semantics<parallel>], iteration_bounds = array<i64: 1>, scalar_prefetch = 0 : i64, scratch_operands = 0 : i64, tpu.core_type = #tpu.core_type<tc>, window_params = [{transform_indices = @transform_0, window_bounds = array<i64: 32, 16>}, {pipeline_mode = #tpu.pipeline_mode<synchronous>, transform_indices = @transform_1, window_bounds = array<i64: 16, 32>}, {pipeline_mode = #tpu.pipeline_mode<synchronous>, transform_indices = @transform_2, window_bounds = array<i64: 1, 32>}, {transform_indices = @transform_3, window_bounds = array<i64: 32, 32>}]} {
    %c0 = arith.constant 0 : index
    %c0_0 = arith.constant 0 : index
    %0 = vector.load %arg1[%c0, %c0_0] : memref<32x16xbf16, #tpu.memory_space<vmem>>, vector<32x16xbf16>
    %c0_1 = arith.constant 0 : index
    %c0_2 = arith.constant 0 : index
    %1 = vector.load %arg2[%c0_1, %c0_2] : memref<16x32xbf16, #tpu.memory_space<vmem>>, vector<16x32xbf16>
    %cst = arith.constant dense<0.000000e+00> : vector<32x32xf32>
    %2 = tpu.matmul %0, %1, %cst {dimension_numbers = #tpu.dot_dimension_numbers<[1], [0], [0], [1], [0, 0, 1, 1], [], []>} : vector<32x16xbf16>, vector<16x32xbf16>, vector<32x32xf32> -> vector<32x32xf32>
    %c0_3 = arith.constant 0 : index
    %c0_4 = arith.constant 0 : index
    %3 = vector.load %arg3[%c0_3, %c0_4] : memref<1x32xf32, #tpu.memory_space<vmem>>, vector<1x32xf32>
    %4 = vector.broadcast %3 : vector<1x32xf32> to vector<32x32xf32>
    %5 = arith.addf %2, %4 : vector<32x32xf32>
    %c0_5 = arith.constant 0 : index
    %c0_6 = arith.constant 0 : index
    %6 = vector.load %arg4[%c0_5, %c0_6] : memref<32x32xf32, #tpu.memory_space<vmem>>, vector<32x32xf32>
    tpu.vector_store %arg4[%c0_5, %c0_6], %5 {strides = array<i32>} : memref<32x32xf32, #tpu.memory_space<vmem>>, vector<32x32xf32>,
    return
  }
  func.func @transform_0(%arg0: i32) -> (i32, i32) {
    %c0_i32 = arith.constant 0 : i32
    %c0_i32_0 = arith.constant 0 : i32
    return %arg0, %c0_i32 : i32, i32
  }
  func.func @transform_1(%arg0: i32) -> (i32, i32) {
    %c0_i32 = arith.constant 0 : i32
    %c0_i32_0 = arith.constant 0 : i32
    %c0_i32_1 = arith.constant 0 : i32
    return %c0_i32, %c0_i32_0 : i32, i32
  }
  func.func @transform_2(%arg0: i32) -> (i32, i32) {
    %c0_i32 = arith.constant 0 : i32
    %c0_i32_0 = arith.constant 0 : i32
    %c0_i32_1 = arith.constant 0 : i32
    return %c0_i32, %c0_i32_0 : i32, i32
  }
  func.func @transform_3(%arg0: i32) -> (i32, i32) {
    %c0_i32 = arith.constant 0 : i32
    %c0_i32_0 = arith.constant 0 : i32
    return %arg0, %c0_i32 : i32, i32
  }
}

module attributes {stable_mosaic.version = 11 : i64} {
  func.func @_mm_kernel_none(%arg0: i32, %arg1: memref<128x8xbf16, #tpu.memory_space<vmem>>, %arg2: memref<8x8xbf16, #tpu.memory_space<vmem>>, %arg3: memref<1x8xf32, #tpu.memory_space<vmem>>, %arg4: memref<128x8xf32, #tpu.memory_space<vmem>>) attributes {dimension_semantics = [#tpu.dimension_semantics<parallel>], iteration_bounds = array<i64: 1>, scalar_prefetch = 0 : i64, scratch_operands = 0 : i64, tpu.core_type = #tpu.core_type<tc>, window_params = [{transform_indices = @transform_0, window_bounds = array<i64: 128, 8>}, {pipeline_mode = #tpu.pipeline_mode<synchronous>, transform_indices = @transform_1, window_bounds = array<i64: 8, 8>}, {pipeline_mode = #tpu.pipeline_mode<synchronous>, transform_indices = @transform_2, window_bounds = array<i64: 1, 8>}, {transform_indices = @transform_3, window_bounds = array<i64: 128, 8>}]} {
    %c0 = arith.constant 0 : index
    %c0_0 = arith.constant 0 : index
    %0 = vector.load %arg1[%c0, %c0_0] : memref<128x8xbf16, #tpu.memory_space<vmem>>, vector<128x8xbf16>
    %c0_1 = arith.constant 0 : index
    %c0_2 = arith.constant 0 : index
    %1 = vector.load %arg2[%c0_1, %c0_2] : memref<8x8xbf16, #tpu.memory_space<vmem>>, vector<8x8xbf16>
    %cst = arith.constant dense<0.000000e+00> : vector<128x8xf32>
    %2 = tpu.matmul %0, %1, %cst {dimension_numbers = #tpu.dot_dimension_numbers<[1], [0], [0], [1], [0, 0, 1, 1], [], []>} : vector<128x8xbf16>, vector<8x8xbf16>, vector<128x8xf32> -> vector<128x8xf32>
    %c0_3 = arith.constant 0 : index
    %c0_4 = arith.constant 0 : index
    %3 = vector.load %arg3[%c0_3, %c0_4] : memref<1x8xf32, #tpu.memory_space<vmem>>, vector<1x8xf32>
    %4 = vector.broadcast %3 : vector<1x8xf32> to vector<128x8xf32>
    %5 = arith.addf %2, %4 : vector<128x8xf32>
    %c0_5 = arith.constant 0 : index
    %c0_6 = arith.constant 0 : index
    %6 = vector.load %arg4[%c0_5, %c0_6] : memref<128x8xf32, #tpu.memory_space<vmem>>, vector<128x8xf32>
    tpu.vector_store %arg4[%c0_5, %c0_6], %5 {strides = array<i32>} : memref<128x8xf32, #tpu.memory_space<vmem>>, vector<128x8xf32>,
    return
  }
  func.func @transform_0(%arg0: i32) -> (i32, i32) {
    %c0_i32 = arith.constant 0 : i32
    %c0_i32_0 = arith.constant 0 : i32
    return %arg0, %c0_i32 : i32, i32
  }
  func.func @transform_1(%arg0: i32) -> (i32, i32) {
    %c0_i32 = arith.constant 0 : i32
    %c0_i32_0 = arith.constant 0 : i32
    %c0_i32_1 = arith.constant 0 : i32
    return %c0_i32, %c0_i32_0 : i32, i32
  }
  func.func @transform_2(%arg0: i32) -> (i32, i32) {
    %c0_i32 = arith.constant 0 : i32
    %c0_i32_0 = arith.constant 0 : i32
    %c0_i32_1 = arith.constant 0 : i32
    return %c0_i32, %c0_i32_0 : i32, i32
  }
  func.func @transform_3(%arg0: i32) -> (i32, i32) {
    %c0_i32 = arith.constant 0 : i32
    %c0_i32_0 = arith.constant 0 : i32
    return %arg0, %c0_i32 : i32, i32
  }
}

module attributes {stable_mosaic.version = 11 : i64} {
  func.func @_mm_kernel_none(%arg0: i32, %arg1: memref<128x72xbf16, #tpu.memory_space<vmem>>, %arg2: memref<72x32xbf16, #tpu.memory_space<vmem>>, %arg3: memref<1x32xf32, #tpu.memory_space<vmem>>, %arg4: memref<128x32xf32, #tpu.memory_space<vmem>>) attributes {dimension_semantics = [#tpu.dimension_semantics<parallel>], iteration_bounds = array<i64: 1>, scalar_prefetch = 0 : i64, scratch_operands = 0 : i64, tpu.core_type = #tpu.core_type<tc>, window_params = [{transform_indices = @transform_0, window_bounds = array<i64: 128, 72>}, {pipeline_mode = #tpu.pipeline_mode<synchronous>, transform_indices = @transform_1, window_bounds = array<i64: 72, 32>}, {pipeline_mode = #tpu.pipeline_mode<synchronous>, transform_indices = @transform_2, window_bounds = array<i64: 1, 32>}, {transform_indices = @transform_3, window_bounds = array<i64: 128, 32>}]} {
    %c0 = arith.constant 0 : index
    %c0_0 = arith.constant 0 : index
    %0 = vector.load %arg1[%c0, %c0_0] : memref<128x72xbf16, #tpu.memory_space<vmem>>, vector<128x72xbf16>
    %c0_1 = arith.constant 0 : index
    %c0_2 = arith.constant 0 : index
    %1 = vector.load %arg2[%c0_1, %c0_2] : memref<72x32xbf16, #tpu.memory_space<vmem>>, vector<72x32xbf16>
    %cst = arith.constant dense<0.000000e+00> : vector<128x32xf32>
    %2 = tpu.matmul %0, %1, %cst {dimension_numbers = #tpu.dot_dimension_numbers<[1], [0], [0], [1], [0, 0, 1, 1], [], []>} : vector<128x72xbf16>, vector<72x32xbf16>, vector<128x32xf32> -> vector<128x32xf32>
    %c0_3 = arith.constant 0 : index
    %c0_4 = arith.constant 0 : index
    %3 = vector.load %arg3[%c0_3, %c0_4] : memref<1x32xf32, #tpu.memory_space<vmem>>, vector<1x32xf32>
    %4 = vector.broadcast %3 : vector<1x32xf32> to vector<128x32xf32>
    %5 = arith.addf %2, %4 : vector<128x32xf32>
    %c0_5 = arith.constant 0 : index
    %c0_6 = arith.constant 0 : index
    %6 = vector.load %arg4[%c0_5, %c0_6] : memref<128x32xf32, #tpu.memory_space<vmem>>, vector<128x32xf32>
    tpu.vector_store %arg4[%c0_5, %c0_6], %5 {strides = array<i32>} : memref<128x32xf32, #tpu.memory_space<vmem>>, vector<128x32xf32>,
    return
  }
  func.func @transform_0(%arg0: i32) -> (i32, i32) {
    %c0_i32 = arith.constant 0 : i32
    %c0_i32_0 = arith.constant 0 : i32
    return %arg0, %c0_i32 : i32, i32
  }
  func.func @transform_1(%arg0: i32) -> (i32, i32) {
    %c0_i32 = arith.constant 0 : i32
    %c0_i32_0 = arith.constant 0 : i32
    %c0_i32_1 = arith.constant 0 : i32
    return %c0_i32, %c0_i32_0 : i32, i32
  }
  func.func @transform_2(%arg0: i32) -> (i32, i32) {
    %c0_i32 = arith.constant 0 : i32
    %c0_i32_0 = arith.constant 0 : i32
    %c0_i32_1 = arith.constant 0 : i32
    return %c0_i32, %c0_i32_0 : i32, i32
  }
  func.func @transform_3(%arg0: i32) -> (i32, i32) {
    %c0_i32 = arith.constant 0 : i32
    %c0_i32_0 = arith.constant 0 : i32
    return %arg0, %c0_i32 : i32, i32
  }
}

module attributes {stable_mosaic.version = 11 : i64} {
  func.func @_mm_kernel_none(%arg0: i32, %arg1: memref<128x72xbf16, #tpu.memory_space<vmem>>, %arg2: memref<72x1xbf16, #tpu.memory_space<vmem>>, %arg3: memref<1x1xf32, #tpu.memory_space<vmem>>, %arg4: memref<128x1xf32, #tpu.memory_space<vmem>>) attributes {dimension_semantics = [#tpu.dimension_semantics<parallel>], iteration_bounds = array<i64: 4>, scalar_prefetch = 0 : i64, scratch_operands = 0 : i64, tpu.core_type = #tpu.core_type<tc>, window_params = [{transform_indices = @transform_0, window_bounds = array<i64: 128, 72>}, {pipeline_mode = #tpu.pipeline_mode<synchronous>, transform_indices = @transform_1, window_bounds = array<i64: 72, 1>}, {pipeline_mode = #tpu.pipeline_mode<synchronous>, transform_indices = @transform_2, window_bounds = array<i64: 1, 1>}, {transform_indices = @transform_3, window_bounds = array<i64: 128, 1>}]} {
    %c0 = arith.constant 0 : index
    %c0_0 = arith.constant 0 : index
    %0 = vector.load %arg1[%c0, %c0_0] : memref<128x72xbf16, #tpu.memory_space<vmem>>, vector<128x72xbf16>
    %c0_1 = arith.constant 0 : index
    %c0_2 = arith.constant 0 : index
    %1 = vector.load %arg2[%c0_1, %c0_2] : memref<72x1xbf16, #tpu.memory_space<vmem>>, vector<72x1xbf16>
    %cst = arith.constant dense<0.000000e+00> : vector<128x1xf32>
    %2 = tpu.matmul %0, %1, %cst {dimension_numbers = #tpu.dot_dimension_numbers<[1], [0], [0], [1], [0, 0, 1, 1], [], []>} : vector<128x72xbf16>, vector<72x1xbf16>, vector<128x1xf32> -> vector<128x1xf32>
    %c0_3 = arith.constant 0 : index
    %c0_4 = arith.constant 0 : index
    %3 = vector.load %arg3[%c0_3, %c0_4] : memref<1x1xf32, #tpu.memory_space<vmem>>, vector<1x1xf32>
    %4 = vector.broadcast %3 : vector<1x1xf32> to vector<128x1xf32>
    %5 = arith.addf %2, %4 : vector<128x1xf32>
    %c0_5 = arith.constant 0 : index
    %c0_6 = arith.constant 0 : index
    %6 = vector.load %arg4[%c0_5, %c0_6] : memref<128x1xf32, #tpu.memory_space<vmem>>, vector<128x1xf32>
    tpu.vector_store %arg4[%c0_5, %c0_6], %5 {strides = array<i32>} : memref<128x1xf32, #tpu.memory_space<vmem>>, vector<128x1xf32>,
    return
  }
  func.func @transform_0(%arg0: i32) -> (i32, i32) {
    %c0_i32 = arith.constant 0 : i32
    %c0_i32_0 = arith.constant 0 : i32
    return %arg0, %c0_i32 : i32, i32
  }
  func.func @transform_1(%arg0: i32) -> (i32, i32) {
    %c0_i32 = arith.constant 0 : i32
    %c0_i32_0 = arith.constant 0 : i32
    %c0_i32_1 = arith.constant 0 : i32
    return %c0_i32, %c0_i32_0 : i32, i32
  }
  func.func @transform_2(%arg0: i32) -> (i32, i32) {
    %c0_i32 = arith.constant 0 : i32
    %c0_i32_0 = arith.constant 0 : i32
    %c0_i32_1 = arith.constant 0 : i32
    return %c0_i32, %c0_i32_0 : i32, i32
  }
  func.func @transform_3(%arg0: i32) -> (i32, i32) {
    %c0_i32 = arith.constant 0 : i32
    %c0_i32_0 = arith.constant 0 : i32
    return %arg0, %c0_i32 : i32, i32
  }
}

</mosaic_0001>

<llo_original>
// kernel: feedback_urdnet.55
$region0: #{feedback_urdnet.55}
  #allocation0 [shape = 'u32[]', space=smem, size = 0x4, offset = 0x4, fixed_abs, tag = 'smem constant byte address 0x4 - core index']
  #allocation1 [shape = 'u32[144,128]{1,0:T(1,128)}', space=vmem, size = 0x12000, scoped, tag = 'internal scratch']
  %s0 = inlined_call_operand.vmem [shape: bf16[512,9], index: 0, kind: input, shape index: {}]
  %s1 = inlined_call_operand.vmem [shape: bf16[9,8], index: 1, kind: input, shape index: {}]
  %s2 = inlined_call_operand.vmem [shape: f32[1,8], index: 2, kind: input, shape index: {}]
  %s3 = inlined_call_operand.vmem [shape: f32[512,8], index: 3, kind: output, shape index: {}]
  %s4 = sld [smem:[#allocation0]]
  $region45: #{feedback_urdnet.55} parent=0
    _
  %s6 = ssub.s32 1, %s4
  %s7 = scalar_select 0, %s6, %s4
  loop: start=0, step=1, limit=6
  $region2: #{feedback_urdnet.55} parent=0 // loop_pre_header
    _
  $region3: #{feedback_urdnet.55} parent=0 // loop_header
    %s9 = sphi 0, %s13
    %p10 = scmp.ge.s32.totalorder %s9, 6
    %s19 = sphi 0, %s21
    %s22 = sphi 0, %s19
    %s23 = sphi 0, %s22
    %s39 = sphi 0, %s23
    %s43 = sphi 0, %s43
    %s45 = sphi 0, %s43
    %s46 = sphi 0, %s45
    %s60 = sphi 0, %s46
    %s64 = sphi 0, %s64
    %s66 = sphi 0, %s64
    %s67 = sphi 0, %s66
    %s81 = sphi 0, %s67
    %s87 = sphi 0, %s89
    %s90 = sphi 0, %s87
    %s91 = sphi 0, %s90
    %s107 = sphi 0, %s91
  $region4: #{feedback_urdnet.55} parent=0 // loop_header_branch
    %12 = sbr.rel (%p10) target = $region8
  $region5: #{feedback_urdnet.55} parent=0 // loop_body
    %s14 = ssub.s32 %s9, 1
    %s15 = ssub.s32 %s9, 2
    %s16 = sadd.s32 %s9, 1
    %s17 = ssub.s32 %s9, %s16
    %p18 = scmp.eq.s32.totalorder %s17, 0
    %s20 = sadd.s32 %s19, 1
    %s21 = scalar_select %p18, %s19, %s20
    %p24 = pneg %p18
    %p25 = scmp.eq.s32.totalorder %s9, 3
    %p26 = por %p24, %p25
    %p27 = scmp.ne.s32.totalorder %s19, %s22
    %p28 = scmp.eq.s32.totalorder %s9, 0
    %p29 = por %p27, %p28
    %p30 = scmp.ne.s32.totalorder %s19, %s22
    %p31 = scmp.eq.s32.totalorder %s14, 3
    %p32 = por %p30, %p31
    %p33 = scmp.ne.s32.totalorder %s22, %s23
    %p34 = scmp.eq.s32.totalorder %s14, 0
    %p35 = por %p33, %p34
    %p36 = scmp.ne.s32.totalorder %s22, %s23
    %p37 = scmp.eq.s32.totalorder %s15, 3
    %p38 = por %p36, %p37
    %p40 = scmp.ne.s32.totalorder %s23, %s39
    %p41 = scmp.eq.s32.totalorder %s15, 0
    %p42 = por %p40, %p41
    %s44 = sadd.s32 %s43, 1
    %p47 = scmp.eq.s32.totalorder %s9, 3
    %p48 = scmp.ne.s32.totalorder %s43, %s45
    %p49 = scmp.eq.s32.totalorder %s9, 0
    %p50 = por %p48, %p49
    %p51 = scmp.ne.s32.totalorder %s43, %s45
    %p52 = scmp.eq.s32.totalorder %s14, 3
    %p53 = por %p51, %p52
    %p54 = scmp.ne.s32.totalorder %s45, %s46
    %p55 = scmp.eq.s32.totalorder %s14, 0
    %p56 = por %p54, %p55
    %p57 = scmp.ne.s32.totalorder %s45, %s46
    %p58 = scmp.eq.s32.totalorder %s15, 3
    %p59 = por %p57, %p58
    %p61 = scmp.ne.s32.totalorder %s46, %s60
    %p62 = scmp.eq.s32.totalorder %s15, 0
    %p63 = por %p61, %p62
    %s65 = sadd.s32 %s64, 1
    %p68 = scmp.eq.s32.totalorder %s9, 3
    %p69 = scmp.ne.s32.totalorder %s64, %s66
    %p70 = scmp.eq.s32.totalorder %s9, 0
    %p71 = por %p69, %p70
    %p72 = scmp.ne.s32.totalorder %s64, %s66
    %p73 = scmp.eq.s32.totalorder %s14, 3
    %p74 = por %p72, %p73
    %p75 = scmp.ne.s32.totalorder %s66, %s67
    %p76 = scmp.eq.s32.totalorder %s14, 0
    %p77 = por %p75, %p76
    %p78 = scmp.ne.s32.totalorder %s66, %s67
    %p79 = scmp.eq.s32.totalorder %s15, 3
    %p80 = por %p78, %p79
    %p82 = scmp.ne.s32.totalorder %s67, %s81
    %p83 = scmp.eq.s32.totalorder %s15, 0
    %p84 = por %p82, %p83
    %s85 = ssub.s32 %s9, %s16
    %p86 = scmp.eq.s32.totalorder %s85, 0
    %s88 = sadd.s32 %s87, 1
    %s89 = scalar_select %p86, %s87, %s88
    %p92 = pneg %p86
    %p93 = scmp.eq.s32.totalorder %s9, 3
    %p94 = por %p92, %p93
    %p95 = scmp.ne.s32.totalorder %s87, %s90
    %p96 = scmp.eq.s32.totalorder %s9, 0
    %p97 = por %p95, %p96
    %p98 = scmp.ne.s32.totalorder %s87, %s90
    %p99 = scmp.eq.s32.totalorder %s14, 3
    %p100 = por %p98, %p99
    %p101 = scmp.ne.s32.totalorder %s90, %s91
    %p102 = scmp.eq.s32.totalorder %s14, 0
    %p103 = por %p101, %p102
    %p104 = scmp.ne.s32.totalorder %s90, %s91
    %p105 = scmp.eq.s32.totalorder %s15, 3
    %p106 = por %p104, %p105
    %p108 = scmp.ne.s32.totalorder %s91, %s107
    %p109 = scmp.eq.s32.totalorder %s15, 0
    %p110 = por %p108, %p109
    %p111 = scmp.le.s32.totalorder 1, %s9
    %p112 = scmp.lt.s32.totalorder %s9, 5
    %p113 = pnand %p111, %p112
    %p114 = pneg %p113
    // Predicated region
    $region9: #{feedback_urdnet.55} parent=5 // pred_check
      _
    $region10: #{feedback_urdnet.55} parent=5 // pred_check_branch
      %116 = sbr.rel (%p113) target = $region12
    $region11: #{feedback_urdnet.55} parent=5 // pred_region
      %s117 = ssub.s32 %s9, 1
      // Predicated region
      $region13: #{feedback_urdnet.55} parent=11 // pred_check
        %p118 = pneg %p56
      $region14: #{feedback_urdnet.55} parent=11 // pred_check_branch
        %120 = sbr.rel (%p118) target = $region16
      $region15: #{feedback_urdnet.55} parent=11 // pred_region
        _
      $region16: #{feedback_urdnet.55} parent=11 // pred_fallthru
        _
      // Predicated region
      $region17: #{feedback_urdnet.55} parent=11 // pred_check
        %p121 = pneg %p77
      $region18: #{feedback_urdnet.55} parent=11 // pred_check_branch
        %123 = sbr.rel (%p121) target = $region20
      $region19: #{feedback_urdnet.55} parent=11 // pred_region
        _
      $region20: #{feedback_urdnet.55} parent=11 // pred_fallthru
        _
    $region12: #{feedback_urdnet.55} parent=5 // pred_fallthru
      _
    %p124 = scmp.lt.s32.totalorder %s9, 4
    // Predicated region
    $region21: #{feedback_urdnet.55} parent=5 // pred_check
      %p125 = pneg %p124
    $region22: #{feedback_urdnet.55} parent=5 // pred_check_branch
      %127 = sbr.rel (%p125) target = $region24
    $region23: #{feedback_urdnet.55} parent=5 // pred_region
      // Predicated region
      $region25: #{feedback_urdnet.55} parent=23 // pred_check
        %p128 = pneg %p29
      $region26: #{feedback_urdnet.55} parent=23 // pred_check_branch
        %130 = sbr.rel (%p128) target = $region28
      $region27: #{feedback_urdnet.55} parent=23 // pred_region
        %s131 = smul.u32 16, %s9
        %p132 = scmp.lt.s32.totalorder %s131, 63
        %s133 = scalar_select %p132, %s131, 63
        %s134 = smul.addr %s133, 4
        %s135 = scalar_lea.vmem %s0, %s134
        %s136 = smul.u32 16, %s9
      $region28: #{feedback_urdnet.55} parent=23 // pred_fallthru
        _
    $region24: #{feedback_urdnet.55} parent=5 // pred_fallthru
      _
    %p137 = scmp.le.s32.totalorder 1, %s9
    %p138 = scmp.lt.s32.totalorder %s9, 5
    %p139 = pnand %p137, %p138
    %p140 = pneg %p139
    // Predicated region
    $region29: #{feedback_urdnet.55} parent=5 // pred_check
      _
    $region30: #{feedback_urdnet.55} parent=5 // pred_check_branch
      %142 = sbr.rel (%p139) target = $region32
    $region31: #{feedback_urdnet.55} parent=5 // pred_region
      %s143 = ssub.s32 %s9, 1
      %s144 = smul.u32 16, %s14
      %p145 = scmp.lt.s32.totalorder %s144, 63
      %s146 = scalar_select %p145, %s144, 63
      %s147 = smul.addr %s146, 4
      %s148 = scalar_lea.vmem %s0, %s147
      %p149 = pneg %p35
      %p150 = pneg %p32
      %p151 = pneg %p56
      %p152 = pneg %p53
      %p153 = pneg %p77
      %p154 = pneg %p74
      %p155 = pneg %p103
      %p156 = pneg %p100
      %s157 = smul.u32 16, %s14
      %p158 = scmp.lt.s32.totalorder %s157, 63
      %s159 = scalar_select %p158, %s157, 63
      %s160 = smul.addr %s159, 8
      %s161 = scalar_lea.vmem %s3, %s160
      %s162 = smul.u32 16, %s14
      %p163 = scmp.lt.s32.totalorder %s162, 63
      %s164 = scalar_select %p163, %s162, 63
      %s165 = smul.addr %s164, 4
      %s166 = scalar_lea.vmem %s0, %s165
      %s167 = smul.u32 16, %s14
      %s168 = smul.u32 16, %s14
      %p169 = scmp.lt.s32.totalorder %s168, 63
      %s170 = scalar_select %p169, %s168, 63
      %s171 = smul.addr %s170, 8
      %s172 = scalar_lea.vmem %s3, %s171
      %s173 = smul.u32 16, %s14
      %v175 = vld [vmem:[%s166] sm:$0xf]
      %v176 = vld [vmem:[%s166 + $0x4] sm:$0xf]
      %v177 = vld [vmem:[%s166 + $0x8] sm:$0xf]
      %v178 = vld [vmem:[%s166 + $0xc] sm:$0xf]
      %v179 = vld [vmem:[%s166 + $0x10] sm:$0xf]
      %v180 = vld [vmem:[%s166 + $0x14] sm:$0xf]
      %v181 = vld [vmem:[%s166 + $0x18] sm:$0xf]
      %v182 = vld [vmem:[%s166 + $0x1c] sm:$0xf]
      %v183 = vld [vmem:[%s166 + $0x20] sm:$0xf]
      %v184 = vld [vmem:[%s166 + $0x24] sm:$0xf]
      %v185 = vld [vmem:[%s166 + $0x28] sm:$0xf]
      %v186 = vld [vmem:[%s166 + $0x2c] sm:$0xf]
      %v187 = vld [vmem:[%s166 + $0x30] sm:$0xf]
      %v188 = vld [vmem:[%s166 + $0x34] sm:$0xf]
      %v189 = vld [vmem:[%s166 + $0x38] sm:$0xf]
      %v190 = vld [vmem:[%s166 + $0x3c] sm:$0xf]
      %v191 = vld [vmem:[%s1] sm:$0xf]
      %v192 = vld [vmem:[%s1 + $0x4] sm:$0x1]
      %v193 = vld [vmem:[%s2] sm:$0x1]
      %v195 = vlaneseq
      %v196 = vshrl.u32 %v195, 7
      %v197 = vsub.s32 0, %v196
      %v198 = vrot.slane %v193, %v197
      %v216 = vunpack.c.l.b16 %v175
      %v217 = vunpack.c.l.b16 %v176
      %v218 = vunpack.c.l.b16 %v177
      %v219 = vunpack.c.l.b16 %v178
      %v220 = vunpack.c.l.b16 %v179
      %v221 = vunpack.c.l.b16 %v180
      %v222 = vunpack.c.l.b16 %v181
      %v223 = vunpack.c.l.b16 %v182
      %v224 = vunpack.c.l.b16 %v183
      %v225 = vunpack.c.l.b16 %v184
      %v226 = vunpack.c.l.b16 %v185
      %v227 = vunpack.c.l.b16 %v186
      %v228 = vunpack.c.l.b16 %v187
      %v229 = vunpack.c.l.b16 %v188
      %v230 = vunpack.c.l.b16 %v189
      %v231 = vunpack.c.l.b16 %v190
      %v232 = vpack.c.b16 %v217, %v216
      %v233 = vpack.c.b16 %v219, %v218
      %v234 = vpack.c.b16 %v221, %v220
      %v235 = vpack.c.b16 %v223, %v222
      %v236 = vpack.c.b16 %v225, %v224
      %v237 = vpack.c.b16 %v227, %v226
      %v238 = vpack.c.b16 %v229, %v228
      %v239 = vpack.c.b16 %v231, %v230
      %v242 = vunpack.c.l.b16 %v191
      %v243 = vunpack.c.l.b16 %v192
      %v244 = vpack.c.b16 %v243, %v242
      %vm245 = vcmask 72704
      %v247 = vsel %vm245, %v232, 0
      %v250 = vsel %vm245, %v233, 0
      %v253 = vsel %vm245, %v234, 0
      %v256 = vsel %vm245, %v235, 0
      %v259 = vsel %vm245, %v236, 0
      %v262 = vsel %vm245, %v237, 0
      %v265 = vsel %vm245, %v238, 0
      %v268 = vsel %vm245, %v239, 0
      %vm270 = vcmask 1043456
      %vm271 = vcmask 1044480
      %v272 = vsel %vm270, 4294967295, 65535
      %v273 = vsel %vm271, %v272, 0
      %v275 = vand.u32 %v244, %v273
      %277 = vmatprep.subr.bf16.mxu0 0
      %278 = vmatpush1.bf16.msra.mxu0 %v275
      %279 = vmatprep.subr.bf16.mxu0 0
      %280 = vmatpush1.bf16.msra.mxu0 0
      %281 = vmatprep.subr.bf16.mxu0 0
      %282 = vmatpush1.bf16.msra.mxu0 0
      %283 = vmatprep.subr.bf16.mxu0 0
      %284 = vmatpush1.bf16.msra.mxu0 0
      %285 = vmatprep.subr.bf16.mxu0 0
      %286 = vmatpush1.bf16.msra.mxu0 0
      %287 = vmatprep.subr.bf16.mxu0 0
      %288 = vmatpush1.bf16.msra.mxu0 0
      %289 = vmatprep.subr.bf16.mxu0 0
      %290 = vmatpush1.bf16.msra.mxu0 0
      %291 = vmatprep.subr.bf16.mxu0 0
      %292 = vmatpush1.bf16.msra.mxu0 0
      %293 = vmatprep.subr.bf16.mxu0 0
      %294 = vmatpush1.bf16.msra.mxu0 0
      %295 = vmatprep.subr.bf16.mxu0 0
      %296 = vmatpush1.bf16.msra.mxu0 0
      %297 = vmatprep.subr.bf16.mxu0 0
      %298 = vmatpush1.bf16.msra.mxu0 0
      %299 = vmatprep.subr.bf16.mxu0 0
      %300 = vmatpush1.bf16.msra.mxu0 0
      %301 = vmatprep.subr.bf16.mxu0 0
      %302 = vmatpush1.bf16.msra.mxu0 0
      %303 = vmatprep.subr.bf16.mxu0 0
      %304 = vmatpush1.bf16.msra.mxu0 0
      %305 = vmatprep.subr.bf16.mxu0 0
      %306 = vmatpush1.bf16.msra.mxu0 0
      %307 = vmatprep.subr.bf16.mxu0 0
      %308 = vmatpush1.bf16.msra.mxu0 0
      %309 = vmatprep.mubr.bf16.mxu0 0
      %310 = vmatmul.mubr.bf16.gmra.mrb[0].mxu0 %v247
      %v311 = vpop.f32.mrb[0].mxu0
      %v312 = vadd.f32 %v198, %v311
      %v313 = vpop.f32.mrb[0].mxu0
      %v314 = vpop.f32.mrb[0].mxu0
      %v315 = vadd.f32 %v198, %v314
      %v316 = vpop.f32.mrb[0].mxu0
      %317 = vmatprep.mubr.bf16.mxu0 0
      %318 = vmatmul.mubr.bf16.gmra.mrb[0].mxu0 %v250
      %v319 = vpop.f32.mrb[0].mxu0
      %v320 = vadd.f32 %v198, %v319
      %v321 = vpop.f32.mrb[0].mxu0
      %v322 = vpop.f32.mrb[0].mxu0
      %v323 = vadd.f32 %v198, %v322
      %v324 = vpop.f32.mrb[0].mxu0
      %325 = vmatprep.mubr.bf16.mxu0 0
      %326 = vmatmul.mubr.bf16.gmra.mrb[0].mxu0 %v253
      %v327 = vpop.f32.mrb[0].mxu0
      %v328 = vadd.f32 %v198, %v327
      %v329 = vpop.f32.mrb[0].mxu0
      %v330 = vpop.f32.mrb[0].mxu0
      %v331 = vadd.f32 %v198, %v330
      %v332 = vpop.f32.mrb[0].mxu0
      %333 = vmatprep.mubr.bf16.mxu0 0
      %334 = vmatmul.mubr.bf16.gmra.mrb[0].mxu0 %v256
      %v335 = vpop.f32.mrb[0].mxu0
      %v336 = vadd.f32 %v198, %v335
      %v337 = vpop.f32.mrb[0].mxu0
      %v338 = vpop.f32.mrb[0].mxu0
      %v339 = vadd.f32 %v198, %v338
      %v340 = vpop.f32.mrb[0].mxu0
      %341 = vmatprep.mubr.bf16.mxu0 0
      %342 = vmatmul.mubr.bf16.gmra.mrb[0].mxu0 %v259
      %v343 = vpop.f32.mrb[0].mxu0
      %v344 = vadd.f32 %v198, %v343
      %v345 = vpop.f32.mrb[0].mxu0
      %v346 = vpop.f32.mrb[0].mxu0
      %v347 = vadd.f32 %v198, %v346
      %v348 = vpop.f32.mrb[0].mxu0
      %349 = vmatprep.mubr.bf16.mxu0 0
      %350 = vmatmul.mubr.bf16.gmra.mrb[0].mxu0 %v262
      %v351 = vpop.f32.mrb[0].mxu0
      %v352 = vadd.f32 %v198, %v351
      %v353 = vpop.f32.mrb[0].mxu0
      %v354 = vpop.f32.mrb[0].mxu0
      %v355 = vadd.f32 %v198, %v354
      %v356 = vpop.f32.mrb[0].mxu0
      %357 = vmatprep.mubr.bf16.mxu0 0
      %358 = vmatmul.mubr.bf16.gmra.mrb[0].mxu0 %v265
      %v359 = vpop.f32.mrb[0].mxu0
      %v360 = vadd.f32 %v198, %v359
      %v361 = vpop.f32.mrb[0].mxu0
      %v362 = vpop.f32.mrb[0].mxu0
      %v363 = vadd.f32 %v198, %v362
      %v364 = vpop.f32.mrb[0].mxu0
      %365 = vmatprep.mubr.bf16.mxu0 0
      %366 = vmatmul.mubr.bf16.gmra.mrb[0].mxu0 %v268
      %v367 = vpop.f32.mrb[0].mxu0
      %v368 = vadd.f32 %v198, %v367
      %v369 = vpop.f32.mrb[0].mxu0
      %v370 = vpop.f32.mrb[0].mxu0
      %v371 = vadd.f32 %v198, %v370
      %v372 = vpop.f32.mrb[0].mxu0
      %373 = vdwg.mxu0
      %vm374 = vcmask 64512
      %375 = vst.msk [vmem:[%s172] sm:$0xff] %vm374, %v312
      %376 = vst.msk [vmem:[%s172 + $0x8] sm:$0xff] %vm374, %v315
      %377 = vst.msk [vmem:[%s172 + $0x10] sm:$0xff] %vm374, %v320
      %378 = vst.msk [vmem:[%s172 + $0x18] sm:$0xff] %vm374, %v323
      %379 = vst.msk [vmem:[%s172 + $0x20] sm:$0xff] %vm374, %v328
      %380 = vst.msk [vmem:[%s172 + $0x28] sm:$0xff] %vm374, %v331
      %381 = vst.msk [vmem:[%s172 + $0x30] sm:$0xff] %vm374, %v336
      %382 = vst.msk [vmem:[%s172 + $0x38] sm:$0xff] %vm374, %v339
      %383 = vst.msk [vmem:[%s172 + $0x40] sm:$0xff] %vm374, %v344
      %384 = vst.msk [vmem:[%s172 + $0x48] sm:$0xff] %vm374, %v347
      %385 = vst.msk [vmem:[%s172 + $0x50] sm:$0xff] %vm374, %v352
      %386 = vst.msk [vmem:[%s172 + $0x58] sm:$0xff] %vm374, %v355
      %387 = vst.msk [vmem:[%s172 + $0x60] sm:$0xff] %vm374, %v360
      %388 = vst.msk [vmem:[%s172 + $0x68] sm:$0xff] %vm374, %v363
      %389 = vst.msk [vmem:[%s172 + $0x70] sm:$0xff] %vm374, %v368
      %390 = vst.msk [vmem:[%s172 + $0x78] sm:$0xff] %vm374, %v371
      %s391 = smul.u32 16, %s14
      %p392 = scmp.lt.s32.totalorder %s391, 63
      %s393 = scalar_select %p392, %s391, 63
      %s394 = smul.addr %s393, 8
      %s395 = scalar_lea.vmem %s3, %s394
      // Predicated region
      $region33: #{feedback_urdnet.55} parent=31 // pred_check
        %p396 = pneg %p100
      $region34: #{feedback_urdnet.55} parent=31 // pred_check_branch
        %398 = sbr.rel (%p396) target = $region36
      $region35: #{feedback_urdnet.55} parent=31 // pred_region
        %s399 = smul.u32 16, %s14
      $region36: #{feedback_urdnet.55} parent=31 // pred_fallthru
        _
    $region32: #{feedback_urdnet.55} parent=5 // pred_fallthru
      _
    %p400 = scmp.le.s32.totalorder 2, %s9
    // Predicated region
    $region37: #{feedback_urdnet.55} parent=5 // pred_check
      %p401 = pneg %p400
    $region38: #{feedback_urdnet.55} parent=5 // pred_check_branch
      %403 = sbr.rel (%p401) target = $region40
    $region39: #{feedback_urdnet.55} parent=5 // pred_region
      %s404 = ssub.s32 %s9, 2
      // Predicated region
      $region41: #{feedback_urdnet.55} parent=39 // pred_check
        %p405 = pneg %p106
      $region42: #{feedback_urdnet.55} parent=39 // pred_check_branch
        %407 = sbr.rel (%p405) target = $region44
      $region43: #{feedback_urdnet.55} parent=39 // pred_region
        %s408 = smul.u32 16, %s15
        %p409 = scmp.lt.s32.totalorder %s408, 63
        %s410 = scalar_select %p409, %s408, 63
        %s411 = smul.addr %s410, 8
        %s412 = scalar_lea.vmem %s3, %s411
      $region44: #{feedback_urdnet.55} parent=39 // pred_fallthru
        _
    $region40: #{feedback_urdnet.55} parent=5 // pred_fallthru
      _
  $region6: #{feedback_urdnet.55} parent=0 // loop_footer
    %s13 = sadd.s32 1, %s9
  $region7: #{feedback_urdnet.55} parent=0 // loop_footer_branch
    %8 = sbr.rel target = $region3
  $region8: #{feedback_urdnet.55} parent=0 // loop_exit
    _

// kernel: feedback_urdnet.56
$region0: #{feedback_urdnet.56}
  #allocation0 [shape = 'u32[]', space=smem, size = 0x4, offset = 0x4, fixed_abs, tag = 'smem constant byte address 0x4 - core index']
  #allocation1 [shape = 'u32[144,128]{1,0:T(1,128)}', space=vmem, size = 0x12000, scoped, tag = 'internal scratch']
  %s0 = inlined_call_operand.vmem [shape: bf16[128,128], index: 0, kind: input, shape index: {}]
  %s1 = inlined_call_operand.vmem [shape: bf16[128,8], index: 1, kind: input, shape index: {}]
  %s2 = inlined_call_operand.vmem [shape: f32[1,8], index: 2, kind: input, shape index: {}]
  %s3 = inlined_call_operand.vmem [shape: f32[128,8], index: 3, kind: output, shape index: {}]
  %s4 = sld [smem:[#allocation0]]
  $region22: #{feedback_urdnet.56} parent=0
    _
  %s6 = ssub.s32 1, %s4
  %s7 = scalar_select 0, %s6, %s4
  // Predicated region
  $region2: #{feedback_urdnet.56} parent=0 // pred_check
    _
  $region3: #{feedback_urdnet.56} parent=0 // pred_check_branch
    %9 = sbr.rel (0) target = $region5
  $region4: #{feedback_urdnet.56} parent=0 // pred_region
    _
  $region5: #{feedback_urdnet.56} parent=0 // pred_fallthru
    _
  // Predicated region
  $region6: #{feedback_urdnet.56} parent=0 // pred_check
    _
  $region7: #{feedback_urdnet.56} parent=0 // pred_check_branch
    %11 = sbr.rel (0) target = $region9
  $region8: #{feedback_urdnet.56} parent=0 // pred_region
    _
  $region9: #{feedback_urdnet.56} parent=0 // pred_fallthru
    _
  // Predicated region
  $region10: #{feedback_urdnet.56} parent=0 // pred_check
    _
  $region11: #{feedback_urdnet.56} parent=0 // pred_check_branch
    %13 = sbr.rel (0) target = $region13
  $region12: #{feedback_urdnet.56} parent=0 // pred_region
    _
  $region13: #{feedback_urdnet.56} parent=0 // pred_fallthru
    _
  %v15 = vld [vmem:[%s0] sm:$0xf]
  %v16 = vld [vmem:[%s0 + $0x4] sm:$0xf]
  %v17 = vld [vmem:[%s0 + $0x8] sm:$0xf]
  %v18 = vld [vmem:[%s0 + $0xc] sm:$0xf]
  %v19 = vld [vmem:[%s0 + $0x10] sm:$0xf]
  %v20 = vld [vmem:[%s0 + $0x14] sm:$0xf]
  %v21 = vld [vmem:[%s0 + $0x18] sm:$0xf]
  %v22 = vld [vmem:[%s0 + $0x1c] sm:$0xf]
  %v23 = vld [vmem:[%s0 + $0x20] sm:$0xf]
  %v24 = vld [vmem:[%s0 + $0x24] sm:$0xf]
  %v25 = vld [vmem:[%s0 + $0x28] sm:$0xf]
  %v26 = vld [vmem:[%s0 + $0x2c] sm:$0xf]
  %v27 = vld [vmem:[%s0 + $0x30] sm:$0xf]
  %v28 = vld [vmem:[%s0 + $0x34] sm:$0xf]
  %v29 = vld [vmem:[%s0 + $0x38] sm:$0xf]
  %v30 = vld [vmem:[%s0 + $0x3c] sm:$0xf]
  %v31 = vld [vmem:[%s1] sm:$0xf]
  %v32 = vld [vmem:[%s1 + $0x4] sm:$0xf]
  %v33 = vld [vmem:[%s1 + $0x8] sm:$0xf]
  %v34 = vld [vmem:[%s1 + $0xc] sm:$0xf]
  %v35 = vld [vmem:[%s1 + $0x10] sm:$0xf]
  %v36 = vld [vmem:[%s1 + $0x14] sm:$0xf]
  %v37 = vld [vmem:[%s1 + $0x18] sm:$0xf]
  %v38 = vld [vmem:[%s1 + $0x1c] sm:$0xf]
  %v39 = vld [vmem:[%s1 + $0x20] sm:$0xf]
  %v40 = vld [vmem:[%s1 + $0x24] sm:$0xf]
  %v41 = vld [vmem:[%s1 + $0x28] sm:$0xf]
  %v42 = vld [vmem:[%s1 + $0x2c] sm:$0xf]
  %v43 = vld [vmem:[%s1 + $0x30] sm:$0xf]
  %v44 = vld [vmem:[%s1 + $0x34] sm:$0xf]
  %v45 = vld [vmem:[%s1 + $0x38] sm:$0xf]
  %v46 = vld [vmem:[%s1 + $0x3c] sm:$0xf]
  %v47 = vld [vmem:[%s2] sm:$0x1]
  %v49 = vlaneseq
  %v50 = vshrl.u32 %v49, 7
  %v51 = vsub.s32 0, %v50
  %v52 = vrot.slane %v47, %v51
  %v70 = vunpack.c.l.b16 %v15
  %v71 = vunpack.c.l.b16 %v16
  %v72 = vunpack.c.l.b16 %v17
  %v73 = vunpack.c.l.b16 %v18
  %v74 = vunpack.c.l.b16 %v19
  %v75 = vunpack.c.l.b16 %v20
  %v76 = vunpack.c.l.b16 %v21
  %v77 = vunpack.c.l.b16 %v22
  %v78 = vunpack.c.l.b16 %v23
  %v79 = vunpack.c.l.b16 %v24
  %v80 = vunpack.c.l.b16 %v25
  %v81 = vunpack.c.l.b16 %v26
  %v82 = vunpack.c.l.b16 %v27
  %v83 = vunpack.c.l.b16 %v28
  %v84 = vunpack.c.l.b16 %v29
  %v85 = vunpack.c.l.b16 %v30
  %v86 = vpack.c.b16 %v71, %v70
  %v87 = vpack.c.b16 %v73, %v72
  %v88 = vpack.c.b16 %v75, %v74
  %v89 = vpack.c.b16 %v77, %v76
  %v90 = vpack.c.b16 %v79, %v78
  %v91 = vpack.c.b16 %v81, %v80
  %v92 = vpack.c.b16 %v83, %v82
  %v93 = vpack.c.b16 %v85, %v84
  %v118 = vunpack.c.l.b16 %v31
  %v119 = vunpack.c.l.b16 %v32
  %v120 = vunpack.c.l.b16 %v33
  %v121 = vunpack.c.l.b16 %v34
  %v122 = vunpack.c.l.b16 %v35
  %v123 = vunpack.c.l.b16 %v36
  %v124 = vunpack.c.l.b16 %v37
  %v125 = vunpack.c.l.b16 %v38
  %v126 = vunpack.c.l.b16 %v39
  %v127 = vunpack.c.l.b16 %v40
  %v128 = vunpack.c.l.b16 %v41
  %v129 = vunpack.c.l.b16 %v42
  %v130 = vunpack.c.l.b16 %v43
  %v131 = vunpack.c.l.b16 %v44
  %v132 = vunpack.c.l.b16 %v45
  %v133 = vunpack.c.l.b16 %v46
  %v134 = vpack.c.b16 %v119, %v118
  %v135 = vpack.c.b16 %v121, %v120
  %v136 = vpack.c.b16 %v123, %v122
  %v137 = vpack.c.b16 %v125, %v124
  %v138 = vpack.c.b16 %v127, %v126
  %v139 = vpack.c.b16 %v129, %v128
  %v140 = vpack.c.b16 %v131, %v130
  %v141 = vpack.c.b16 %v133, %v132
  %150 = vmatprep.subr.bf16.mxu0 0
  %151 = vmatpush1.bf16.msra.mxu0 %v134
  %152 = vmatprep.subr.bf16.mxu0 0
  %153 = vmatpush1.bf16.msra.mxu0 %v135
  %154 = vmatprep.subr.bf16.mxu0 0
  %155 = vmatpush1.bf16.msra.mxu0 %v136
  %156 = vmatprep.subr.bf16.mxu0 0
  %157 = vmatpush1.bf16.msra.mxu0 %v137
  %158 = vmatprep.subr.bf16.mxu0 0
  %159 = vmatpush1.bf16.msra.mxu0 %v138
  %160 = vmatprep.subr.bf16.mxu0 0
  %161 = vmatpush1.bf16.msra.mxu0 %v139
  %162 = vmatprep.subr.bf16.mxu0 0
  %163 = vmatpush1.bf16.msra.mxu0 %v140
  %164 = vmatprep.subr.bf16.mxu0 0
  %165 = vmatpush1.bf16.msra.mxu0 %v141
  %166 = vmatprep.subr.bf16.mxu0 0
  %167 = vmatpush1.bf16.msra.mxu0 0
  %168 = vmatprep.subr.bf16.mxu0 0
  %169 = vmatpush1.bf16.msra.mxu0 0
  %170 = vmatprep.subr.bf16.mxu0 0
  %171 = vmatpush1.bf16.msra.mxu0 0
  %172 = vmatprep.subr.bf16.mxu0 0
  %173 = vmatpush1.bf16.msra.mxu0 0
  %174 = vmatprep.subr.bf16.mxu0 0
  %175 = vmatpush1.bf16.msra.mxu0 0
  %176 = vmatprep.subr.bf16.mxu0 0
  %177 = vmatpush1.bf16.msra.mxu0 0
  %178 = vmatprep.subr.bf16.mxu0 0
  %179 = vmatpush1.bf16.msra.mxu0 0
  %180 = vmatprep.subr.bf16.mxu0 0
  %181 = vmatpush1.bf16.msra.mxu0 0
  %182 = vmatprep.mubr.bf16.mxu0 0
  %183 = vmatmul.mubr.bf16.gmra.mrb[0].mxu0 %v86
  %v184 = vpop.f32.mrb[0].mxu0
  %v185 = vadd.f32 %v52, %v184
  %v186 = vpop.f32.mrb[0].mxu0
  %v187 = vpop.f32.mrb[0].mxu0
  %v188 = vadd.f32 %v52, %v187
  %v189 = vpop.f32.mrb[0].mxu0
  %190 = vmatprep.mubr.bf16.mxu0 0
  %191 = vmatmul.mubr.bf16.gmra.mrb[0].mxu0 %v87
  %v192 = vpop.f32.mrb[0].mxu0
  %v193 = vadd.f32 %v52, %v192
  %v194 = vpop.f32.mrb[0].mxu0
  %v195 = vpop.f32.mrb[0].mxu0
  %v196 = vadd.f32 %v52, %v195
  %v197 = vpop.f32.mrb[0].mxu0
  %198 = vmatprep.mubr.bf16.mxu0 0
  %199 = vmatmul.mubr.bf16.gmra.mrb[0].mxu0 %v88
  %v200 = vpop.f32.mrb[0].mxu0
  %v201 = vadd.f32 %v52, %v200
  %v202 = vpop.f32.mrb[0].mxu0
  %v203 = vpop.f32.mrb[0].mxu0
  %v204 = vadd.f32 %v52, %v203
  %v205 = vpop.f32.mrb[0].mxu0
  %206 = vmatprep.mubr.bf16.mxu0 0
  %207 = vmatmul.mubr.bf16.gmra.mrb[0].mxu0 %v89
  %v208 = vpop.f32.mrb[0].mxu0
  %v209 = vadd.f32 %v52, %v208
  %v210 = vpop.f32.mrb[0].mxu0
  %v211 = vpop.f32.mrb[0].mxu0
  %v212 = vadd.f32 %v52, %v211
  %v213 = vpop.f32.mrb[0].mxu0
  %214 = vmatprep.mubr.bf16.mxu0 0
  %215 = vmatmul.mubr.bf16.gmra.mrb[0].mxu0 %v90
  %v216 = vpop.f32.mrb[0].mxu0
  %v217 = vadd.f32 %v52, %v216
  %v218 = vpop.f32.mrb[0].mxu0
  %v219 = vpop.f32.mrb[0].mxu0
  %v220 = vadd.f32 %v52, %v219
  %v221 = vpop.f32.mrb[0].mxu0
  %222 = vmatprep.mubr.bf16.mxu0 0
  %223 = vmatmul.mubr.bf16.gmra.mrb[0].mxu0 %v91
  %v224 = vpop.f32.mrb[0].mxu0
  %v225 = vadd.f32 %v52, %v224
  %v226 = vpop.f32.mrb[0].mxu0
  %v227 = vpop.f32.mrb[0].mxu0
  %v228 = vadd.f32 %v52, %v227
  %v229 = vpop.f32.mrb[0].mxu0
  %230 = vmatprep.mubr.bf16.mxu0 0
  %231 = vmatmul.mubr.bf16.gmra.mrb[0].mxu0 %v92
  %v232 = vpop.f32.mrb[0].mxu0
  %v233 = vadd.f32 %v52, %v232
  %v234 = vpop.f32.mrb[0].mxu0
  %v235 = vpop.f32.mrb[0].mxu0
  %v236 = vadd.f32 %v52, %v235
  %v237 = vpop.f32.mrb[0].mxu0
  %238 = vmatprep.mubr.bf16.mxu0 0
  %239 = vmatmul.mubr.bf16.gmra.mrb[0].mxu0 %v93
  %v240 = vpop.f32.mrb[0].mxu0
  %v241 = vadd.f32 %v52, %v240
  %v242 = vpop.f32.mrb[0].mxu0
  %v243 = vpop.f32.mrb[0].mxu0
  %v244 = vadd.f32 %v52, %v243
  %v245 = vpop.f32.mrb[0].mxu0
  %246 = vdwg.mxu0
  %vm247 = vcmask 64512
  %248 = vst.msk [vmem:[%s3] sm:$0xff] %vm247, %v185
  %249 = vst.msk [vmem:[%s3 + $0x8] sm:$0xff] %vm247, %v188
  %250 = vst.msk [vmem:[%s3 + $0x10] sm:$0xff] %vm247, %v193
  %251 = vst.msk [vmem:[%s3 + $0x18] sm:$0xff] %vm247, %v196
  %252 = vst.msk [vmem:[%s3 + $0x20] sm:$0xff] %vm247, %v201
  %253 = vst.msk [vmem:[%s3 + $0x28] sm:$0xff] %vm247, %v204
  %254 = vst.msk [vmem:[%s3 + $0x30] sm:$0xff] %vm247, %v209
  %255 = vst.msk [vmem:[%s3 + $0x38] sm:$0xff] %vm247, %v212
  %256 = vst.msk [vmem:[%s3 + $0x40] sm:$0xff] %vm247, %v217
  %257 = vst.msk [vmem:[%s3 + $0x48] sm:$0xff] %vm247, %v220
  %258 = vst.msk [vmem:[%s3 + $0x50] sm:$0xff] %vm247, %v225
  %259 = vst.msk [vmem:[%s3 + $0x58] sm:$0xff] %vm247, %v228
  %260 = vst.msk [vmem:[%s3 + $0x60] sm:$0xff] %vm247, %v233
  %261 = vst.msk [vmem:[%s3 + $0x68] sm:$0xff] %vm247, %v236
  %262 = vst.msk [vmem:[%s3 + $0x70] sm:$0xff] %vm247, %v241
  %263 = vst.msk [vmem:[%s3 + $0x78] sm:$0xff] %vm247, %v244
  // Predicated region
  $region14: #{feedback_urdnet.56} parent=0 // pred_check
    _
  $region15: #{feedback_urdnet.56} parent=0 // pred_check_branch
    %265 = sbr.rel (0) target = $region17
  $region16: #{feedback_urdnet.56} parent=0 // pred_region
    _
  $region17: #{feedback_urdnet.56} parent=0 // pred_fallthru
    _
  // Predicated region
  $region18: #{feedback_urdnet.56} parent=0 // pred_check
    _
  $region19: #{feedback_urdnet.56} parent=0 // pred_check_branch
    %267 = sbr.rel (0) target = $region21
  $region20: #{feedback_urdnet.56} parent=0 // pred_region
    _
  $region21: #{feedback_urdnet.56} parent=0 // pred_fallthru
    _

// kernel: feedback_urdnet.57
$region0: #{feedback_urdnet.57}
  #allocation0 [shape = 'u32[]', space=smem, size = 0x4, offset = 0x4, fixed_abs, tag = 'smem constant byte address 0x4 - core index']
  #allocation1 [shape = 'u32[144,128]{1,0:T(1,128)}', space=vmem, size = 0x12000, scoped, tag = 'internal scratch']
  %s0 = inlined_call_operand.vmem [shape: bf16[128,8], index: 0, kind: input, shape index: {}]
  %s1 = inlined_call_operand.vmem [shape: f32[128,8], index: 1, kind: input, shape index: {}]
  %s2 = inlined_call_operand.vmem [shape: bf16[8,8], index: 2, kind: input, shape index: {}]
  %s3 = inlined_call_operand.vmem [shape: f32[1,8], index: 3, kind: input, shape index: {}]
  %s4 = inlined_call_operand.vmem [shape: bf16[8,8], index: 4, kind: input, shape index: {}]
  %s5 = inlined_call_operand.vmem [shape: f32[1,8], index: 5, kind: input, shape index: {}]
  %s6 = inlined_call_operand.vmem [shape: bf16[8,8], index: 6, kind: input, shape index: {}]
  %s7 = inlined_call_operand.vmem [shape: f32[1,8], index: 7, kind: input, shape index: {}]
  %s8 = inlined_call_operand.vmem [shape: bf16[8,8], index: 8, kind: input, shape index: {}]
  %s9 = inlined_call_operand.vmem [shape: f32[1,8], index: 9, kind: input, shape index: {}]
  %s10 = inlined_call_operand.vmem [shape: f32[128,8], index: 10, kind: output, shape index: {}]
  %s11 = sld [smem:[#allocation0]]
  $region50: #{feedback_urdnet.57} parent=0
    _
  %s13 = ssub.s32 1, %s11
  %s14 = scalar_select 0, %s13, %s11
  // Predicated region
  $region2: #{feedback_urdnet.57} parent=0 // pred_check
    _
  $region3: #{feedback_urdnet.57} parent=0 // pred_check_branch
    %16 = sbr.rel (0) target = $region5
  $region4: #{feedback_urdnet.57} parent=0 // pred_region
    _
  $region5: #{feedback_urdnet.57} parent=0 // pred_fallthru
    _
  // Predicated region
  $region6: #{feedback_urdnet.57} parent=0 // pred_check
    _
  $region7: #{feedback_urdnet.57} parent=0 // pred_check_branch
    %18 = sbr.rel (0) target = $region9
  $region8: #{feedback_urdnet.57} parent=0 // pred_region
    _
  $region9: #{feedback_urdnet.57} parent=0 // pred_fallthru
    _
  // Predicated region
  $region10: #{feedback_urdnet.57} parent=0 // pred_check
    _
  $region11: #{feedback_urdnet.57} parent=0 // pred_check_branch
    %20 = sbr.rel (0) target = $region13
  $region12: #{feedback_urdnet.57} parent=0 // pred_region
    _
  $region13: #{feedback_urdnet.57} parent=0 // pred_fallthru
    _
  // Predicated region
  $region14: #{feedback_urdnet.57} parent=0 // pred_check
    _
  $region15: #{feedback_urdnet.57} parent=0 // pred_check_branch
    %22 = sbr.rel (0) target = $region17
  $region16: #{feedback_urdnet.57} parent=0 // pred_region
    _
  $region17: #{feedback_urdnet.57} parent=0 // pred_fallthru
    _
  // Predicated region
  $region18: #{feedback_urdnet.57} parent=0 // pred_check
    _
  $region19: #{feedback_urdnet.57} parent=0 // pred_check_branch
    %24 = sbr.rel (0) target = $region21
  $region20: #{feedback_urdnet.57} parent=0 // pred_region
    _
  $region21: #{feedback_urdnet.57} parent=0 // pred_fallthru
    _
  // Predicated region
  $region22: #{feedback_urdnet.57} parent=0 // pred_check
    _
  $region23: #{feedback_urdnet.57} parent=0 // pred_check_branch
    %26 = sbr.rel (0) target = $region25
  $region24: #{feedback_urdnet.57} parent=0 // pred_region
    _
  $region25: #{feedback_urdnet.57} parent=0 // pred_fallthru
    _
  // Predicated region
  $region26: #{feedback_urdnet.57} parent=0 // pred_check
    _
  $region27: #{feedback_urdnet.57} parent=0 // pred_check_branch
    %28 = sbr.rel (0) target = $region29
  $region28: #{feedback_urdnet.57} parent=0 // pred_region
    _
  $region29: #{feedback_urdnet.57} parent=0 // pred_fallthru
    _
  // Predicated region
  $region30: #{feedback_urdnet.57} parent=0 // pred_check
    _
  $region31: #{feedback_urdnet.57} parent=0 // pred_check_branch
    %30 = sbr.rel (0) target = $region33
  $region32: #{feedback_urdnet.57} parent=0 // pred_region
    _
  $region33: #{feedback_urdnet.57} parent=0 // pred_fallthru
    _
  // Predicated region
  $region34: #{feedback_urdnet.57} parent=0 // pred_check
    _
  $region35: #{feedback_urdnet.57} parent=0 // pred_check_branch
    %32 = sbr.rel (0) target = $region37
  $region36: #{feedback_urdnet.57} parent=0 // pred_region
    _
  $region37: #{feedback_urdnet.57} parent=0 // pred_fallthru
    _
  // Predicated region
  $region38: #{feedback_urdnet.57} parent=0 // pred_check
    _
  $region39: #{feedback_urdnet.57} parent=0 // pred_check_branch
    %34 = sbr.rel (0) target = $region41
  $region40: #{feedback_urdnet.57} parent=0 // pred_region
    _
  $region41: #{feedback_urdnet.57} parent=0 // pred_fallthru
    _
  %v36 = vld [vmem:[%s0] sm:$0xf]
  %v37 = vld [vmem:[%s0 + $0x4] sm:$0xf]
  %v38 = vld [vmem:[%s0 + $0x8] sm:$0xf]
  %v39 = vld [vmem:[%s0 + $0xc] sm:$0xf]
  %v40 = vld [vmem:[%s0 + $0x10] sm:$0xf]
  %v41 = vld [vmem:[%s0 + $0x14] sm:$0xf]
  %v42 = vld [vmem:[%s0 + $0x18] sm:$0xf]
  %v43 = vld [vmem:[%s0 + $0x1c] sm:$0xf]
  %v44 = vld [vmem:[%s0 + $0x20] sm:$0xf]
  %v45 = vld [vmem:[%s0 + $0x24] sm:$0xf]
  %v46 = vld [vmem:[%s0 + $0x28] sm:$0xf]
  %v47 = vld [vmem:[%s0 + $0x2c] sm:$0xf]
  %v48 = vld [vmem:[%s0 + $0x30] sm:$0xf]
  %v49 = vld [vmem:[%s0 + $0x34] sm:$0xf]
  %v50 = vld [vmem:[%s0 + $0x38] sm:$0xf]
  %v51 = vld [vmem:[%s0 + $0x3c] sm:$0xf]
  %v52 = vld [vmem:[%s2] sm:$0xf]
  %v53 = vld [vmem:[%s3] sm:$0x1]
  %v55 = vlaneseq
  %v56 = vshrl.u32 %v55, 7
  %v57 = vsub.s32 0, %v56
  %v58 = vrot.slane %v53, %v57
  %v76 = vunpack.c.l.b16 %v36
  %v77 = vunpack.c.l.b16 %v37
  %v78 = vunpack.c.l.b16 %v38
  %v79 = vunpack.c.l.b16 %v39
  %v80 = vunpack.c.l.b16 %v40
  %v81 = vunpack.c.l.b16 %v41
  %v82 = vunpack.c.l.b16 %v42
  %v83 = vunpack.c.l.b16 %v43
  %v84 = vunpack.c.l.b16 %v44
  %v85 = vunpack.c.l.b16 %v45
  %v86 = vunpack.c.l.b16 %v46
  %v87 = vunpack.c.l.b16 %v47
  %v88 = vunpack.c.l.b16 %v48
  %v89 = vunpack.c.l.b16 %v49
  %v90 = vunpack.c.l.b16 %v50
  %v91 = vunpack.c.l.b16 %v51
  %v92 = vpack.c.b16 %v77, %v76
  %v93 = vpack.c.b16 %v79, %v78
  %v94 = vpack.c.b16 %v81, %v80
  %v95 = vpack.c.b16 %v83, %v82
  %v96 = vpack.c.b16 %v85, %v84
  %v97 = vpack.c.b16 %v87, %v86
  %v98 = vpack.c.b16 %v89, %v88
  %v99 = vpack.c.b16 %v91, %v90
  %vm100 = vcmask 64512
  %v102 = vsel %vm100, %v92, 0
  %v105 = vsel %vm100, %v93, 0
  %v108 = vsel %vm100, %v94, 0
  %v111 = vsel %vm100, %v95, 0
  %v114 = vsel %vm100, %v96, 0
  %v117 = vsel %vm100, %v97, 0
  %v120 = vsel %vm100, %v98, 0
  %v123 = vsel %vm100, %v99, 0
  %vm125 = vcmask 1043456
  %v127 = vsel %vm125, %v52, 0
  %129 = vmatprep.subr.bf16.mxu0 0
  %130 = vmatpush1.bf16.msra.mxu0 %v127
  %131 = vmatprep.subr.bf16.mxu0 0
  %132 = vmatpush1.bf16.msra.mxu0 0
  %133 = vmatprep.subr.bf16.mxu0 0
  %134 = vmatpush1.bf16.msra.mxu0 0
  %135 = vmatprep.subr.bf16.mxu0 0
  %136 = vmatpush1.bf16.msra.mxu0 0
  %137 = vmatprep.subr.bf16.mxu0 0
  %138 = vmatpush1.bf16.msra.mxu0 0
  %139 = vmatprep.subr.bf16.mxu0 0
  %140 = vmatpush1.bf16.msra.mxu0 0
  %141 = vmatprep.subr.bf16.mxu0 0
  %142 = vmatpush1.bf16.msra.mxu0 0
  %143 = vmatprep.subr.bf16.mxu0 0
  %144 = vmatpush1.bf16.msra.mxu0 0
  %145 = vmatprep.subr.bf16.mxu0 0
  %146 = vmatpush1.bf16.msra.mxu0 0
  %147 = vmatprep.subr.bf16.mxu0 0
  %148 = vmatpush1.bf16.msra.mxu0 0
  %149 = vmatprep.subr.bf16.mxu0 0
  %150 = vmatpush1.bf16.msra.mxu0 0
  %151 = vmatprep.subr.bf16.mxu0 0
  %152 = vmatpush1.bf16.msra.mxu0 0
  %153 = vmatprep.subr.bf16.mxu0 0
  %154 = vmatpush1.bf16.msra.mxu0 0
  %155 = vmatprep.subr.bf16.mxu0 0
  %156 = vmatpush1.bf16.msra.mxu0 0
  %157 = vmatprep.subr.bf16.mxu0 0
  %158 = vmatpush1.bf16.msra.mxu0 0
  %159 = vmatprep.subr.bf16.mxu0 0
  %160 = vmatpush1.bf16.msra.mxu0 0
  %161 = vmatprep.mubr.bf16.mxu0 0
  %162 = vmatmul.mubr.bf16.gmra.mrb[0].mxu0 %v102
  %v163 = vpop.f32.mrb[0].mxu0
  %v164 = vadd.f32 %v58, %v163
  %v165 = vpop.f32.mrb[0].mxu0
  %v166 = vpop.f32.mrb[0].mxu0
  %v167 = vadd.f32 %v58, %v166
  %v168 = vpop.f32.mrb[0].mxu0
  %169 = vmatprep.mubr.bf16.mxu0 0
  %170 = vmatmul.mubr.bf16.gmra.mrb[0].mxu0 %v105
  %v171 = vpop.f32.mrb[0].mxu0
  %v172 = vadd.f32 %v58, %v171
  %v173 = vpop.f32.mrb[0].mxu0
  %v174 = vpop.f32.mrb[0].mxu0
  %v175 = vadd.f32 %v58, %v174
  %v176 = vpop.f32.mrb[0].mxu0
  %177 = vmatprep.mubr.bf16.mxu0 0
  %178 = vmatmul.mubr.bf16.gmra.mrb[0].mxu0 %v108
  %v179 = vpop.f32.mrb[0].mxu0
  %v180 = vadd.f32 %v58, %v179
  %v181 = vpop.f32.mrb[0].mxu0
  %v182 = vpop.f32.mrb[0].mxu0
  %v183 = vadd.f32 %v58, %v182
  %v184 = vpop.f32.mrb[0].mxu0
  %185 = vmatprep.mubr.bf16.mxu0 0
  %186 = vmatmul.mubr.bf16.gmra.mrb[0].mxu0 %v111
  %v187 = vpop.f32.mrb[0].mxu0
  %v188 = vadd.f32 %v58, %v187
  %v189 = vpop.f32.mrb[0].mxu0
  %v190 = vpop.f32.mrb[0].mxu0
  %v191 = vadd.f32 %v58, %v190
  %v192 = vpop.f32.mrb[0].mxu0
  %193 = vmatprep.mubr.bf16.mxu0 0
  %194 = vmatmul.mubr.bf16.gmra.mrb[0].mxu0 %v114
  %v195 = vpop.f32.mrb[0].mxu0
  %v196 = vadd.f32 %v58, %v195
  %v197 = vpop.f32.mrb[0].mxu0
  %v198 = vpop.f32.mrb[0].mxu0
  %v199 = vadd.f32 %v58, %v198
  %v200 = vpop.f32.mrb[0].mxu0
  %201 = vmatprep.mubr.bf16.mxu0 0
  %202 = vmatmul.mubr.bf16.gmra.mrb[0].mxu0 %v117
  %v203 = vpop.f32.mrb[0].mxu0
  %v204 = vadd.f32 %v58, %v203
  %v205 = vpop.f32.mrb[0].mxu0
  %v206 = vpop.f32.mrb[0].mxu0
  %v207 = vadd.f32 %v58, %v206
  %v208 = vpop.f32.mrb[0].mxu0
  %209 = vmatprep.mubr.bf16.mxu0 0
  %210 = vmatmul.mubr.bf16.gmra.mrb[0].mxu0 %v120
  %v211 = vpop.f32.mrb[0].mxu0
  %v212 = vadd.f32 %v58, %v211
  %v213 = vpop.f32.mrb[0].mxu0
  %v214 = vpop.f32.mrb[0].mxu0
  %v215 = vadd.f32 %v58, %v214
  %v216 = vpop.f32.mrb[0].mxu0
  %217 = vmatprep.mubr.bf16.mxu0 0
  %218 = vmatmul.mubr.bf16.gmra.mrb[0].mxu0 %v123
  %v219 = vpop.f32.mrb[0].mxu0
  %v220 = vadd.f32 %v58, %v219
  %v221 = vpop.f32.mrb[0].mxu0
  %v222 = vpop.f32.mrb[0].mxu0
  %v223 = vadd.f32 %v58, %v222
  %v224 = vpop.f32.mrb[0].mxu0
  %225 = vdwg.mxu0
  %vm226 = vcmp.ge.f32.partialorder %v164, 0.0
  %vm227 = vcmp.ge.f32.partialorder %v167, 0.0
  %vm228 = vcmp.ge.f32.partialorder %v172, 0.0
  %vm229 = vcmp.ge.f32.partialorder %v175, 0.0
  %vm230 = vcmp.ge.f32.partialorder %v180, 0.0
  %vm231 = vcmp.ge.f32.partialorder %v183, 0.0
  %vm232 = vcmp.ge.f32.partialorder %v188, 0.0
  %vm233 = vcmp.ge.f32.partialorder %v191, 0.0
  %vm234 = vcmp.ge.f32.partialorder %v196, 0.0
  %vm235 = vcmp.ge.f32.partialorder %v199, 0.0
  %vm236 = vcmp.ge.f32.partialorder %v204, 0.0
  %vm237 = vcmp.ge.f32.partialorder %v207, 0.0
  %vm238 = vcmp.ge.f32.partialorder %v212, 0.0
  %vm239 = vcmp.ge.f32.partialorder %v215, 0.0
  %vm240 = vcmp.ge.f32.partialorder %v220, 0.0
  %vm241 = vcmp.ge.f32.partialorder %v223, 0.0
  %v242 = vmul.f32 %v164, 0.1
  %v243 = vmul.f32 %v167, 0.1
  %v244 = vmul.f32 %v172, 0.1
  %v245 = vmul.f32 %v175, 0.1
  %v246 = vmul.f32 %v180, 0.1
  %v247 = vmul.f32 %v183, 0.1
  %v248 = vmul.f32 %v188, 0.1
  %v249 = vmul.f32 %v191, 0.1
  %v250 = vmul.f32 %v196, 0.1
  %v251 = vmul.f32 %v199, 0.1
  %v252 = vmul.f32 %v204, 0.1
  %v253 = vmul.f32 %v207, 0.1
  %v254 = vmul.f32 %v212, 0.1
  %v255 = vmul.f32 %v215, 0.1
  %v256 = vmul.f32 %v220, 0.1
  %v257 = vmul.f32 %v223, 0.1
  %v258 = vsel %vm226, %v164, %v242
  %v259 = vsel %vm227, %v167, %v243
  %v260 = vsel %vm228, %v172, %v244
  %v261 = vsel %vm229, %v175, %v245
  %v262 = vsel %vm230, %v180, %v246
  %v263 = vsel %vm231, %v183, %v247
  %v264 = vsel %vm232, %v188, %v248
  %v265 = vsel %vm233, %v191, %v249
  %v266 = vsel %vm234, %v196, %v250
  %v267 = vsel %vm235, %v199, %v251
  %v268 = vsel %vm236, %v204, %v252
  %v269 = vsel %vm237, %v207, %v253
  %v270 = vsel %vm238, %v212, %v254
  %v271 = vsel %vm239, %v215, %v255
  %v272 = vsel %vm240, %v220, %v256
  %v273 = vsel %vm241, %v223, %v257
  %v274 = vpack.c.bf16 %v259, %v258
  %v275 = vpack.c.bf16 %v261, %v260
  %v276 = vpack.c.bf16 %v263, %v262
  %v277 = vpack.c.bf16 %v265, %v264
  %v278 = vpack.c.bf16 %v267, %v266
  %v279 = vpack.c.bf16 %v269, %v268
  %v280 = vpack.c.bf16 %v271, %v270
  %v281 = vpack.c.bf16 %v273, %v272
  %v282 = vld [vmem:[%s4] sm:$0xf]
  %v283 = vld [vmem:[%s5] sm:$0x1]
  %v285 = vlaneseq
  %v286 = vshrl.u32 %v285, 7
  %v287 = vsub.s32 0, %v286
  %v288 = vrot.slane %v283, %v287
  %v291 = vsel %vm100, %v274, 0
  %v294 = vsel %vm100, %v275, 0
  %v297 = vsel %vm100, %v276, 0
  %v300 = vsel %vm100, %v277, 0
  %v303 = vsel %vm100, %v278, 0
  %v306 = vsel %vm100, %v279, 0
  %v309 = vsel %vm100, %v280, 0
  %v312 = vsel %vm100, %v281, 0
  %v315 = vsel %vm125, %v282, 0
  %317 = vmatprep.subr.bf16.mxu0 0
  %318 = vmatpush1.bf16.msra.mxu0 %v315
  %319 = vmatprep.subr.bf16.mxu0 0
  %320 = vmatpush1.bf16.msra.mxu0 0
  %321 = vmatprep.subr.bf16.mxu0 0
  %322 = vmatpush1.bf16.msra.mxu0 0
  %323 = vmatprep.subr.bf16.mxu0 0
  %324 = vmatpush1.bf16.msra.mxu0 0
  %325 = vmatprep.subr.bf16.mxu0 0
  %326 = vmatpush1.bf16.msra.mxu0 0
  %327 = vmatprep.subr.bf16.mxu0 0
  %328 = vmatpush1.bf16.msra.mxu0 0
  %329 = vmatprep.subr.bf16.mxu0 0
  %330 = vmatpush1.bf16.msra.mxu0 0
  %331 = vmatprep.subr.bf16.mxu0 0
  %332 = vmatpush1.bf16.msra.mxu0 0
  %333 = vmatprep.subr.bf16.mxu0 0
  %334 = vmatpush1.bf16.msra.mxu0 0
  %335 = vmatprep.subr.bf16.mxu0 0
  %336 = vmatpush1.bf16.msra.mxu0 0
  %337 = vmatprep.subr.bf16.mxu0 0
  %338 = vmatpush1.bf16.msra.mxu0 0
  %339 = vmatprep.subr.bf16.mxu0 0
  %340 = vmatpush1.bf16.msra.mxu0 0
  %341 = vmatprep.subr.bf16.mxu0 0
  %342 = vmatpush1.bf16.msra.mxu0 0
  %343 = vmatprep.subr.bf16.mxu0 0
  %344 = vmatpush1.bf16.msra.mxu0 0
  %345 = vmatprep.subr.bf16.mxu0 0
  %346 = vmatpush1.bf16.msra.mxu0 0
  %347 = vmatprep.subr.bf16.mxu0 0
  %348 = vmatpush1.bf16.msra.mxu0 0
  %349 = vmatprep.mubr.bf16.mxu0 0
  %350 = vmatmul.mubr.bf16.gmra.mrb[0].mxu0 %v291
  %v351 = vpop.f32.mrb[0].mxu0
  %v352 = vadd.f32 %v288, %v351
  %v353 = vpop.f32.mrb[0].mxu0
  %v354 = vpop.f32.mrb[0].mxu0
  %v355 = vadd.f32 %v288, %v354
  %v356 = vpop.f32.mrb[0].mxu0
  %357 = vmatprep.mubr.bf16.mxu0 0
  %358 = vmatmul.mubr.bf16.gmra.mrb[0].mxu0 %v294
  %v359 = vpop.f32.mrb[0].mxu0
  %v360 = vadd.f32 %v288, %v359
  %v361 = vpop.f32.mrb[0].mxu0
  %v362 = vpop.f32.mrb[0].mxu0
  %v363 = vadd.f32 %v288, %v362
  %v364 = vpop.f32.mrb[0].mxu0
  %365 = vmatprep.mubr.bf16.mxu0 0
  %366 = vmatmul.mubr.bf16.gmra.mrb[0].mxu0 %v297
  %v367 = vpop.f32.mrb[0].mxu0
  %v368 = vadd.f32 %v288, %v367
  %v369 = vpop.f32.mrb[0].mxu0
  %v370 = vpop.f32.mrb[0].mxu0
  %v371 = vadd.f32 %v288, %v370
  %v372 = vpop.f32.mrb[0].mxu0
  %373 = vmatprep.mubr.bf16.mxu0 0
  %374 = vmatmul.mubr.bf16.gmra.mrb[0].mxu0 %v300
  %v375 = vpop.f32.mrb[0].mxu0
  %v376 = vadd.f32 %v288, %v375
  %v377 = vpop.f32.mrb[0].mxu0
  %v378 = vpop.f32.mrb[0].mxu0
  %v379 = vadd.f32 %v288, %v378
  %v380 = vpop.f32.mrb[0].mxu0
  %381 = vmatprep.mubr.bf16.mxu0 0
  %382 = vmatmul.mubr.bf16.gmra.mrb[0].mxu0 %v303
  %v383 = vpop.f32.mrb[0].mxu0
  %v384 = vadd.f32 %v288, %v383
  %v385 = vpop.f32.mrb[0].mxu0
  %v386 = vpop.f32.mrb[0].mxu0
  %v387 = vadd.f32 %v288, %v386
  %v388 = vpop.f32.mrb[0].mxu0
  %389 = vmatprep.mubr.bf16.mxu0 0
  %390 = vmatmul.mubr.bf16.gmra.mrb[0].mxu0 %v306
  %v391 = vpop.f32.mrb[0].mxu0
  %v392 = vadd.f32 %v288, %v391
  %v393 = vpop.f32.mrb[0].mxu0
  %v394 = vpop.f32.mrb[0].mxu0
  %v395 = vadd.f32 %v288, %v394
  %v396 = vpop.f32.mrb[0].mxu0
  %397 = vmatprep.mubr.bf16.mxu0 0
  %398 = vmatmul.mubr.bf16.gmra.mrb[0].mxu0 %v309
  %v399 = vpop.f32.mrb[0].mxu0
  %v400 = vadd.f32 %v288, %v399
  %v401 = vpop.f32.mrb[0].mxu0
  %v402 = vpop.f32.mrb[0].mxu0
  %v403 = vadd.f32 %v288, %v402
  %v404 = vpop.f32.mrb[0].mxu0
  %405 = vmatprep.mubr.bf16.mxu0 0
  %406 = vmatmul.mubr.bf16.gmra.mrb[0].mxu0 %v312
  %v407 = vpop.f32.mrb[0].mxu0
  %v408 = vadd.f32 %v288, %v407
  %v409 = vpop.f32.mrb[0].mxu0
  %v410 = vpop.f32.mrb[0].mxu0
  %v411 = vadd.f32 %v288, %v410
  %v412 = vpop.f32.mrb[0].mxu0
  %413 = vdwg.mxu0
  %v414 = vld [vmem:[%s6] sm:$0xf]
  %v415 = vld [vmem:[%s7] sm:$0x1]
  %v417 = vlaneseq
  %v418 = vshrl.u32 %v417, 7
  %v419 = vsub.s32 0, %v418
  %v420 = vrot.slane %v415, %v419
  %v423 = vsel %vm125, %v414, 0
  %425 = vmatprep.subr.bf16.mxu0 0
  %426 = vmatpush1.bf16.msra.mxu0 %v423
  %427 = vmatprep.subr.bf16.mxu0 0
  %428 = vmatpush1.bf16.msra.mxu0 0
  %429 = vmatprep.subr.bf16.mxu0 0
  %430 = vmatpush1.bf16.msra.mxu0 0
  %431 = vmatprep.subr.bf16.mxu0 0
  %432 = vmatpush1.bf16.msra.mxu0 0
  %433 = vmatprep.subr.bf16.mxu0 0
  %434 = vmatpush1.bf16.msra.mxu0 0
  %435 = vmatprep.subr.bf16.mxu0 0
  %436 = vmatpush1.bf16.msra.mxu0 0
  %437 = vmatprep.subr.bf16.mxu0 0
  %438 = vmatpush1.bf16.msra.mxu0 0
  %439 = vmatprep.subr.bf16.mxu0 0
  %440 = vmatpush1.bf16.msra.mxu0 0
  %441 = vmatprep.subr.bf16.mxu0 0
  %442 = vmatpush1.bf16.msra.mxu0 0
  %443 = vmatprep.subr.bf16.mxu0 0
  %444 = vmatpush1.bf16.msra.mxu0 0
  %445 = vmatprep.subr.bf16.mxu0 0
  %446 = vmatpush1.bf16.msra.mxu0 0
  %447 = vmatprep.subr.bf16.mxu0 0
  %448 = vmatpush1.bf16.msra.mxu0 0
  %449 = vmatprep.subr.bf16.mxu0 0
  %450 = vmatpush1.bf16.msra.mxu0 0
  %451 = vmatprep.subr.bf16.mxu0 0
  %452 = vmatpush1.bf16.msra.mxu0 0
  %453 = vmatprep.subr.bf16.mxu0 0
  %454 = vmatpush1.bf16.msra.mxu0 0
  %455 = vmatprep.subr.bf16.mxu0 0
  %456 = vmatpush1.bf16.msra.mxu0 0
  %457 = vmatprep.mubr.bf16.mxu0 0
  %458 = vmatmul.mubr.bf16.gmra.mrb[0].mxu0 %v102
  %v459 = vpop.f32.mrb[0].mxu0
  %v460 = vadd.f32 %v420, %v459
  %v461 = vpop.f32.mrb[0].mxu0
  %v462 = vpop.f32.mrb[0].mxu0
  %v463 = vadd.f32 %v420, %v462
  %v464 = vpop.f32.mrb[0].mxu0
  %465 = vmatprep.mubr.bf16.mxu0 0
  %466 = vmatmul.mubr.bf16.gmra.mrb[0].mxu0 %v105
  %v467 = vpop.f32.mrb[0].mxu0
  %v468 = vadd.f32 %v420, %v467
  %v469 = vpop.f32.mrb[0].mxu0
  %v470 = vpop.f32.mrb[0].mxu0
  %v471 = vadd.f32 %v420, %v470
  %v472 = vpop.f32.mrb[0].mxu0
  %473 = vmatprep.mubr.bf16.mxu0 0
  %474 = vmatmul.mubr.bf16.gmra.mrb[0].mxu0 %v108
  %v475 = vpop.f32.mrb[0].mxu0
  %v476 = vadd.f32 %v420, %v475
  %v477 = vpop.f32.mrb[0].mxu0
  %v478 = vpop.f32.mrb[0].mxu0
  %v479 = vadd.f32 %v420, %v478
  %v480 = vpop.f32.mrb[0].mxu0
  %481 = vmatprep.mubr.bf16.mxu0 0
  %482 = vmatmul.mubr.bf16.gmra.mrb[0].mxu0 %v111
  %v483 = vpop.f32.mrb[0].mxu0
  %v484 = vadd.f32 %v420, %v483
  %v485 = vpop.f32.mrb[0].mxu0
  %v486 = vpop.f32.mrb[0].mxu0
  %v487 = vadd.f32 %v420, %v486
  %v488 = vpop.f32.mrb[0].mxu0
  %489 = vmatprep.mubr.bf16.mxu0 0
  %490 = vmatmul.mubr.bf16.gmra.mrb[0].mxu0 %v114
  %v491 = vpop.f32.mrb[0].mxu0
  %v492 = vadd.f32 %v420, %v491
  %v493 = vpop.f32.mrb[0].mxu0
  %v494 = vpop.f32.mrb[0].mxu0
  %v495 = vadd.f32 %v420, %v494
  %v496 = vpop.f32.mrb[0].mxu0
  %497 = vmatprep.mubr.bf16.mxu0 0
  %498 = vmatmul.mubr.bf16.gmra.mrb[0].mxu0 %v117
  %v499 = vpop.f32.mrb[0].mxu0
  %v500 = vadd.f32 %v420, %v499
  %v501 = vpop.f32.mrb[0].mxu0
  %v502 = vpop.f32.mrb[0].mxu0
  %v503 = vadd.f32 %v420, %v502
  %v504 = vpop.f32.mrb[0].mxu0
  %505 = vmatprep.mubr.bf16.mxu0 0
  %506 = vmatmul.mubr.bf16.gmra.mrb[0].mxu0 %v120
  %v507 = vpop.f32.mrb[0].mxu0
  %v508 = vadd.f32 %v420, %v507
  %v509 = vpop.f32.mrb[0].mxu0
  %v510 = vpop.f32.mrb[0].mxu0
  %v511 = vadd.f32 %v420, %v510
  %v512 = vpop.f32.mrb[0].mxu0
  %513 = vmatprep.mubr.bf16.mxu0 0
  %514 = vmatmul.mubr.bf16.gmra.mrb[0].mxu0 %v123
  %v515 = vpop.f32.mrb[0].mxu0
  %v516 = vadd.f32 %v420, %v515
  %v517 = vpop.f32.mrb[0].mxu0
  %v518 = vpop.f32.mrb[0].mxu0
  %v519 = vadd.f32 %v420, %v518
  %v520 = vpop.f32.mrb[0].mxu0
  %521 = vdwg.mxu0
  %vm522 = vcmp.ge.f32.partialorder %v460, 0.0
  %vm523 = vcmp.ge.f32.partialorder %v463, 0.0
  %vm524 = vcmp.ge.f32.partialorder %v468, 0.0
  %vm525 = vcmp.ge.f32.partialorder %v471, 0.0
  %vm526 = vcmp.ge.f32.partialorder %v476, 0.0
  %vm527 = vcmp.ge.f32.partialorder %v479, 0.0
  %vm528 = vcmp.ge.f32.partialorder %v484, 0.0
  %vm529 = vcmp.ge.f32.partialorder %v487, 0.0
  %vm530 = vcmp.ge.f32.partialorder %v492, 0.0
  %vm531 = vcmp.ge.f32.partialorder %v495, 0.0
  %vm532 = vcmp.ge.f32.partialorder %v500, 0.0
  %vm533 = vcmp.ge.f32.partialorder %v503, 0.0
  %vm534 = vcmp.ge.f32.partialorder %v508, 0.0
  %vm535 = vcmp.ge.f32.partialorder %v511, 0.0
  %vm536 = vcmp.ge.f32.partialorder %v516, 0.0
  %vm537 = vcmp.ge.f32.partialorder %v519, 0.0
  %v538 = vmul.f32 %v460, 0.1
  %v539 = vmul.f32 %v463, 0.1
  %v540 = vmul.f32 %v468, 0.1
  %v541 = vmul.f32 %v471, 0.1
  %v542 = vmul.f32 %v476, 0.1
  %v543 = vmul.f32 %v479, 0.1
  %v544 = vmul.f32 %v484, 0.1
  %v545 = vmul.f32 %v487, 0.1
  %v546 = vmul.f32 %v492, 0.1
  %v547 = vmul.f32 %v495, 0.1
  %v548 = vmul.f32 %v500, 0.1
  %v549 = vmul.f32 %v503, 0.1
  %v550 = vmul.f32 %v508, 0.1
  %v551 = vmul.f32 %v511, 0.1
  %v552 = vmul.f32 %v516, 0.1
  %v553 = vmul.f32 %v519, 0.1
  %v554 = vsel %vm522, %v460, %v538
  %v555 = vsel %vm523, %v463, %v539
  %v556 = vsel %vm524, %v468, %v540
  %v557 = vsel %vm525, %v471, %v541
  %v558 = vsel %vm526, %v476, %v542
  %v559 = vsel %vm527, %v479, %v543
  %v560 = vsel %vm528, %v484, %v544
  %v561 = vsel %vm529, %v487, %v545
  %v562 = vsel %vm530, %v492, %v546
  %v563 = vsel %vm531, %v495, %v547
  %v564 = vsel %vm532, %v500, %v548
  %v565 = vsel %vm533, %v503, %v549
  %v566 = vsel %vm534, %v508, %v550
  %v567 = vsel %vm535, %v511, %v551
  %v568 = vsel %vm536, %v516, %v552
  %v569 = vsel %vm537, %v519, %v553
  %v570 = vpack.c.bf16 %v555, %v554
  %v571 = vpack.c.bf16 %v557, %v556
  %v572 = vpack.c.bf16 %v559, %v558
  %v573 = vpack.c.bf16 %v561, %v560
  %v574 = vpack.c.bf16 %v563, %v562
  %v575 = vpack.c.bf16 %v565, %v564
  %v576 = vpack.c.bf16 %v567, %v566
  %v577 = vpack.c.bf16 %v569, %v568
  %v578 = vld [vmem:[%s8] sm:$0xf]
  %v579 = vld [vmem:[%s9] sm:$0x1]
  %v581 = vlaneseq
  %v582 = vshrl.u32 %v581, 7
  %v583 = vsub.s32 0, %v582
  %v584 = vrot.slane %v579, %v583
  %v587 = vsel %vm100, %v570, 0
  %v590 = vsel %vm100, %v571, 0
  %v593 = vsel %vm100, %v572, 0
  %v596 = vsel %vm100, %v573, 0
  %v599 = vsel %vm100, %v574, 0
  %v602 = vsel %vm100, %v575, 0
  %v605 = vsel %vm100, %v576, 0
  %v608 = vsel %vm100, %v577, 0
  %v611 = vsel %vm125, %v578, 0
  %613 = vmatprep.subr.bf16.mxu0 0
  %614 = vmatpush1.bf16.msra.mxu0 %v611
  %615 = vmatprep.subr.bf16.mxu0 0
  %616 = vmatpush1.bf16.msra.mxu0 0
  %617 = vmatprep.subr.bf16.mxu0 0
  %618 = vmatpush1.bf16.msra.mxu0 0
  %619 = vmatprep.subr.bf16.mxu0 0
  %620 = vmatpush1.bf16.msra.mxu0 0
  %621 = vmatprep.subr.bf16.mxu0 0
  %622 = vmatpush1.bf16.msra.mxu0 0
  %623 = vmatprep.subr.bf16.mxu0 0
  %624 = vmatpush1.bf16.msra.mxu0 0
  %625 = vmatprep.subr.bf16.mxu0 0
  %626 = vmatpush1.bf16.msra.mxu0 0
  %627 = vmatprep.subr.bf16.mxu0 0
  %628 = vmatpush1.bf16.msra.mxu0 0
  %629 = vmatprep.subr.bf16.mxu0 0
  %630 = vmatpush1.bf16.msra.mxu0 0
  %631 = vmatprep.subr.bf16.mxu0 0
  %632 = vmatpush1.bf16.msra.mxu0 0
  %633 = vmatprep.subr.bf16.mxu0 0
  %634 = vmatpush1.bf16.msra.mxu0 0
  %635 = vmatprep.subr.bf16.mxu0 0
  %636 = vmatpush1.bf16.msra.mxu0 0
  %637 = vmatprep.subr.bf16.mxu0 0
  %638 = vmatpush1.bf16.msra.mxu0 0
  %639 = vmatprep.subr.bf16.mxu0 0
  %640 = vmatpush1.bf16.msra.mxu0 0
  %641 = vmatprep.subr.bf16.mxu0 0
  %642 = vmatpush1.bf16.msra.mxu0 0
  %643 = vmatprep.subr.bf16.mxu0 0
  %644 = vmatpush1.bf16.msra.mxu0 0
  %645 = vmatprep.mubr.bf16.mxu0 0
  %646 = vmatmul.mubr.bf16.gmra.mrb[0].mxu0 %v587
  %v647 = vpop.f32.mrb[0].mxu0
  %v648 = vadd.f32 %v584, %v647
  %v649 = vpop.f32.mrb[0].mxu0
  %v650 = vpop.f32.mrb[0].mxu0
  %v651 = vadd.f32 %v584, %v650
  %v652 = vpop.f32.mrb[0].mxu0
  %653 = vmatprep.mubr.bf16.mxu0 0
  %654 = vmatmul.mubr.bf16.gmra.mrb[0].mxu0 %v590
  %v655 = vpop.f32.mrb[0].mxu0
  %v656 = vadd.f32 %v584, %v655
  %v657 = vpop.f32.mrb[0].mxu0
  %v658 = vpop.f32.mrb[0].mxu0
  %v659 = vadd.f32 %v584, %v658
  %v660 = vpop.f32.mrb[0].mxu0
  %661 = vmatprep.mubr.bf16.mxu0 0
  %662 = vmatmul.mubr.bf16.gmra.mrb[0].mxu0 %v593
  %v663 = vpop.f32.mrb[0].mxu0
  %v664 = vadd.f32 %v584, %v663
  %v665 = vpop.f32.mrb[0].mxu0
  %v666 = vpop.f32.mrb[0].mxu0
  %v667 = vadd.f32 %v584, %v666
  %v668 = vpop.f32.mrb[0].mxu0
  %669 = vmatprep.mubr.bf16.mxu0 0
  %670 = vmatmul.mubr.bf16.gmra.mrb[0].mxu0 %v596
  %v671 = vpop.f32.mrb[0].mxu0
  %v672 = vadd.f32 %v584, %v671
  %v673 = vpop.f32.mrb[0].mxu0
  %v674 = vpop.f32.mrb[0].mxu0
  %v675 = vadd.f32 %v584, %v674
  %v676 = vpop.f32.mrb[0].mxu0
  %677 = vmatprep.mubr.bf16.mxu0 0
  %678 = vmatmul.mubr.bf16.gmra.mrb[0].mxu0 %v599
  %v679 = vpop.f32.mrb[0].mxu0
  %v680 = vadd.f32 %v584, %v679
  %v681 = vpop.f32.mrb[0].mxu0
  %v682 = vpop.f32.mrb[0].mxu0
  %v683 = vadd.f32 %v584, %v682
  %v684 = vpop.f32.mrb[0].mxu0
  %685 = vmatprep.mubr.bf16.mxu0 0
  %686 = vmatmul.mubr.bf16.gmra.mrb[0].mxu0 %v602
  %v687 = vpop.f32.mrb[0].mxu0
  %v688 = vadd.f32 %v584, %v687
  %v689 = vpop.f32.mrb[0].mxu0
  %v690 = vpop.f32.mrb[0].mxu0
  %v691 = vadd.f32 %v584, %v690
  %v692 = vpop.f32.mrb[0].mxu0
  %693 = vmatprep.mubr.bf16.mxu0 0
  %694 = vmatmul.mubr.bf16.gmra.mrb[0].mxu0 %v605
  %v695 = vpop.f32.mrb[0].mxu0
  %v696 = vadd.f32 %v584, %v695
  %v697 = vpop.f32.mrb[0].mxu0
  %v698 = vpop.f32.mrb[0].mxu0
  %v699 = vadd.f32 %v584, %v698
  %v700 = vpop.f32.mrb[0].mxu0
  %701 = vmatprep.mubr.bf16.mxu0 0
  %702 = vmatmul.mubr.bf16.gmra.mrb[0].mxu0 %v608
  %v703 = vpop.f32.mrb[0].mxu0
  %v704 = vadd.f32 %v584, %v703
  %v705 = vpop.f32.mrb[0].mxu0
  %v706 = vpop.f32.mrb[0].mxu0
  %v707 = vadd.f32 %v584, %v706
  %v708 = vpop.f32.mrb[0].mxu0
  %709 = vdwg.mxu0
  %v710 = vld [vmem:[%s1] sm:$0xff]
  %v711 = vld [vmem:[%s1 + $0x8] sm:$0xff]
  %v712 = vld [vmem:[%s1 + $0x10] sm:$0xff]
  %v713 = vld [vmem:[%s1 + $0x18] sm:$0xff]
  %v714 = vld [vmem:[%s1 + $0x20] sm:$0xff]
  %v715 = vld [vmem:[%s1 + $0x28] sm:$0xff]
  %v716 = vld [vmem:[%s1 + $0x30] sm:$0xff]
  %v717 = vld [vmem:[%s1 + $0x38] sm:$0xff]
  %v718 = vld [vmem:[%s1 + $0x40] sm:$0xff]
  %v719 = vld [vmem:[%s1 + $0x48] sm:$0xff]
  %v720 = vld [vmem:[%s1 + $0x50] sm:$0xff]
  %v721 = vld [vmem:[%s1 + $0x58] sm:$0xff]
  %v722 = vld [vmem:[%s1 + $0x60] sm:$0xff]
  %v723 = vld [vmem:[%s1 + $0x68] sm:$0xff]
  %v724 = vld [vmem:[%s1 + $0x70] sm:$0xff]
  %v725 = vld [vmem:[%s1 + $0x78] sm:$0xff]
  %v726 = vadd.f32 %v352, 1.0
  %v727 = vadd.f32 %v355, 1.0
  %v728 = vadd.f32 %v360, 1.0
  %v729 = vadd.f32 %v363, 1.0
  %v730 = vadd.f32 %v368, 1.0
  %v731 = vadd.f32 %v371, 1.0
  %v732 = vadd.f32 %v376, 1.0
  %v733 = vadd.f32 %v379, 1.0
  %v734 = vadd.f32 %v384, 1.0
  %v735 = vadd.f32 %v387, 1.0
  %v736 = vadd.f32 %v392, 1.0
  %v737 = vadd.f32 %v395, 1.0
  %v738 = vadd.f32 %v400, 1.0
  %v739 = vadd.f32 %v403, 1.0
  %v740 = vadd.f32 %v408, 1.0
  %v741 = vadd.f32 %v411, 1.0
  %v742 = vmul.f32 %v710, %v726
  %v743 = vmul.f32 %v711, %v727
  %v744 = vmul.f32 %v712, %v728
  %v745 = vmul.f32 %v713, %v729
  %v746 = vmul.f32 %v714, %v730
  %v747 = vmul.f32 %v715, %v731
  %v748 = vmul.f32 %v716, %v732
  %v749 = vmul.f32 %v717, %v733
  %v750 = vmul.f32 %v718, %v734
  %v751 = vmul.f32 %v719, %v735
  %v752 = vmul.f32 %v720, %v736
  %v753 = vmul.f32 %v721, %v737
  %v754 = vmul.f32 %v722, %v738
  %v755 = vmul.f32 %v723, %v739
  %v756 = vmul.f32 %v724, %v740
  %v757 = vmul.f32 %v725, %v741
  %v758 = vadd.f32 %v742, %v648
  %v759 = vadd.f32 %v743, %v651
  %v760 = vadd.f32 %v744, %v656
  %v761 = vadd.f32 %v745, %v659
  %v762 = vadd.f32 %v746, %v664
  %v763 = vadd.f32 %v747, %v667
  %v764 = vadd.f32 %v748, %v672
  %v765 = vadd.f32 %v749, %v675
  %v766 = vadd.f32 %v750, %v680
  %v767 = vadd.f32 %v751, %v683
  %v768 = vadd.f32 %v752, %v688
  %v769 = vadd.f32 %v753, %v691
  %v770 = vadd.f32 %v754, %v696
  %v771 = vadd.f32 %v755, %v699
  %v772 = vadd.f32 %v756, %v704
  %v773 = vadd.f32 %v757, %v707
  %774 = vst.msk [vmem:[%s10] sm:$0xff] %vm100, %v758
  %775 = vst.msk [vmem:[%s10 + $0x8] sm:$0xff] %vm100, %v759
  %776 = vst.msk [vmem:[%s10 + $0x10] sm:$0xff] %vm100, %v760
  %777 = vst.msk [vmem:[%s10 + $0x18] sm:$0xff] %vm100, %v761
  %778 = vst.msk [vmem:[%s10 + $0x20] sm:$0xff] %vm100, %v762
  %779 = vst.msk [vmem:[%s10 + $0x28] sm:$0xff] %vm100, %v763
  %780 = vst.msk [vmem:[%s10 + $0x30] sm:$0xff] %vm100, %v764
  %781 = vst.msk [vmem:[%s10 + $0x38] sm:$0xff] %vm100, %v765
  %782 = vst.msk [vmem:[%s10 + $0x40] sm:$0xff] %vm100, %v766
  %783 = vst.msk [vmem:[%s10 + $0x48] sm:$0xff] %vm100, %v767
  %784 = vst.msk [vmem:[%s10 + $0x50] sm:$0xff] %vm100, %v768
  %785 = vst.msk [vmem:[%s10 + $0x58] sm:$0xff] %vm100, %v769
  %786 = vst.msk [vmem:[%s10 + $0x60] sm:$0xff] %vm100, %v770
  %787 = vst.msk [vmem:[%s10 + $0x68] sm:$0xff] %vm100, %v771
  %788 = vst.msk [vmem:[%s10 + $0x70] sm:$0xff] %vm100, %v772
  %789 = vst.msk [vmem:[%s10 + $0x78] sm:$0xff] %vm100, %v773
  // Predicated region
  $region42: #{feedback_urdnet.57} parent=0 // pred_check
    _
  $region43: #{feedback_urdnet.57} parent=0 // pred_check_branch
    %791 = sbr.rel (0) target = $region45
  $region44: #{feedback_urdnet.57} parent=0 // pred_region
    _
  $region45: #{feedback_urdnet.57} parent=0 // pred_fallthru
    _
  // Predicated region
  $region46: #{feedback_urdnet.57} parent=0 // pred_check
    _
  $region47: #{feedback_urdnet.57} parent=0 // pred_check_branch
    %793 = sbr.rel (0) target = $region49
  $region48: #{feedback_urdnet.57} parent=0 // pred_region
    _
  $region49: #{feedback_urdnet.57} parent=0 // pred_fallthru
    _

// kernel: feedback_urdnet.58
$region0: #{feedback_urdnet.58}
  #allocation0 [shape = 'u32[]', space=smem, size = 0x4, offset = 0x4, fixed_abs, tag = 'smem constant byte address 0x4 - core index']
  #allocation1 [shape = 'u32[144,128]{1,0:T(1,128)}', space=vmem, size = 0x12000, scoped, tag = 'internal scratch']
  %s0 = inlined_call_operand.vmem [shape: bf16[128,72], index: 0, kind: input, shape index: {}]
  %s1 = inlined_call_operand.vmem [shape: bf16[72,4], index: 1, kind: input, shape index: {}]
  %s2 = inlined_call_operand.vmem [shape: f32[1,4], index: 2, kind: input, shape index: {}]
  %s3 = inlined_call_operand.vmem [shape: f32[128,4], index: 3, kind: output, shape index: {}]
  %s4 = sld [smem:[#allocation0]]
  $region22: #{feedback_urdnet.58} parent=0
    _
  %s6 = ssub.s32 1, %s4
  %s7 = scalar_select 0, %s6, %s4
  // Predicated region
  $region2: #{feedback_urdnet.58} parent=0 // pred_check
    _
  $region3: #{feedback_urdnet.58} parent=0 // pred_check_branch
    %9 = sbr.rel (0) target = $region5
  $region4: #{feedback_urdnet.58} parent=0 // pred_region
    _
  $region5: #{feedback_urdnet.58} parent=0 // pred_fallthru
    _
  // Predicated region
  $region6: #{feedback_urdnet.58} parent=0 // pred_check
    _
  $region7: #{feedback_urdnet.58} parent=0 // pred_check_branch
    %11 = sbr.rel (0) target = $region9
  $region8: #{feedback_urdnet.58} parent=0 // pred_region
    _
  $region9: #{feedback_urdnet.58} parent=0 // pred_fallthru
    _
  // Predicated region
  $region10: #{feedback_urdnet.58} parent=0 // pred_check
    _
  $region11: #{feedback_urdnet.58} parent=0 // pred_check_branch
    %13 = sbr.rel (0) target = $region13
  $region12: #{feedback_urdnet.58} parent=0 // pred_region
    _
  $region13: #{feedback_urdnet.58} parent=0 // pred_fallthru
    _
  %v15 = vld [vmem:[%s0] sm:$0xf]
  %v16 = vld [vmem:[%s0 + $0x4] sm:$0xf]
  %v17 = vld [vmem:[%s0 + $0x8] sm:$0xf]
  %v18 = vld [vmem:[%s0 + $0xc] sm:$0xf]
  %v19 = vld [vmem:[%s0 + $0x10] sm:$0xf]
  %v20 = vld [vmem:[%s0 + $0x14] sm:$0xf]
  %v21 = vld [vmem:[%s0 + $0x18] sm:$0xf]
  %v22 = vld [vmem:[%s0 + $0x1c] sm:$0xf]
  %v23 = vld [vmem:[%s0 + $0x20] sm:$0xf]
  %v24 = vld [vmem:[%s0 + $0x24] sm:$0xf]
  %v25 = vld [vmem:[%s0 + $0x28] sm:$0xf]
  %v26 = vld [vmem:[%s0 + $0x2c] sm:$0xf]
  %v27 = vld [vmem:[%s0 + $0x30] sm:$0xf]
  %v28 = vld [vmem:[%s0 + $0x34] sm:$0xf]
  %v29 = vld [vmem:[%s0 + $0x38] sm:$0xf]
  %v30 = vld [vmem:[%s0 + $0x3c] sm:$0xf]
  %v31 = vld [vmem:[%s1] sm:$0xf]
  %v32 = vld [vmem:[%s1 + $0x4] sm:$0xf]
  %v33 = vld [vmem:[%s1 + $0x8] sm:$0xf]
  %v34 = vld [vmem:[%s1 + $0xc] sm:$0xf]
  %v35 = vld [vmem:[%s1 + $0x10] sm:$0xf]
  %v36 = vld [vmem:[%s1 + $0x14] sm:$0xf]
  %v37 = vld [vmem:[%s1 + $0x18] sm:$0xf]
  %v38 = vld [vmem:[%s1 + $0x1c] sm:$0xf]
  %v39 = vld [vmem:[%s1 + $0x20] sm:$0xf]
  %v40 = vld [vmem:[%s2] sm:$0x1]
  %v42 = vlaneseq
  %v43 = vshrl.u32 %v42, 7
  %v44 = vsub.s32 0, %v43
  %v45 = vrot.slane %v40, %v44
  %v63 = vunpack.c.l.b16 %v15
  %v64 = vunpack.c.l.b16 %v16
  %v65 = vunpack.c.l.b16 %v17
  %v66 = vunpack.c.l.b16 %v18
  %v67 = vunpack.c.l.b16 %v19
  %v68 = vunpack.c.l.b16 %v20
  %v69 = vunpack.c.l.b16 %v21
  %v70 = vunpack.c.l.b16 %v22
  %v71 = vunpack.c.l.b16 %v23
  %v72 = vunpack.c.l.b16 %v24
  %v73 = vunpack.c.l.b16 %v25
  %v74 = vunpack.c.l.b16 %v26
  %v75 = vunpack.c.l.b16 %v27
  %v76 = vunpack.c.l.b16 %v28
  %v77 = vunpack.c.l.b16 %v29
  %v78 = vunpack.c.l.b16 %v30
  %v79 = vpack.c.b16 %v64, %v63
  %v80 = vpack.c.b16 %v66, %v65
  %v81 = vpack.c.b16 %v68, %v67
  %v82 = vpack.c.b16 %v70, %v69
  %v83 = vpack.c.b16 %v72, %v71
  %v84 = vpack.c.b16 %v74, %v73
  %v85 = vpack.c.b16 %v76, %v75
  %v86 = vpack.c.b16 %v78, %v77
  %v96 = vunpack.c.l.b16 %v31
  %v97 = vunpack.c.l.b16 %v32
  %v98 = vunpack.c.l.b16 %v33
  %v99 = vunpack.c.l.b16 %v34
  %v100 = vunpack.c.l.b16 %v35
  %v101 = vunpack.c.l.b16 %v36
  %v102 = vunpack.c.l.b16 %v37
  %v103 = vunpack.c.l.b16 %v38
  %v104 = vunpack.c.l.b16 %v39
  %v105 = vpack.c.b16 %v97, %v96
  %v106 = vpack.c.b16 %v99, %v98
  %v107 = vpack.c.b16 %v101, %v100
  %v108 = vpack.c.b16 %v103, %v102
  %v109 = vpack.c.b16 %v104, %v104
  %vm114 = vcmask 588800
  %v116 = vsel %vm114, %v79, 0
  %v119 = vsel %vm114, %v80, 0
  %v122 = vsel %vm114, %v81, 0
  %v125 = vsel %vm114, %v82, 0
  %v128 = vsel %vm114, %v83, 0
  %v131 = vsel %vm114, %v84, 0
  %v134 = vsel %vm114, %v85, 0
  %v137 = vsel %vm114, %v86, 0
  %vm139 = vcmask 1043456
  %v141 = vsel %vm139, %v109, 0
  %143 = vmatprep.subr.bf16.mxu0 0
  %144 = vmatpush1.bf16.msra.mxu0 %v105
  %145 = vmatprep.subr.bf16.mxu0 0
  %146 = vmatpush1.bf16.msra.mxu0 %v106
  %147 = vmatprep.subr.bf16.mxu0 0
  %148 = vmatpush1.bf16.msra.mxu0 %v107
  %149 = vmatprep.subr.bf16.mxu0 0
  %150 = vmatpush1.bf16.msra.mxu0 %v108
  %151 = vmatprep.subr.bf16.mxu0 0
  %152 = vmatpush1.bf16.msra.mxu0 %v141
  %153 = vmatprep.subr.bf16.mxu0 0
  %154 = vmatpush1.bf16.msra.mxu0 0
  %155 = vmatprep.subr.bf16.mxu0 0
  %156 = vmatpush1.bf16.msra.mxu0 0
  %157 = vmatprep.subr.bf16.mxu0 0
  %158 = vmatpush1.bf16.msra.mxu0 0
  %159 = vmatprep.subr.bf16.mxu0 0
  %160 = vmatpush1.bf16.msra.mxu0 0
  %161 = vmatprep.subr.bf16.mxu0 0
  %162 = vmatpush1.bf16.msra.mxu0 0
  %163 = vmatprep.subr.bf16.mxu0 0
  %164 = vmatpush1.bf16.msra.mxu0 0
  %165 = vmatprep.subr.bf16.mxu0 0
  %166 = vmatpush1.bf16.msra.mxu0 0
  %167 = vmatprep.subr.bf16.mxu0 0
  %168 = vmatpush1.bf16.msra.mxu0 0
  %169 = vmatprep.subr.bf16.mxu0 0
  %170 = vmatpush1.bf16.msra.mxu0 0
  %171 = vmatprep.subr.bf16.mxu0 0
  %172 = vmatpush1.bf16.msra.mxu0 0
  %173 = vmatprep.subr.bf16.mxu0 0
  %174 = vmatpush1.bf16.msra.mxu0 0
  %175 = vmatprep.mubr.bf16.mxu0 0
  %176 = vmatmul.mubr.bf16.gmra.mrb[0].mxu0 %v116
  %v177 = vpop.f32.mrb[0].mxu0
  %v178 = vadd.f32 %v45, %v177
  %v179 = vpop.f32.mrb[0].mxu0
  %v180 = vpop.f32.mrb[0].mxu0
  %v181 = vadd.f32 %v45, %v180
  %v182 = vpop.f32.mrb[0].mxu0
  %183 = vmatprep.mubr.bf16.mxu0 0
  %184 = vmatmul.mubr.bf16.gmra.mrb[0].mxu0 %v119
  %v185 = vpop.f32.mrb[0].mxu0
  %v186 = vadd.f32 %v45, %v185
  %v187 = vpop.f32.mrb[0].mxu0
  %v188 = vpop.f32.mrb[0].mxu0
  %v189 = vadd.f32 %v45, %v188
  %v190 = vpop.f32.mrb[0].mxu0
  %191 = vmatprep.mubr.bf16.mxu0 0
  %192 = vmatmul.mubr.bf16.gmra.mrb[0].mxu0 %v122
  %v193 = vpop.f32.mrb[0].mxu0
  %v194 = vadd.f32 %v45, %v193
  %v195 = vpop.f32.mrb[0].mxu0
  %v196 = vpop.f32.mrb[0].mxu0
  %v197 = vadd.f32 %v45, %v196
  %v198 = vpop.f32.mrb[0].mxu0
  %199 = vmatprep.mubr.bf16.mxu0 0
  %200 = vmatmul.mubr.bf16.gmra.mrb[0].mxu0 %v125
  %v201 = vpop.f32.mrb[0].mxu0
  %v202 = vadd.f32 %v45, %v201
  %v203 = vpop.f32.mrb[0].mxu0
  %v204 = vpop.f32.mrb[0].mxu0
  %v205 = vadd.f32 %v45, %v204
  %v206 = vpop.f32.mrb[0].mxu0
  %207 = vmatprep.mubr.bf16.mxu0 0
  %208 = vmatmul.mubr.bf16.gmra.mrb[0].mxu0 %v128
  %v209 = vpop.f32.mrb[0].mxu0
  %v210 = vadd.f32 %v45, %v209
  %v211 = vpop.f32.mrb[0].mxu0
  %v212 = vpop.f32.mrb[0].mxu0
  %v213 = vadd.f32 %v45, %v212
  %v214 = vpop.f32.mrb[0].mxu0
  %215 = vmatprep.mubr.bf16.mxu0 0
  %216 = vmatmul.mubr.bf16.gmra.mrb[0].mxu0 %v131
  %v217 = vpop.f32.mrb[0].mxu0
  %v218 = vadd.f32 %v45, %v217
  %v219 = vpop.f32.mrb[0].mxu0
  %v220 = vpop.f32.mrb[0].mxu0
  %v221 = vadd.f32 %v45, %v220
  %v222 = vpop.f32.mrb[0].mxu0
  %223 = vmatprep.mubr.bf16.mxu0 0
  %224 = vmatmul.mubr.bf16.gmra.mrb[0].mxu0 %v134
  %v225 = vpop.f32.mrb[0].mxu0
  %v226 = vadd.f32 %v45, %v225
  %v227 = vpop.f32.mrb[0].mxu0
  %v228 = vpop.f32.mrb[0].mxu0
  %v229 = vadd.f32 %v45, %v228
  %v230 = vpop.f32.mrb[0].mxu0
  %231 = vmatprep.mubr.bf16.mxu0 0
  %232 = vmatmul.mubr.bf16.gmra.mrb[0].mxu0 %v137
  %v233 = vpop.f32.mrb[0].mxu0
  %v234 = vadd.f32 %v45, %v233
  %v235 = vpop.f32.mrb[0].mxu0
  %v236 = vpop.f32.mrb[0].mxu0
  %v237 = vadd.f32 %v45, %v236
  %v238 = vpop.f32.mrb[0].mxu0
  %239 = vdwg.mxu0
  %v240 = vmax.f32 %v178, 0.0
  %v241 = vmax.f32 %v181, 0.0
  %v242 = vmax.f32 %v186, 0.0
  %v243 = vmax.f32 %v189, 0.0
  %v244 = vmax.f32 %v194, 0.0
  %v245 = vmax.f32 %v197, 0.0
  %v246 = vmax.f32 %v202, 0.0
  %v247 = vmax.f32 %v205, 0.0
  %v248 = vmax.f32 %v210, 0.0
  %v249 = vmax.f32 %v213, 0.0
  %v250 = vmax.f32 %v218, 0.0
  %v251 = vmax.f32 %v221, 0.0
  %v252 = vmax.f32 %v226, 0.0
  %v253 = vmax.f32 %v229, 0.0
  %v254 = vmax.f32 %v234, 0.0
  %v255 = vmax.f32 %v237, 0.0
  %vm256 = vcmask 31744
  %257 = vst.msk [vmem:[%s3] sm:$0xff] %vm256, %v240
  %258 = vst.msk [vmem:[%s3 + $0x8] sm:$0xff] %vm256, %v241
  %259 = vst.msk [vmem:[%s3 + $0x10] sm:$0xff] %vm256, %v242
  %260 = vst.msk [vmem:[%s3 + $0x18] sm:$0xff] %vm256, %v243
  %261 = vst.msk [vmem:[%s3 + $0x20] sm:$0xff] %vm256, %v244
  %262 = vst.msk [vmem:[%s3 + $0x28] sm:$0xff] %vm256, %v245
  %263 = vst.msk [vmem:[%s3 + $0x30] sm:$0xff] %vm256, %v246
  %264 = vst.msk [vmem:[%s3 + $0x38] sm:$0xff] %vm256, %v247
  %265 = vst.msk [vmem:[%s3 + $0x40] sm:$0xff] %vm256, %v248
  %266 = vst.msk [vmem:[%s3 + $0x48] sm:$0xff] %vm256, %v249
  %267 = vst.msk [vmem:[%s3 + $0x50] sm:$0xff] %vm256, %v250
  %268 = vst.msk [vmem:[%s3 + $0x58] sm:$0xff] %vm256, %v251
  %269 = vst.msk [vmem:[%s3 + $0x60] sm:$0xff] %vm256, %v252
  %270 = vst.msk [vmem:[%s3 + $0x68] sm:$0xff] %vm256, %v253
  %271 = vst.msk [vmem:[%s3 + $0x70] sm:$0xff] %vm256, %v254
  %272 = vst.msk [vmem:[%s3 + $0x78] sm:$0xff] %vm256, %v255
  // Predicated region
  $region14: #{feedback_urdnet.58} parent=0 // pred_check
    _
  $region15: #{feedback_urdnet.58} parent=0 // pred_check_branch
    %274 = sbr.rel (0) target = $region17
  $region16: #{feedback_urdnet.58} parent=0 // pred_region
    _
  $region17: #{feedback_urdnet.58} parent=0 // pred_fallthru
    _
  // Predicated region
  $region18: #{feedback_urdnet.58} parent=0 // pred_check
    _
  $region19: #{feedback_urdnet.58} parent=0 // pred_check_branch
    %276 = sbr.rel (0) target = $region21
  $region20: #{feedback_urdnet.58} parent=0 // pred_region
    _
  $region21: #{feedback_urdnet.58} parent=0 // pred_fallthru
    _

// kernel: feedback_urdnet.59
$region0: #{feedback_urdnet.59}
  #allocation0 [shape = 'u32[]', space=smem, size = 0x4, offset = 0x4, fixed_abs, tag = 'smem constant byte address 0x4 - core index']
  #allocation1 [shape = 'u32[144,128]{1,0:T(1,128)}', space=vmem, size = 0x12000, scoped, tag = 'internal scratch']
  %s0 = inlined_call_operand.vmem [shape: bf16[128,8], index: 0, kind: input, shape index: {}]
  %s1 = inlined_call_operand.vmem [shape: f32[128,12], index: 1, kind: input, shape index: {}]
  %s2 = inlined_call_operand.vmem [shape: bf16[8,8], index: 2, kind: input, shape index: {}]
  %s3 = inlined_call_operand.vmem [shape: f32[1,8], index: 3, kind: input, shape index: {}]
  %s4 = inlined_call_operand.vmem [shape: bf16[8,12], index: 4, kind: input, shape index: {}]
  %s5 = inlined_call_operand.vmem [shape: f32[1,12], index: 5, kind: input, shape index: {}]
  %s6 = inlined_call_operand.vmem [shape: bf16[8,8], index: 6, kind: input, shape index: {}]
  %s7 = inlined_call_operand.vmem [shape: f32[1,8], index: 7, kind: input, shape index: {}]
  %s8 = inlined_call_operand.vmem [shape: bf16[8,12], index: 8, kind: input, shape index: {}]
  %s9 = inlined_call_operand.vmem [shape: f32[1,12], index: 9, kind: input, shape index: {}]
  %s10 = inlined_call_operand.vmem [shape: f32[128,12], index: 10, kind: output, shape index: {}]
  %s11 = sld [smem:[#allocation0]]
  $region50: #{feedback_urdnet.59} parent=0
    _
  %s13 = ssub.s32 1, %s11
  %s14 = scalar_select 0, %s13, %s11
  // Predicated region
  $region2: #{feedback_urdnet.59} parent=0 // pred_check
    _
  $region3: #{feedback_urdnet.59} parent=0 // pred_check_branch
    %16 = sbr.rel (0) target = $region5
  $region4: #{feedback_urdnet.59} parent=0 // pred_region
    _
  $region5: #{feedback_urdnet.59} parent=0 // pred_fallthru
    _
  // Predicated region
  $region6: #{feedback_urdnet.59} parent=0 // pred_check
    _
  $region7: #{feedback_urdnet.59} parent=0 // pred_check_branch
    %18 = sbr.rel (0) target = $region9
  $region8: #{feedback_urdnet.59} parent=0 // pred_region
    _
  $region9: #{feedback_urdnet.59} parent=0 // pred_fallthru
    _
  // Predicated region
  $region10: #{feedback_urdnet.59} parent=0 // pred_check
    _
  $region11: #{feedback_urdnet.59} parent=0 // pred_check_branch
    %20 = sbr.rel (0) target = $region13
  $region12: #{feedback_urdnet.59} parent=0 // pred_region
    _
  $region13: #{feedback_urdnet.59} parent=0 // pred_fallthru
    _
  // Predicated region
  $region14: #{feedback_urdnet.59} parent=0 // pred_check
    _
  $region15: #{feedback_urdnet.59} parent=0 // pred_check_branch
    %22 = sbr.rel (0) target = $region17
  $region16: #{feedback_urdnet.59} parent=0 // pred_region
    _
  $region17: #{feedback_urdnet.59} parent=0 // pred_fallthru
    _
  // Predicated region
  $region18: #{feedback_urdnet.59} parent=0 // pred_check
    _
  $region19: #{feedback_urdnet.59} parent=0 // pred_check_branch
    %24 = sbr.rel (0) target = $region21
  $region20: #{feedback_urdnet.59} parent=0 // pred_region
    _
  $region21: #{feedback_urdnet.59} parent=0 // pred_fallthru
    _
  // Predicated region
  $region22: #{feedback_urdnet.59} parent=0 // pred_check
    _
  $region23: #{feedback_urdnet.59} parent=0 // pred_check_branch
    %26 = sbr.rel (0) target = $region25
  $region24: #{feedback_urdnet.59} parent=0 // pred_region
    _
  $region25: #{feedback_urdnet.59} parent=0 // pred_fallthru
    _
  // Predicated region
  $region26: #{feedback_urdnet.59} parent=0 // pred_check
    _
  $region27: #{feedback_urdnet.59} parent=0 // pred_check_branch
    %28 = sbr.rel (0) target = $region29
  $region28: #{feedback_urdnet.59} parent=0 // pred_region
    _
  $region29: #{feedback_urdnet.59} parent=0 // pred_fallthru
    _
  // Predicated region
  $region30: #{feedback_urdnet.59} parent=0 // pred_check
    _
  $region31: #{feedback_urdnet.59} parent=0 // pred_check_branch
    %30 = sbr.rel (0) target = $region33
  $region32: #{feedback_urdnet.59} parent=0 // pred_region
    _
  $region33: #{feedback_urdnet.59} parent=0 // pred_fallthru
    _
  // Predicated region
  $region34: #{feedback_urdnet.59} parent=0 // pred_check
    _
  $region35: #{feedback_urdnet.59} parent=0 // pred_check_branch
    %32 = sbr.rel (0) target = $region37
  $region36: #{feedback_urdnet.59} parent=0 // pred_region
    _
  $region37: #{feedback_urdnet.59} parent=0 // pred_fallthru
    _
  // Predicated region
  $region38: #{feedback_urdnet.59} parent=0 // pred_check
    _
  $region39: #{feedback_urdnet.59} parent=0 // pred_check_branch
    %34 = sbr.rel (0) target = $region41
  $region40: #{feedback_urdnet.59} parent=0 // pred_region
    _
  $region41: #{feedback_urdnet.59} parent=0 // pred_fallthru
    _
  %v36 = vld [vmem:[%s0] sm:$0xf]
  %v37 = vld [vmem:[%s0 + $0x4] sm:$0xf]
  %v38 = vld [vmem:[%s0 + $0x8] sm:$0xf]
  %v39 = vld [vmem:[%s0 + $0xc] sm:$0xf]
  %v40 = vld [vmem:[%s0 + $0x10] sm:$0xf]
  %v41 = vld [vmem:[%s0 + $0x14] sm:$0xf]
  %v42 = vld [vmem:[%s0 + $0x18] sm:$0xf]
  %v43 = vld [vmem:[%s0 + $0x1c] sm:$0xf]
  %v44 = vld [vmem:[%s0 + $0x20] sm:$0xf]
  %v45 = vld [vmem:[%s0 + $0x24] sm:$0xf]
  %v46 = vld [vmem:[%s0 + $0x28] sm:$0xf]
  %v47 = vld [vmem:[%s0 + $0x2c] sm:$0xf]
  %v48 = vld [vmem:[%s0 + $0x30] sm:$0xf]
  %v49 = vld [vmem:[%s0 + $0x34] sm:$0xf]
  %v50 = vld [vmem:[%s0 + $0x38] sm:$0xf]
  %v51 = vld [vmem:[%s0 + $0x3c] sm:$0xf]
  %v52 = vld [vmem:[%s2] sm:$0xf]
  %v53 = vld [vmem:[%s3] sm:$0x1]
  %v55 = vlaneseq
  %v56 = vshrl.u32 %v55, 7
  %v57 = vsub.s32 0, %v56
  %v58 = vrot.slane %v53, %v57
  %v76 = vunpack.c.l.b16 %v36
  %v77 = vunpack.c.l.b16 %v37
  %v78 = vunpack.c.l.b16 %v38
  %v79 = vunpack.c.l.b16 %v39
  %v80 = vunpack.c.l.b16 %v40
  %v81 = vunpack.c.l.b16 %v41
  %v82 = vunpack.c.l.b16 %v42
  %v83 = vunpack.c.l.b16 %v43
  %v84 = vunpack.c.l.b16 %v44
  %v85 = vunpack.c.l.b16 %v45
  %v86 = vunpack.c.l.b16 %v46
  %v87 = vunpack.c.l.b16 %v47
  %v88 = vunpack.c.l.b16 %v48
  %v89 = vunpack.c.l.b16 %v49
  %v90 = vunpack.c.l.b16 %v50
  %v91 = vunpack.c.l.b16 %v51
  %v92 = vpack.c.b16 %v77, %v76
  %v93 = vpack.c.b16 %v79, %v78
  %v94 = vpack.c.b16 %v81, %v80
  %v95 = vpack.c.b16 %v83, %v82
  %v96 = vpack.c.b16 %v85, %v84
  %v97 = vpack.c.b16 %v87, %v86
  %v98 = vpack.c.b16 %v89, %v88
  %v99 = vpack.c.b16 %v91, %v90
  %vm100 = vcmask 64512
  %v102 = vsel %vm100, %v92, 0
  %v105 = vsel %vm100, %v93, 0
  %v108 = vsel %vm100, %v94, 0
  %v111 = vsel %vm100, %v95, 0
  %v114 = vsel %vm100, %v96, 0
  %v117 = vsel %vm100, %v97, 0
  %v120 = vsel %vm100, %v98, 0
  %v123 = vsel %vm100, %v99, 0
  %vm125 = vcmask 1043456
  %v127 = vsel %vm125, %v52, 0
  %129 = vmatprep.subr.bf16.mxu0 0
  %130 = vmatpush1.bf16.msra.mxu0 %v127
  %131 = vmatprep.subr.bf16.mxu0 0
  %132 = vmatpush1.bf16.msra.mxu0 0
  %133 = vmatprep.subr.bf16.mxu0 0
  %134 = vmatpush1.bf16.msra.mxu0 0
  %135 = vmatprep.subr.bf16.mxu0 0
  %136 = vmatpush1.bf16.msra.mxu0 0
  %137 = vmatprep.subr.bf16.mxu0 0
  %138 = vmatpush1.bf16.msra.mxu0 0
  %139 = vmatprep.subr.bf16.mxu0 0
  %140 = vmatpush1.bf16.msra.mxu0 0
  %141 = vmatprep.subr.bf16.mxu0 0
  %142 = vmatpush1.bf16.msra.mxu0 0
  %143 = vmatprep.subr.bf16.mxu0 0
  %144 = vmatpush1.bf16.msra.mxu0 0
  %145 = vmatprep.subr.bf16.mxu0 0
  %146 = vmatpush1.bf16.msra.mxu0 0
  %147 = vmatprep.subr.bf16.mxu0 0
  %148 = vmatpush1.bf16.msra.mxu0 0
  %149 = vmatprep.subr.bf16.mxu0 0
  %150 = vmatpush1.bf16.msra.mxu0 0
  %151 = vmatprep.subr.bf16.mxu0 0
  %152 = vmatpush1.bf16.msra.mxu0 0
  %153 = vmatprep.subr.bf16.mxu0 0
  %154 = vmatpush1.bf16.msra.mxu0 0
  %155 = vmatprep.subr.bf16.mxu0 0
  %156 = vmatpush1.bf16.msra.mxu0 0
  %157 = vmatprep.subr.bf16.mxu0 0
  %158 = vmatpush1.bf16.msra.mxu0 0
  %159 = vmatprep.subr.bf16.mxu0 0
  %160 = vmatpush1.bf16.msra.mxu0 0
  %161 = vmatprep.mubr.bf16.mxu0 0
  %162 = vmatmul.mubr.bf16.gmra.mrb[0].mxu0 %v102
  %v163 = vpop.f32.mrb[0].mxu0
  %v164 = vadd.f32 %v58, %v163
  %v165 = vpop.f32.mrb[0].mxu0
  %v166 = vpop.f32.mrb[0].mxu0
  %v167 = vadd.f32 %v58, %v166
  %v168 = vpop.f32.mrb[0].mxu0
  %169 = vmatprep.mubr.bf16.mxu0 0
  %170 = vmatmul.mubr.bf16.gmra.mrb[0].mxu0 %v105
  %v171 = vpop.f32.mrb[0].mxu0
  %v172 = vadd.f32 %v58, %v171
  %v173 = vpop.f32.mrb[0].mxu0
  %v174 = vpop.f32.mrb[0].mxu0
  %v175 = vadd.f32 %v58, %v174
  %v176 = vpop.f32.mrb[0].mxu0
  %177 = vmatprep.mubr.bf16.mxu0 0
  %178 = vmatmul.mubr.bf16.gmra.mrb[0].mxu0 %v108
  %v179 = vpop.f32.mrb[0].mxu0
  %v180 = vadd.f32 %v58, %v179
  %v181 = vpop.f32.mrb[0].mxu0
  %v182 = vpop.f32.mrb[0].mxu0
  %v183 = vadd.f32 %v58, %v182
  %v184 = vpop.f32.mrb[0].mxu0
  %185 = vmatprep.mubr.bf16.mxu0 0
  %186 = vmatmul.mubr.bf16.gmra.mrb[0].mxu0 %v111
  %v187 = vpop.f32.mrb[0].mxu0
  %v188 = vadd.f32 %v58, %v187
  %v189 = vpop.f32.mrb[0].mxu0
  %v190 = vpop.f32.mrb[0].mxu0
  %v191 = vadd.f32 %v58, %v190
  %v192 = vpop.f32.mrb[0].mxu0
  %193 = vmatprep.mubr.bf16.mxu0 0
  %194 = vmatmul.mubr.bf16.gmra.mrb[0].mxu0 %v114
  %v195 = vpop.f32.mrb[0].mxu0
  %v196 = vadd.f32 %v58, %v195
  %v197 = vpop.f32.mrb[0].mxu0
  %v198 = vpop.f32.mrb[0].mxu0
  %v199 = vadd.f32 %v58, %v198
  %v200 = vpop.f32.mrb[0].mxu0
  %201 = vmatprep.mubr.bf16.mxu0 0
  %202 = vmatmul.mubr.bf16.gmra.mrb[0].mxu0 %v117
  %v203 = vpop.f32.mrb[0].mxu0
  %v204 = vadd.f32 %v58, %v203
  %v205 = vpop.f32.mrb[0].mxu0
  %v206 = vpop.f32.mrb[0].mxu0
  %v207 = vadd.f32 %v58, %v206
  %v208 = vpop.f32.mrb[0].mxu0
  %209 = vmatprep.mubr.bf16.mxu0 0
  %210 = vmatmul.mubr.bf16.gmra.mrb[0].mxu0 %v120
  %v211 = vpop.f32.mrb[0].mxu0
  %v212 = vadd.f32 %v58, %v211
  %v213 = vpop.f32.mrb[0].mxu0
  %v214 = vpop.f32.mrb[0].mxu0
  %v215 = vadd.f32 %v58, %v214
  %v216 = vpop.f32.mrb[0].mxu0
  %217 = vmatprep.mubr.bf16.mxu0 0
  %218 = vmatmul.mubr.bf16.gmra.mrb[0].mxu0 %v123
  %v219 = vpop.f32.mrb[0].mxu0
  %v220 = vadd.f32 %v58, %v219
  %v221 = vpop.f32.mrb[0].mxu0
  %v222 = vpop.f32.mrb[0].mxu0
  %v223 = vadd.f32 %v58, %v222
  %v224 = vpop.f32.mrb[0].mxu0
  %225 = vdwg.mxu0
  %vm226 = vcmp.ge.f32.partialorder %v164, 0.0
  %vm227 = vcmp.ge.f32.partialorder %v167, 0.0
  %vm228 = vcmp.ge.f32.partialorder %v172, 0.0
  %vm229 = vcmp.ge.f32.partialorder %v175, 0.0
  %vm230 = vcmp.ge.f32.partialorder %v180, 0.0
  %vm231 = vcmp.ge.f32.partialorder %v183, 0.0
  %vm232 = vcmp.ge.f32.partialorder %v188, 0.0
  %vm233 = vcmp.ge.f32.partialorder %v191, 0.0
  %vm234 = vcmp.ge.f32.partialorder %v196, 0.0
  %vm235 = vcmp.ge.f32.partialorder %v199, 0.0
  %vm236 = vcmp.ge.f32.partialorder %v204, 0.0
  %vm237 = vcmp.ge.f32.partialorder %v207, 0.0
  %vm238 = vcmp.ge.f32.partialorder %v212, 0.0
  %vm239 = vcmp.ge.f32.partialorder %v215, 0.0
  %vm240 = vcmp.ge.f32.partialorder %v220, 0.0
  %vm241 = vcmp.ge.f32.partialorder %v223, 0.0
  %v242 = vmul.f32 %v164, 0.1
  %v243 = vmul.f32 %v167, 0.1
  %v244 = vmul.f32 %v172, 0.1
  %v245 = vmul.f32 %v175, 0.1
  %v246 = vmul.f32 %v180, 0.1
  %v247 = vmul.f32 %v183, 0.1
  %v248 = vmul.f32 %v188, 0.1
  %v249 = vmul.f32 %v191, 0.1
  %v250 = vmul.f32 %v196, 0.1
  %v251 = vmul.f32 %v199, 0.1
  %v252 = vmul.f32 %v204, 0.1
  %v253 = vmul.f32 %v207, 0.1
  %v254 = vmul.f32 %v212, 0.1
  %v255 = vmul.f32 %v215, 0.1
  %v256 = vmul.f32 %v220, 0.1
  %v257 = vmul.f32 %v223, 0.1
  %v258 = vsel %vm226, %v164, %v242
  %v259 = vsel %vm227, %v167, %v243
  %v260 = vsel %vm228, %v172, %v244
  %v261 = vsel %vm229, %v175, %v245
  %v262 = vsel %vm230, %v180, %v246
  %v263 = vsel %vm231, %v183, %v247
  %v264 = vsel %vm232, %v188, %v248
  %v265 = vsel %vm233, %v191, %v249
  %v266 = vsel %vm234, %v196, %v250
  %v267 = vsel %vm235, %v199, %v251
  %v268 = vsel %vm236, %v204, %v252
  %v269 = vsel %vm237, %v207, %v253
  %v270 = vsel %vm238, %v212, %v254
  %v271 = vsel %vm239, %v215, %v255
  %v272 = vsel %vm240, %v220, %v256
  %v273 = vsel %vm241, %v223, %v257
  %v274 = vpack.c.bf16 %v259, %v258
  %v275 = vpack.c.bf16 %v261, %v260
  %v276 = vpack.c.bf16 %v263, %v262
  %v277 = vpack.c.bf16 %v265, %v264
  %v278 = vpack.c.bf16 %v267, %v266
  %v279 = vpack.c.bf16 %v269, %v268
  %v280 = vpack.c.bf16 %v271, %v270
  %v281 = vpack.c.bf16 %v273, %v272
  %v282 = vld [vmem:[%s4] sm:$0xf]
  %v283 = vld [vmem:[%s5] sm:$0x1]
  %v285 = vlaneseq
  %v286 = vshrl.u32 %v285, 7
  %v287 = vsub.s32 0, %v286
  %v288 = vrot.slane %v283, %v287
  %v291 = vsel %vm100, %v274, 0
  %v294 = vsel %vm100, %v275, 0
  %v297 = vsel %vm100, %v276, 0
  %v300 = vsel %vm100, %v277, 0
  %v303 = vsel %vm100, %v278, 0
  %v306 = vsel %vm100, %v279, 0
  %v309 = vsel %vm100, %v280, 0
  %v312 = vsel %vm100, %v281, 0
  %v315 = vsel %vm125, %v282, 0
  %317 = vmatprep.subr.bf16.mxu0 0
  %318 = vmatpush1.bf16.msra.mxu0 %v315
  %319 = vmatprep.subr.bf16.mxu0 0
  %320 = vmatpush1.bf16.msra.mxu0 0
  %321 = vmatprep.subr.bf16.mxu0 0
  %322 = vmatpush1.bf16.msra.mxu0 0
  %323 = vmatprep.subr.bf16.mxu0 0
  %324 = vmatpush1.bf16.msra.mxu0 0
  %325 = vmatprep.subr.bf16.mxu0 0
  %326 = vmatpush1.bf16.msra.mxu0 0
  %327 = vmatprep.subr.bf16.mxu0 0
  %328 = vmatpush1.bf16.msra.mxu0 0
  %329 = vmatprep.subr.bf16.mxu0 0
  %330 = vmatpush1.bf16.msra.mxu0 0
  %331 = vmatprep.subr.bf16.mxu0 0
  %332 = vmatpush1.bf16.msra.mxu0 0
  %333 = vmatprep.subr.bf16.mxu0 0
  %334 = vmatpush1.bf16.msra.mxu0 0
  %335 = vmatprep.subr.bf16.mxu0 0
  %336 = vmatpush1.bf16.msra.mxu0 0
  %337 = vmatprep.subr.bf16.mxu0 0
  %338 = vmatpush1.bf16.msra.mxu0 0
  %339 = vmatprep.subr.bf16.mxu0 0
  %340 = vmatpush1.bf16.msra.mxu0 0
  %341 = vmatprep.subr.bf16.mxu0 0
  %342 = vmatpush1.bf16.msra.mxu0 0
  %343 = vmatprep.subr.bf16.mxu0 0
  %344 = vmatpush1.bf16.msra.mxu0 0
  %345 = vmatprep.subr.bf16.mxu0 0
  %346 = vmatpush1.bf16.msra.mxu0 0
  %347 = vmatprep.subr.bf16.mxu0 0
  %348 = vmatpush1.bf16.msra.mxu0 0
  %349 = vmatprep.mubr.bf16.mxu0 0
  %350 = vmatmul.mubr.bf16.gmra.mrb[0].mxu0 %v291
  %v351 = vpop.f32.mrb[0].mxu0
  %v352 = vadd.f32 %v288, %v351
  %v353 = vpop.f32.mrb[0].mxu0
  %v354 = vpop.f32.mrb[0].mxu0
  %v355 = vadd.f32 %v288, %v354
  %v356 = vpop.f32.mrb[0].mxu0
  %357 = vmatprep.mubr.bf16.mxu0 0
  %358 = vmatmul.mubr.bf16.gmra.mrb[0].mxu0 %v294
  %v359 = vpop.f32.mrb[0].mxu0
  %v360 = vadd.f32 %v288, %v359
  %v361 = vpop.f32.mrb[0].mxu0
  %v362 = vpop.f32.mrb[0].mxu0
  %v363 = vadd.f32 %v288, %v362
  %v364 = vpop.f32.mrb[0].mxu0
  %365 = vmatprep.mubr.bf16.mxu0 0
  %366 = vmatmul.mubr.bf16.gmra.mrb[0].mxu0 %v297
  %v367 = vpop.f32.mrb[0].mxu0
  %v368 = vadd.f32 %v288, %v367
  %v369 = vpop.f32.mrb[0].mxu0
  %v370 = vpop.f32.mrb[0].mxu0
  %v371 = vadd.f32 %v288, %v370
  %v372 = vpop.f32.mrb[0].mxu0
  %373 = vmatprep.mubr.bf16.mxu0 0
  %374 = vmatmul.mubr.bf16.gmra.mrb[0].mxu0 %v300
  %v375 = vpop.f32.mrb[0].mxu0
  %v376 = vadd.f32 %v288, %v375
  %v377 = vpop.f32.mrb[0].mxu0
  %v378 = vpop.f32.mrb[0].mxu0
  %v379 = vadd.f32 %v288, %v378
  %v380 = vpop.f32.mrb[0].mxu0
  %381 = vmatprep.mubr.bf16.mxu0 0
  %382 = vmatmul.mubr.bf16.gmra.mrb[0].mxu0 %v303
  %v383 = vpop.f32.mrb[0].mxu0
  %v384 = vadd.f32 %v288, %v383
  %v385 = vpop.f32.mrb[0].mxu0
  %v386 = vpop.f32.mrb[0].mxu0
  %v387 = vadd.f32 %v288, %v386
  %v388 = vpop.f32.mrb[0].mxu0
  %389 = vmatprep.mubr.bf16.mxu0 0
  %390 = vmatmul.mubr.bf16.gmra.mrb[0].mxu0 %v306
  %v391 = vpop.f32.mrb[0].mxu0
  %v392 = vadd.f32 %v288, %v391
  %v393 = vpop.f32.mrb[0].mxu0
  %v394 = vpop.f32.mrb[0].mxu0
  %v395 = vadd.f32 %v288, %v394
  %v396 = vpop.f32.mrb[0].mxu0
  %397 = vmatprep.mubr.bf16.mxu0 0
  %398 = vmatmul.mubr.bf16.gmra.mrb[0].mxu0 %v309
  %v399 = vpop.f32.mrb[0].mxu0
  %v400 = vadd.f32 %v288, %v399
  %v401 = vpop.f32.mrb[0].mxu0
  %v402 = vpop.f32.mrb[0].mxu0
  %v403 = vadd.f32 %v288, %v402
  %v404 = vpop.f32.mrb[0].mxu0
  %405 = vmatprep.mubr.bf16.mxu0 0
  %406 = vmatmul.mubr.bf16.gmra.mrb[0].mxu0 %v312
  %v407 = vpop.f32.mrb[0].mxu0
  %v408 = vadd.f32 %v288, %v407
  %v409 = vpop.f32.mrb[0].mxu0
  %v410 = vpop.f32.mrb[0].mxu0
  %v411 = vadd.f32 %v288, %v410
  %v412 = vpop.f32.mrb[0].mxu0
  %413 = vdwg.mxu0
  %v414 = vld [vmem:[%s6] sm:$0xf]
  %v415 = vld [vmem:[%s7] sm:$0x1]
  %v417 = vlaneseq
  %v418 = vshrl.u32 %v417, 7
  %v419 = vsub.s32 0, %v418
  %v420 = vrot.slane %v415, %v419
  %v423 = vsel %vm125, %v414, 0
  %425 = vmatprep.subr.bf16.mxu0 0
  %426 = vmatpush1.bf16.msra.mxu0 %v423
  %427 = vmatprep.subr.bf16.mxu0 0
  %428 = vmatpush1.bf16.msra.mxu0 0
  %429 = vmatprep.subr.bf16.mxu0 0
  %430 = vmatpush1.bf16.msra.mxu0 0
  %431 = vmatprep.subr.bf16.mxu0 0
  %432 = vmatpush1.bf16.msra.mxu0 0
  %433 = vmatprep.subr.bf16.mxu0 0
  %434 = vmatpush1.bf16.msra.mxu0 0
  %435 = vmatprep.subr.bf16.mxu0 0
  %436 = vmatpush1.bf16.msra.mxu0 0
  %437 = vmatprep.subr.bf16.mxu0 0
  %438 = vmatpush1.bf16.msra.mxu0 0
  %439 = vmatprep.subr.bf16.mxu0 0
  %440 = vmatpush1.bf16.msra.mxu0 0
  %441 = vmatprep.subr.bf16.mxu0 0
  %442 = vmatpush1.bf16.msra.mxu0 0
  %443 = vmatprep.subr.bf16.mxu0 0
  %444 = vmatpush1.bf16.msra.mxu0 0
  %445 = vmatprep.subr.bf16.mxu0 0
  %446 = vmatpush1.bf16.msra.mxu0 0
  %447 = vmatprep.subr.bf16.mxu0 0
  %448 = vmatpush1.bf16.msra.mxu0 0
  %449 = vmatprep.subr.bf16.mxu0 0
  %450 = vmatpush1.bf16.msra.mxu0 0
  %451 = vmatprep.subr.bf16.mxu0 0
  %452 = vmatpush1.bf16.msra.mxu0 0
  %453 = vmatprep.subr.bf16.mxu0 0
  %454 = vmatpush1.bf16.msra.mxu0 0
  %455 = vmatprep.subr.bf16.mxu0 0
  %456 = vmatpush1.bf16.msra.mxu0 0
  %457 = vmatprep.mubr.bf16.mxu0 0
  %458 = vmatmul.mubr.bf16.gmra.mrb[0].mxu0 %v102
  %v459 = vpop.f32.mrb[0].mxu0
  %v460 = vadd.f32 %v420, %v459
  %v461 = vpop.f32.mrb[0].mxu0
  %v462 = vpop.f32.mrb[0].mxu0
  %v463 = vadd.f32 %v420, %v462
  %v464 = vpop.f32.mrb[0].mxu0
  %465 = vmatprep.mubr.bf16.mxu0 0
  %466 = vmatmul.mubr.bf16.gmra.mrb[0].mxu0 %v105
  %v467 = vpop.f32.mrb[0].mxu0
  %v468 = vadd.f32 %v420, %v467
  %v469 = vpop.f32.mrb[0].mxu0
  %v470 = vpop.f32.mrb[0].mxu0
  %v471 = vadd.f32 %v420, %v470
  %v472 = vpop.f32.mrb[0].mxu0
  %473 = vmatprep.mubr.bf16.mxu0 0
  %474 = vmatmul.mubr.bf16.gmra.mrb[0].mxu0 %v108
  %v475 = vpop.f32.mrb[0].mxu0
  %v476 = vadd.f32 %v420, %v475
  %v477 = vpop.f32.mrb[0].mxu0
  %v478 = vpop.f32.mrb[0].mxu0
  %v479 = vadd.f32 %v420, %v478
  %v480 = vpop.f32.mrb[0].mxu0
  %481 = vmatprep.mubr.bf16.mxu0 0
  %482 = vmatmul.mubr.bf16.gmra.mrb[0].mxu0 %v111
  %v483 = vpop.f32.mrb[0].mxu0
  %v484 = vadd.f32 %v420, %v483
  %v485 = vpop.f32.mrb[0].mxu0
  %v486 = vpop.f32.mrb[0].mxu0
  %v487 = vadd.f32 %v420, %v486
  %v488 = vpop.f32.mrb[0].mxu0
  %489 = vmatprep.mubr.bf16.mxu0 0
  %490 = vmatmul.mubr.bf16.gmra.mrb[0].mxu0 %v114
  %v491 = vpop.f32.mrb[0].mxu0
  %v492 = vadd.f32 %v420, %v491
  %v493 = vpop.f32.mrb[0].mxu0
  %v494 = vpop.f32.mrb[0].mxu0
  %v495 = vadd.f32 %v420, %v494
  %v496 = vpop.f32.mrb[0].mxu0
  %497 = vmatprep.mubr.bf16.mxu0 0
  %498 = vmatmul.mubr.bf16.gmra.mrb[0].mxu0 %v117
  %v499 = vpop.f32.mrb[0].mxu0
  %v500 = vadd.f32 %v420, %v499
  %v501 = vpop.f32.mrb[0].mxu0
  %v502 = vpop.f32.mrb[0].mxu0
  %v503 = vadd.f32 %v420, %v502
  %v504 = vpop.f32.mrb[0].mxu0
  %505 = vmatprep.mubr.bf16.mxu0 0
  %506 = vmatmul.mubr.bf16.gmra.mrb[0].mxu0 %v120
  %v507 = vpop.f32.mrb[0].mxu0
  %v508 = vadd.f32 %v420, %v507
  %v509 = vpop.f32.mrb[0].mxu0
  %v510 = vpop.f32.mrb[0].mxu0
  %v511 = vadd.f32 %v420, %v510
  %v512 = vpop.f32.mrb[0].mxu0
  %513 = vmatprep.mubr.bf16.mxu0 0
  %514 = vmatmul.mubr.bf16.gmra.mrb[0].mxu0 %v123
  %v515 = vpop.f32.mrb[0].mxu0
  %v516 = vadd.f32 %v420, %v515
  %v517 = vpop.f32.mrb[0].mxu0
  %v518 = vpop.f32.mrb[0].mxu0
  %v519 = vadd.f32 %v420, %v518
  %v520 = vpop.f32.mrb[0].mxu0
  %521 = vdwg.mxu0
  %vm522 = vcmp.ge.f32.partialorder %v460, 0.0
  %vm523 = vcmp.ge.f32.partialorder %v463, 0.0
  %vm524 = vcmp.ge.f32.partialorder %v468, 0.0
  %vm525 = vcmp.ge.f32.partialorder %v471, 0.0
  %vm526 = vcmp.ge.f32.partialorder %v476, 0.0
  %vm527 = vcmp.ge.f32.partialorder %v479, 0.0
  %vm528 = vcmp.ge.f32.partialorder %v484, 0.0
  %vm529 = vcmp.ge.f32.partialorder %v487, 0.0
  %vm530 = vcmp.ge.f32.partialorder %v492, 0.0
  %vm531 = vcmp.ge.f32.partialorder %v495, 0.0
  %vm532 = vcmp.ge.f32.partialorder %v500, 0.0
  %vm533 = vcmp.ge.f32.partialorder %v503, 0.0
  %vm534 = vcmp.ge.f32.partialorder %v508, 0.0
  %vm535 = vcmp.ge.f32.partialorder %v511, 0.0
  %vm536 = vcmp.ge.f32.partialorder %v516, 0.0
  %vm537 = vcmp.ge.f32.partialorder %v519, 0.0
  %v538 = vmul.f32 %v460, 0.1
  %v539 = vmul.f32 %v463, 0.1
  %v540 = vmul.f32 %v468, 0.1
  %v541 = vmul.f32 %v471, 0.1
  %v542 = vmul.f32 %v476, 0.1
  %v543 = vmul.f32 %v479, 0.1
  %v544 = vmul.f32 %v484, 0.1
  %v545 = vmul.f32 %v487, 0.1
  %v546 = vmul.f32 %v492, 0.1
  %v547 = vmul.f32 %v495, 0.1
  %v548 = vmul.f32 %v500, 0.1
  %v549 = vmul.f32 %v503, 0.1
  %v550 = vmul.f32 %v508, 0.1
  %v551 = vmul.f32 %v511, 0.1
  %v552 = vmul.f32 %v516, 0.1
  %v553 = vmul.f32 %v519, 0.1
  %v554 = vsel %vm522, %v460, %v538
  %v555 = vsel %vm523, %v463, %v539
  %v556 = vsel %vm524, %v468, %v540
  %v557 = vsel %vm525, %v471, %v541
  %v558 = vsel %vm526, %v476, %v542
  %v559 = vsel %vm527, %v479, %v543
  %v560 = vsel %vm528, %v484, %v544
  %v561 = vsel %vm529, %v487, %v545
  %v562 = vsel %vm530, %v492, %v546
  %v563 = vsel %vm531, %v495, %v547
  %v564 = vsel %vm532, %v500, %v548
  %v565 = vsel %vm533, %v503, %v549
  %v566 = vsel %vm534, %v508, %v550
  %v567 = vsel %vm535, %v511, %v551
  %v568 = vsel %vm536, %v516, %v552
  %v569 = vsel %vm537, %v519, %v553
  %v570 = vpack.c.bf16 %v555, %v554
  %v571 = vpack.c.bf16 %v557, %v556
  %v572 = vpack.c.bf16 %v559, %v558
  %v573 = vpack.c.bf16 %v561, %v560
  %v574 = vpack.c.bf16 %v563, %v562
  %v575 = vpack.c.bf16 %v565, %v564
  %v576 = vpack.c.bf16 %v567, %v566
  %v577 = vpack.c.bf16 %v569, %v568
  %v578 = vld [vmem:[%s8] sm:$0xf]
  %v579 = vld [vmem:[%s9] sm:$0x1]
  %v581 = vlaneseq
  %v582 = vshrl.u32 %v581, 7
  %v583 = vsub.s32 0, %v582
  %v584 = vrot.slane %v579, %v583
  %v587 = vsel %vm100, %v570, 0
  %v590 = vsel %vm100, %v571, 0
  %v593 = vsel %vm100, %v572, 0
  %v596 = vsel %vm100, %v573, 0
  %v599 = vsel %vm100, %v574, 0
  %v602 = vsel %vm100, %v575, 0
  %v605 = vsel %vm100, %v576, 0
  %v608 = vsel %vm100, %v577, 0
  %v611 = vsel %vm125, %v578, 0
  %613 = vmatprep.subr.bf16.mxu0 0
  %614 = vmatpush1.bf16.msra.mxu0 %v611
  %615 = vmatprep.subr.bf16.mxu0 0
  %616 = vmatpush1.bf16.msra.mxu0 0
  %617 = vmatprep.subr.bf16.mxu0 0
  %618 = vmatpush1.bf16.msra.mxu0 0
  %619 = vmatprep.subr.bf16.mxu0 0
  %620 = vmatpush1.bf16.msra.mxu0 0
  %621 = vmatprep.subr.bf16.mxu0 0
  %622 = vmatpush1.bf16.msra.mxu0 0
  %623 = vmatprep.subr.bf16.mxu0 0
  %624 = vmatpush1.bf16.msra.mxu0 0
  %625 = vmatprep.subr.bf16.mxu0 0
  %626 = vmatpush1.bf16.msra.mxu0 0
  %627 = vmatprep.subr.bf16.mxu0 0
  %628 = vmatpush1.bf16.msra.mxu0 0
  %629 = vmatprep.subr.bf16.mxu0 0
  %630 = vmatpush1.bf16.msra.mxu0 0
  %631 = vmatprep.subr.bf16.mxu0 0
  %632 = vmatpush1.bf16.msra.mxu0 0
  %633 = vmatprep.subr.bf16.mxu0 0
  %634 = vmatpush1.bf16.msra.mxu0 0
  %635 = vmatprep.subr.bf16.mxu0 0
  %636 = vmatpush1.bf16.msra.mxu0 0
  %637 = vmatprep.subr.bf16.mxu0 0
  %638 = vmatpush1.bf16.msra.mxu0 0
  %639 = vmatprep.subr.bf16.mxu0 0
  %640 = vmatpush1.bf16.msra.mxu0 0
  %641 = vmatprep.subr.bf16.mxu0 0
  %642 = vmatpush1.bf16.msra.mxu0 0
  %643 = vmatprep.subr.bf16.mxu0 0
  %644 = vmatpush1.bf16.msra.mxu0 0
  %645 = vmatprep.mubr.bf16.mxu0 0
  %646 = vmatmul.mubr.bf16.gmra.mrb[0].mxu0 %v587
  %v647 = vpop.f32.mrb[0].mxu0
  %v648 = vadd.f32 %v584, %v647
  %v649 = vpop.f32.mrb[0].mxu0
  %v650 = vpop.f32.mrb[0].mxu0
  %v651 = vadd.f32 %v584, %v650
  %v652 = vpop.f32.mrb[0].mxu0
  %653 = vmatprep.mubr.bf16.mxu0 0
  %654 = vmatmul.mubr.bf16.gmra.mrb[0].mxu0 %v590
  %v655 = vpop.f32.mrb[0].mxu0
  %v656 = vadd.f32 %v584, %v655
  %v657 = vpop.f32.mrb[0].mxu0
  %v658 = vpop.f32.mrb[0].mxu0
  %v659 = vadd.f32 %v584, %v658
  %v660 = vpop.f32.mrb[0].mxu0
  %661 = vmatprep.mubr.bf16.mxu0 0
  %662 = vmatmul.mubr.bf16.gmra.mrb[0].mxu0 %v593
  %v663 = vpop.f32.mrb[0].mxu0
  %v664 = vadd.f32 %v584, %v663
  %v665 = vpop.f32.mrb[0].mxu0
  %v666 = vpop.f32.mrb[0].mxu0
  %v667 = vadd.f32 %v584, %v666
  %v668 = vpop.f32.mrb[0].mxu0
  %669 = vmatprep.mubr.bf16.mxu0 0
  %670 = vmatmul.mubr.bf16.gmra.mrb[0].mxu0 %v596
  %v671 = vpop.f32.mrb[0].mxu0
  %v672 = vadd.f32 %v584, %v671
  %v673 = vpop.f32.mrb[0].mxu0
  %v674 = vpop.f32.mrb[0].mxu0
  %v675 = vadd.f32 %v584, %v674
  %v676 = vpop.f32.mrb[0].mxu0
  %677 = vmatprep.mubr.bf16.mxu0 0
  %678 = vmatmul.mubr.bf16.gmra.mrb[0].mxu0 %v599
  %v679 = vpop.f32.mrb[0].mxu0
  %v680 = vadd.f32 %v584, %v679
  %v681 = vpop.f32.mrb[0].mxu0
  %v682 = vpop.f32.mrb[0].mxu0
  %v683 = vadd.f32 %v584, %v682
  %v684 = vpop.f32.mrb[0].mxu0
  %685 = vmatprep.mubr.bf16.mxu0 0
  %686 = vmatmul.mubr.bf16.gmra.mrb[0].mxu0 %v602
  %v687 = vpop.f32.mrb[0].mxu0
  %v688 = vadd.f32 %v584, %v687
  %v689 = vpop.f32.mrb[0].mxu0
  %v690 = vpop.f32.mrb[0].mxu0
  %v691 = vadd.f32 %v584, %v690
  %v692 = vpop.f32.mrb[0].mxu0
  %693 = vmatprep.mubr.bf16.mxu0 0
  %694 = vmatmul.mubr.bf16.gmra.mrb[0].mxu0 %v605
  %v695 = vpop.f32.mrb[0].mxu0
  %v696 = vadd.f32 %v584, %v695
  %v697 = vpop.f32.mrb[0].mxu0
  %v698 = vpop.f32.mrb[0].mxu0
  %v699 = vadd.f32 %v584, %v698
  %v700 = vpop.f32.mrb[0].mxu0
  %701 = vmatprep.mubr.bf16.mxu0 0
  %702 = vmatmul.mubr.bf16.gmra.mrb[0].mxu0 %v608
  %v703 = vpop.f32.mrb[0].mxu0
  %v704 = vadd.f32 %v584, %v703
  %v705 = vpop.f32.mrb[0].mxu0
  %v706 = vpop.f32.mrb[0].mxu0
  %v707 = vadd.f32 %v584, %v706
  %v708 = vpop.f32.mrb[0].mxu0
  %709 = vdwg.mxu0
  %v710 = vld [vmem:[%s1] sm:$0xff]
  %v711 = vld [vmem:[%s1 + $0x8] sm:$0xff]
  %v712 = vld [vmem:[%s1 + $0x10] sm:$0xff]
  %v713 = vld [vmem:[%s1 + $0x18] sm:$0xff]
  %v714 = vld [vmem:[%s1 + $0x20] sm:$0xff]
  %v715 = vld [vmem:[%s1 + $0x28] sm:$0xff]
  %v716 = vld [vmem:[%s1 + $0x30] sm:$0xff]
  %v717 = vld [vmem:[%s1 + $0x38] sm:$0xff]
  %v718 = vld [vmem:[%s1 + $0x40] sm:$0xff]
  %v719 = vld [vmem:[%s1 + $0x48] sm:$0xff]
  %v720 = vld [vmem:[%s1 + $0x50] sm:$0xff]
  %v721 = vld [vmem:[%s1 + $0x58] sm:$0xff]
  %v722 = vld [vmem:[%s1 + $0x60] sm:$0xff]
  %v723 = vld [vmem:[%s1 + $0x68] sm:$0xff]
  %v724 = vld [vmem:[%s1 + $0x70] sm:$0xff]
  %v725 = vld [vmem:[%s1 + $0x78] sm:$0xff]
  %v726 = vadd.f32 %v352, 1.0
  %v727 = vadd.f32 %v355, 1.0
  %v728 = vadd.f32 %v360, 1.0
  %v729 = vadd.f32 %v363, 1.0
  %v730 = vadd.f32 %v368, 1.0
  %v731 = vadd.f32 %v371, 1.0
  %v732 = vadd.f32 %v376, 1.0
  %v733 = vadd.f32 %v379, 1.0
  %v734 = vadd.f32 %v384, 1.0
  %v735 = vadd.f32 %v387, 1.0
  %v736 = vadd.f32 %v392, 1.0
  %v737 = vadd.f32 %v395, 1.0
  %v738 = vadd.f32 %v400, 1.0
  %v739 = vadd.f32 %v403, 1.0
  %v740 = vadd.f32 %v408, 1.0
  %v741 = vadd.f32 %v411, 1.0
  %v742 = vmul.f32 %v710, %v726
  %v743 = vmul.f32 %v711, %v727
  %v744 = vmul.f32 %v712, %v728
  %v745 = vmul.f32 %v713, %v729
  %v746 = vmul.f32 %v714, %v730
  %v747 = vmul.f32 %v715, %v731
  %v748 = vmul.f32 %v716, %v732
  %v749 = vmul.f32 %v717, %v733
  %v750 = vmul.f32 %v718, %v734
  %v751 = vmul.f32 %v719, %v735
  %v752 = vmul.f32 %v720, %v736
  %v753 = vmul.f32 %v721, %v737
  %v754 = vmul.f32 %v722, %v738
  %v755 = vmul.f32 %v723, %v739
  %v756 = vmul.f32 %v724, %v740
  %v757 = vmul.f32 %v725, %v741
  %v758 = vadd.f32 %v742, %v648
  %v759 = vadd.f32 %v743, %v651
  %v760 = vadd.f32 %v744, %v656
  %v761 = vadd.f32 %v745, %v659
  %v762 = vadd.f32 %v746, %v664
  %v763 = vadd.f32 %v747, %v667
  %v764 = vadd.f32 %v748, %v672
  %v765 = vadd.f32 %v749, %v675
  %v766 = vadd.f32 %v750, %v680
  %v767 = vadd.f32 %v751, %v683
  %v768 = vadd.f32 %v752, %v688
  %v769 = vadd.f32 %v753, %v691
  %v770 = vadd.f32 %v754, %v696
  %v771 = vadd.f32 %v755, %v699
  %v772 = vadd.f32 %v756, %v704
  %v773 = vadd.f32 %v757, %v707
  %vm774 = vcmask 97280
  %775 = vst.msk [vmem:[%s10] sm:$0xff] %vm774, %v758
  %776 = vst.msk [vmem:[%s10 + $0x8] sm:$0xff] %vm774, %v759
  %777 = vst.msk [vmem:[%s10 + $0x10] sm:$0xff] %vm774, %v760
  %778 = vst.msk [vmem:[%s10 + $0x18] sm:$0xff] %vm774, %v761
  %779 = vst.msk [vmem:[%s10 + $0x20] sm:$0xff] %vm774, %v762
  %780 = vst.msk [vmem:[%s10 + $0x28] sm:$0xff] %vm774, %v763
  %781 = vst.msk [vmem:[%s10 + $0x30] sm:$0xff] %vm774, %v764
  %782 = vst.msk [vmem:[%s10 + $0x38] sm:$0xff] %vm774, %v765
  %783 = vst.msk [vmem:[%s10 + $0x40] sm:$0xff] %vm774, %v766
  %784 = vst.msk [vmem:[%s10 + $0x48] sm:$0xff] %vm774, %v767
  %785 = vst.msk [vmem:[%s10 + $0x50] sm:$0xff] %vm774, %v768
  %786 = vst.msk [vmem:[%s10 + $0x58] sm:$0xff] %vm774, %v769
  %787 = vst.msk [vmem:[%s10 + $0x60] sm:$0xff] %vm774, %v770
  %788 = vst.msk [vmem:[%s10 + $0x68] sm:$0xff] %vm774, %v771
  %789 = vst.msk [vmem:[%s10 + $0x70] sm:$0xff] %vm774, %v772
  %790 = vst.msk [vmem:[%s10 + $0x78] sm:$0xff] %vm774, %v773
  // Predicated region
  $region42: #{feedback_urdnet.59} parent=0 // pred_check
    _
  $region43: #{feedback_urdnet.59} parent=0 // pred_check_branch
    %792 = sbr.rel (0) target = $region45
  $region44: #{feedback_urdnet.59} parent=0 // pred_region
    _
  $region45: #{feedback_urdnet.59} parent=0 // pred_fallthru
    _
  // Predicated region
  $region46: #{feedback_urdnet.59} parent=0 // pred_check
    _
  $region47: #{feedback_urdnet.59} parent=0 // pred_check_branch
    %794 = sbr.rel (0) target = $region49
  $region48: #{feedback_urdnet.59} parent=0 // pred_region
    _
  $region49: #{feedback_urdnet.59} parent=0 // pred_fallthru
    _

// kernel: feedback_urdnet.60
$region0: #{feedback_urdnet.60}
  #allocation0 [shape = 'u32[]', space=smem, size = 0x4, offset = 0x4, fixed_abs, tag = 'smem constant byte address 0x4 - core index']
  #allocation1 [shape = 'u32[144,128]{1,0:T(1,128)}', space=vmem, size = 0x12000, scoped, tag = 'internal scratch']
  %s0 = inlined_call_operand.vmem [shape: bf16[128,108], index: 0, kind: input, shape index: {}]
  %s1 = inlined_call_operand.vmem [shape: bf16[108,4], index: 1, kind: input, shape index: {}]
  %s2 = inlined_call_operand.vmem [shape: f32[1,4], index: 2, kind: input, shape index: {}]
  %s3 = inlined_call_operand.vmem [shape: f32[128,4], index: 3, kind: output, shape index: {}]
  %s4 = sld [smem:[#allocation0]]
  $region22: #{feedback_urdnet.60} parent=0
    _
  %s6 = ssub.s32 1, %s4
  %s7 = scalar_select 0, %s6, %s4
  // Predicated region
  $region2: #{feedback_urdnet.60} parent=0 // pred_check
    _
  $region3: #{feedback_urdnet.60} parent=0 // pred_check_branch
    %9 = sbr.rel (0) target = $region5
  $region4: #{feedback_urdnet.60} parent=0 // pred_region
    _
  $region5: #{feedback_urdnet.60} parent=0 // pred_fallthru
    _
  // Predicated region
  $region6: #{feedback_urdnet.60} parent=0 // pred_check
    _
  $region7: #{feedback_urdnet.60} parent=0 // pred_check_branch
    %11 = sbr.rel (0) target = $region9
  $region8: #{feedback_urdnet.60} parent=0 // pred_region
    _
  $region9: #{feedback_urdnet.60} parent=0 // pred_fallthru
    _
  // Predicated region
  $region10: #{feedback_urdnet.60} parent=0 // pred_check
    _
  $region11: #{feedback_urdnet.60} parent=0 // pred_check_branch
    %13 = sbr.rel (0) target = $region13
  $region12: #{feedback_urdnet.60} parent=0 // pred_region
    _
  $region13: #{feedback_urdnet.60} parent=0 // pred_fallthru
    _
  %v15 = vld [vmem:[%s0] sm:$0xf]
  %v16 = vld [vmem:[%s0 + $0x4] sm:$0xf]
  %v17 = vld [vmem:[%s0 + $0x8] sm:$0xf]
  %v18 = vld [vmem:[%s0 + $0xc] sm:$0xf]
  %v19 = vld [vmem:[%s0 + $0x10] sm:$0xf]
  %v20 = vld [vmem:[%s0 + $0x14] sm:$0xf]
  %v21 = vld [vmem:[%s0 + $0x18] sm:$0xf]
  %v22 = vld [vmem:[%s0 + $0x1c] sm:$0xf]
  %v23 = vld [vmem:[%s0 + $0x20] sm:$0xf]
  %v24 = vld [vmem:[%s0 + $0x24] sm:$0xf]
  %v25 = vld [vmem:[%s0 + $0x28] sm:$0xf]
  %v26 = vld [vmem:[%s0 + $0x2c] sm:$0xf]
  %v27 = vld [vmem:[%s0 + $0x30] sm:$0xf]
  %v28 = vld [vmem:[%s0 + $0x34] sm:$0xf]
  %v29 = vld [vmem:[%s0 + $0x38] sm:$0xf]
  %v30 = vld [vmem:[%s0 + $0x3c] sm:$0xf]
  %v31 = vld [vmem:[%s1] sm:$0xf]
  %v32 = vld [vmem:[%s1 + $0x4] sm:$0xf]
  %v33 = vld [vmem:[%s1 + $0x8] sm:$0xf]
  %v34 = vld [vmem:[%s1 + $0xc] sm:$0xf]
  %v35 = vld [vmem:[%s1 + $0x10] sm:$0xf]
  %v36 = vld [vmem:[%s1 + $0x14] sm:$0xf]
  %v37 = vld [vmem:[%s1 + $0x18] sm:$0xf]
  %v38 = vld [vmem:[%s1 + $0x1c] sm:$0xf]
  %v39 = vld [vmem:[%s1 + $0x20] sm:$0xf]
  %v40 = vld [vmem:[%s1 + $0x24] sm:$0xf]
  %v41 = vld [vmem:[%s1 + $0x28] sm:$0xf]
  %v42 = vld [vmem:[%s1 + $0x2c] sm:$0xf]
  %v43 = vld [vmem:[%s1 + $0x30] sm:$0xf]
  %v44 = vld [vmem:[%s1 + $0x34] sm:$0x3]
  %v45 = vld [vmem:[%s2] sm:$0x1]
  %v47 = vlaneseq
  %v48 = vshrl.u32 %v47, 7
  %v49 = vsub.s32 0, %v48
  %v50 = vrot.slane %v45, %v49
  %v68 = vunpack.c.l.b16 %v15
  %v69 = vunpack.c.l.b16 %v16
  %v70 = vunpack.c.l.b16 %v17
  %v71 = vunpack.c.l.b16 %v18
  %v72 = vunpack.c.l.b16 %v19
  %v73 = vunpack.c.l.b16 %v20
  %v74 = vunpack.c.l.b16 %v21
  %v75 = vunpack.c.l.b16 %v22
  %v76 = vunpack.c.l.b16 %v23
  %v77 = vunpack.c.l.b16 %v24
  %v78 = vunpack.c.l.b16 %v25
  %v79 = vunpack.c.l.b16 %v26
  %v80 = vunpack.c.l.b16 %v27
  %v81 = vunpack.c.l.b16 %v28
  %v82 = vunpack.c.l.b16 %v29
  %v83 = vunpack.c.l.b16 %v30
  %v84 = vpack.c.b16 %v69, %v68
  %v85 = vpack.c.b16 %v71, %v70
  %v86 = vpack.c.b16 %v73, %v72
  %v87 = vpack.c.b16 %v75, %v74
  %v88 = vpack.c.b16 %v77, %v76
  %v89 = vpack.c.b16 %v79, %v78
  %v90 = vpack.c.b16 %v81, %v80
  %v91 = vpack.c.b16 %v83, %v82
  %v106 = vunpack.c.l.b16 %v31
  %v107 = vunpack.c.l.b16 %v32
  %v108 = vunpack.c.l.b16 %v33
  %v109 = vunpack.c.l.b16 %v34
  %v110 = vunpack.c.l.b16 %v35
  %v111 = vunpack.c.l.b16 %v36
  %v112 = vunpack.c.l.b16 %v37
  %v113 = vunpack.c.l.b16 %v38
  %v114 = vunpack.c.l.b16 %v39
  %v115 = vunpack.c.l.b16 %v40
  %v116 = vunpack.c.l.b16 %v41
  %v117 = vunpack.c.l.b16 %v42
  %v118 = vunpack.c.l.b16 %v43
  %v119 = vunpack.c.l.b16 %v44
  %v120 = vpack.c.b16 %v107, %v106
  %v121 = vpack.c.b16 %v109, %v108
  %v122 = vpack.c.b16 %v111, %v110
  %v123 = vpack.c.b16 %v113, %v112
  %v124 = vpack.c.b16 %v115, %v114
  %v125 = vpack.c.b16 %v117, %v116
  %v126 = vpack.c.b16 %v119, %v118
  %vm133 = vcmask 883712
  %v135 = vsel %vm133, %v84, 0
  %v138 = vsel %vm133, %v85, 0
  %v141 = vsel %vm133, %v86, 0
  %v144 = vsel %vm133, %v87, 0
  %v147 = vsel %vm133, %v88, 0
  %v150 = vsel %vm133, %v89, 0
  %v153 = vsel %vm133, %v90, 0
  %v156 = vsel %vm133, %v91, 0
  %vm158 = vcmask 1045504
  %v160 = vsel %vm158, %v126, 0
  %162 = vmatprep.subr.bf16.mxu0 0
  %163 = vmatpush1.bf16.msra.mxu0 %v120
  %164 = vmatprep.subr.bf16.mxu0 0
  %165 = vmatpush1.bf16.msra.mxu0 %v121
  %166 = vmatprep.subr.bf16.mxu0 0
  %167 = vmatpush1.bf16.msra.mxu0 %v122
  %168 = vmatprep.subr.bf16.mxu0 0
  %169 = vmatpush1.bf16.msra.mxu0 %v123
  %170 = vmatprep.subr.bf16.mxu0 0
  %171 = vmatpush1.bf16.msra.mxu0 %v124
  %172 = vmatprep.subr.bf16.mxu0 0
  %173 = vmatpush1.bf16.msra.mxu0 %v125
  %174 = vmatprep.subr.bf16.mxu0 0
  %175 = vmatpush1.bf16.msra.mxu0 %v160
  %176 = vmatprep.subr.bf16.mxu0 0
  %177 = vmatpush1.bf16.msra.mxu0 0
  %178 = vmatprep.subr.bf16.mxu0 0
  %179 = vmatpush1.bf16.msra.mxu0 0
  %180 = vmatprep.subr.bf16.mxu0 0
  %181 = vmatpush1.bf16.msra.mxu0 0
  %182 = vmatprep.subr.bf16.mxu0 0
  %183 = vmatpush1.bf16.msra.mxu0 0
  %184 = vmatprep.subr.bf16.mxu0 0
  %185 = vmatpush1.bf16.msra.mxu0 0
  %186 = vmatprep.subr.bf16.mxu0 0
  %187 = vmatpush1.bf16.msra.mxu0 0
  %188 = vmatprep.subr.bf16.mxu0 0
  %189 = vmatpush1.bf16.msra.mxu0 0
  %190 = vmatprep.subr.bf16.mxu0 0
  %191 = vmatpush1.bf16.msra.mxu0 0
  %192 = vmatprep.subr.bf16.mxu0 0
  %193 = vmatpush1.bf16.msra.mxu0 0
  %194 = vmatprep.mubr.bf16.mxu0 0
  %195 = vmatmul.mubr.bf16.gmra.mrb[0].mxu0 %v135
  %v196 = vpop.f32.mrb[0].mxu0
  %v197 = vadd.f32 %v50, %v196
  %v198 = vpop.f32.mrb[0].mxu0
  %v199 = vpop.f32.mrb[0].mxu0
  %v200 = vadd.f32 %v50, %v199
  %v201 = vpop.f32.mrb[0].mxu0
  %202 = vmatprep.mubr.bf16.mxu0 0
  %203 = vmatmul.mubr.bf16.gmra.mrb[0].mxu0 %v138
  %v204 = vpop.f32.mrb[0].mxu0
  %v205 = vadd.f32 %v50, %v204
  %v206 = vpop.f32.mrb[0].mxu0
  %v207 = vpop.f32.mrb[0].mxu0
  %v208 = vadd.f32 %v50, %v207
  %v209 = vpop.f32.mrb[0].mxu0
  %210 = vmatprep.mubr.bf16.mxu0 0
  %211 = vmatmul.mubr.bf16.gmra.mrb[0].mxu0 %v141
  %v212 = vpop.f32.mrb[0].mxu0
  %v213 = vadd.f32 %v50, %v212
  %v214 = vpop.f32.mrb[0].mxu0
  %v215 = vpop.f32.mrb[0].mxu0
  %v216 = vadd.f32 %v50, %v215
  %v217 = vpop.f32.mrb[0].mxu0
  %218 = vmatprep.mubr.bf16.mxu0 0
  %219 = vmatmul.mubr.bf16.gmra.mrb[0].mxu0 %v144
  %v220 = vpop.f32.mrb[0].mxu0
  %v221 = vadd.f32 %v50, %v220
  %v222 = vpop.f32.mrb[0].mxu0
  %v223 = vpop.f32.mrb[0].mxu0
  %v224 = vadd.f32 %v50, %v223
  %v225 = vpop.f32.mrb[0].mxu0
  %226 = vmatprep.mubr.bf16.mxu0 0
  %227 = vmatmul.mubr.bf16.gmra.mrb[0].mxu0 %v147
  %v228 = vpop.f32.mrb[0].mxu0
  %v229 = vadd.f32 %v50, %v228
  %v230 = vpop.f32.mrb[0].mxu0
  %v231 = vpop.f32.mrb[0].mxu0
  %v232 = vadd.f32 %v50, %v231
  %v233 = vpop.f32.mrb[0].mxu0
  %234 = vmatprep.mubr.bf16.mxu0 0
  %235 = vmatmul.mubr.bf16.gmra.mrb[0].mxu0 %v150
  %v236 = vpop.f32.mrb[0].mxu0
  %v237 = vadd.f32 %v50, %v236
  %v238 = vpop.f32.mrb[0].mxu0
  %v239 = vpop.f32.mrb[0].mxu0
  %v240 = vadd.f32 %v50, %v239
  %v241 = vpop.f32.mrb[0].mxu0
  %242 = vmatprep.mubr.bf16.mxu0 0
  %243 = vmatmul.mubr.bf16.gmra.mrb[0].mxu0 %v153
  %v244 = vpop.f32.mrb[0].mxu0
  %v245 = vadd.f32 %v50, %v244
  %v246 = vpop.f32.mrb[0].mxu0
  %v247 = vpop.f32.mrb[0].mxu0
  %v248 = vadd.f32 %v50, %v247
  %v249 = vpop.f32.mrb[0].mxu0
  %250 = vmatprep.mubr.bf16.mxu0 0
  %251 = vmatmul.mubr.bf16.gmra.mrb[0].mxu0 %v156
  %v252 = vpop.f32.mrb[0].mxu0
  %v253 = vadd.f32 %v50, %v252
  %v254 = vpop.f32.mrb[0].mxu0
  %v255 = vpop.f32.mrb[0].mxu0
  %v256 = vadd.f32 %v50, %v255
  %v257 = vpop.f32.mrb[0].mxu0
  %258 = vdwg.mxu0
  %v259 = vmax.f32 %v197, 0.0
  %v260 = vmax.f32 %v200, 0.0
  %v261 = vmax.f32 %v205, 0.0
  %v262 = vmax.f32 %v208, 0.0
  %v263 = vmax.f32 %v213, 0.0
  %v264 = vmax.f32 %v216, 0.0
  %v265 = vmax.f32 %v221, 0.0
  %v266 = vmax.f32 %v224, 0.0
  %v267 = vmax.f32 %v229, 0.0
  %v268 = vmax.f32 %v232, 0.0
  %v269 = vmax.f32 %v237, 0.0
  %v270 = vmax.f32 %v240, 0.0
  %v271 = vmax.f32 %v245, 0.0
  %v272 = vmax.f32 %v248, 0.0
  %v273 = vmax.f32 %v253, 0.0
  %v274 = vmax.f32 %v256, 0.0
  %vm275 = vcmask 31744
  %276 = vst.msk [vmem:[%s3] sm:$0xff] %vm275, %v259
  %277 = vst.msk [vmem:[%s3 + $0x8] sm:$0xff] %vm275, %v260
  %278 = vst.msk [vmem:[%s3 + $0x10] sm:$0xff] %vm275, %v261
  %279 = vst.msk [vmem:[%s3 + $0x18] sm:$0xff] %vm275, %v262
  %280 = vst.msk [vmem:[%s3 + $0x20] sm:$0xff] %vm275, %v263
  %281 = vst.msk [vmem:[%s3 + $0x28] sm:$0xff] %vm275, %v264
  %282 = vst.msk [vmem:[%s3 + $0x30] sm:$0xff] %vm275, %v265
  %283 = vst.msk [vmem:[%s3 + $0x38] sm:$0xff] %vm275, %v266
  %284 = vst.msk [vmem:[%s3 + $0x40] sm:$0xff] %vm275, %v267
  %285 = vst.msk [vmem:[%s3 + $0x48] sm:$0xff] %vm275, %v268
  %286 = vst.msk [vmem:[%s3 + $0x50] sm:$0xff] %vm275, %v269
  %287 = vst.msk [vmem:[%s3 + $0x58] sm:$0xff] %vm275, %v270
  %288 = vst.msk [vmem:[%s3 + $0x60] sm:$0xff] %vm275, %v271
  %289 = vst.msk [vmem:[%s3 + $0x68] sm:$0xff] %vm275, %v272
  %290 = vst.msk [vmem:[%s3 + $0x70] sm:$0xff] %vm275, %v273
  %291 = vst.msk [vmem:[%s3 + $0x78] sm:$0xff] %vm275, %v274
  // Predicated region
  $region14: #{feedback_urdnet.60} parent=0 // pred_check
    _
  $region15: #{feedback_urdnet.60} parent=0 // pred_check_branch
    %293 = sbr.rel (0) target = $region17
  $region16: #{feedback_urdnet.60} parent=0 // pred_region
    _
  $region17: #{feedback_urdnet.60} parent=0 // pred_fallthru
    _
  // Predicated region
  $region18: #{feedback_urdnet.60} parent=0 // pred_check
    _
  $region19: #{feedback_urdnet.60} parent=0 // pred_check_branch
    %295 = sbr.rel (0) target = $region21
  $region20: #{feedback_urdnet.60} parent=0 // pred_region
    _
  $region21: #{feedback_urdnet.60} parent=0 // pred_fallthru
    _

// kernel: feedback_urdnet.62
$region0: #{feedback_urdnet.62}
  #allocation0 [shape = 'u32[]', space=smem, size = 0x4, offset = 0x4, fixed_abs, tag = 'smem constant byte address 0x4 - core index']
  #allocation1 [shape = 'u32[144,128]{1,0:T(1,128)}', space=vmem, size = 0x12000, scoped, tag = 'internal scratch']
  %s0 = inlined_call_operand.vmem [shape: bf16[128,16], index: 0, kind: input, shape index: {}]
  %s1 = inlined_call_operand.vmem [shape: bf16[16,8], index: 1, kind: input, shape index: {}]
  %s2 = inlined_call_operand.vmem [shape: f32[1,8], index: 2, kind: input, shape index: {}]
  %s3 = inlined_call_operand.vmem [shape: f32[128,8], index: 3, kind: output, shape index: {}]
  %s4 = sld [smem:[#allocation0]]
  $region22: #{feedback_urdnet.62} parent=0
    _
  %s6 = ssub.s32 1, %s4
  %s7 = scalar_select 0, %s6, %s4
  // Predicated region
  $region2: #{feedback_urdnet.62} parent=0 // pred_check
    _
  $region3: #{feedback_urdnet.62} parent=0 // pred_check_branch
    %9 = sbr.rel (0) target = $region5
  $region4: #{feedback_urdnet.62} parent=0 // pred_region
    _
  $region5: #{feedback_urdnet.62} parent=0 // pred_fallthru
    _
  // Predicated region
  $region6: #{feedback_urdnet.62} parent=0 // pred_check
    _
  $region7: #{feedback_urdnet.62} parent=0 // pred_check_branch
    %11 = sbr.rel (0) target = $region9
  $region8: #{feedback_urdnet.62} parent=0 // pred_region
    _
  $region9: #{feedback_urdnet.62} parent=0 // pred_fallthru
    _
  // Predicated region
  $region10: #{feedback_urdnet.62} parent=0 // pred_check
    _
  $region11: #{feedback_urdnet.62} parent=0 // pred_check_branch
    %13 = sbr.rel (0) target = $region13
  $region12: #{feedback_urdnet.62} parent=0 // pred_region
    _
  $region13: #{feedback_urdnet.62} parent=0 // pred_fallthru
    _
  %v15 = vld [vmem:[%s0] sm:$0xf]
  %v16 = vld [vmem:[%s0 + $0x4] sm:$0xf]
  %v17 = vld [vmem:[%s0 + $0x8] sm:$0xf]
  %v18 = vld [vmem:[%s0 + $0xc] sm:$0xf]
  %v19 = vld [vmem:[%s0 + $0x10] sm:$0xf]
  %v20 = vld [vmem:[%s0 + $0x14] sm:$0xf]
  %v21 = vld [vmem:[%s0 + $0x18] sm:$0xf]
  %v22 = vld [vmem:[%s0 + $0x1c] sm:$0xf]
  %v23 = vld [vmem:[%s0 + $0x20] sm:$0xf]
  %v24 = vld [vmem:[%s0 + $0x24] sm:$0xf]
  %v25 = vld [vmem:[%s0 + $0x28] sm:$0xf]
  %v26 = vld [vmem:[%s0 + $0x2c] sm:$0xf]
  %v27 = vld [vmem:[%s0 + $0x30] sm:$0xf]
  %v28 = vld [vmem:[%s0 + $0x34] sm:$0xf]
  %v29 = vld [vmem:[%s0 + $0x38] sm:$0xf]
  %v30 = vld [vmem:[%s0 + $0x3c] sm:$0xf]
  %v31 = vld [vmem:[%s1] sm:$0xf]
  %v32 = vld [vmem:[%s1 + $0x4] sm:$0xf]
  %v33 = vld [vmem:[%s2] sm:$0x1]
  %v35 = vlaneseq
  %v36 = vshrl.u32 %v35, 7
  %v37 = vsub.s32 0, %v36
  %v38 = vrot.slane %v33, %v37
  %v56 = vunpack.c.l.b16 %v15
  %v57 = vunpack.c.l.b16 %v16
  %v58 = vunpack.c.l.b16 %v17
  %v59 = vunpack.c.l.b16 %v18
  %v60 = vunpack.c.l.b16 %v19
  %v61 = vunpack.c.l.b16 %v20
  %v62 = vunpack.c.l.b16 %v21
  %v63 = vunpack.c.l.b16 %v22
  %v64 = vunpack.c.l.b16 %v23
  %v65 = vunpack.c.l.b16 %v24
  %v66 = vunpack.c.l.b16 %v25
  %v67 = vunpack.c.l.b16 %v26
  %v68 = vunpack.c.l.b16 %v27
  %v69 = vunpack.c.l.b16 %v28
  %v70 = vunpack.c.l.b16 %v29
  %v71 = vunpack.c.l.b16 %v30
  %v72 = vpack.c.b16 %v57, %v56
  %v73 = vpack.c.b16 %v59, %v58
  %v74 = vpack.c.b16 %v61, %v60
  %v75 = vpack.c.b16 %v63, %v62
  %v76 = vpack.c.b16 %v65, %v64
  %v77 = vpack.c.b16 %v67, %v66
  %v78 = vpack.c.b16 %v69, %v68
  %v79 = vpack.c.b16 %v71, %v70
  %v82 = vunpack.c.l.b16 %v31
  %v83 = vunpack.c.l.b16 %v32
  %v84 = vpack.c.b16 %v83, %v82
  %vm86 = vcmask 130048
  %v88 = vsel %vm86, %v72, 0
  %v91 = vsel %vm86, %v73, 0
  %v94 = vsel %vm86, %v74, 0
  %v97 = vsel %vm86, %v75, 0
  %v100 = vsel %vm86, %v76, 0
  %v103 = vsel %vm86, %v77, 0
  %v106 = vsel %vm86, %v78, 0
  %v109 = vsel %vm86, %v79, 0
  %111 = vmatprep.subr.bf16.mxu0 0
  %112 = vmatpush1.bf16.msra.mxu0 %v84
  %113 = vmatprep.subr.bf16.mxu0 0
  %114 = vmatpush1.bf16.msra.mxu0 0
  %115 = vmatprep.subr.bf16.mxu0 0
  %116 = vmatpush1.bf16.msra.mxu0 0
  %117 = vmatprep.subr.bf16.mxu0 0
  %118 = vmatpush1.bf16.msra.mxu0 0
  %119 = vmatprep.subr.bf16.mxu0 0
  %120 = vmatpush1.bf16.msra.mxu0 0
  %121 = vmatprep.subr.bf16.mxu0 0
  %122 = vmatpush1.bf16.msra.mxu0 0
  %123 = vmatprep.subr.bf16.mxu0 0
  %124 = vmatpush1.bf16.msra.mxu0 0
  %125 = vmatprep.subr.bf16.mxu0 0
  %126 = vmatpush1.bf16.msra.mxu0 0
  %127 = vmatprep.subr.bf16.mxu0 0
  %128 = vmatpush1.bf16.msra.mxu0 0
  %129 = vmatprep.subr.bf16.mxu0 0
  %130 = vmatpush1.bf16.msra.mxu0 0
  %131 = vmatprep.subr.bf16.mxu0 0
  %132 = vmatpush1.bf16.msra.mxu0 0
  %133 = vmatprep.subr.bf16.mxu0 0
  %134 = vmatpush1.bf16.msra.mxu0 0
  %135 = vmatprep.subr.bf16.mxu0 0
  %136 = vmatpush1.bf16.msra.mxu0 0
  %137 = vmatprep.subr.bf16.mxu0 0
  %138 = vmatpush1.bf16.msra.mxu0 0
  %139 = vmatprep.subr.bf16.mxu0 0
  %140 = vmatpush1.bf16.msra.mxu0 0
  %141 = vmatprep.subr.bf16.mxu0 0
  %142 = vmatpush1.bf16.msra.mxu0 0
  %143 = vmatprep.mubr.bf16.mxu0 0
  %144 = vmatmul.mubr.bf16.gmra.mrb[0].mxu0 %v88
  %v145 = vpop.f32.mrb[0].mxu0
  %v146 = vadd.f32 %v38, %v145
  %v147 = vpop.f32.mrb[0].mxu0
  %v148 = vpop.f32.mrb[0].mxu0
  %v149 = vadd.f32 %v38, %v148
  %v150 = vpop.f32.mrb[0].mxu0
  %151 = vmatprep.mubr.bf16.mxu0 0
  %152 = vmatmul.mubr.bf16.gmra.mrb[0].mxu0 %v91
  %v153 = vpop.f32.mrb[0].mxu0
  %v154 = vadd.f32 %v38, %v153
  %v155 = vpop.f32.mrb[0].mxu0
  %v156 = vpop.f32.mrb[0].mxu0
  %v157 = vadd.f32 %v38, %v156
  %v158 = vpop.f32.mrb[0].mxu0
  %159 = vmatprep.mubr.bf16.mxu0 0
  %160 = vmatmul.mubr.bf16.gmra.mrb[0].mxu0 %v94
  %v161 = vpop.f32.mrb[0].mxu0
  %v162 = vadd.f32 %v38, %v161
  %v163 = vpop.f32.mrb[0].mxu0
  %v164 = vpop.f32.mrb[0].mxu0
  %v165 = vadd.f32 %v38, %v164
  %v166 = vpop.f32.mrb[0].mxu0
  %167 = vmatprep.mubr.bf16.mxu0 0
  %168 = vmatmul.mubr.bf16.gmra.mrb[0].mxu0 %v97
  %v169 = vpop.f32.mrb[0].mxu0
  %v170 = vadd.f32 %v38, %v169
  %v171 = vpop.f32.mrb[0].mxu0
  %v172 = vpop.f32.mrb[0].mxu0
  %v173 = vadd.f32 %v38, %v172
  %v174 = vpop.f32.mrb[0].mxu0
  %175 = vmatprep.mubr.bf16.mxu0 0
  %176 = vmatmul.mubr.bf16.gmra.mrb[0].mxu0 %v100
  %v177 = vpop.f32.mrb[0].mxu0
  %v178 = vadd.f32 %v38, %v177
  %v179 = vpop.f32.mrb[0].mxu0
  %v180 = vpop.f32.mrb[0].mxu0
  %v181 = vadd.f32 %v38, %v180
  %v182 = vpop.f32.mrb[0].mxu0
  %183 = vmatprep.mubr.bf16.mxu0 0
  %184 = vmatmul.mubr.bf16.gmra.mrb[0].mxu0 %v103
  %v185 = vpop.f32.mrb[0].mxu0
  %v186 = vadd.f32 %v38, %v185
  %v187 = vpop.f32.mrb[0].mxu0
  %v188 = vpop.f32.mrb[0].mxu0
  %v189 = vadd.f32 %v38, %v188
  %v190 = vpop.f32.mrb[0].mxu0
  %191 = vmatprep.mubr.bf16.mxu0 0
  %192 = vmatmul.mubr.bf16.gmra.mrb[0].mxu0 %v106
  %v193 = vpop.f32.mrb[0].mxu0
  %v194 = vadd.f32 %v38, %v193
  %v195 = vpop.f32.mrb[0].mxu0
  %v196 = vpop.f32.mrb[0].mxu0
  %v197 = vadd.f32 %v38, %v196
  %v198 = vpop.f32.mrb[0].mxu0
  %199 = vmatprep.mubr.bf16.mxu0 0
  %200 = vmatmul.mubr.bf16.gmra.mrb[0].mxu0 %v109
  %v201 = vpop.f32.mrb[0].mxu0
  %v202 = vadd.f32 %v38, %v201
  %v203 = vpop.f32.mrb[0].mxu0
  %v204 = vpop.f32.mrb[0].mxu0
  %v205 = vadd.f32 %v38, %v204
  %v206 = vpop.f32.mrb[0].mxu0
  %207 = vdwg.mxu0
  %vm208 = vcmask 64512
  %209 = vst.msk [vmem:[%s3] sm:$0xff] %vm208, %v146
  %210 = vst.msk [vmem:[%s3 + $0x8] sm:$0xff] %vm208, %v149
  %211 = vst.msk [vmem:[%s3 + $0x10] sm:$0xff] %vm208, %v154
  %212 = vst.msk [vmem:[%s3 + $0x18] sm:$0xff] %vm208, %v157
  %213 = vst.msk [vmem:[%s3 + $0x20] sm:$0xff] %vm208, %v162
  %214 = vst.msk [vmem:[%s3 + $0x28] sm:$0xff] %vm208, %v165
  %215 = vst.msk [vmem:[%s3 + $0x30] sm:$0xff] %vm208, %v170
  %216 = vst.msk [vmem:[%s3 + $0x38] sm:$0xff] %vm208, %v173
  %217 = vst.msk [vmem:[%s3 + $0x40] sm:$0xff] %vm208, %v178
  %218 = vst.msk [vmem:[%s3 + $0x48] sm:$0xff] %vm208, %v181
  %219 = vst.msk [vmem:[%s3 + $0x50] sm:$0xff] %vm208, %v186
  %220 = vst.msk [vmem:[%s3 + $0x58] sm:$0xff] %vm208, %v189
  %221 = vst.msk [vmem:[%s3 + $0x60] sm:$0xff] %vm208, %v194
  %222 = vst.msk [vmem:[%s3 + $0x68] sm:$0xff] %vm208, %v197
  %223 = vst.msk [vmem:[%s3 + $0x70] sm:$0xff] %vm208, %v202
  %224 = vst.msk [vmem:[%s3 + $0x78] sm:$0xff] %vm208, %v205
  // Predicated region
  $region14: #{feedback_urdnet.62} parent=0 // pred_check
    _
  $region15: #{feedback_urdnet.62} parent=0 // pred_check_branch
    %226 = sbr.rel (0) target = $region17
  $region16: #{feedback_urdnet.62} parent=0 // pred_region
    _
  $region17: #{feedback_urdnet.62} parent=0 // pred_fallthru
    _
  // Predicated region
  $region18: #{feedback_urdnet.62} parent=0 // pred_check
    _
  $region19: #{feedback_urdnet.62} parent=0 // pred_check_branch
    %228 = sbr.rel (0) target = $region21
  $region20: #{feedback_urdnet.62} parent=0 // pred_region
    _
  $region21: #{feedback_urdnet.62} parent=0 // pred_fallthru
    _

// kernel: feedback_urdnet.61
$region0: #{feedback_urdnet.61}
  #allocation0 [shape = 'u32[]', space=smem, size = 0x4, offset = 0x4, fixed_abs, tag = 'smem constant byte address 0x4 - core index']
  #allocation1 [shape = 'u32[144,128]{1,0:T(1,128)}', space=vmem, size = 0x12000, scoped, tag = 'internal scratch']
  %s0 = inlined_call_operand.vmem [shape: bf16[128,8], index: 0, kind: input, shape index: {}]
  %s1 = inlined_call_operand.vmem [shape: f32[128,16], index: 1, kind: input, shape index: {}]
  %s2 = inlined_call_operand.vmem [shape: bf16[8,8], index: 2, kind: input, shape index: {}]
  %s3 = inlined_call_operand.vmem [shape: f32[1,8], index: 3, kind: input, shape index: {}]
  %s4 = inlined_call_operand.vmem [shape: bf16[8,16], index: 4, kind: input, shape index: {}]
  %s5 = inlined_call_operand.vmem [shape: f32[1,16], index: 5, kind: input, shape index: {}]
  %s6 = inlined_call_operand.vmem [shape: bf16[8,8], index: 6, kind: input, shape index: {}]
  %s7 = inlined_call_operand.vmem [shape: f32[1,8], index: 7, kind: input, shape index: {}]
  %s8 = inlined_call_operand.vmem [shape: bf16[8,16], index: 8, kind: input, shape index: {}]
  %s9 = inlined_call_operand.vmem [shape: f32[1,16], index: 9, kind: input, shape index: {}]
  %s10 = inlined_call_operand.vmem [shape: f32[128,16], index: 10, kind: output, shape index: {}]
  %s11 = sld [smem:[#allocation0]]
  $region50: #{feedback_urdnet.61} parent=0
    _
  %s13 = ssub.s32 1, %s11
  %s14 = scalar_select 0, %s13, %s11
  // Predicated region
  $region2: #{feedback_urdnet.61} parent=0 // pred_check
    _
  $region3: #{feedback_urdnet.61} parent=0 // pred_check_branch
    %16 = sbr.rel (0) target = $region5
  $region4: #{feedback_urdnet.61} parent=0 // pred_region
    _
  $region5: #{feedback_urdnet.61} parent=0 // pred_fallthru
    _
  // Predicated region
  $region6: #{feedback_urdnet.61} parent=0 // pred_check
    _
  $region7: #{feedback_urdnet.61} parent=0 // pred_check_branch
    %18 = sbr.rel (0) target = $region9
  $region8: #{feedback_urdnet.61} parent=0 // pred_region
    _
  $region9: #{feedback_urdnet.61} parent=0 // pred_fallthru
    _
  // Predicated region
  $region10: #{feedback_urdnet.61} parent=0 // pred_check
    _
  $region11: #{feedback_urdnet.61} parent=0 // pred_check_branch
    %20 = sbr.rel (0) target = $region13
  $region12: #{feedback_urdnet.61} parent=0 // pred_region
    _
  $region13: #{feedback_urdnet.61} parent=0 // pred_fallthru
    _
  // Predicated region
  $region14: #{feedback_urdnet.61} parent=0 // pred_check
    _
  $region15: #{feedback_urdnet.61} parent=0 // pred_check_branch
    %22 = sbr.rel (0) target = $region17
  $region16: #{feedback_urdnet.61} parent=0 // pred_region
    _
  $region17: #{feedback_urdnet.61} parent=0 // pred_fallthru
    _
  // Predicated region
  $region18: #{feedback_urdnet.61} parent=0 // pred_check
    _
  $region19: #{feedback_urdnet.61} parent=0 // pred_check_branch
    %24 = sbr.rel (0) target = $region21
  $region20: #{feedback_urdnet.61} parent=0 // pred_region
    _
  $region21: #{feedback_urdnet.61} parent=0 // pred_fallthru
    _
  // Predicated region
  $region22: #{feedback_urdnet.61} parent=0 // pred_check
    _
  $region23: #{feedback_urdnet.61} parent=0 // pred_check_branch
    %26 = sbr.rel (0) target = $region25
  $region24: #{feedback_urdnet.61} parent=0 // pred_region
    _
  $region25: #{feedback_urdnet.61} parent=0 // pred_fallthru
    _
  // Predicated region
  $region26: #{feedback_urdnet.61} parent=0 // pred_check
    _
  $region27: #{feedback_urdnet.61} parent=0 // pred_check_branch
    %28 = sbr.rel (0) target = $region29
  $region28: #{feedback_urdnet.61} parent=0 // pred_region
    _
  $region29: #{feedback_urdnet.61} parent=0 // pred_fallthru
    _
  // Predicated region
  $region30: #{feedback_urdnet.61} parent=0 // pred_check
    _
  $region31: #{feedback_urdnet.61} parent=0 // pred_check_branch
    %30 = sbr.rel (0) target = $region33
  $region32: #{feedback_urdnet.61} parent=0 // pred_region
    _
  $region33: #{feedback_urdnet.61} parent=0 // pred_fallthru
    _
  // Predicated region
  $region34: #{feedback_urdnet.61} parent=0 // pred_check
    _
  $region35: #{feedback_urdnet.61} parent=0 // pred_check_branch
    %32 = sbr.rel (0) target = $region37
  $region36: #{feedback_urdnet.61} parent=0 // pred_region
    _
  $region37: #{feedback_urdnet.61} parent=0 // pred_fallthru
    _
  // Predicated region
  $region38: #{feedback_urdnet.61} parent=0 // pred_check
    _
  $region39: #{feedback_urdnet.61} parent=0 // pred_check_branch
    %34 = sbr.rel (0) target = $region41
  $region40: #{feedback_urdnet.61} parent=0 // pred_region
    _
  $region41: #{feedback_urdnet.61} parent=0 // pred_fallthru
    _
  %v36 = vld [vmem:[%s0] sm:$0xf]
  %v37 = vld [vmem:[%s0 + $0x4] sm:$0xf]
  %v38 = vld [vmem:[%s0 + $0x8] sm:$0xf]
  %v39 = vld [vmem:[%s0 + $0xc] sm:$0xf]
  %v40 = vld [vmem:[%s0 + $0x10] sm:$0xf]
  %v41 = vld [vmem:[%s0 + $0x14] sm:$0xf]
  %v42 = vld [vmem:[%s0 + $0x18] sm:$0xf]
  %v43 = vld [vmem:[%s0 + $0x1c] sm:$0xf]
  %v44 = vld [vmem:[%s0 + $0x20] sm:$0xf]
  %v45 = vld [vmem:[%s0 + $0x24] sm:$0xf]
  %v46 = vld [vmem:[%s0 + $0x28] sm:$0xf]
  %v47 = vld [vmem:[%s0 + $0x2c] sm:$0xf]
  %v48 = vld [vmem:[%s0 + $0x30] sm:$0xf]
  %v49 = vld [vmem:[%s0 + $0x34] sm:$0xf]
  %v50 = vld [vmem:[%s0 + $0x38] sm:$0xf]
  %v51 = vld [vmem:[%s0 + $0x3c] sm:$0xf]
  %v52 = vld [vmem:[%s2] sm:$0xf]
  %v53 = vld [vmem:[%s3] sm:$0x1]
  %v55 = vlaneseq
  %v56 = vshrl.u32 %v55, 7
  %v57 = vsub.s32 0, %v56
  %v58 = vrot.slane %v53, %v57
  %v76 = vunpack.c.l.b16 %v36
  %v77 = vunpack.c.l.b16 %v37
  %v78 = vunpack.c.l.b16 %v38
  %v79 = vunpack.c.l.b16 %v39
  %v80 = vunpack.c.l.b16 %v40
  %v81 = vunpack.c.l.b16 %v41
  %v82 = vunpack.c.l.b16 %v42
  %v83 = vunpack.c.l.b16 %v43
  %v84 = vunpack.c.l.b16 %v44
  %v85 = vunpack.c.l.b16 %v45
  %v86 = vunpack.c.l.b16 %v46
  %v87 = vunpack.c.l.b16 %v47
  %v88 = vunpack.c.l.b16 %v48
  %v89 = vunpack.c.l.b16 %v49
  %v90 = vunpack.c.l.b16 %v50
  %v91 = vunpack.c.l.b16 %v51
  %v92 = vpack.c.b16 %v77, %v76
  %v93 = vpack.c.b16 %v79, %v78
  %v94 = vpack.c.b16 %v81, %v80
  %v95 = vpack.c.b16 %v83, %v82
  %v96 = vpack.c.b16 %v85, %v84
  %v97 = vpack.c.b16 %v87, %v86
  %v98 = vpack.c.b16 %v89, %v88
  %v99 = vpack.c.b16 %v91, %v90
  %vm100 = vcmask 64512
  %v102 = vsel %vm100, %v92, 0
  %v105 = vsel %vm100, %v93, 0
  %v108 = vsel %vm100, %v94, 0
  %v111 = vsel %vm100, %v95, 0
  %v114 = vsel %vm100, %v96, 0
  %v117 = vsel %vm100, %v97, 0
  %v120 = vsel %vm100, %v98, 0
  %v123 = vsel %vm100, %v99, 0
  %vm125 = vcmask 1043456
  %v127 = vsel %vm125, %v52, 0
  %129 = vmatprep.subr.bf16.mxu0 0
  %130 = vmatpush1.bf16.msra.mxu0 %v127
  %131 = vmatprep.subr.bf16.mxu0 0
  %132 = vmatpush1.bf16.msra.mxu0 0
  %133 = vmatprep.subr.bf16.mxu0 0
  %134 = vmatpush1.bf16.msra.mxu0 0
  %135 = vmatprep.subr.bf16.mxu0 0
  %136 = vmatpush1.bf16.msra.mxu0 0
  %137 = vmatprep.subr.bf16.mxu0 0
  %138 = vmatpush1.bf16.msra.mxu0 0
  %139 = vmatprep.subr.bf16.mxu0 0
  %140 = vmatpush1.bf16.msra.mxu0 0
  %141 = vmatprep.subr.bf16.mxu0 0
  %142 = vmatpush1.bf16.msra.mxu0 0
  %143 = vmatprep.subr.bf16.mxu0 0
  %144 = vmatpush1.bf16.msra.mxu0 0
  %145 = vmatprep.subr.bf16.mxu0 0
  %146 = vmatpush1.bf16.msra.mxu0 0
  %147 = vmatprep.subr.bf16.mxu0 0
  %148 = vmatpush1.bf16.msra.mxu0 0
  %149 = vmatprep.subr.bf16.mxu0 0
  %150 = vmatpush1.bf16.msra.mxu0 0
  %151 = vmatprep.subr.bf16.mxu0 0
  %152 = vmatpush1.bf16.msra.mxu0 0
  %153 = vmatprep.subr.bf16.mxu0 0
  %154 = vmatpush1.bf16.msra.mxu0 0
  %155 = vmatprep.subr.bf16.mxu0 0
  %156 = vmatpush1.bf16.msra.mxu0 0
  %157 = vmatprep.subr.bf16.mxu0 0
  %158 = vmatpush1.bf16.msra.mxu0 0
  %159 = vmatprep.subr.bf16.mxu0 0
  %160 = vmatpush1.bf16.msra.mxu0 0
  %161 = vmatprep.mubr.bf16.mxu0 0
  %162 = vmatmul.mubr.bf16.gmra.mrb[0].mxu0 %v102
  %v163 = vpop.f32.mrb[0].mxu0
  %v164 = vadd.f32 %v58, %v163
  %v165 = vpop.f32.mrb[0].mxu0
  %v166 = vpop.f32.mrb[0].mxu0
  %v167 = vadd.f32 %v58, %v166
  %v168 = vpop.f32.mrb[0].mxu0
  %169 = vmatprep.mubr.bf16.mxu0 0
  %170 = vmatmul.mubr.bf16.gmra.mrb[0].mxu0 %v105
  %v171 = vpop.f32.mrb[0].mxu0
  %v172 = vadd.f32 %v58, %v171
  %v173 = vpop.f32.mrb[0].mxu0
  %v174 = vpop.f32.mrb[0].mxu0
  %v175 = vadd.f32 %v58, %v174
  %v176 = vpop.f32.mrb[0].mxu0
  %177 = vmatprep.mubr.bf16.mxu0 0
  %178 = vmatmul.mubr.bf16.gmra.mrb[0].mxu0 %v108
  %v179 = vpop.f32.mrb[0].mxu0
  %v180 = vadd.f32 %v58, %v179
  %v181 = vpop.f32.mrb[0].mxu0
  %v182 = vpop.f32.mrb[0].mxu0
  %v183 = vadd.f32 %v58, %v182
  %v184 = vpop.f32.mrb[0].mxu0
  %185 = vmatprep.mubr.bf16.mxu0 0
  %186 = vmatmul.mubr.bf16.gmra.mrb[0].mxu0 %v111
  %v187 = vpop.f32.mrb[0].mxu0
  %v188 = vadd.f32 %v58, %v187
  %v189 = vpop.f32.mrb[0].mxu0
  %v190 = vpop.f32.mrb[0].mxu0
  %v191 = vadd.f32 %v58, %v190
  %v192 = vpop.f32.mrb[0].mxu0
  %193 = vmatprep.mubr.bf16.mxu0 0
  %194 = vmatmul.mubr.bf16.gmra.mrb[0].mxu0 %v114
  %v195 = vpop.f32.mrb[0].mxu0
  %v196 = vadd.f32 %v58, %v195
  %v197 = vpop.f32.mrb[0].mxu0
  %v198 = vpop.f32.mrb[0].mxu0
  %v199 = vadd.f32 %v58, %v198
  %v200 = vpop.f32.mrb[0].mxu0
  %201 = vmatprep.mubr.bf16.mxu0 0
  %202 = vmatmul.mubr.bf16.gmra.mrb[0].mxu0 %v117
  %v203 = vpop.f32.mrb[0].mxu0
  %v204 = vadd.f32 %v58, %v203
  %v205 = vpop.f32.mrb[0].mxu0
  %v206 = vpop.f32.mrb[0].mxu0
  %v207 = vadd.f32 %v58, %v206
  %v208 = vpop.f32.mrb[0].mxu0
  %209 = vmatprep.mubr.bf16.mxu0 0
  %210 = vmatmul.mubr.bf16.gmra.mrb[0].mxu0 %v120
  %v211 = vpop.f32.mrb[0].mxu0
  %v212 = vadd.f32 %v58, %v211
  %v213 = vpop.f32.mrb[0].mxu0
  %v214 = vpop.f32.mrb[0].mxu0
  %v215 = vadd.f32 %v58, %v214
  %v216 = vpop.f32.mrb[0].mxu0
  %217 = vmatprep.mubr.bf16.mxu0 0
  %218 = vmatmul.mubr.bf16.gmra.mrb[0].mxu0 %v123
  %v219 = vpop.f32.mrb[0].mxu0
  %v220 = vadd.f32 %v58, %v219
  %v221 = vpop.f32.mrb[0].mxu0
  %v222 = vpop.f32.mrb[0].mxu0
  %v223 = vadd.f32 %v58, %v222
  %v224 = vpop.f32.mrb[0].mxu0
  %225 = vdwg.mxu0
  %vm226 = vcmp.ge.f32.partialorder %v164, 0.0
  %vm227 = vcmp.ge.f32.partialorder %v167, 0.0
  %vm228 = vcmp.ge.f32.partialorder %v172, 0.0
  %vm229 = vcmp.ge.f32.partialorder %v175, 0.0
  %vm230 = vcmp.ge.f32.partialorder %v180, 0.0
  %vm231 = vcmp.ge.f32.partialorder %v183, 0.0
  %vm232 = vcmp.ge.f32.partialorder %v188, 0.0
  %vm233 = vcmp.ge.f32.partialorder %v191, 0.0
  %vm234 = vcmp.ge.f32.partialorder %v196, 0.0
  %vm235 = vcmp.ge.f32.partialorder %v199, 0.0
  %vm236 = vcmp.ge.f32.partialorder %v204, 0.0
  %vm237 = vcmp.ge.f32.partialorder %v207, 0.0
  %vm238 = vcmp.ge.f32.partialorder %v212, 0.0
  %vm239 = vcmp.ge.f32.partialorder %v215, 0.0
  %vm240 = vcmp.ge.f32.partialorder %v220, 0.0
  %vm241 = vcmp.ge.f32.partialorder %v223, 0.0
  %v242 = vmul.f32 %v164, 0.1
  %v243 = vmul.f32 %v167, 0.1
  %v244 = vmul.f32 %v172, 0.1
  %v245 = vmul.f32 %v175, 0.1
  %v246 = vmul.f32 %v180, 0.1
  %v247 = vmul.f32 %v183, 0.1
  %v248 = vmul.f32 %v188, 0.1
  %v249 = vmul.f32 %v191, 0.1
  %v250 = vmul.f32 %v196, 0.1
  %v251 = vmul.f32 %v199, 0.1
  %v252 = vmul.f32 %v204, 0.1
  %v253 = vmul.f32 %v207, 0.1
  %v254 = vmul.f32 %v212, 0.1
  %v255 = vmul.f32 %v215, 0.1
  %v256 = vmul.f32 %v220, 0.1
  %v257 = vmul.f32 %v223, 0.1
  %v258 = vsel %vm226, %v164, %v242
  %v259 = vsel %vm227, %v167, %v243
  %v260 = vsel %vm228, %v172, %v244
  %v261 = vsel %vm229, %v175, %v245
  %v262 = vsel %vm230, %v180, %v246
  %v263 = vsel %vm231, %v183, %v247
  %v264 = vsel %vm232, %v188, %v248
  %v265 = vsel %vm233, %v191, %v249
  %v266 = vsel %vm234, %v196, %v250
  %v267 = vsel %vm235, %v199, %v251
  %v268 = vsel %vm236, %v204, %v252
  %v269 = vsel %vm237, %v207, %v253
  %v270 = vsel %vm238, %v212, %v254
  %v271 = vsel %vm239, %v215, %v255
  %v272 = vsel %vm240, %v220, %v256
  %v273 = vsel %vm241, %v223, %v257
  %v274 = vpack.c.bf16 %v259, %v258
  %v275 = vpack.c.bf16 %v261, %v260
  %v276 = vpack.c.bf16 %v263, %v262
  %v277 = vpack.c.bf16 %v265, %v264
  %v278 = vpack.c.bf16 %v267, %v266
  %v279 = vpack.c.bf16 %v269, %v268
  %v280 = vpack.c.bf16 %v271, %v270
  %v281 = vpack.c.bf16 %v273, %v272
  %v282 = vld [vmem:[%s4] sm:$0xf]
  %v283 = vld [vmem:[%s5] sm:$0x1]
  %v285 = vlaneseq
  %v286 = vshrl.u32 %v285, 7
  %v287 = vsub.s32 0, %v286
  %v288 = vrot.slane %v283, %v287
  %v291 = vsel %vm100, %v274, 0
  %v294 = vsel %vm100, %v275, 0
  %v297 = vsel %vm100, %v276, 0
  %v300 = vsel %vm100, %v277, 0
  %v303 = vsel %vm100, %v278, 0
  %v306 = vsel %vm100, %v279, 0
  %v309 = vsel %vm100, %v280, 0
  %v312 = vsel %vm100, %v281, 0
  %v315 = vsel %vm125, %v282, 0
  %317 = vmatprep.subr.bf16.mxu0 0
  %318 = vmatpush1.bf16.msra.mxu0 %v315
  %319 = vmatprep.subr.bf16.mxu0 0
  %320 = vmatpush1.bf16.msra.mxu0 0
  %321 = vmatprep.subr.bf16.mxu0 0
  %322 = vmatpush1.bf16.msra.mxu0 0
  %323 = vmatprep.subr.bf16.mxu0 0
  %324 = vmatpush1.bf16.msra.mxu0 0
  %325 = vmatprep.subr.bf16.mxu0 0
  %326 = vmatpush1.bf16.msra.mxu0 0
  %327 = vmatprep.subr.bf16.mxu0 0
  %328 = vmatpush1.bf16.msra.mxu0 0
  %329 = vmatprep.subr.bf16.mxu0 0
  %330 = vmatpush1.bf16.msra.mxu0 0
  %331 = vmatprep.subr.bf16.mxu0 0
  %332 = vmatpush1.bf16.msra.mxu0 0
  %333 = vmatprep.subr.bf16.mxu0 0
  %334 = vmatpush1.bf16.msra.mxu0 0
  %335 = vmatprep.subr.bf16.mxu0 0
  %336 = vmatpush1.bf16.msra.mxu0 0
  %337 = vmatprep.subr.bf16.mxu0 0
  %338 = vmatpush1.bf16.msra.mxu0 0
  %339 = vmatprep.subr.bf16.mxu0 0
  %340 = vmatpush1.bf16.msra.mxu0 0
  %341 = vmatprep.subr.bf16.mxu0 0
  %342 = vmatpush1.bf16.msra.mxu0 0
  %343 = vmatprep.subr.bf16.mxu0 0
  %344 = vmatpush1.bf16.msra.mxu0 0
  %345 = vmatprep.subr.bf16.mxu0 0
  %346 = vmatpush1.bf16.msra.mxu0 0
  %347 = vmatprep.subr.bf16.mxu0 0
  %348 = vmatpush1.bf16.msra.mxu0 0
  %349 = vmatprep.mubr.bf16.mxu0 0
  %350 = vmatmul.mubr.bf16.gmra.mrb[0].mxu0 %v291
  %v351 = vpop.f32.mrb[0].mxu0
  %v352 = vadd.f32 %v288, %v351
  %v353 = vpop.f32.mrb[0].mxu0
  %v354 = vpop.f32.mrb[0].mxu0
  %v355 = vadd.f32 %v288, %v354
  %v356 = vpop.f32.mrb[0].mxu0
  %357 = vmatprep.mubr.bf16.mxu0 0
  %358 = vmatmul.mubr.bf16.gmra.mrb[0].mxu0 %v294
  %v359 = vpop.f32.mrb[0].mxu0
  %v360 = vadd.f32 %v288, %v359
  %v361 = vpop.f32.mrb[0].mxu0
  %v362 = vpop.f32.mrb[0].mxu0
  %v363 = vadd.f32 %v288, %v362
  %v364 = vpop.f32.mrb[0].mxu0
  %365 = vmatprep.mubr.bf16.mxu0 0
  %366 = vmatmul.mubr.bf16.gmra.mrb[0].mxu0 %v297
  %v367 = vpop.f32.mrb[0].mxu0
  %v368 = vadd.f32 %v288, %v367
  %v369 = vpop.f32.mrb[0].mxu0
  %v370 = vpop.f32.mrb[0].mxu0
  %v371 = vadd.f32 %v288, %v370
  %v372 = vpop.f32.mrb[0].mxu0
  %373 = vmatprep.mubr.bf16.mxu0 0
  %374 = vmatmul.mubr.bf16.gmra.mrb[0].mxu0 %v300
  %v375 = vpop.f32.mrb[0].mxu0
  %v376 = vadd.f32 %v288, %v375
  %v377 = vpop.f32.mrb[0].mxu0
  %v378 = vpop.f32.mrb[0].mxu0
  %v379 = vadd.f32 %v288, %v378
  %v380 = vpop.f32.mrb[0].mxu0
  %381 = vmatprep.mubr.bf16.mxu0 0
  %382 = vmatmul.mubr.bf16.gmra.mrb[0].mxu0 %v303
  %v383 = vpop.f32.mrb[0].mxu0
  %v384 = vadd.f32 %v288, %v383
  %v385 = vpop.f32.mrb[0].mxu0
  %v386 = vpop.f32.mrb[0].mxu0
  %v387 = vadd.f32 %v288, %v386
  %v388 = vpop.f32.mrb[0].mxu0
  %389 = vmatprep.mubr.bf16.mxu0 0
  %390 = vmatmul.mubr.bf16.gmra.mrb[0].mxu0 %v306
  %v391 = vpop.f32.mrb[0].mxu0
  %v392 = vadd.f32 %v288, %v391
  %v393 = vpop.f32.mrb[0].mxu0
  %v394 = vpop.f32.mrb[0].mxu0
  %v395 = vadd.f32 %v288, %v394
  %v396 = vpop.f32.mrb[0].mxu0
  %397 = vmatprep.mubr.bf16.mxu0 0
  %398 = vmatmul.mubr.bf16.gmra.mrb[0].mxu0 %v309
  %v399 = vpop.f32.mrb[0].mxu0
  %v400 = vadd.f32 %v288, %v399
  %v401 = vpop.f32.mrb[0].mxu0
  %v402 = vpop.f32.mrb[0].mxu0
  %v403 = vadd.f32 %v288, %v402
  %v404 = vpop.f32.mrb[0].mxu0
  %405 = vmatprep.mubr.bf16.mxu0 0
  %406 = vmatmul.mubr.bf16.gmra.mrb[0].mxu0 %v312
  %v407 = vpop.f32.mrb[0].mxu0
  %v408 = vadd.f32 %v288, %v407
  %v409 = vpop.f32.mrb[0].mxu0
  %v410 = vpop.f32.mrb[0].mxu0
  %v411 = vadd.f32 %v288, %v410
  %v412 = vpop.f32.mrb[0].mxu0
  %413 = vdwg.mxu0
  %v414 = vld [vmem:[%s6] sm:$0xf]
  %v415 = vld [vmem:[%s7] sm:$0x1]
  %v417 = vlaneseq
  %v418 = vshrl.u32 %v417, 7
  %v419 = vsub.s32 0, %v418
  %v420 = vrot.slane %v415, %v419
  %v423 = vsel %vm125, %v414, 0
  %425 = vmatprep.subr.bf16.mxu0 0
  %426 = vmatpush1.bf16.msra.mxu0 %v423
  %427 = vmatprep.subr.bf16.mxu0 0
  %428 = vmatpush1.bf16.msra.mxu0 0
  %429 = vmatprep.subr.bf16.mxu0 0
  %430 = vmatpush1.bf16.msra.mxu0 0
  %431 = vmatprep.subr.bf16.mxu0 0
  %432 = vmatpush1.bf16.msra.mxu0 0
  %433 = vmatprep.subr.bf16.mxu0 0
  %434 = vmatpush1.bf16.msra.mxu0 0
  %435 = vmatprep.subr.bf16.mxu0 0
  %436 = vmatpush1.bf16.msra.mxu0 0
  %437 = vmatprep.subr.bf16.mxu0 0
  %438 = vmatpush1.bf16.msra.mxu0 0
  %439 = vmatprep.subr.bf16.mxu0 0
  %440 = vmatpush1.bf16.msra.mxu0 0
  %441 = vmatprep.subr.bf16.mxu0 0
  %442 = vmatpush1.bf16.msra.mxu0 0
  %443 = vmatprep.subr.bf16.mxu0 0
  %444 = vmatpush1.bf16.msra.mxu0 0
  %445 = vmatprep.subr.bf16.mxu0 0
  %446 = vmatpush1.bf16.msra.mxu0 0
  %447 = vmatprep.subr.bf16.mxu0 0
  %448 = vmatpush1.bf16.msra.mxu0 0
  %449 = vmatprep.subr.bf16.mxu0 0
  %450 = vmatpush1.bf16.msra.mxu0 0
  %451 = vmatprep.subr.bf16.mxu0 0
  %452 = vmatpush1.bf16.msra.mxu0 0
  %453 = vmatprep.subr.bf16.mxu0 0
  %454 = vmatpush1.bf16.msra.mxu0 0
  %455 = vmatprep.subr.bf16.mxu0 0
  %456 = vmatpush1.bf16.msra.mxu0 0
  %457 = vmatprep.mubr.bf16.mxu0 0
  %458 = vmatmul.mubr.bf16.gmra.mrb[0].mxu0 %v102
  %v459 = vpop.f32.mrb[0].mxu0
  %v460 = vadd.f32 %v420, %v459
  %v461 = vpop.f32.mrb[0].mxu0
  %v462 = vpop.f32.mrb[0].mxu0
  %v463 = vadd.f32 %v420, %v462
  %v464 = vpop.f32.mrb[0].mxu0
  %465 = vmatprep.mubr.bf16.mxu0 0
  %466 = vmatmul.mubr.bf16.gmra.mrb[0].mxu0 %v105
  %v467 = vpop.f32.mrb[0].mxu0
  %v468 = vadd.f32 %v420, %v467
  %v469 = vpop.f32.mrb[0].mxu0
  %v470 = vpop.f32.mrb[0].mxu0
  %v471 = vadd.f32 %v420, %v470
  %v472 = vpop.f32.mrb[0].mxu0
  %473 = vmatprep.mubr.bf16.mxu0 0
  %474 = vmatmul.mubr.bf16.gmra.mrb[0].mxu0 %v108
  %v475 = vpop.f32.mrb[0].mxu0
  %v476 = vadd.f32 %v420, %v475
  %v477 = vpop.f32.mrb[0].mxu0
  %v478 = vpop.f32.mrb[0].mxu0
  %v479 = vadd.f32 %v420, %v478
  %v480 = vpop.f32.mrb[0].mxu0
  %481 = vmatprep.mubr.bf16.mxu0 0
  %482 = vmatmul.mubr.bf16.gmra.mrb[0].mxu0 %v111
  %v483 = vpop.f32.mrb[0].mxu0
  %v484 = vadd.f32 %v420, %v483
  %v485 = vpop.f32.mrb[0].mxu0
  %v486 = vpop.f32.mrb[0].mxu0
  %v487 = vadd.f32 %v420, %v486
  %v488 = vpop.f32.mrb[0].mxu0
  %489 = vmatprep.mubr.bf16.mxu0 0
  %490 = vmatmul.mubr.bf16.gmra.mrb[0].mxu0 %v114
  %v491 = vpop.f32.mrb[0].mxu0
  %v492 = vadd.f32 %v420, %v491
  %v493 = vpop.f32.mrb[0].mxu0
  %v494 = vpop.f32.mrb[0].mxu0
  %v495 = vadd.f32 %v420, %v494
  %v496 = vpop.f32.mrb[0].mxu0
  %497 = vmatprep.mubr.bf16.mxu0 0
  %498 = vmatmul.mubr.bf16.gmra.mrb[0].mxu0 %v117
  %v499 = vpop.f32.mrb[0].mxu0
  %v500 = vadd.f32 %v420, %v499
  %v501 = vpop.f32.mrb[0].mxu0
  %v502 = vpop.f32.mrb[0].mxu0
  %v503 = vadd.f32 %v420, %v502
  %v504 = vpop.f32.mrb[0].mxu0
  %505 = vmatprep.mubr.bf16.mxu0 0
  %506 = vmatmul.mubr.bf16.gmra.mrb[0].mxu0 %v120
  %v507 = vpop.f32.mrb[0].mxu0
  %v508 = vadd.f32 %v420, %v507
  %v509 = vpop.f32.mrb[0].mxu0
  %v510 = vpop.f32.mrb[0].mxu0
  %v511 = vadd.f32 %v420, %v510
  %v512 = vpop.f32.mrb[0].mxu0
  %513 = vmatprep.mubr.bf16.mxu0 0
  %514 = vmatmul.mubr.bf16.gmra.mrb[0].mxu0 %v123
  %v515 = vpop.f32.mrb[0].mxu0
  %v516 = vadd.f32 %v420, %v515
  %v517 = vpop.f32.mrb[0].mxu0
  %v518 = vpop.f32.mrb[0].mxu0
  %v519 = vadd.f32 %v420, %v518
  %v520 = vpop.f32.mrb[0].mxu0
  %521 = vdwg.mxu0
  %vm522 = vcmp.ge.f32.partialorder %v460, 0.0
  %vm523 = vcmp.ge.f32.partialorder %v463, 0.0
  %vm524 = vcmp.ge.f32.partialorder %v468, 0.0
  %vm525 = vcmp.ge.f32.partialorder %v471, 0.0
  %vm526 = vcmp.ge.f32.partialorder %v476, 0.0
  %vm527 = vcmp.ge.f32.partialorder %v479, 0.0
  %vm528 = vcmp.ge.f32.partialorder %v484, 0.0
  %vm529 = vcmp.ge.f32.partialorder %v487, 0.0
  %vm530 = vcmp.ge.f32.partialorder %v492, 0.0
  %vm531 = vcmp.ge.f32.partialorder %v495, 0.0
  %vm532 = vcmp.ge.f32.partialorder %v500, 0.0
  %vm533 = vcmp.ge.f32.partialorder %v503, 0.0
  %vm534 = vcmp.ge.f32.partialorder %v508, 0.0
  %vm535 = vcmp.ge.f32.partialorder %v511, 0.0
  %vm536 = vcmp.ge.f32.partialorder %v516, 0.0
  %vm537 = vcmp.ge.f32.partialorder %v519, 0.0
  %v538 = vmul.f32 %v460, 0.1
  %v539 = vmul.f32 %v463, 0.1
  %v540 = vmul.f32 %v468, 0.1
  %v541 = vmul.f32 %v471, 0.1
  %v542 = vmul.f32 %v476, 0.1
  %v543 = vmul.f32 %v479, 0.1
  %v544 = vmul.f32 %v484, 0.1
  %v545 = vmul.f32 %v487, 0.1
  %v546 = vmul.f32 %v492, 0.1
  %v547 = vmul.f32 %v495, 0.1
  %v548 = vmul.f32 %v500, 0.1
  %v549 = vmul.f32 %v503, 0.1
  %v550 = vmul.f32 %v508, 0.1
  %v551 = vmul.f32 %v511, 0.1
  %v552 = vmul.f32 %v516, 0.1
  %v553 = vmul.f32 %v519, 0.1
  %v554 = vsel %vm522, %v460, %v538
  %v555 = vsel %vm523, %v463, %v539
  %v556 = vsel %vm524, %v468, %v540
  %v557 = vsel %vm525, %v471, %v541
  %v558 = vsel %vm526, %v476, %v542
  %v559 = vsel %vm527, %v479, %v543
  %v560 = vsel %vm528, %v484, %v544
  %v561 = vsel %vm529, %v487, %v545
  %v562 = vsel %vm530, %v492, %v546
  %v563 = vsel %vm531, %v495, %v547
  %v564 = vsel %vm532, %v500, %v548
  %v565 = vsel %vm533, %v503, %v549
  %v566 = vsel %vm534, %v508, %v550
  %v567 = vsel %vm535, %v511, %v551
  %v568 = vsel %vm536, %v516, %v552
  %v569 = vsel %vm537, %v519, %v553
  %v570 = vpack.c.bf16 %v555, %v554
  %v571 = vpack.c.bf16 %v557, %v556
  %v572 = vpack.c.bf16 %v559, %v558
  %v573 = vpack.c.bf16 %v561, %v560
  %v574 = vpack.c.bf16 %v563, %v562
  %v575 = vpack.c.bf16 %v565, %v564
  %v576 = vpack.c.bf16 %v567, %v566
  %v577 = vpack.c.bf16 %v569, %v568
  %v578 = vld [vmem:[%s8] sm:$0xf]
  %v579 = vld [vmem:[%s9] sm:$0x1]
  %v581 = vlaneseq
  %v582 = vshrl.u32 %v581, 7
  %v583 = vsub.s32 0, %v582
  %v584 = vrot.slane %v579, %v583
  %v587 = vsel %vm100, %v570, 0
  %v590 = vsel %vm100, %v571, 0
  %v593 = vsel %vm100, %v572, 0
  %v596 = vsel %vm100, %v573, 0
  %v599 = vsel %vm100, %v574, 0
  %v602 = vsel %vm100, %v575, 0
  %v605 = vsel %vm100, %v576, 0
  %v608 = vsel %vm100, %v577, 0
  %v611 = vsel %vm125, %v578, 0
  %613 = vmatprep.subr.bf16.mxu0 0
  %614 = vmatpush1.bf16.msra.mxu0 %v611
  %615 = vmatprep.subr.bf16.mxu0 0
  %616 = vmatpush1.bf16.msra.mxu0 0
  %617 = vmatprep.subr.bf16.mxu0 0
  %618 = vmatpush1.bf16.msra.mxu0 0
  %619 = vmatprep.subr.bf16.mxu0 0
  %620 = vmatpush1.bf16.msra.mxu0 0
  %621 = vmatprep.subr.bf16.mxu0 0
  %622 = vmatpush1.bf16.msra.mxu0 0
  %623 = vmatprep.subr.bf16.mxu0 0
  %624 = vmatpush1.bf16.msra.mxu0 0
  %625 = vmatprep.subr.bf16.mxu0 0
  %626 = vmatpush1.bf16.msra.mxu0 0
  %627 = vmatprep.subr.bf16.mxu0 0
  %628 = vmatpush1.bf16.msra.mxu0 0
  %629 = vmatprep.subr.bf16.mxu0 0
  %630 = vmatpush1.bf16.msra.mxu0 0
  %631 = vmatprep.subr.bf16.mxu0 0
  %632 = vmatpush1.bf16.msra.mxu0 0
  %633 = vmatprep.subr.bf16.mxu0 0
  %634 = vmatpush1.bf16.msra.mxu0 0
  %635 = vmatprep.subr.bf16.mxu0 0
  %636 = vmatpush1.bf16.msra.mxu0 0
  %637 = vmatprep.subr.bf16.mxu0 0
  %638 = vmatpush1.bf16.msra.mxu0 0
  %639 = vmatprep.subr.bf16.mxu0 0
  %640 = vmatpush1.bf16.msra.mxu0 0
  %641 = vmatprep.subr.bf16.mxu0 0
  %642 = vmatpush1.bf16.msra.mxu0 0
  %643 = vmatprep.subr.bf16.mxu0 0
  %644 = vmatpush1.bf16.msra.mxu0 0
  %645 = vmatprep.mubr.bf16.mxu0 0
  %646 = vmatmul.mubr.bf16.gmra.mrb[0].mxu0 %v587
  %v647 = vpop.f32.mrb[0].mxu0
  %v648 = vadd.f32 %v584, %v647
  %v649 = vpop.f32.mrb[0].mxu0
  %v650 = vpop.f32.mrb[0].mxu0
  %v651 = vadd.f32 %v584, %v650
  %v652 = vpop.f32.mrb[0].mxu0
  %653 = vmatprep.mubr.bf16.mxu0 0
  %654 = vmatmul.mubr.bf16.gmra.mrb[0].mxu0 %v590
  %v655 = vpop.f32.mrb[0].mxu0
  %v656 = vadd.f32 %v584, %v655
  %v657 = vpop.f32.mrb[0].mxu0
  %v658 = vpop.f32.mrb[0].mxu0
  %v659 = vadd.f32 %v584, %v658
  %v660 = vpop.f32.mrb[0].mxu0
  %661 = vmatprep.mubr.bf16.mxu0 0
  %662 = vmatmul.mubr.bf16.gmra.mrb[0].mxu0 %v593
  %v663 = vpop.f32.mrb[0].mxu0
  %v664 = vadd.f32 %v584, %v663
  %v665 = vpop.f32.mrb[0].mxu0
  %v666 = vpop.f32.mrb[0].mxu0
  %v667 = vadd.f32 %v584, %v666
  %v668 = vpop.f32.mrb[0].mxu0
  %669 = vmatprep.mubr.bf16.mxu0 0
  %670 = vmatmul.mubr.bf16.gmra.mrb[0].mxu0 %v596
  %v671 = vpop.f32.mrb[0].mxu0
  %v672 = vadd.f32 %v584, %v671
  %v673 = vpop.f32.mrb[0].mxu0
  %v674 = vpop.f32.mrb[0].mxu0
  %v675 = vadd.f32 %v584, %v674
  %v676 = vpop.f32.mrb[0].mxu0
  %677 = vmatprep.mubr.bf16.mxu0 0
  %678 = vmatmul.mubr.bf16.gmra.mrb[0].mxu0 %v599
  %v679 = vpop.f32.mrb[0].mxu0
  %v680 = vadd.f32 %v584, %v679
  %v681 = vpop.f32.mrb[0].mxu0
  %v682 = vpop.f32.mrb[0].mxu0
  %v683 = vadd.f32 %v584, %v682
  %v684 = vpop.f32.mrb[0].mxu0
  %685 = vmatprep.mubr.bf16.mxu0 0
  %686 = vmatmul.mubr.bf16.gmra.mrb[0].mxu0 %v602
  %v687 = vpop.f32.mrb[0].mxu0
  %v688 = vadd.f32 %v584, %v687
  %v689 = vpop.f32.mrb[0].mxu0
  %v690 = vpop.f32.mrb[0].mxu0
  %v691 = vadd.f32 %v584, %v690
  %v692 = vpop.f32.mrb[0].mxu0
  %693 = vmatprep.mubr.bf16.mxu0 0
  %694 = vmatmul.mubr.bf16.gmra.mrb[0].mxu0 %v605
  %v695 = vpop.f32.mrb[0].mxu0
  %v696 = vadd.f32 %v584, %v695
  %v697 = vpop.f32.mrb[0].mxu0
  %v698 = vpop.f32.mrb[0].mxu0
  %v699 = vadd.f32 %v584, %v698
  %v700 = vpop.f32.mrb[0].mxu0
  %701 = vmatprep.mubr.bf16.mxu0 0
  %702 = vmatmul.mubr.bf16.gmra.mrb[0].mxu0 %v608
  %v703 = vpop.f32.mrb[0].mxu0
  %v704 = vadd.f32 %v584, %v703
  %v705 = vpop.f32.mrb[0].mxu0
  %v706 = vpop.f32.mrb[0].mxu0
  %v707 = vadd.f32 %v584, %v706
  %v708 = vpop.f32.mrb[0].mxu0
  %709 = vdwg.mxu0
  %v710 = vld [vmem:[%s1] sm:$0xff]
  %v711 = vld [vmem:[%s1 + $0x8] sm:$0xff]
  %v712 = vld [vmem:[%s1 + $0x10] sm:$0xff]
  %v713 = vld [vmem:[%s1 + $0x18] sm:$0xff]
  %v714 = vld [vmem:[%s1 + $0x20] sm:$0xff]
  %v715 = vld [vmem:[%s1 + $0x28] sm:$0xff]
  %v716 = vld [vmem:[%s1 + $0x30] sm:$0xff]
  %v717 = vld [vmem:[%s1 + $0x38] sm:$0xff]
  %v718 = vld [vmem:[%s1 + $0x40] sm:$0xff]
  %v719 = vld [vmem:[%s1 + $0x48] sm:$0xff]
  %v720 = vld [vmem:[%s1 + $0x50] sm:$0xff]
  %v721 = vld [vmem:[%s1 + $0x58] sm:$0xff]
  %v722 = vld [vmem:[%s1 + $0x60] sm:$0xff]
  %v723 = vld [vmem:[%s1 + $0x68] sm:$0xff]
  %v724 = vld [vmem:[%s1 + $0x70] sm:$0xff]
  %v725 = vld [vmem:[%s1 + $0x78] sm:$0xff]
  %v726 = vadd.f32 %v352, 1.0
  %v727 = vadd.f32 %v355, 1.0
  %v728 = vadd.f32 %v360, 1.0
  %v729 = vadd.f32 %v363, 1.0
  %v730 = vadd.f32 %v368, 1.0
  %v731 = vadd.f32 %v371, 1.0
  %v732 = vadd.f32 %v376, 1.0
  %v733 = vadd.f32 %v379, 1.0
  %v734 = vadd.f32 %v384, 1.0
  %v735 = vadd.f32 %v387, 1.0
  %v736 = vadd.f32 %v392, 1.0
  %v737 = vadd.f32 %v395, 1.0
  %v738 = vadd.f32 %v400, 1.0
  %v739 = vadd.f32 %v403, 1.0
  %v740 = vadd.f32 %v408, 1.0
  %v741 = vadd.f32 %v411, 1.0
  %v742 = vmul.f32 %v710, %v726
  %v743 = vmul.f32 %v711, %v727
  %v744 = vmul.f32 %v712, %v728
  %v745 = vmul.f32 %v713, %v729
  %v746 = vmul.f32 %v714, %v730
  %v747 = vmul.f32 %v715, %v731
  %v748 = vmul.f32 %v716, %v732
  %v749 = vmul.f32 %v717, %v733
  %v750 = vmul.f32 %v718, %v734
  %v751 = vmul.f32 %v719, %v735
  %v752 = vmul.f32 %v720, %v736
  %v753 = vmul.f32 %v721, %v737
  %v754 = vmul.f32 %v722, %v738
  %v755 = vmul.f32 %v723, %v739
  %v756 = vmul.f32 %v724, %v740
  %v757 = vmul.f32 %v725, %v741
  %v758 = vadd.f32 %v742, %v648
  %v759 = vadd.f32 %v743, %v651
  %v760 = vadd.f32 %v744, %v656
  %v761 = vadd.f32 %v745, %v659
  %v762 = vadd.f32 %v746, %v664
  %v763 = vadd.f32 %v747, %v667
  %v764 = vadd.f32 %v748, %v672
  %v765 = vadd.f32 %v749, %v675
  %v766 = vadd.f32 %v750, %v680
  %v767 = vadd.f32 %v751, %v683
  %v768 = vadd.f32 %v752, %v688
  %v769 = vadd.f32 %v753, %v691
  %v770 = vadd.f32 %v754, %v696
  %v771 = vadd.f32 %v755, %v699
  %v772 = vadd.f32 %v756, %v704
  %v773 = vadd.f32 %v757, %v707
  %vm774 = vcmask 130048
  %775 = vst.msk [vmem:[%s10] sm:$0xff] %vm774, %v758
  %776 = vst.msk [vmem:[%s10 + $0x8] sm:$0xff] %vm774, %v759
  %777 = vst.msk [vmem:[%s10 + $0x10] sm:$0xff] %vm774, %v760
  %778 = vst.msk [vmem:[%s10 + $0x18] sm:$0xff] %vm774, %v761
  %779 = vst.msk [vmem:[%s10 + $0x20] sm:$0xff] %vm774, %v762
  %780 = vst.msk [vmem:[%s10 + $0x28] sm:$0xff] %vm774, %v763
  %781 = vst.msk [vmem:[%s10 + $0x30] sm:$0xff] %vm774, %v764
  %782 = vst.msk [vmem:[%s10 + $0x38] sm:$0xff] %vm774, %v765
  %783 = vst.msk [vmem:[%s10 + $0x40] sm:$0xff] %vm774, %v766
  %784 = vst.msk [vmem:[%s10 + $0x48] sm:$0xff] %vm774, %v767
  %785 = vst.msk [vmem:[%s10 + $0x50] sm:$0xff] %vm774, %v768
  %786 = vst.msk [vmem:[%s10 + $0x58] sm:$0xff] %vm774, %v769
  %787 = vst.msk [vmem:[%s10 + $0x60] sm:$0xff] %vm774, %v770
  %788 = vst.msk [vmem:[%s10 + $0x68] sm:$0xff] %vm774, %v771
  %789 = vst.msk [vmem:[%s10 + $0x70] sm:$0xff] %vm774, %v772
  %790 = vst.msk [vmem:[%s10 + $0x78] sm:$0xff] %vm774, %v773
  // Predicated region
  $region42: #{feedback_urdnet.61} parent=0 // pred_check
    _
  $region43: #{feedback_urdnet.61} parent=0 // pred_check_branch
    %792 = sbr.rel (0) target = $region45
  $region44: #{feedback_urdnet.61} parent=0 // pred_region
    _
  $region45: #{feedback_urdnet.61} parent=0 // pred_fallthru
    _
  // Predicated region
  $region46: #{feedback_urdnet.61} parent=0 // pred_check
    _
  $region47: #{feedback_urdnet.61} parent=0 // pred_check_branch
    %794 = sbr.rel (0) target = $region49
  $region48: #{feedback_urdnet.61} parent=0 // pred_region
    _
  $region49: #{feedback_urdnet.61} parent=0 // pred_fallthru
    _

// kernel: feedback_urdnet.63
$region0: #{feedback_urdnet.63}
  #allocation0 [shape = 'u32[]', space=smem, size = 0x4, offset = 0x4, fixed_abs, tag = 'smem constant byte address 0x4 - core index']
  #allocation1 [shape = 'u32[144,128]{1,0:T(1,128)}', space=vmem, size = 0x12000, scoped, tag = 'internal scratch']
  %s0 = inlined_call_operand.vmem [shape: bf16[32,72], index: 0, kind: input, shape index: {}]
  %s1 = inlined_call_operand.vmem [shape: bf16[72,16], index: 1, kind: input, shape index: {}]
  %s2 = inlined_call_operand.vmem [shape: f32[1,16], index: 2, kind: input, shape index: {}]
  %s3 = inlined_call_operand.vmem [shape: f32[32,16], index: 3, kind: output, shape index: {}]
  %s4 = sld [smem:[#allocation0]]
  $region22: #{feedback_urdnet.63} parent=0
    _
  %s6 = ssub.s32 1, %s4
  %s7 = scalar_select 0, %s6, %s4
  // Predicated region
  $region2: #{feedback_urdnet.63} parent=0 // pred_check
    _
  $region3: #{feedback_urdnet.63} parent=0 // pred_check_branch
    %9 = sbr.rel (0) target = $region5
  $region4: #{feedback_urdnet.63} parent=0 // pred_region
    _
  $region5: #{feedback_urdnet.63} parent=0 // pred_fallthru
    _
  // Predicated region
  $region6: #{feedback_urdnet.63} parent=0 // pred_check
    _
  $region7: #{feedback_urdnet.63} parent=0 // pred_check_branch
    %11 = sbr.rel (0) target = $region9
  $region8: #{feedback_urdnet.63} parent=0 // pred_region
    _
  $region9: #{feedback_urdnet.63} parent=0 // pred_fallthru
    _
  // Predicated region
  $region10: #{feedback_urdnet.63} parent=0 // pred_check
    _
  $region11: #{feedback_urdnet.63} parent=0 // pred_check_branch
    %13 = sbr.rel (0) target = $region13
  $region12: #{feedback_urdnet.63} parent=0 // pred_region
    _
  $region13: #{feedback_urdnet.63} parent=0 // pred_fallthru
    _
  %v15 = vld [vmem:[%s0] sm:$0xf]
  %v16 = vld [vmem:[%s0 + $0x4] sm:$0xf]
  %v17 = vld [vmem:[%s0 + $0x8] sm:$0xf]
  %v18 = vld [vmem:[%s0 + $0xc] sm:$0xf]
  %v19 = vld [vmem:[%s1] sm:$0xf]
  %v20 = vld [vmem:[%s1 + $0x4] sm:$0xf]
  %v21 = vld [vmem:[%s1 + $0x8] sm:$0xf]
  %v22 = vld [vmem:[%s1 + $0xc] sm:$0xf]
  %v23 = vld [vmem:[%s1 + $0x10] sm:$0xf]
  %v24 = vld [vmem:[%s1 + $0x14] sm:$0xf]
  %v25 = vld [vmem:[%s1 + $0x18] sm:$0xf]
  %v26 = vld [vmem:[%s1 + $0x1c] sm:$0xf]
  %v27 = vld [vmem:[%s1 + $0x20] sm:$0xf]
  %v28 = vld [vmem:[%s2] sm:$0x1]
  %v30 = vlaneseq
  %v31 = vshrl.u32 %v30, 7
  %v32 = vsub.s32 0, %v31
  %v33 = vrot.slane %v28, %v32
  %v39 = vunpack.c.l.b16 %v15
  %v40 = vunpack.c.l.b16 %v16
  %v41 = vunpack.c.l.b16 %v17
  %v42 = vunpack.c.l.b16 %v18
  %v43 = vpack.c.b16 %v40, %v39
  %v44 = vpack.c.b16 %v42, %v41
  %v54 = vunpack.c.l.b16 %v19
  %v55 = vunpack.c.l.b16 %v20
  %v56 = vunpack.c.l.b16 %v21
  %v57 = vunpack.c.l.b16 %v22
  %v58 = vunpack.c.l.b16 %v23
  %v59 = vunpack.c.l.b16 %v24
  %v60 = vunpack.c.l.b16 %v25
  %v61 = vunpack.c.l.b16 %v26
  %v62 = vunpack.c.l.b16 %v27
  %v63 = vpack.c.b16 %v55, %v54
  %v64 = vpack.c.b16 %v57, %v56
  %v65 = vpack.c.b16 %v59, %v58
  %v66 = vpack.c.b16 %v61, %v60
  %v67 = vpack.c.b16 %v62, %v62
  %vm72 = vcmask 588800
  %v74 = vsel %vm72, %v43, 0
  %v77 = vsel %vm72, %v44, 0
  %vm79 = vcmask 1043456
  %v81 = vsel %vm79, %v67, 0
  %83 = vmatprep.subr.bf16.mxu0 0
  %84 = vmatpush1.bf16.msra.mxu0 %v63
  %85 = vmatprep.subr.bf16.mxu0 0
  %86 = vmatpush1.bf16.msra.mxu0 %v64
  %87 = vmatprep.subr.bf16.mxu0 0
  %88 = vmatpush1.bf16.msra.mxu0 %v65
  %89 = vmatprep.subr.bf16.mxu0 0
  %90 = vmatpush1.bf16.msra.mxu0 %v66
  %91 = vmatprep.subr.bf16.mxu0 0
  %92 = vmatpush1.bf16.msra.mxu0 %v81
  %93 = vmatprep.subr.bf16.mxu0 0
  %94 = vmatpush1.bf16.msra.mxu0 0
  %95 = vmatprep.subr.bf16.mxu0 0
  %96 = vmatpush1.bf16.msra.mxu0 0
  %97 = vmatprep.subr.bf16.mxu0 0
  %98 = vmatpush1.bf16.msra.mxu0 0
  %99 = vmatprep.subr.bf16.mxu0 0
  %100 = vmatpush1.bf16.msra.mxu0 0
  %101 = vmatprep.subr.bf16.mxu0 0
  %102 = vmatpush1.bf16.msra.mxu0 0
  %103 = vmatprep.subr.bf16.mxu0 0
  %104 = vmatpush1.bf16.msra.mxu0 0
  %105 = vmatprep.subr.bf16.mxu0 0
  %106 = vmatpush1.bf16.msra.mxu0 0
  %107 = vmatprep.subr.bf16.mxu0 0
  %108 = vmatpush1.bf16.msra.mxu0 0
  %109 = vmatprep.subr.bf16.mxu0 0
  %110 = vmatpush1.bf16.msra.mxu0 0
  %111 = vmatprep.subr.bf16.mxu0 0
  %112 = vmatpush1.bf16.msra.mxu0 0
  %113 = vmatprep.subr.bf16.mxu0 0
  %114 = vmatpush1.bf16.msra.mxu0 0
  %115 = vmatprep.mubr.bf16.mxu0 0
  %116 = vmatmul.mubr.bf16.gmra.mrb[0].mxu0 %v74
  %v117 = vpop.f32.mrb[0].mxu0
  %v118 = vadd.f32 %v33, %v117
  %v119 = vpop.f32.mrb[0].mxu0
  %v120 = vpop.f32.mrb[0].mxu0
  %v121 = vadd.f32 %v33, %v120
  %v122 = vpop.f32.mrb[0].mxu0
  %123 = vmatprep.mubr.bf16.mxu0 0
  %124 = vmatmul.mubr.bf16.gmra.mrb[0].mxu0 %v77
  %v125 = vpop.f32.mrb[0].mxu0
  %v126 = vadd.f32 %v33, %v125
  %v127 = vpop.f32.mrb[0].mxu0
  %v128 = vpop.f32.mrb[0].mxu0
  %v129 = vadd.f32 %v33, %v128
  %v130 = vpop.f32.mrb[0].mxu0
  %131 = vdwg.mxu0
  %v132 = vmax.f32 %v118, 0.0
  %v133 = vmax.f32 %v121, 0.0
  %v134 = vmax.f32 %v126, 0.0
  %v135 = vmax.f32 %v129, 0.0
  %vm136 = vcmask 130048
  %137 = vst.msk [vmem:[%s3] sm:$0xff] %vm136, %v132
  %138 = vst.msk [vmem:[%s3 + $0x8] sm:$0xff] %vm136, %v133
  %139 = vst.msk [vmem:[%s3 + $0x10] sm:$0xff] %vm136, %v134
  %140 = vst.msk [vmem:[%s3 + $0x18] sm:$0xff] %vm136, %v135
  // Predicated region
  $region14: #{feedback_urdnet.63} parent=0 // pred_check
    _
  $region15: #{feedback_urdnet.63} parent=0 // pred_check_branch
    %142 = sbr.rel (0) target = $region17
  $region16: #{feedback_urdnet.63} parent=0 // pred_region
    _
  $region17: #{feedback_urdnet.63} parent=0 // pred_fallthru
    _
  // Predicated region
  $region18: #{feedback_urdnet.63} parent=0 // pred_check
    _
  $region19: #{feedback_urdnet.63} parent=0 // pred_check_branch
    %144 = sbr.rel (0) target = $region21
  $region20: #{feedback_urdnet.63} parent=0 // pred_region
    _
  $region21: #{feedback_urdnet.63} parent=0 // pred_fallthru
    _

// kernel: feedback_urdnet.64
$region0: #{feedback_urdnet.64}
  #allocation0 [shape = 'u32[]', space=smem, size = 0x4, offset = 0x4, fixed_abs, tag = 'smem constant byte address 0x4 - core index']
  #allocation1 [shape = 'u32[144,128]{1,0:T(1,128)}', space=vmem, size = 0x12000, scoped, tag = 'internal scratch']
  %s0 = inlined_call_operand.vmem [shape: bf16[32,144], index: 0, kind: input, shape index: {}]
  %s1 = inlined_call_operand.vmem [shape: bf16[144,4], index: 1, kind: input, shape index: {}]
  %s2 = inlined_call_operand.vmem [shape: f32[1,4], index: 2, kind: input, shape index: {}]
  %s3 = inlined_call_operand.vmem [shape: f32[32,4], index: 3, kind: output, shape index: {}]
  %s4 = sld [smem:[#allocation0]]
  $region22: #{feedback_urdnet.64} parent=0
    _
  %s6 = ssub.s32 1, %s4
  %s7 = scalar_select 0, %s6, %s4
  // Predicated region
  $region2: #{feedback_urdnet.64} parent=0 // pred_check
    _
  $region3: #{feedback_urdnet.64} parent=0 // pred_check_branch
    %9 = sbr.rel (0) target = $region5
  $region4: #{feedback_urdnet.64} parent=0 // pred_region
    _
  $region5: #{feedback_urdnet.64} parent=0 // pred_fallthru
    _
  // Predicated region
  $region6: #{feedback_urdnet.64} parent=0 // pred_check
    _
  $region7: #{feedback_urdnet.64} parent=0 // pred_check_branch
    %11 = sbr.rel (0) target = $region9
  $region8: #{feedback_urdnet.64} parent=0 // pred_region
    _
  $region9: #{feedback_urdnet.64} parent=0 // pred_fallthru
    _
  // Predicated region
  $region10: #{feedback_urdnet.64} parent=0 // pred_check
    _
  $region11: #{feedback_urdnet.64} parent=0 // pred_check_branch
    %13 = sbr.rel (0) target = $region13
  $region12: #{feedback_urdnet.64} parent=0 // pred_region
    _
  $region13: #{feedback_urdnet.64} parent=0 // pred_fallthru
    _
  %v15 = vld [vmem:[%s0] sm:$0xff]
  %v16 = vld [vmem:[%s0 + $0x8] sm:$0xff]
  %v17 = vld [vmem:[%s0 + $0x10] sm:$0xff]
  %v18 = vld [vmem:[%s0 + $0x18] sm:$0xff]
  %v19 = vld [vmem:[%s1] sm:$0xf]
  %v20 = vld [vmem:[%s1 + $0x4] sm:$0xf]
  %v21 = vld [vmem:[%s1 + $0x8] sm:$0xf]
  %v22 = vld [vmem:[%s1 + $0xc] sm:$0xf]
  %v23 = vld [vmem:[%s1 + $0x10] sm:$0xf]
  %v24 = vld [vmem:[%s1 + $0x14] sm:$0xf]
  %v25 = vld [vmem:[%s1 + $0x18] sm:$0xf]
  %v26 = vld [vmem:[%s1 + $0x1c] sm:$0xf]
  %v27 = vld [vmem:[%s1 + $0x20] sm:$0xf]
  %v28 = vld [vmem:[%s1 + $0x24] sm:$0xf]
  %v29 = vld [vmem:[%s1 + $0x28] sm:$0xf]
  %v30 = vld [vmem:[%s1 + $0x2c] sm:$0xf]
  %v31 = vld [vmem:[%s1 + $0x30] sm:$0xf]
  %v32 = vld [vmem:[%s1 + $0x34] sm:$0xf]
  %v33 = vld [vmem:[%s1 + $0x38] sm:$0xf]
  %v34 = vld [vmem:[%s1 + $0x3c] sm:$0xf]
  %v35 = vld [vmem:[%s1 + $0x40] sm:$0xf]
  %v36 = vld [vmem:[%s1 + $0x44] sm:$0xf]
  %v37 = vld [vmem:[%s2] sm:$0x1]
  %v39 = vlaneseq
  %v40 = vshrl.u32 %v39, 7
  %v41 = vsub.s32 0, %v40
  %v42 = vrot.slane %v37, %v41
  %v48 = vunpack.c.l.b16 %v15
  %v49 = vunpack.c.h.b16 %v15
  %v50 = vunpack.c.l.b16 %v16
  %v51 = vunpack.c.h.b16 %v16
  %v52 = vunpack.c.l.b16 %v17
  %v53 = vunpack.c.h.b16 %v17
  %v54 = vunpack.c.l.b16 %v18
  %v55 = vunpack.c.h.b16 %v18
  %v56 = vpack.c.b16 %v50, %v48
  %v57 = vpack.c.b16 %v51, %v49
  %v58 = vpack.c.b16 %v54, %v52
  %v59 = vpack.c.b16 %v55, %v53
  %v80 = vunpack.c.l.b16 %v19
  %v81 = vunpack.c.l.b16 %v20
  %v82 = vunpack.c.l.b16 %v21
  %v83 = vunpack.c.l.b16 %v22
  %v84 = vunpack.c.l.b16 %v23
  %v85 = vunpack.c.l.b16 %v24
  %v86 = vunpack.c.l.b16 %v25
  %v87 = vunpack.c.l.b16 %v26
  %v88 = vunpack.c.l.b16 %v27
  %v89 = vunpack.c.l.b16 %v28
  %v90 = vunpack.c.l.b16 %v29
  %v91 = vunpack.c.l.b16 %v30
  %v92 = vunpack.c.l.b16 %v31
  %v93 = vunpack.c.l.b16 %v32
  %v94 = vunpack.c.l.b16 %v33
  %v95 = vunpack.c.l.b16 %v34
  %v96 = vunpack.c.l.b16 %v35
  %v97 = vunpack.c.l.b16 %v36
  %v98 = vpack.c.b16 %v81, %v80
  %v99 = vpack.c.b16 %v83, %v82
  %v100 = vpack.c.b16 %v85, %v84
  %v101 = vpack.c.b16 %v87, %v86
  %v102 = vpack.c.b16 %v89, %v88
  %v103 = vpack.c.b16 %v91, %v90
  %v104 = vpack.c.b16 %v93, %v92
  %v105 = vpack.c.b16 %v95, %v94
  %v106 = vpack.c.b16 %v97, %v96
  %vm116 = vcmask 130048
  %v118 = vsel %vm116, %v57, 0
  %v121 = vsel %vm116, %v59, 0
  %123 = vmatprep.subr.bf16.mxu0 0
  %124 = vmatpush1.bf16.msra.mxu0 %v98
  %125 = vmatprep.subr.bf16.mxu0 0
  %126 = vmatpush1.bf16.msra.mxu0 %v99
  %127 = vmatprep.subr.bf16.mxu0 0
  %128 = vmatpush1.bf16.msra.mxu0 %v100
  %129 = vmatprep.subr.bf16.mxu0 0
  %130 = vmatpush1.bf16.msra.mxu0 %v101
  %131 = vmatprep.subr.bf16.mxu0 0
  %132 = vmatpush1.bf16.msra.mxu0 %v102
  %133 = vmatprep.subr.bf16.mxu0 0
  %134 = vmatpush1.bf16.msra.mxu0 %v103
  %135 = vmatprep.subr.bf16.mxu0 0
  %136 = vmatpush1.bf16.msra.mxu0 %v104
  %137 = vmatprep.subr.bf16.mxu0 0
  %138 = vmatpush1.bf16.msra.mxu0 %v105
  %139 = vmatprep.subr.bf16.mxu0 0
  %140 = vmatpush1.bf16.msra.mxu0 %v106
  %141 = vmatprep.subr.bf16.mxu0 0
  %142 = vmatpush1.bf16.msra.mxu0 0
  %143 = vmatprep.subr.bf16.mxu0 0
  %144 = vmatpush1.bf16.msra.mxu0 0
  %145 = vmatprep.subr.bf16.mxu0 0
  %146 = vmatpush1.bf16.msra.mxu0 0
  %147 = vmatprep.subr.bf16.mxu0 0
  %148 = vmatpush1.bf16.msra.mxu0 0
  %149 = vmatprep.subr.bf16.mxu0 0
  %150 = vmatpush1.bf16.msra.mxu0 0
  %151 = vmatprep.subr.bf16.mxu0 0
  %152 = vmatpush1.bf16.msra.mxu0 0
  %153 = vmatprep.subr.bf16.mxu0 0
  %154 = vmatpush1.bf16.msra.mxu0 0
  %155 = vmatprep.mubr.bf16.mxu0 %v118
  %156 = vmatmul.mubr.bf16.gmra.mrb[0].mxu0 %v56
  %v157 = vpop.f32.mrb[0].mxu0
  %v158 = vadd.f32 %v42, %v157
  %v159 = vpop.f32.mrb[0].mxu0
  %v160 = vpop.f32.mrb[0].mxu0
  %v161 = vadd.f32 %v42, %v160
  %v162 = vpop.f32.mrb[0].mxu0
  %163 = vmatprep.mubr.bf16.mxu0 %v121
  %164 = vmatmul.mubr.bf16.gmra.mrb[0].mxu0 %v58
  %v165 = vpop.f32.mrb[0].mxu0
  %v166 = vadd.f32 %v42, %v165
  %v167 = vpop.f32.mrb[0].mxu0
  %v168 = vpop.f32.mrb[0].mxu0
  %v169 = vadd.f32 %v42, %v168
  %v170 = vpop.f32.mrb[0].mxu0
  %171 = vdwg.mxu0
  %v172 = vmax.f32 %v158, 0.0
  %v173 = vmax.f32 %v161, 0.0
  %v174 = vmax.f32 %v166, 0.0
  %v175 = vmax.f32 %v169, 0.0
  %vm176 = vcmask 31744
  %177 = vst.msk [vmem:[%s3] sm:$0xff] %vm176, %v172
  %178 = vst.msk [vmem:[%s3 + $0x8] sm:$0xff] %vm176, %v173
  %179 = vst.msk [vmem:[%s3 + $0x10] sm:$0xff] %vm176, %v174
  %180 = vst.msk [vmem:[%s3 + $0x18] sm:$0xff] %vm176, %v175
  // Predicated region
  $region14: #{feedback_urdnet.64} parent=0 // pred_check
    _
  $region15: #{feedback_urdnet.64} parent=0 // pred_check_branch
    %182 = sbr.rel (0) target = $region17
  $region16: #{feedback_urdnet.64} parent=0 // pred_region
    _
  $region17: #{feedback_urdnet.64} parent=0 // pred_fallthru
    _
  // Predicated region
  $region18: #{feedback_urdnet.64} parent=0 // pred_check
    _
  $region19: #{feedback_urdnet.64} parent=0 // pred_check_branch
    %184 = sbr.rel (0) target = $region21
  $region20: #{feedback_urdnet.64} parent=0 // pred_region
    _
  $region21: #{feedback_urdnet.64} parent=0 // pred_fallthru
    _

// kernel: feedback_urdnet.65
$region0: #{feedback_urdnet.65}
  #allocation0 [shape = 'u32[]', space=smem, size = 0x4, offset = 0x4, fixed_abs, tag = 'smem constant byte address 0x4 - core index']
  #allocation1 [shape = 'u32[144,128]{1,0:T(1,128)}', space=vmem, size = 0x12000, scoped, tag = 'internal scratch']
  %s0 = inlined_call_operand.vmem [shape: bf16[32,180], index: 0, kind: input, shape index: {}]
  %s1 = inlined_call_operand.vmem [shape: bf16[180,4], index: 1, kind: input, shape index: {}]
  %s2 = inlined_call_operand.vmem [shape: f32[1,4], index: 2, kind: input, shape index: {}]
  %s3 = inlined_call_operand.vmem [shape: f32[32,4], index: 3, kind: output, shape index: {}]
  %s4 = sld [smem:[#allocation0]]
  $region22: #{feedback_urdnet.65} parent=0
    _
  %s6 = ssub.s32 1, %s4
  %s7 = scalar_select 0, %s6, %s4
  // Predicated region
  $region2: #{feedback_urdnet.65} parent=0 // pred_check
    _
  $region3: #{feedback_urdnet.65} parent=0 // pred_check_branch
    %9 = sbr.rel (0) target = $region5
  $region4: #{feedback_urdnet.65} parent=0 // pred_region
    _
  $region5: #{feedback_urdnet.65} parent=0 // pred_fallthru
    _
  // Predicated region
  $region6: #{feedback_urdnet.65} parent=0 // pred_check
    _
  $region7: #{feedback_urdnet.65} parent=0 // pred_check_branch
    %11 = sbr.rel (0) target = $region9
  $region8: #{feedback_urdnet.65} parent=0 // pred_region
    _
  $region9: #{feedback_urdnet.65} parent=0 // pred_fallthru
    _
  // Predicated region
  $region10: #{feedback_urdnet.65} parent=0 // pred_check
    _
  $region11: #{feedback_urdnet.65} parent=0 // pred_check_branch
    %13 = sbr.rel (0) target = $region13
  $region12: #{feedback_urdnet.65} parent=0 // pred_region
    _
  $region13: #{feedback_urdnet.65} parent=0 // pred_fallthru
    _
  %v15 = vld [vmem:[%s0] sm:$0xff]
  %v16 = vld [vmem:[%s0 + $0x8] sm:$0xff]
  %v17 = vld [vmem:[%s0 + $0x10] sm:$0xff]
  %v18 = vld [vmem:[%s0 + $0x18] sm:$0xff]
  %v19 = vld [vmem:[%s1] sm:$0xf]
  %v20 = vld [vmem:[%s1 + $0x4] sm:$0xf]
  %v21 = vld [vmem:[%s1 + $0x8] sm:$0xf]
  %v22 = vld [vmem:[%s1 + $0xc] sm:$0xf]
  %v23 = vld [vmem:[%s1 + $0x10] sm:$0xf]
  %v24 = vld [vmem:[%s1 + $0x14] sm:$0xf]
  %v25 = vld [vmem:[%s1 + $0x18] sm:$0xf]
  %v26 = vld [vmem:[%s1 + $0x1c] sm:$0xf]
  %v27 = vld [vmem:[%s1 + $0x20] sm:$0xf]
  %v28 = vld [vmem:[%s1 + $0x24] sm:$0xf]
  %v29 = vld [vmem:[%s1 + $0x28] sm:$0xf]
  %v30 = vld [vmem:[%s1 + $0x2c] sm:$0xf]
  %v31 = vld [vmem:[%s1 + $0x30] sm:$0xf]
  %v32 = vld [vmem:[%s1 + $0x34] sm:$0xf]
  %v33 = vld [vmem:[%s1 + $0x38] sm:$0xf]
  %v34 = vld [vmem:[%s1 + $0x3c] sm:$0xf]
  %v35 = vld [vmem:[%s1 + $0x40] sm:$0xf]
  %v36 = vld [vmem:[%s1 + $0x44] sm:$0xf]
  %v37 = vld [vmem:[%s1 + $0x48] sm:$0xf]
  %v38 = vld [vmem:[%s1 + $0x4c] sm:$0xf]
  %v39 = vld [vmem:[%s1 + $0x50] sm:$0xf]
  %v40 = vld [vmem:[%s1 + $0x54] sm:$0xf]
  %v41 = vld [vmem:[%s1 + $0x58] sm:$0x3]
  %v42 = vld [vmem:[%s2] sm:$0x1]
  %v44 = vlaneseq
  %v45 = vshrl.u32 %v44, 7
  %v46 = vsub.s32 0, %v45
  %v47 = vrot.slane %v42, %v46
  %v53 = vunpack.c.l.b16 %v15
  %v54 = vunpack.c.h.b16 %v15
  %v55 = vunpack.c.l.b16 %v16
  %v56 = vunpack.c.h.b16 %v16
  %v57 = vunpack.c.l.b16 %v17
  %v58 = vunpack.c.h.b16 %v17
  %v59 = vunpack.c.l.b16 %v18
  %v60 = vunpack.c.h.b16 %v18
  %v61 = vpack.c.b16 %v55, %v53
  %v62 = vpack.c.b16 %v56, %v54
  %v63 = vpack.c.b16 %v59, %v57
  %v64 = vpack.c.b16 %v60, %v58
  %v90 = vunpack.c.l.b16 %v19
  %v91 = vunpack.c.l.b16 %v20
  %v92 = vunpack.c.l.b16 %v21
  %v93 = vunpack.c.l.b16 %v22
  %v94 = vunpack.c.l.b16 %v23
  %v95 = vunpack.c.l.b16 %v24
  %v96 = vunpack.c.l.b16 %v25
  %v97 = vunpack.c.l.b16 %v26
  %v98 = vunpack.c.l.b16 %v27
  %v99 = vunpack.c.l.b16 %v28
  %v100 = vunpack.c.l.b16 %v29
  %v101 = vunpack.c.l.b16 %v30
  %v102 = vunpack.c.l.b16 %v31
  %v103 = vunpack.c.l.b16 %v32
  %v104 = vunpack.c.l.b16 %v33
  %v105 = vunpack.c.l.b16 %v34
  %v106 = vunpack.c.l.b16 %v35
  %v107 = vunpack.c.l.b16 %v36
  %v108 = vunpack.c.l.b16 %v37
  %v109 = vunpack.c.l.b16 %v38
  %v110 = vunpack.c.l.b16 %v39
  %v111 = vunpack.c.l.b16 %v40
  %v112 = vunpack.c.l.b16 %v41
  %v113 = vpack.c.b16 %v91, %v90
  %v114 = vpack.c.b16 %v93, %v92
  %v115 = vpack.c.b16 %v95, %v94
  %v116 = vpack.c.b16 %v97, %v96
  %v117 = vpack.c.b16 %v99, %v98
  %v118 = vpack.c.b16 %v101, %v100
  %v119 = vpack.c.b16 %v103, %v102
  %v120 = vpack.c.b16 %v105, %v104
  %v121 = vpack.c.b16 %v107, %v106
  %v122 = vpack.c.b16 %v109, %v108
  %v123 = vpack.c.b16 %v111, %v110
  %v124 = vpack.c.b16 %v112, %v112
  %vm136 = vcmask 424960
  %v138 = vsel %vm136, %v62, 0
  %v141 = vsel %vm136, %v64, 0
  %vm143 = vcmask 1041408
  %v145 = vsel %vm143, %v124, 0
  %147 = vmatprep.subr.bf16.mxu0 0
  %148 = vmatpush1.bf16.msra.mxu0 %v113
  %149 = vmatprep.subr.bf16.mxu0 0
  %150 = vmatpush1.bf16.msra.mxu0 %v114
  %151 = vmatprep.subr.bf16.mxu0 0
  %152 = vmatpush1.bf16.msra.mxu0 %v115
  %153 = vmatprep.subr.bf16.mxu0 0
  %154 = vmatpush1.bf16.msra.mxu0 %v116
  %155 = vmatprep.subr.bf16.mxu0 0
  %156 = vmatpush1.bf16.msra.mxu0 %v117
  %157 = vmatprep.subr.bf16.mxu0 0
  %158 = vmatpush1.bf16.msra.mxu0 %v118
  %159 = vmatprep.subr.bf16.mxu0 0
  %160 = vmatpush1.bf16.msra.mxu0 %v119
  %161 = vmatprep.subr.bf16.mxu0 0
  %162 = vmatpush1.bf16.msra.mxu0 %v120
  %163 = vmatprep.subr.bf16.mxu0 0
  %164 = vmatpush1.bf16.msra.mxu0 %v121
  %165 = vmatprep.subr.bf16.mxu0 0
  %166 = vmatpush1.bf16.msra.mxu0 %v122
  %167 = vmatprep.subr.bf16.mxu0 0
  %168 = vmatpush1.bf16.msra.mxu0 %v123
  %169 = vmatprep.subr.bf16.mxu0 0
  %170 = vmatpush1.bf16.msra.mxu0 %v145
  %171 = vmatprep.subr.bf16.mxu0 0
  %172 = vmatpush1.bf16.msra.mxu0 0
  %173 = vmatprep.subr.bf16.mxu0 0
  %174 = vmatpush1.bf16.msra.mxu0 0
  %175 = vmatprep.subr.bf16.mxu0 0
  %176 = vmatpush1.bf16.msra.mxu0 0
  %177 = vmatprep.subr.bf16.mxu0 0
  %178 = vmatpush1.bf16.msra.mxu0 0
  %179 = vmatprep.mubr.bf16.mxu0 %v138
  %180 = vmatmul.mubr.bf16.gmra.mrb[0].mxu0 %v61
  %v181 = vpop.f32.mrb[0].mxu0
  %v182 = vadd.f32 %v47, %v181
  %v183 = vpop.f32.mrb[0].mxu0
  %v184 = vpop.f32.mrb[0].mxu0
  %v185 = vadd.f32 %v47, %v184
  %v186 = vpop.f32.mrb[0].mxu0
  %187 = vmatprep.mubr.bf16.mxu0 %v141
  %188 = vmatmul.mubr.bf16.gmra.mrb[0].mxu0 %v63
  %v189 = vpop.f32.mrb[0].mxu0
  %v190 = vadd.f32 %v47, %v189
  %v191 = vpop.f32.mrb[0].mxu0
  %v192 = vpop.f32.mrb[0].mxu0
  %v193 = vadd.f32 %v47, %v192
  %v194 = vpop.f32.mrb[0].mxu0
  %195 = vdwg.mxu0
  %v196 = vmax.f32 %v182, 0.0
  %v197 = vmax.f32 %v185, 0.0
  %v198 = vmax.f32 %v190, 0.0
  %v199 = vmax.f32 %v193, 0.0
  %vm200 = vcmask 31744
  %201 = vst.msk [vmem:[%s3] sm:$0xff] %vm200, %v196
  %202 = vst.msk [vmem:[%s3 + $0x8] sm:$0xff] %vm200, %v197
  %203 = vst.msk [vmem:[%s3 + $0x10] sm:$0xff] %vm200, %v198
  %204 = vst.msk [vmem:[%s3 + $0x18] sm:$0xff] %vm200, %v199
  // Predicated region
  $region14: #{feedback_urdnet.65} parent=0 // pred_check
    _
  $region15: #{feedback_urdnet.65} parent=0 // pred_check_branch
    %206 = sbr.rel (0) target = $region17
  $region16: #{feedback_urdnet.65} parent=0 // pred_region
    _
  $region17: #{feedback_urdnet.65} parent=0 // pred_fallthru
    _
  // Predicated region
  $region18: #{feedback_urdnet.65} parent=0 // pred_check
    _
  $region19: #{feedback_urdnet.65} parent=0 // pred_check_branch
    %208 = sbr.rel (0) target = $region21
  $region20: #{feedback_urdnet.65} parent=0 // pred_region
    _
  $region21: #{feedback_urdnet.65} parent=0 // pred_fallthru
    _

// kernel: feedback_urdnet.66
$region0: #{feedback_urdnet.66}
  #allocation0 [shape = 'u32[]', space=smem, size = 0x4, offset = 0x4, fixed_abs, tag = 'smem constant byte address 0x4 - core index']
  #allocation1 [shape = 'u32[144,128]{1,0:T(1,128)}', space=vmem, size = 0x12000, scoped, tag = 'internal scratch']
  %s0 = inlined_call_operand.vmem [shape: bf16[32,24], index: 0, kind: input, shape index: {}]
  %s1 = inlined_call_operand.vmem [shape: bf16[24,16], index: 1, kind: input, shape index: {}]
  %s2 = inlined_call_operand.vmem [shape: f32[1,16], index: 2, kind: input, shape index: {}]
  %s3 = inlined_call_operand.vmem [shape: f32[32,16], index: 3, kind: output, shape index: {}]
  %s4 = sld [smem:[#allocation0]]
  $region22: #{feedback_urdnet.66} parent=0
    _
  %s6 = ssub.s32 1, %s4
  %s7 = scalar_select 0, %s6, %s4
  // Predicated region
  $region2: #{feedback_urdnet.66} parent=0 // pred_check
    _
  $region3: #{feedback_urdnet.66} parent=0 // pred_check_branch
    %9 = sbr.rel (0) target = $region5
  $region4: #{feedback_urdnet.66} parent=0 // pred_region
    _
  $region5: #{feedback_urdnet.66} parent=0 // pred_fallthru
    _
  // Predicated region
  $region6: #{feedback_urdnet.66} parent=0 // pred_check
    _
  $region7: #{feedback_urdnet.66} parent=0 // pred_check_branch
    %11 = sbr.rel (0) target = $region9
  $region8: #{feedback_urdnet.66} parent=0 // pred_region
    _
  $region9: #{feedback_urdnet.66} parent=0 // pred_fallthru
    _
  // Predicated region
  $region10: #{feedback_urdnet.66} parent=0 // pred_check
    _
  $region11: #{feedback_urdnet.66} parent=0 // pred_check_branch
    %13 = sbr.rel (0) target = $region13
  $region12: #{feedback_urdnet.66} parent=0 // pred_region
    _
  $region13: #{feedback_urdnet.66} parent=0 // pred_fallthru
    _
  %v15 = vld [vmem:[%s0] sm:$0xf]
  %v16 = vld [vmem:[%s0 + $0x4] sm:$0xf]
  %v17 = vld [vmem:[%s0 + $0x8] sm:$0xf]
  %v18 = vld [vmem:[%s0 + $0xc] sm:$0xf]
  %v19 = vld [vmem:[%s1] sm:$0xf]
  %v20 = vld [vmem:[%s1 + $0x4] sm:$0xf]
  %v21 = vld [vmem:[%s1 + $0x8] sm:$0xf]
  %v22 = vld [vmem:[%s2] sm:$0x1]
  %v24 = vlaneseq
  %v25 = vshrl.u32 %v24, 7
  %v26 = vsub.s32 0, %v25
  %v27 = vrot.slane %v22, %v26
  %v33 = vunpack.c.l.b16 %v15
  %v34 = vunpack.c.l.b16 %v16
  %v35 = vunpack.c.l.b16 %v17
  %v36 = vunpack.c.l.b16 %v18
  %v37 = vpack.c.b16 %v34, %v33
  %v38 = vpack.c.b16 %v36, %v35
  %v42 = vunpack.c.l.b16 %v19
  %v43 = vunpack.c.l.b16 %v20
  %v44 = vunpack.c.l.b16 %v21
  %v45 = vpack.c.b16 %v43, %v42
  %v46 = vpack.c.b16 %v44, %v44
  %vm48 = vcmask 195584
  %v50 = vsel %vm48, %v37, 0
  %v53 = vsel %vm48, %v38, 0
  %vm55 = vcmask 1043456
  %v57 = vsel %vm55, %v46, 0
  %59 = vmatprep.subr.bf16.mxu0 0
  %60 = vmatpush1.bf16.msra.mxu0 %v45
  %61 = vmatprep.subr.bf16.mxu0 0
  %62 = vmatpush1.bf16.msra.mxu0 %v57
  %63 = vmatprep.subr.bf16.mxu0 0
  %64 = vmatpush1.bf16.msra.mxu0 0
  %65 = vmatprep.subr.bf16.mxu0 0
  %66 = vmatpush1.bf16.msra.mxu0 0
  %67 = vmatprep.subr.bf16.mxu0 0
  %68 = vmatpush1.bf16.msra.mxu0 0
  %69 = vmatprep.subr.bf16.mxu0 0
  %70 = vmatpush1.bf16.msra.mxu0 0
  %71 = vmatprep.subr.bf16.mxu0 0
  %72 = vmatpush1.bf16.msra.mxu0 0
  %73 = vmatprep.subr.bf16.mxu0 0
  %74 = vmatpush1.bf16.msra.mxu0 0
  %75 = vmatprep.subr.bf16.mxu0 0
  %76 = vmatpush1.bf16.msra.mxu0 0
  %77 = vmatprep.subr.bf16.mxu0 0
  %78 = vmatpush1.bf16.msra.mxu0 0
  %79 = vmatprep.subr.bf16.mxu0 0
  %80 = vmatpush1.bf16.msra.mxu0 0
  %81 = vmatprep.subr.bf16.mxu0 0
  %82 = vmatpush1.bf16.msra.mxu0 0
  %83 = vmatprep.subr.bf16.mxu0 0
  %84 = vmatpush1.bf16.msra.mxu0 0
  %85 = vmatprep.subr.bf16.mxu0 0
  %86 = vmatpush1.bf16.msra.mxu0 0
  %87 = vmatprep.subr.bf16.mxu0 0
  %88 = vmatpush1.bf16.msra.mxu0 0
  %89 = vmatprep.subr.bf16.mxu0 0
  %90 = vmatpush1.bf16.msra.mxu0 0
  %91 = vmatprep.mubr.bf16.mxu0 0
  %92 = vmatmul.mubr.bf16.gmra.mrb[0].mxu0 %v50
  %v93 = vpop.f32.mrb[0].mxu0
  %v94 = vadd.f32 %v27, %v93
  %v95 = vpop.f32.mrb[0].mxu0
  %v96 = vpop.f32.mrb[0].mxu0
  %v97 = vadd.f32 %v27, %v96
  %v98 = vpop.f32.mrb[0].mxu0
  %99 = vmatprep.mubr.bf16.mxu0 0
  %100 = vmatmul.mubr.bf16.gmra.mrb[0].mxu0 %v53
  %v101 = vpop.f32.mrb[0].mxu0
  %v102 = vadd.f32 %v27, %v101
  %v103 = vpop.f32.mrb[0].mxu0
  %v104 = vpop.f32.mrb[0].mxu0
  %v105 = vadd.f32 %v27, %v104
  %v106 = vpop.f32.mrb[0].mxu0
  %107 = vdwg.mxu0
  %vm108 = vcmask 130048
  %109 = vst.msk [vmem:[%s3] sm:$0xff] %vm108, %v94
  %110 = vst.msk [vmem:[%s3 + $0x8] sm:$0xff] %vm108, %v97
  %111 = vst.msk [vmem:[%s3 + $0x10] sm:$0xff] %vm108, %v102
  %112 = vst.msk [vmem:[%s3 + $0x18] sm:$0xff] %vm108, %v105
  // Predicated region
  $region14: #{feedback_urdnet.66} parent=0 // pred_check
    _
  $region15: #{feedback_urdnet.66} parent=0 // pred_check_branch
    %114 = sbr.rel (0) target = $region17
  $region16: #{feedback_urdnet.66} parent=0 // pred_region
    _
  $region17: #{feedback_urdnet.66} parent=0 // pred_fallthru
    _
  // Predicated region
  $region18: #{feedback_urdnet.66} parent=0 // pred_check
    _
  $region19: #{feedback_urdnet.66} parent=0 // pred_check_branch
    %116 = sbr.rel (0) target = $region21
  $region20: #{feedback_urdnet.66} parent=0 // pred_region
    _
  $region21: #{feedback_urdnet.66} parent=0 // pred_fallthru
    _

// kernel: feedback_urdnet.67
$region0: #{feedback_urdnet.67}
  #allocation0 [shape = 'u32[]', space=smem, size = 0x4, offset = 0x4, fixed_abs, tag = 'smem constant byte address 0x4 - core index']
  #allocation1 [shape = 'u32[144,128]{1,0:T(1,128)}', space=vmem, size = 0x12000, scoped, tag = 'internal scratch']
  %s0 = inlined_call_operand.vmem [shape: bf16[8,144], index: 0, kind: input, shape index: {}]
  %s1 = inlined_call_operand.vmem [shape: bf16[144,32], index: 1, kind: input, shape index: {}]
  %s2 = inlined_call_operand.vmem [shape: f32[1,32], index: 2, kind: input, shape index: {}]
  %s3 = inlined_call_operand.vmem [shape: f32[8,32], index: 3, kind: output, shape index: {}]
  %s4 = sld [smem:[#allocation0]]
  $region22: #{feedback_urdnet.67} parent=0
    _
  %s6 = ssub.s32 1, %s4
  %s7 = scalar_select 0, %s6, %s4
  // Predicated region
  $region2: #{feedback_urdnet.67} parent=0 // pred_check
    _
  $region3: #{feedback_urdnet.67} parent=0 // pred_check_branch
    %9 = sbr.rel (0) target = $region5
  $region4: #{feedback_urdnet.67} parent=0 // pred_region
    _
  $region5: #{feedback_urdnet.67} parent=0 // pred_fallthru
    _
  // Predicated region
  $region6: #{feedback_urdnet.67} parent=0 // pred_check
    _
  $region7: #{feedback_urdnet.67} parent=0 // pred_check_branch
    %11 = sbr.rel (0) target = $region9
  $region8: #{feedback_urdnet.67} parent=0 // pred_region
    _
  $region9: #{feedback_urdnet.67} parent=0 // pred_fallthru
    _
  // Predicated region
  $region10: #{feedback_urdnet.67} parent=0 // pred_check
    _
  $region11: #{feedback_urdnet.67} parent=0 // pred_check_branch
    %13 = sbr.rel (0) target = $region13
  $region12: #{feedback_urdnet.67} parent=0 // pred_region
    _
  $region13: #{feedback_urdnet.67} parent=0 // pred_fallthru
    _
  %v15 = vld [vmem:[%s0] sm:$0xff]
  %v16 = vld [vmem:[%s1] sm:$0xf]
  %v17 = vld [vmem:[%s1 + $0x4] sm:$0xf]
  %v18 = vld [vmem:[%s1 + $0x8] sm:$0xf]
  %v19 = vld [vmem:[%s1 + $0xc] sm:$0xf]
  %v20 = vld [vmem:[%s1 + $0x10] sm:$0xf]
  %v21 = vld [vmem:[%s1 + $0x14] sm:$0xf]
  %v22 = vld [vmem:[%s1 + $0x18] sm:$0xf]
  %v23 = vld [vmem:[%s1 + $0x1c] sm:$0xf]
  %v24 = vld [vmem:[%s1 + $0x20] sm:$0xf]
  %v25 = vld [vmem:[%s1 + $0x24] sm:$0xf]
  %v26 = vld [vmem:[%s1 + $0x28] sm:$0xf]
  %v27 = vld [vmem:[%s1 + $0x2c] sm:$0xf]
  %v28 = vld [vmem:[%s1 + $0x30] sm:$0xf]
  %v29 = vld [vmem:[%s1 + $0x34] sm:$0xf]
  %v30 = vld [vmem:[%s1 + $0x38] sm:$0xf]
  %v31 = vld [vmem:[%s1 + $0x3c] sm:$0xf]
  %v32 = vld [vmem:[%s1 + $0x40] sm:$0xf]
  %v33 = vld [vmem:[%s1 + $0x44] sm:$0xf]
  %v34 = vld [vmem:[%s2] sm:$0x1]
  %v36 = vlaneseq
  %v37 = vshrl.u32 %v36, 7
  %v38 = vsub.s32 0, %v37
  %v39 = vrot.slane %v34, %v38
  %v42 = vunpack.c.l.b16 %v15
  %v43 = vunpack.c.h.b16 %v15
  %v44 = vpack.c.b16 %v42, %v42
  %v45 = vpack.c.b16 %v43, %v43
  %v65 = vunpack.c.l.b16 %v16
  %v66 = vunpack.c.l.b16 %v17
  %v67 = vunpack.c.l.b16 %v18
  %v68 = vunpack.c.l.b16 %v19
  %v69 = vunpack.c.l.b16 %v20
  %v70 = vunpack.c.l.b16 %v21
  %v71 = vunpack.c.l.b16 %v22
  %v72 = vunpack.c.l.b16 %v23
  %v73 = vunpack.c.l.b16 %v24
  %v74 = vunpack.c.l.b16 %v25
  %v75 = vunpack.c.l.b16 %v26
  %v76 = vunpack.c.l.b16 %v27
  %v77 = vunpack.c.l.b16 %v28
  %v78 = vunpack.c.l.b16 %v29
  %v79 = vunpack.c.l.b16 %v30
  %v80 = vunpack.c.l.b16 %v31
  %v81 = vunpack.c.l.b16 %v32
  %v82 = vunpack.c.l.b16 %v33
  %v83 = vpack.c.b16 %v66, %v65
  %v84 = vpack.c.b16 %v68, %v67
  %v85 = vpack.c.b16 %v70, %v69
  %v86 = vpack.c.b16 %v72, %v71
  %v87 = vpack.c.b16 %v74, %v73
  %v88 = vpack.c.b16 %v76, %v75
  %v89 = vpack.c.b16 %v78, %v77
  %v90 = vpack.c.b16 %v80, %v79
  %v91 = vpack.c.b16 %v82, %v81
  %vm101 = vcmask 130048
  %v103 = vsel %vm101, %v45, 0
  %105 = vmatprep.subr.bf16.mxu0 0
  %106 = vmatpush1.bf16.msra.mxu0 %v83
  %107 = vmatprep.subr.bf16.mxu0 0
  %108 = vmatpush1.bf16.msra.mxu0 %v84
  %109 = vmatprep.subr.bf16.mxu0 0
  %110 = vmatpush1.bf16.msra.mxu0 %v85
  %111 = vmatprep.subr.bf16.mxu0 0
  %112 = vmatpush1.bf16.msra.mxu0 %v86
  %113 = vmatprep.subr.bf16.mxu0 0
  %114 = vmatpush1.bf16.msra.mxu0 %v87
  %115 = vmatprep.subr.bf16.mxu0 0
  %116 = vmatpush1.bf16.msra.mxu0 %v88
  %117 = vmatprep.subr.bf16.mxu0 0
  %118 = vmatpush1.bf16.msra.mxu0 %v89
  %119 = vmatprep.subr.bf16.mxu0 0
  %120 = vmatpush1.bf16.msra.mxu0 %v90
  %121 = vmatprep.subr.bf16.mxu0 0
  %122 = vmatpush1.bf16.msra.mxu0 %v91
  %123 = vmatprep.subr.bf16.mxu0 0
  %124 = vmatpush1.bf16.msra.mxu0 0
  %125 = vmatprep.subr.bf16.mxu0 0
  %126 = vmatpush1.bf16.msra.mxu0 0
  %127 = vmatprep.subr.bf16.mxu0 0
  %128 = vmatpush1.bf16.msra.mxu0 0
  %129 = vmatprep.subr.bf16.mxu0 0
  %130 = vmatpush1.bf16.msra.mxu0 0
  %131 = vmatprep.subr.bf16.mxu0 0
  %132 = vmatpush1.bf16.msra.mxu0 0
  %133 = vmatprep.subr.bf16.mxu0 0
  %134 = vmatpush1.bf16.msra.mxu0 0
  %135 = vmatprep.subr.bf16.mxu0 0
  %136 = vmatpush1.bf16.msra.mxu0 0
  %137 = vmatprep.mubr.bf16.mxu0 %v103
  %138 = vmatmul.mubr.bf16.gmra.mrb[0].mxu0 %v44
  %v139 = vpop.f32.mrb[0].mxu0
  %v140 = vadd.f32 %v39, %v139
  %v141 = vpop.f32.mrb[0].mxu0
  %v142 = vpop.f32.mrb[0].mxu0
  %v143 = vpop.f32.mrb[0].mxu0
  %144 = vdwg.mxu0
  %v145 = vmax.f32 %v140, 0.0
  %vm146 = vcmask 261120
  %147 = vst.msk [vmem:[%s3] sm:$0xff] %vm146, %v145
  // Predicated region
  $region14: #{feedback_urdnet.67} parent=0 // pred_check
    _
  $region15: #{feedback_urdnet.67} parent=0 // pred_check_branch
    %149 = sbr.rel (0) target = $region17
  $region16: #{feedback_urdnet.67} parent=0 // pred_region
    _
  $region17: #{feedback_urdnet.67} parent=0 // pred_fallthru
    _
  // Predicated region
  $region18: #{feedback_urdnet.67} parent=0 // pred_check
    _
  $region19: #{feedback_urdnet.67} parent=0 // pred_check_branch
    %151 = sbr.rel (0) target = $region21
  $region20: #{feedback_urdnet.67} parent=0 // pred_region
    _
  $region21: #{feedback_urdnet.67} parent=0 // pred_fallthru
    _

// kernel: feedback_urdnet.68
$region0: #{feedback_urdnet.68}
  #allocation0 [shape = 'u32[]', space=smem, size = 0x4, offset = 0x4, fixed_abs, tag = 'smem constant byte address 0x4 - core index']
  #allocation1 [shape = 'u32[144,128]{1,0:T(1,128)}', space=vmem, size = 0x12000, scoped, tag = 'internal scratch']
  %s0 = inlined_call_operand.vmem [shape: bf16[8,288], index: 0, kind: input, shape index: {}]
  %s1 = inlined_call_operand.vmem [shape: bf16[288,4], index: 1, kind: input, shape index: {}]
  %s2 = inlined_call_operand.vmem [shape: f32[1,4], index: 2, kind: input, shape index: {}]
  %s3 = inlined_call_operand.vmem [shape: f32[8,4], index: 3, kind: output, shape index: {}]
  %s4 = sld [smem:[#allocation0]]
  $region22: #{feedback_urdnet.68} parent=0
    _
  %s6 = ssub.s32 1, %s4
  %s7 = scalar_select 0, %s6, %s4
  // Predicated region
  $region2: #{feedback_urdnet.68} parent=0 // pred_check
    _
  $region3: #{feedback_urdnet.68} parent=0 // pred_check_branch
    %9 = sbr.rel (0) target = $region5
  $region4: #{feedback_urdnet.68} parent=0 // pred_region
    _
  $region5: #{feedback_urdnet.68} parent=0 // pred_fallthru
    _
  // Predicated region
  $region6: #{feedback_urdnet.68} parent=0 // pred_check
    _
  $region7: #{feedback_urdnet.68} parent=0 // pred_check_branch
    %11 = sbr.rel (0) target = $region9
  $region8: #{feedback_urdnet.68} parent=0 // pred_region
    _
  $region9: #{feedback_urdnet.68} parent=0 // pred_fallthru
    _
  // Predicated region
  $region10: #{feedback_urdnet.68} parent=0 // pred_check
    _
  $region11: #{feedback_urdnet.68} parent=0 // pred_check_branch
    %13 = sbr.rel (0) target = $region13
  $region12: #{feedback_urdnet.68} parent=0 // pred_region
    _
  $region13: #{feedback_urdnet.68} parent=0 // pred_fallthru
    _
  %v15 = vld [vmem:[%s0] sm:$0xff]
  %v16 = vld [vmem:[%s0 + $0x8] sm:$0xf]
  %v17 = vld [vmem:[%s1] sm:$0xf]
  %v18 = vld [vmem:[%s1 + $0x4] sm:$0xf]
  %v19 = vld [vmem:[%s1 + $0x8] sm:$0xf]
  %v20 = vld [vmem:[%s1 + $0xc] sm:$0xf]
  %v21 = vld [vmem:[%s1 + $0x10] sm:$0xf]
  %v22 = vld [vmem:[%s1 + $0x14] sm:$0xf]
  %v23 = vld [vmem:[%s1 + $0x18] sm:$0xf]
  %v24 = vld [vmem:[%s1 + $0x1c] sm:$0xf]
  %v25 = vld [vmem:[%s1 + $0x20] sm:$0xf]
  %v26 = vld [vmem:[%s1 + $0x24] sm:$0xf]
  %v27 = vld [vmem:[%s1 + $0x28] sm:$0xf]
  %v28 = vld [vmem:[%s1 + $0x2c] sm:$0xf]
  %v29 = vld [vmem:[%s1 + $0x30] sm:$0xf]
  %v30 = vld [vmem:[%s1 + $0x34] sm:$0xf]
  %v31 = vld [vmem:[%s1 + $0x38] sm:$0xf]
  %v32 = vld [vmem:[%s1 + $0x3c] sm:$0xf]
  %v33 = vld [vmem:[%s1 + $0x40] sm:$0xf]
  %v34 = vld [vmem:[%s1 + $0x44] sm:$0xf]
  %v35 = vld [vmem:[%s1 + $0x48] sm:$0xf]
  %v36 = vld [vmem:[%s1 + $0x4c] sm:$0xf]
  %v37 = vld [vmem:[%s1 + $0x50] sm:$0xf]
  %v38 = vld [vmem:[%s1 + $0x54] sm:$0xf]
  %v39 = vld [vmem:[%s1 + $0x58] sm:$0xf]
  %v40 = vld [vmem:[%s1 + $0x5c] sm:$0xf]
  %v41 = vld [vmem:[%s1 + $0x60] sm:$0xf]
  %v42 = vld [vmem:[%s1 + $0x64] sm:$0xf]
  %v43 = vld [vmem:[%s1 + $0x68] sm:$0xf]
  %v44 = vld [vmem:[%s1 + $0x6c] sm:$0xf]
  %v45 = vld [vmem:[%s1 + $0x70] sm:$0xf]
  %v46 = vld [vmem:[%s1 + $0x74] sm:$0xf]
  %v47 = vld [vmem:[%s1 + $0x78] sm:$0xf]
  %v48 = vld [vmem:[%s1 + $0x7c] sm:$0xf]
  %v49 = vld [vmem:[%s1 + $0x80] sm:$0xf]
  %v50 = vld [vmem:[%s1 + $0x84] sm:$0xf]
  %v51 = vld [vmem:[%s1 + $0x88] sm:$0xf]
  %v52 = vld [vmem:[%s1 + $0x8c] sm:$0xf]
  %v53 = vld [vmem:[%s2] sm:$0x1]
  %v55 = vlaneseq
  %v56 = vshrl.u32 %v55, 7
  %v57 = vsub.s32 0, %v56
  %v58 = vrot.slane %v53, %v57
  %v62 = vunpack.c.l.b16 %v15
  %v63 = vunpack.c.h.b16 %v15
  %v64 = vunpack.c.l.b16 %v16
  %v65 = vpack.c.b16 %v62, %v62
  %v66 = vpack.c.b16 %v63, %v63
  %v67 = vpack.c.b16 %v64, %v64
  %v106 = vunpack.c.l.b16 %v17
  %v107 = vunpack.c.l.b16 %v18
  %v108 = vunpack.c.l.b16 %v19
  %v109 = vunpack.c.l.b16 %v20
  %v110 = vunpack.c.l.b16 %v21
  %v111 = vunpack.c.l.b16 %v22
  %v112 = vunpack.c.l.b16 %v23
  %v113 = vunpack.c.l.b16 %v24
  %v114 = vunpack.c.l.b16 %v25
  %v115 = vunpack.c.l.b16 %v26
  %v116 = vunpack.c.l.b16 %v27
  %v117 = vunpack.c.l.b16 %v28
  %v118 = vunpack.c.l.b16 %v29
  %v119 = vunpack.c.l.b16 %v30
  %v120 = vunpack.c.l.b16 %v31
  %v121 = vunpack.c.l.b16 %v32
  %v122 = vunpack.c.l.b16 %v33
  %v123 = vunpack.c.l.b16 %v34
  %v124 = vunpack.c.l.b16 %v35
  %v125 = vunpack.c.l.b16 %v36
  %v126 = vunpack.c.l.b16 %v37
  %v127 = vunpack.c.l.b16 %v38
  %v128 = vunpack.c.l.b16 %v39
  %v129 = vunpack.c.l.b16 %v40
  %v130 = vunpack.c.l.b16 %v41
  %v131 = vunpack.c.l.b16 %v42
  %v132 = vunpack.c.l.b16 %v43
  %v133 = vunpack.c.l.b16 %v44
  %v134 = vunpack.c.l.b16 %v45
  %v135 = vunpack.c.l.b16 %v46
  %v136 = vunpack.c.l.b16 %v47
  %v137 = vunpack.c.l.b16 %v48
  %v138 = vunpack.c.l.b16 %v49
  %v139 = vunpack.c.l.b16 %v50
  %v140 = vunpack.c.l.b16 %v51
  %v141 = vunpack.c.l.b16 %v52
  %v142 = vpack.c.b16 %v107, %v106
  %v143 = vpack.c.b16 %v109, %v108
  %v144 = vpack.c.b16 %v111, %v110
  %v145 = vpack.c.b16 %v113, %v112
  %v146 = vpack.c.b16 %v115, %v114
  %v147 = vpack.c.b16 %v117, %v116
  %v148 = vpack.c.b16 %v119, %v118
  %v149 = vpack.c.b16 %v121, %v120
  %v150 = vpack.c.b16 %v123, %v122
  %v151 = vpack.c.b16 %v125, %v124
  %v152 = vpack.c.b16 %v127, %v126
  %v153 = vpack.c.b16 %v129, %v128
  %v154 = vpack.c.b16 %v131, %v130
  %v155 = vpack.c.b16 %v133, %v132
  %v156 = vpack.c.b16 %v135, %v134
  %v157 = vpack.c.b16 %v137, %v136
  %v158 = vpack.c.b16 %v139, %v138
  %v159 = vpack.c.b16 %v141, %v140
  %vm178 = vcmask 261120
  %v180 = vsel %vm178, %v67, 0
  %182 = vmatprep.subr.bf16.mxu0 0
  %183 = vmatpush1.bf16.msra.mxu0 %v142
  %184 = vmatprep.subr.bf16.mxu0 0
  %185 = vmatpush1.bf16.msra.mxu0 %v143
  %186 = vmatprep.subr.bf16.mxu0 0
  %187 = vmatpush1.bf16.msra.mxu0 %v144
  %188 = vmatprep.subr.bf16.mxu0 0
  %189 = vmatpush1.bf16.msra.mxu0 %v145
  %190 = vmatprep.subr.bf16.mxu0 0
  %191 = vmatpush1.bf16.msra.mxu0 %v146
  %192 = vmatprep.subr.bf16.mxu0 0
  %193 = vmatpush1.bf16.msra.mxu0 %v147
  %194 = vmatprep.subr.bf16.mxu0 0
  %195 = vmatpush1.bf16.msra.mxu0 %v148
  %196 = vmatprep.subr.bf16.mxu0 0
  %197 = vmatpush1.bf16.msra.mxu0 %v149
  %198 = vmatprep.subr.bf16.mxu0 0
  %199 = vmatpush1.bf16.msra.mxu0 %v150
  %200 = vmatprep.subr.bf16.mxu0 0
  %201 = vmatpush1.bf16.msra.mxu0 %v151
  %202 = vmatprep.subr.bf16.mxu0 0
  %203 = vmatpush1.bf16.msra.mxu0 %v152
  %204 = vmatprep.subr.bf16.mxu0 0
  %205 = vmatpush1.bf16.msra.mxu0 %v153
  %206 = vmatprep.subr.bf16.mxu0 0
  %207 = vmatpush1.bf16.msra.mxu0 %v154
  %208 = vmatprep.subr.bf16.mxu0 0
  %209 = vmatpush1.bf16.msra.mxu0 %v155
  %210 = vmatprep.subr.bf16.mxu0 0
  %211 = vmatpush1.bf16.msra.mxu0 %v156
  %212 = vmatprep.subr.bf16.mxu0 0
  %213 = vmatpush1.bf16.msra.mxu0 %v157
  %214 = vmatprep.mubr.bf16.mxu0 %v66
  %215 = vmatmul.mubr.bf16.gmra.mrb[0].mxu0 %v65
  %v216 = vpop.f32.mrb[0].mxu0
  %v217 = vadd.f32 %v58, %v216
  %v218 = vpop.f32.mrb[0].mxu0
  %v219 = vpop.f32.mrb[0].mxu0
  %v220 = vpop.f32.mrb[0].mxu0
  %221 = vdwg.mxu0
  %222 = vmatprep.subr.bf16.mxu0 0
  %223 = vmatpush1.bf16.msra.mxu0 %v158
  %224 = vmatprep.subr.bf16.mxu0 0
  %225 = vmatpush1.bf16.msra.mxu0 %v159
  %226 = vmatprep.subr.bf16.mxu0 0
  %227 = vmatpush1.bf16.msra.mxu0 0
  %228 = vmatprep.subr.bf16.mxu0 0
  %229 = vmatpush1.bf16.msra.mxu0 0
  %230 = vmatprep.subr.bf16.mxu0 0
  %231 = vmatpush1.bf16.msra.mxu0 0
  %232 = vmatprep.subr.bf16.mxu0 0
  %233 = vmatpush1.bf16.msra.mxu0 0
  %234 = vmatprep.subr.bf16.mxu0 0
  %235 = vmatpush1.bf16.msra.mxu0 0
  %236 = vmatprep.subr.bf16.mxu0 0
  %237 = vmatpush1.bf16.msra.mxu0 0
  %238 = vmatprep.subr.bf16.mxu0 0
  %239 = vmatpush1.bf16.msra.mxu0 0
  %240 = vmatprep.subr.bf16.mxu0 0
  %241 = vmatpush1.bf16.msra.mxu0 0
  %242 = vmatprep.subr.bf16.mxu0 0
  %243 = vmatpush1.bf16.msra.mxu0 0
  %244 = vmatprep.subr.bf16.mxu0 0
  %245 = vmatpush1.bf16.msra.mxu0 0
  %246 = vmatprep.subr.bf16.mxu0 0
  %247 = vmatpush1.bf16.msra.mxu0 0
  %248 = vmatprep.subr.bf16.mxu0 0
  %249 = vmatpush1.bf16.msra.mxu0 0
  %250 = vmatprep.subr.bf16.mxu0 0
  %251 = vmatpush1.bf16.msra.mxu0 0
  %252 = vmatprep.subr.bf16.mxu0 0
  %253 = vmatpush1.bf16.msra.mxu0 0
  %254 = vmatprep.mubr.bf16.mxu0 0
  %255 = vmatmul.mubr.bf16.gmra.mrb[0].mxu0 %v180
  %v256 = vpop.f32.mrb[0].mxu0
  %v257 = vadd.f32 %v217, %v256
  %v258 = vpop.f32.mrb[0].mxu0
  %v259 = vpop.f32.mrb[0].mxu0
  %v260 = vpop.f32.mrb[0].mxu0
  %261 = vdwg.mxu0
  %v262 = vmax.f32 %v257, 0.0
  %vm263 = vcmask 31744
  %264 = vst.msk [vmem:[%s3] sm:$0xff] %vm263, %v262
  // Predicated region
  $region14: #{feedback_urdnet.68} parent=0 // pred_check
    _
  $region15: #{feedback_urdnet.68} parent=0 // pred_check_branch
    %266 = sbr.rel (0) target = $region17
  $region16: #{feedback_urdnet.68} parent=0 // pred_region
    _
  $region17: #{feedback_urdnet.68} parent=0 // pred_fallthru
    _
  // Predicated region
  $region18: #{feedback_urdnet.68} parent=0 // pred_check
    _
  $region19: #{feedback_urdnet.68} parent=0 // pred_check_branch
    %268 = sbr.rel (0) target = $region21
  $region20: #{feedback_urdnet.68} parent=0 // pred_region
    _
  $region21: #{feedback_urdnet.68} parent=0 // pred_fallthru
    _

// kernel: feedback_urdnet.69
$region0: #{feedback_urdnet.69}
  #allocation0 [shape = 'u32[]', space=smem, size = 0x4, offset = 0x4, fixed_abs, tag = 'smem constant byte address 0x4 - core index']
  #allocation1 [shape = 'u32[144,128]{1,0:T(1,128)}', space=vmem, size = 0x12000, scoped, tag = 'internal scratch']
  %s0 = inlined_call_operand.vmem [shape: bf16[8,324], index: 0, kind: input, shape index: {}]
  %s1 = inlined_call_operand.vmem [shape: bf16[324,4], index: 1, kind: input, shape index: {}]
  %s2 = inlined_call_operand.vmem [shape: f32[1,4], index: 2, kind: input, shape index: {}]
  %s3 = inlined_call_operand.vmem [shape: f32[8,4], index: 3, kind: output, shape index: {}]
  %s4 = sld [smem:[#allocation0]]
  $region22: #{feedback_urdnet.69} parent=0
    _
  %s6 = ssub.s32 1, %s4
  %s7 = scalar_select 0, %s6, %s4
  // Predicated region
  $region2: #{feedback_urdnet.69} parent=0 // pred_check
    _
  $region3: #{feedback_urdnet.69} parent=0 // pred_check_branch
    %9 = sbr.rel (0) target = $region5
  $region4: #{feedback_urdnet.69} parent=0 // pred_region
    _
  $region5: #{feedback_urdnet.69} parent=0 // pred_fallthru
    _
  // Predicated region
  $region6: #{feedback_urdnet.69} parent=0 // pred_check
    _
  $region7: #{feedback_urdnet.69} parent=0 // pred_check_branch
    %11 = sbr.rel (0) target = $region9
  $region8: #{feedback_urdnet.69} parent=0 // pred_region
    _
  $region9: #{feedback_urdnet.69} parent=0 // pred_fallthru
    _
  // Predicated region
  $region10: #{feedback_urdnet.69} parent=0 // pred_check
    _
  $region11: #{feedback_urdnet.69} parent=0 // pred_check_branch
    %13 = sbr.rel (0) target = $region13
  $region12: #{feedback_urdnet.69} parent=0 // pred_region
    _
  $region13: #{feedback_urdnet.69} parent=0 // pred_fallthru
    _
  %v15 = vld [vmem:[%s0] sm:$0xff]
  %v16 = vld [vmem:[%s0 + $0x8] sm:$0xf]
  %v17 = vld [vmem:[%s1] sm:$0xf]
  %v18 = vld [vmem:[%s1 + $0x4] sm:$0xf]
  %v19 = vld [vmem:[%s1 + $0x8] sm:$0xf]
  %v20 = vld [vmem:[%s1 + $0xc] sm:$0xf]
  %v21 = vld [vmem:[%s1 + $0x10] sm:$0xf]
  %v22 = vld [vmem:[%s1 + $0x14] sm:$0xf]
  %v23 = vld [vmem:[%s1 + $0x18] sm:$0xf]
  %v24 = vld [vmem:[%s1 + $0x1c] sm:$0xf]
  %v25 = vld [vmem:[%s1 + $0x20] sm:$0xf]
  %v26 = vld [vmem:[%s1 + $0x24] sm:$0xf]
  %v27 = vld [vmem:[%s1 + $0x28] sm:$0xf]
  %v28 = vld [vmem:[%s1 + $0x2c] sm:$0xf]
  %v29 = vld [vmem:[%s1 + $0x30] sm:$0xf]
  %v30 = vld [vmem:[%s1 + $0x34] sm:$0xf]
  %v31 = vld [vmem:[%s1 + $0x38] sm:$0xf]
  %v32 = vld [vmem:[%s1 + $0x3c] sm:$0xf]
  %v33 = vld [vmem:[%s1 + $0x40] sm:$0xf]
  %v34 = vld [vmem:[%s1 + $0x44] sm:$0xf]
  %v35 = vld [vmem:[%s1 + $0x48] sm:$0xf]
  %v36 = vld [vmem:[%s1 + $0x4c] sm:$0xf]
  %v37 = vld [vmem:[%s1 + $0x50] sm:$0xf]
  %v38 = vld [vmem:[%s1 + $0x54] sm:$0xf]
  %v39 = vld [vmem:[%s1 + $0x58] sm:$0xf]
  %v40 = vld [vmem:[%s1 + $0x5c] sm:$0xf]
  %v41 = vld [vmem:[%s1 + $0x60] sm:$0xf]
  %v42 = vld [vmem:[%s1 + $0x64] sm:$0xf]
  %v43 = vld [vmem:[%s1 + $0x68] sm:$0xf]
  %v44 = vld [vmem:[%s1 + $0x6c] sm:$0xf]
  %v45 = vld [vmem:[%s1 + $0x70] sm:$0xf]
  %v46 = vld [vmem:[%s1 + $0x74] sm:$0xf]
  %v47 = vld [vmem:[%s1 + $0x78] sm:$0xf]
  %v48 = vld [vmem:[%s1 + $0x7c] sm:$0xf]
  %v49 = vld [vmem:[%s1 + $0x80] sm:$0xf]
  %v50 = vld [vmem:[%s1 + $0x84] sm:$0xf]
  %v51 = vld [vmem:[%s1 + $0x88] sm:$0xf]
  %v52 = vld [vmem:[%s1 + $0x8c] sm:$0xf]
  %v53 = vld [vmem:[%s1 + $0x90] sm:$0xf]
  %v54 = vld [vmem:[%s1 + $0x94] sm:$0xf]
  %v55 = vld [vmem:[%s1 + $0x98] sm:$0xf]
  %v56 = vld [vmem:[%s1 + $0x9c] sm:$0xf]
  %v57 = vld [vmem:[%s1 + $0xa0] sm:$0x3]
  %v58 = vld [vmem:[%s2] sm:$0x1]
  %v60 = vlaneseq
  %v61 = vshrl.u32 %v60, 7
  %v62 = vsub.s32 0, %v61
  %v63 = vrot.slane %v58, %v62
  %v67 = vunpack.c.l.b16 %v15
  %v68 = vunpack.c.h.b16 %v15
  %v69 = vunpack.c.l.b16 %v16
  %v70 = vpack.c.b16 %v67, %v67
  %v71 = vpack.c.b16 %v68, %v68
  %v72 = vpack.c.b16 %v69, %v69
  %v116 = vunpack.c.l.b16 %v17
  %v117 = vunpack.c.l.b16 %v18
  %v118 = vunpack.c.l.b16 %v19
  %v119 = vunpack.c.l.b16 %v20
  %v120 = vunpack.c.l.b16 %v21
  %v121 = vunpack.c.l.b16 %v22
  %v122 = vunpack.c.l.b16 %v23
  %v123 = vunpack.c.l.b16 %v24
  %v124 = vunpack.c.l.b16 %v25
  %v125 = vunpack.c.l.b16 %v26
  %v126 = vunpack.c.l.b16 %v27
  %v127 = vunpack.c.l.b16 %v28
  %v128 = vunpack.c.l.b16 %v29
  %v129 = vunpack.c.l.b16 %v30
  %v130 = vunpack.c.l.b16 %v31
  %v131 = vunpack.c.l.b16 %v32
  %v132 = vunpack.c.l.b16 %v33
  %v133 = vunpack.c.l.b16 %v34
  %v134 = vunpack.c.l.b16 %v35
  %v135 = vunpack.c.l.b16 %v36
  %v136 = vunpack.c.l.b16 %v37
  %v137 = vunpack.c.l.b16 %v38
  %v138 = vunpack.c.l.b16 %v39
  %v139 = vunpack.c.l.b16 %v40
  %v140 = vunpack.c.l.b16 %v41
  %v141 = vunpack.c.l.b16 %v42
  %v142 = vunpack.c.l.b16 %v43
  %v143 = vunpack.c.l.b16 %v44
  %v144 = vunpack.c.l.b16 %v45
  %v145 = vunpack.c.l.b16 %v46
  %v146 = vunpack.c.l.b16 %v47
  %v147 = vunpack.c.l.b16 %v48
  %v148 = vunpack.c.l.b16 %v49
  %v149 = vunpack.c.l.b16 %v50
  %v150 = vunpack.c.l.b16 %v51
  %v151 = vunpack.c.l.b16 %v52
  %v152 = vunpack.c.l.b16 %v53
  %v153 = vunpack.c.l.b16 %v54
  %v154 = vunpack.c.l.b16 %v55
  %v155 = vunpack.c.l.b16 %v56
  %v156 = vunpack.c.l.b16 %v57
  %v157 = vpack.c.b16 %v117, %v116
  %v158 = vpack.c.b16 %v119, %v118
  %v159 = vpack.c.b16 %v121, %v120
  %v160 = vpack.c.b16 %v123, %v122
  %v161 = vpack.c.b16 %v125, %v124
  %v162 = vpack.c.b16 %v127, %v126
  %v163 = vpack.c.b16 %v129, %v128
  %v164 = vpack.c.b16 %v131, %v130
  %v165 = vpack.c.b16 %v133, %v132
  %v166 = vpack.c.b16 %v135, %v134
  %v167 = vpack.c.b16 %v137, %v136
  %v168 = vpack.c.b16 %v139, %v138
  %v169 = vpack.c.b16 %v141, %v140
  %v170 = vpack.c.b16 %v143, %v142
  %v171 = vpack.c.b16 %v145, %v144
  %v172 = vpack.c.b16 %v147, %v146
  %v173 = vpack.c.b16 %v149, %v148
  %v174 = vpack.c.b16 %v151, %v150
  %v175 = vpack.c.b16 %v153, %v152
  %v176 = vpack.c.b16 %v155, %v154
  %v177 = vpack.c.b16 %v156, %v156
  %vm198 = vcmask 556032
  %v200 = vsel %vm198, %v72, 0
  %vm202 = vcmask 1041408
  %v204 = vsel %vm202, %v177, 0
  %206 = vmatprep.subr.bf16.mxu0 0
  %207 = vmatpush1.bf16.msra.mxu0 %v157
  %208 = vmatprep.subr.bf16.mxu0 0
  %209 = vmatpush1.bf16.msra.mxu0 %v158
  %210 = vmatprep.subr.bf16.mxu0 0
  %211 = vmatpush1.bf16.msra.mxu0 %v159
  %212 = vmatprep.subr.bf16.mxu0 0
  %213 = vmatpush1.bf16.msra.mxu0 %v160
  %214 = vmatprep.subr.bf16.mxu0 0
  %215 = vmatpush1.bf16.msra.mxu0 %v161
  %216 = vmatprep.subr.bf16.mxu0 0
  %217 = vmatpush1.bf16.msra.mxu0 %v162
  %218 = vmatprep.subr.bf16.mxu0 0
  %219 = vmatpush1.bf16.msra.mxu0 %v163
  %220 = vmatprep.subr.bf16.mxu0 0
  %221 = vmatpush1.bf16.msra.mxu0 %v164
  %222 = vmatprep.subr.bf16.mxu0 0
  %223 = vmatpush1.bf16.msra.mxu0 %v165
  %224 = vmatprep.subr.bf16.mxu0 0
  %225 = vmatpush1.bf16.msra.mxu0 %v166
  %226 = vmatprep.subr.bf16.mxu0 0
  %227 = vmatpush1.bf16.msra.mxu0 %v167
  %228 = vmatprep.subr.bf16.mxu0 0
  %229 = vmatpush1.bf16.msra.mxu0 %v168
  %230 = vmatprep.subr.bf16.mxu0 0
  %231 = vmatpush1.bf16.msra.mxu0 %v169
  %232 = vmatprep.subr.bf16.mxu0 0
  %233 = vmatpush1.bf16.msra.mxu0 %v170
  %234 = vmatprep.subr.bf16.mxu0 0
  %235 = vmatpush1.bf16.msra.mxu0 %v171
  %236 = vmatprep.subr.bf16.mxu0 0
  %237 = vmatpush1.bf16.msra.mxu0 %v172
  %238 = vmatprep.mubr.bf16.mxu0 %v71
  %239 = vmatmul.mubr.bf16.gmra.mrb[0].mxu0 %v70
  %v240 = vpop.f32.mrb[0].mxu0
  %v241 = vadd.f32 %v63, %v240
  %v242 = vpop.f32.mrb[0].mxu0
  %v243 = vpop.f32.mrb[0].mxu0
  %v244 = vpop.f32.mrb[0].mxu0
  %245 = vdwg.mxu0
  %246 = vmatprep.subr.bf16.mxu0 0
  %247 = vmatpush1.bf16.msra.mxu0 %v173
  %248 = vmatprep.subr.bf16.mxu0 0
  %249 = vmatpush1.bf16.msra.mxu0 %v174
  %250 = vmatprep.subr.bf16.mxu0 0
  %251 = vmatpush1.bf16.msra.mxu0 %v175
  %252 = vmatprep.subr.bf16.mxu0 0
  %253 = vmatpush1.bf16.msra.mxu0 %v176
  %254 = vmatprep.subr.bf16.mxu0 0
  %255 = vmatpush1.bf16.msra.mxu0 %v204
  %256 = vmatprep.subr.bf16.mxu0 0
  %257 = vmatpush1.bf16.msra.mxu0 0
  %258 = vmatprep.subr.bf16.mxu0 0
  %259 = vmatpush1.bf16.msra.mxu0 0
  %260 = vmatprep.subr.bf16.mxu0 0
  %261 = vmatpush1.bf16.msra.mxu0 0
  %262 = vmatprep.subr.bf16.mxu0 0
  %263 = vmatpush1.bf16.msra.mxu0 0
  %264 = vmatprep.subr.bf16.mxu0 0
  %265 = vmatpush1.bf16.msra.mxu0 0
  %266 = vmatprep.subr.bf16.mxu0 0
  %267 = vmatpush1.bf16.msra.mxu0 0
  %268 = vmatprep.subr.bf16.mxu0 0
  %269 = vmatpush1.bf16.msra.mxu0 0
  %270 = vmatprep.subr.bf16.mxu0 0
  %271 = vmatpush1.bf16.msra.mxu0 0
  %272 = vmatprep.subr.bf16.mxu0 0
  %273 = vmatpush1.bf16.msra.mxu0 0
  %274 = vmatprep.subr.bf16.mxu0 0
  %275 = vmatpush1.bf16.msra.mxu0 0
  %276 = vmatprep.subr.bf16.mxu0 0
  %277 = vmatpush1.bf16.msra.mxu0 0
  %278 = vmatprep.mubr.bf16.mxu0 0
  %279 = vmatmul.mubr.bf16.gmra.mrb[0].mxu0 %v200
  %v280 = vpop.f32.mrb[0].mxu0
  %v281 = vadd.f32 %v241, %v280
  %v282 = vpop.f32.mrb[0].mxu0
  %v283 = vpop.f32.mrb[0].mxu0
  %v284 = vpop.f32.mrb[0].mxu0
  %285 = vdwg.mxu0
  %v286 = vmax.f32 %v281, 0.0
  %vm287 = vcmask 31744
  %288 = vst.msk [vmem:[%s3] sm:$0xff] %vm287, %v286
  // Predicated region
  $region14: #{feedback_urdnet.69} parent=0 // pred_check
    _
  $region15: #{feedback_urdnet.69} parent=0 // pred_check_branch
    %290 = sbr.rel (0) target = $region17
  $region16: #{feedback_urdnet.69} parent=0 // pred_region
    _
  $region17: #{feedback_urdnet.69} parent=0 // pred_fallthru
    _
  // Predicated region
  $region18: #{feedback_urdnet.69} parent=0 // pred_check
    _
  $region19: #{feedback_urdnet.69} parent=0 // pred_check_branch
    %292 = sbr.rel (0) target = $region21
  $region20: #{feedback_urdnet.69} parent=0 // pred_region
    _
  $region21: #{feedback_urdnet.69} parent=0 // pred_fallthru
    _

// kernel: feedback_urdnet.70
$region0: #{feedback_urdnet.70}
  #allocation0 [shape = 'u32[]', space=smem, size = 0x4, offset = 0x4, fixed_abs, tag = 'smem constant byte address 0x4 - core index']
  #allocation1 [shape = 'u32[144,128]{1,0:T(1,128)}', space=vmem, size = 0x12000, scoped, tag = 'internal scratch']
  %s0 = inlined_call_operand.vmem [shape: bf16[8,40], index: 0, kind: input, shape index: {}]
  %s1 = inlined_call_operand.vmem [shape: bf16[40,32], index: 1, kind: input, shape index: {}]
  %s2 = inlined_call_operand.vmem [shape: f32[1,32], index: 2, kind: input, shape index: {}]
  %s3 = inlined_call_operand.vmem [shape: f32[8,32], index: 3, kind: output, shape index: {}]
  %s4 = sld [smem:[#allocation0]]
  $region22: #{feedback_urdnet.70} parent=0
    _
  %s6 = ssub.s32 1, %s4
  %s7 = scalar_select 0, %s6, %s4
  // Predicated region
  $region2: #{feedback_urdnet.70} parent=0 // pred_check
    _
  $region3: #{feedback_urdnet.70} parent=0 // pred_check_branch
    %9 = sbr.rel (0) target = $region5
  $region4: #{feedback_urdnet.70} parent=0 // pred_region
    _
  $region5: #{feedback_urdnet.70} parent=0 // pred_fallthru
    _
  // Predicated region
  $region6: #{feedback_urdnet.70} parent=0 // pred_check
    _
  $region7: #{feedback_urdnet.70} parent=0 // pred_check_branch
    %11 = sbr.rel (0) target = $region9
  $region8: #{feedback_urdnet.70} parent=0 // pred_region
    _
  $region9: #{feedback_urdnet.70} parent=0 // pred_fallthru
    _
  // Predicated region
  $region10: #{feedback_urdnet.70} parent=0 // pred_check
    _
  $region11: #{feedback_urdnet.70} parent=0 // pred_check_branch
    %13 = sbr.rel (0) target = $region13
  $region12: #{feedback_urdnet.70} parent=0 // pred_region
    _
  $region13: #{feedback_urdnet.70} parent=0 // pred_fallthru
    _
  %v15 = vld [vmem:[%s0] sm:$0xf]
  %v16 = vld [vmem:[%s1] sm:$0xf]
  %v17 = vld [vmem:[%s1 + $0x4] sm:$0xf]
  %v18 = vld [vmem:[%s1 + $0x8] sm:$0xf]
  %v19 = vld [vmem:[%s1 + $0xc] sm:$0xf]
  %v20 = vld [vmem:[%s1 + $0x10] sm:$0xf]
  %v21 = vld [vmem:[%s2] sm:$0x1]
  %v23 = vlaneseq
  %v24 = vshrl.u32 %v23, 7
  %v25 = vsub.s32 0, %v24
  %v26 = vrot.slane %v21, %v25
  %v33 = vunpack.c.l.b16 %v16
  %v34 = vunpack.c.l.b16 %v17
  %v35 = vunpack.c.l.b16 %v18
  %v36 = vunpack.c.l.b16 %v19
  %v37 = vunpack.c.l.b16 %v20
  %v38 = vpack.c.b16 %v34, %v33
  %v39 = vpack.c.b16 %v36, %v35
  %v40 = vpack.c.b16 %v37, %v37
  %vm43 = vcmask 326656
  %v45 = vsel %vm43, %v15, 0
  %vm47 = vcmask 1043456
  %v49 = vsel %vm47, %v40, 0
  %51 = vmatprep.subr.bf16.mxu0 0
  %52 = vmatpush1.bf16.msra.mxu0 %v38
  %53 = vmatprep.subr.bf16.mxu0 0
  %54 = vmatpush1.bf16.msra.mxu0 %v39
  %55 = vmatprep.subr.bf16.mxu0 0
  %56 = vmatpush1.bf16.msra.mxu0 %v49
  %57 = vmatprep.subr.bf16.mxu0 0
  %58 = vmatpush1.bf16.msra.mxu0 0
  %59 = vmatprep.subr.bf16.mxu0 0
  %60 = vmatpush1.bf16.msra.mxu0 0
  %61 = vmatprep.subr.bf16.mxu0 0
  %62 = vmatpush1.bf16.msra.mxu0 0
  %63 = vmatprep.subr.bf16.mxu0 0
  %64 = vmatpush1.bf16.msra.mxu0 0
  %65 = vmatprep.subr.bf16.mxu0 0
  %66 = vmatpush1.bf16.msra.mxu0 0
  %67 = vmatprep.subr.bf16.mxu0 0
  %68 = vmatpush1.bf16.msra.mxu0 0
  %69 = vmatprep.subr.bf16.mxu0 0
  %70 = vmatpush1.bf16.msra.mxu0 0
  %71 = vmatprep.subr.bf16.mxu0 0
  %72 = vmatpush1.bf16.msra.mxu0 0
  %73 = vmatprep.subr.bf16.mxu0 0
  %74 = vmatpush1.bf16.msra.mxu0 0
  %75 = vmatprep.subr.bf16.mxu0 0
  %76 = vmatpush1.bf16.msra.mxu0 0
  %77 = vmatprep.subr.bf16.mxu0 0
  %78 = vmatpush1.bf16.msra.mxu0 0
  %79 = vmatprep.subr.bf16.mxu0 0
  %80 = vmatpush1.bf16.msra.mxu0 0
  %81 = vmatprep.subr.bf16.mxu0 0
  %82 = vmatpush1.bf16.msra.mxu0 0
  %83 = vmatprep.mubr.bf16.mxu0 0
  %84 = vmatmul.mubr.bf16.gmra.mrb[0].mxu0 %v45
  %v85 = vpop.f32.mrb[0].mxu0
  %v86 = vadd.f32 %v26, %v85
  %v87 = vpop.f32.mrb[0].mxu0
  %v88 = vpop.f32.mrb[0].mxu0
  %v89 = vpop.f32.mrb[0].mxu0
  %90 = vdwg.mxu0
  %vm91 = vcmask 261120
  %92 = vst.msk [vmem:[%s3] sm:$0xff] %vm91, %v86
  // Predicated region
  $region14: #{feedback_urdnet.70} parent=0 // pred_check
    _
  $region15: #{feedback_urdnet.70} parent=0 // pred_check_branch
    %94 = sbr.rel (0) target = $region17
  $region16: #{feedback_urdnet.70} parent=0 // pred_region
    _
  $region17: #{feedback_urdnet.70} parent=0 // pred_fallthru
    _
  // Predicated region
  $region18: #{feedback_urdnet.70} parent=0 // pred_check
    _
  $region19: #{feedback_urdnet.70} parent=0 // pred_check_branch
    %96 = sbr.rel (0) target = $region21
  $region20: #{feedback_urdnet.70} parent=0 // pred_region
    _
  $region21: #{feedback_urdnet.70} parent=0 // pred_fallthru
    _

// kernel: feedback_urdnet.71
$region0: #{feedback_urdnet.71}
  #allocation0 [shape = 'u32[]', space=smem, size = 0x4, offset = 0x4, fixed_abs, tag = 'smem constant byte address 0x4 - core index']
  #allocation1 [shape = 'u32[144,128]{1,0:T(1,128)}', space=vmem, size = 0x12000, scoped, tag = 'internal scratch']
  %s0 = inlined_call_operand.vmem [shape: bf16[8,32], index: 0, kind: input, shape index: {}]
  %s1 = inlined_call_operand.vmem [shape: bf16[32,64], index: 1, kind: input, shape index: {}]
  %s2 = inlined_call_operand.vmem [shape: f32[1,64], index: 2, kind: input, shape index: {}]
  %s3 = inlined_call_operand.vmem [shape: f32[8,64], index: 3, kind: output, shape index: {}]
  %s4 = sld [smem:[#allocation0]]
  $region22: #{feedback_urdnet.71} parent=0
    _
  %s6 = ssub.s32 1, %s4
  %s7 = scalar_select 0, %s6, %s4
  // Predicated region
  $region2: #{feedback_urdnet.71} parent=0 // pred_check
    _
  $region3: #{feedback_urdnet.71} parent=0 // pred_check_branch
    %9 = sbr.rel (0) target = $region5
  $region4: #{feedback_urdnet.71} parent=0 // pred_region
    _
  $region5: #{feedback_urdnet.71} parent=0 // pred_fallthru
    _
  // Predicated region
  $region6: #{feedback_urdnet.71} parent=0 // pred_check
    _
  $region7: #{feedback_urdnet.71} parent=0 // pred_check_branch
    %11 = sbr.rel (0) target = $region9
  $region8: #{feedback_urdnet.71} parent=0 // pred_region
    _
  $region9: #{feedback_urdnet.71} parent=0 // pred_fallthru
    _
  // Predicated region
  $region10: #{feedback_urdnet.71} parent=0 // pred_check
    _
  $region11: #{feedback_urdnet.71} parent=0 // pred_check_branch
    %13 = sbr.rel (0) target = $region13
  $region12: #{feedback_urdnet.71} parent=0 // pred_region
    _
  $region13: #{feedback_urdnet.71} parent=0 // pred_fallthru
    _
  %v15 = vld [vmem:[%s0] sm:$0xf]
  %v16 = vld [vmem:[%s1] sm:$0xf]
  %v17 = vld [vmem:[%s1 + $0x4] sm:$0xf]
  %v18 = vld [vmem:[%s1 + $0x8] sm:$0xf]
  %v19 = vld [vmem:[%s1 + $0xc] sm:$0xf]
  %v20 = vld [vmem:[%s2] sm:$0x1]
  %v22 = vlaneseq
  %v23 = vshrl.u32 %v22, 7
  %v24 = vsub.s32 0, %v23
  %v25 = vrot.slane %v20, %v24
  %v31 = vunpack.c.l.b16 %v16
  %v32 = vunpack.c.l.b16 %v17
  %v33 = vunpack.c.l.b16 %v18
  %v34 = vunpack.c.l.b16 %v19
  %v35 = vpack.c.b16 %v32, %v31
  %v36 = vpack.c.b16 %v34, %v33
  %vm39 = vcmask 261120
  %v41 = vsel %vm39, %v15, 0
  %43 = vmatprep.subr.bf16.mxu0 0
  %44 = vmatpush1.bf16.msra.mxu0 %v35
  %45 = vmatprep.subr.bf16.mxu0 0
  %46 = vmatpush1.bf16.msra.mxu0 %v36
  %47 = vmatprep.subr.bf16.mxu0 0
  %48 = vmatpush1.bf16.msra.mxu0 0
  %49 = vmatprep.subr.bf16.mxu0 0
  %50 = vmatpush1.bf16.msra.mxu0 0
  %51 = vmatprep.subr.bf16.mxu0 0
  %52 = vmatpush1.bf16.msra.mxu0 0
  %53 = vmatprep.subr.bf16.mxu0 0
  %54 = vmatpush1.bf16.msra.mxu0 0
  %55 = vmatprep.subr.bf16.mxu0 0
  %56 = vmatpush1.bf16.msra.mxu0 0
  %57 = vmatprep.subr.bf16.mxu0 0
  %58 = vmatpush1.bf16.msra.mxu0 0
  %59 = vmatprep.subr.bf16.mxu0 0
  %60 = vmatpush1.bf16.msra.mxu0 0
  %61 = vmatprep.subr.bf16.mxu0 0
  %62 = vmatpush1.bf16.msra.mxu0 0
  %63 = vmatprep.subr.bf16.mxu0 0
  %64 = vmatpush1.bf16.msra.mxu0 0
  %65 = vmatprep.subr.bf16.mxu0 0
  %66 = vmatpush1.bf16.msra.mxu0 0
  %67 = vmatprep.subr.bf16.mxu0 0
  %68 = vmatpush1.bf16.msra.mxu0 0
  %69 = vmatprep.subr.bf16.mxu0 0
  %70 = vmatpush1.bf16.msra.mxu0 0
  %71 = vmatprep.subr.bf16.mxu0 0
  %72 = vmatpush1.bf16.msra.mxu0 0
  %73 = vmatprep.subr.bf16.mxu0 0
  %74 = vmatpush1.bf16.msra.mxu0 0
  %75 = vmatprep.mubr.bf16.mxu0 0
  %76 = vmatmul.mubr.bf16.gmra.mrb[0].mxu0 %v41
  %v77 = vpop.f32.mrb[0].mxu0
  %v78 = vadd.f32 %v25, %v77
  %v79 = vpop.f32.mrb[0].mxu0
  %v80 = vpop.f32.mrb[0].mxu0
  %v81 = vpop.f32.mrb[0].mxu0
  %82 = vdwg.mxu0
  %vm83 = vcmask 523264
  %84 = vst.msk [vmem:[%s3] sm:$0xff] %vm83, %v78
  // Predicated region
  $region14: #{feedback_urdnet.71} parent=0 // pred_check
    _
  $region15: #{feedback_urdnet.71} parent=0 // pred_check_branch
    %86 = sbr.rel (0) target = $region17
  $region16: #{feedback_urdnet.71} parent=0 // pred_region
    _
  $region17: #{feedback_urdnet.71} parent=0 // pred_fallthru
    _
  // Predicated region
  $region18: #{feedback_urdnet.71} parent=0 // pred_check
    _
  $region19: #{feedback_urdnet.71} parent=0 // pred_check_branch
    %88 = sbr.rel (0) target = $region21
  $region20: #{feedback_urdnet.71} parent=0 // pred_region
    _
  $region21: #{feedback_urdnet.71} parent=0 // pred_fallthru
    _

// kernel: feedback_urdnet.75
$region0: #{feedback_urdnet.75}
  #allocation0 [shape = 'u32[]', space=smem, size = 0x4, offset = 0x4, fixed_abs, tag = 'smem constant byte address 0x4 - core index']
  #allocation1 [shape = 'u32[144,128]{1,0:T(1,128)}', space=vmem, size = 0x12000, scoped, tag = 'internal scratch']
  %s0 = inlined_call_operand.vmem [shape: bf16[32,16], index: 0, kind: input, shape index: {}]
  %s1 = inlined_call_operand.vmem [shape: bf16[16,32], index: 1, kind: input, shape index: {}]
  %s2 = inlined_call_operand.vmem [shape: f32[1,32], index: 2, kind: input, shape index: {}]
  %s3 = inlined_call_operand.vmem [shape: f32[32,32], index: 3, kind: output, shape index: {}]
  %s4 = sld [smem:[#allocation0]]
  $region22: #{feedback_urdnet.75} parent=0
    _
  %s6 = ssub.s32 1, %s4
  %s7 = scalar_select 0, %s6, %s4
  // Predicated region
  $region2: #{feedback_urdnet.75} parent=0 // pred_check
    _
  $region3: #{feedback_urdnet.75} parent=0 // pred_check_branch
    %9 = sbr.rel (0) target = $region5
  $region4: #{feedback_urdnet.75} parent=0 // pred_region
    _
  $region5: #{feedback_urdnet.75} parent=0 // pred_fallthru
    _
  // Predicated region
  $region6: #{feedback_urdnet.75} parent=0 // pred_check
    _
  $region7: #{feedback_urdnet.75} parent=0 // pred_check_branch
    %11 = sbr.rel (0) target = $region9
  $region8: #{feedback_urdnet.75} parent=0 // pred_region
    _
  $region9: #{feedback_urdnet.75} parent=0 // pred_fallthru
    _
  // Predicated region
  $region10: #{feedback_urdnet.75} parent=0 // pred_check
    _
  $region11: #{feedback_urdnet.75} parent=0 // pred_check_branch
    %13 = sbr.rel (0) target = $region13
  $region12: #{feedback_urdnet.75} parent=0 // pred_region
    _
  $region13: #{feedback_urdnet.75} parent=0 // pred_fallthru
    _
  %v15 = vld [vmem:[%s0] sm:$0xf]
  %v16 = vld [vmem:[%s0 + $0x4] sm:$0xf]
  %v17 = vld [vmem:[%s0 + $0x8] sm:$0xf]
  %v18 = vld [vmem:[%s0 + $0xc] sm:$0xf]
  %v19 = vld [vmem:[%s1] sm:$0xf]
  %v20 = vld [vmem:[%s1 + $0x4] sm:$0xf]
  %v21 = vld [vmem:[%s2] sm:$0x1]
  %v23 = vlaneseq
  %v24 = vshrl.u32 %v23, 7
  %v25 = vsub.s32 0, %v24
  %v26 = vrot.slane %v21, %v25
  %v32 = vunpack.c.l.b16 %v15
  %v33 = vunpack.c.l.b16 %v16
  %v34 = vunpack.c.l.b16 %v17
  %v35 = vunpack.c.l.b16 %v18
  %v36 = vpack.c.b16 %v33, %v32
  %v37 = vpack.c.b16 %v35, %v34
  %v40 = vunpack.c.l.b16 %v19
  %v41 = vunpack.c.l.b16 %v20
  %v42 = vpack.c.b16 %v41, %v40
  %vm44 = vcmask 130048
  %v46 = vsel %vm44, %v36, 0
  %v49 = vsel %vm44, %v37, 0
  %51 = vmatprep.subr.bf16.mxu0 0
  %52 = vmatpush1.bf16.msra.mxu0 %v42
  %53 = vmatprep.subr.bf16.mxu0 0
  %54 = vmatpush1.bf16.msra.mxu0 0
  %55 = vmatprep.subr.bf16.mxu0 0
  %56 = vmatpush1.bf16.msra.mxu0 0
  %57 = vmatprep.subr.bf16.mxu0 0
  %58 = vmatpush1.bf16.msra.mxu0 0
  %59 = vmatprep.subr.bf16.mxu0 0
  %60 = vmatpush1.bf16.msra.mxu0 0
  %61 = vmatprep.subr.bf16.mxu0 0
  %62 = vmatpush1.bf16.msra.mxu0 0
  %63 = vmatprep.subr.bf16.mxu0 0
  %64 = vmatpush1.bf16.msra.mxu0 0
  %65 = vmatprep.subr.bf16.mxu0 0
  %66 = vmatpush1.bf16.msra.mxu0 0
  %67 = vmatprep.subr.bf16.mxu0 0
  %68 = vmatpush1.bf16.msra.mxu0 0
  %69 = vmatprep.subr.bf16.mxu0 0
  %70 = vmatpush1.bf16.msra.mxu0 0
  %71 = vmatprep.subr.bf16.mxu0 0
  %72 = vmatpush1.bf16.msra.mxu0 0
  %73 = vmatprep.subr.bf16.mxu0 0
  %74 = vmatpush1.bf16.msra.mxu0 0
  %75 = vmatprep.subr.bf16.mxu0 0
  %76 = vmatpush1.bf16.msra.mxu0 0
  %77 = vmatprep.subr.bf16.mxu0 0
  %78 = vmatpush1.bf16.msra.mxu0 0
  %79 = vmatprep.subr.bf16.mxu0 0
  %80 = vmatpush1.bf16.msra.mxu0 0
  %81 = vmatprep.subr.bf16.mxu0 0
  %82 = vmatpush1.bf16.msra.mxu0 0
  %83 = vmatprep.mubr.bf16.mxu0 0
  %84 = vmatmul.mubr.bf16.gmra.mrb[0].mxu0 %v46
  %v85 = vpop.f32.mrb[0].mxu0
  %v86 = vadd.f32 %v26, %v85
  %v87 = vpop.f32.mrb[0].mxu0
  %v88 = vpop.f32.mrb[0].mxu0
  %v89 = vadd.f32 %v26, %v88
  %v90 = vpop.f32.mrb[0].mxu0
  %91 = vmatprep.mubr.bf16.mxu0 0
  %92 = vmatmul.mubr.bf16.gmra.mrb[0].mxu0 %v49
  %v93 = vpop.f32.mrb[0].mxu0
  %v94 = vadd.f32 %v26, %v93
  %v95 = vpop.f32.mrb[0].mxu0
  %v96 = vpop.f32.mrb[0].mxu0
  %v97 = vadd.f32 %v26, %v96
  %v98 = vpop.f32.mrb[0].mxu0
  %99 = vdwg.mxu0
  %vm100 = vcmask 261120
  %101 = vst.msk [vmem:[%s3] sm:$0xff] %vm100, %v86
  %102 = vst.msk [vmem:[%s3 + $0x8] sm:$0xff] %vm100, %v89
  %103 = vst.msk [vmem:[%s3 + $0x10] sm:$0xff] %vm100, %v94
  %104 = vst.msk [vmem:[%s3 + $0x18] sm:$0xff] %vm100, %v97
  // Predicated region
  $region14: #{feedback_urdnet.75} parent=0 // pred_check
    _
  $region15: #{feedback_urdnet.75} parent=0 // pred_check_branch
    %106 = sbr.rel (0) target = $region17
  $region16: #{feedback_urdnet.75} parent=0 // pred_region
    _
  $region17: #{feedback_urdnet.75} parent=0 // pred_fallthru
    _
  // Predicated region
  $region18: #{feedback_urdnet.75} parent=0 // pred_check
    _
  $region19: #{feedback_urdnet.75} parent=0 // pred_check_branch
    %108 = sbr.rel (0) target = $region21
  $region20: #{feedback_urdnet.75} parent=0 // pred_region
    _
  $region21: #{feedback_urdnet.75} parent=0 // pred_fallthru
    _

// kernel: feedback_urdnet.79
$region0: #{feedback_urdnet.79}
  #allocation0 [shape = 'u32[]', space=smem, size = 0x4, offset = 0x4, fixed_abs, tag = 'smem constant byte address 0x4 - core index']
  #allocation1 [shape = 'u32[144,128]{1,0:T(1,128)}', space=vmem, size = 0x12000, scoped, tag = 'internal scratch']
  %s0 = inlined_call_operand.vmem [shape: bf16[128,8], index: 0, kind: input, shape index: {}]
  %s1 = inlined_call_operand.vmem [shape: bf16[8,8], index: 1, kind: input, shape index: {}]
  %s2 = inlined_call_operand.vmem [shape: f32[1,8], index: 2, kind: input, shape index: {}]
  %s3 = inlined_call_operand.vmem [shape: f32[128,8], index: 3, kind: output, shape index: {}]
  %s4 = sld [smem:[#allocation0]]
  $region22: #{feedback_urdnet.79} parent=0
    _
  %s6 = ssub.s32 1, %s4
  %s7 = scalar_select 0, %s6, %s4
  // Predicated region
  $region2: #{feedback_urdnet.79} parent=0 // pred_check
    _
  $region3: #{feedback_urdnet.79} parent=0 // pred_check_branch
    %9 = sbr.rel (0) target = $region5
  $region4: #{feedback_urdnet.79} parent=0 // pred_region
    _
  $region5: #{feedback_urdnet.79} parent=0 // pred_fallthru
    _
  // Predicated region
  $region6: #{feedback_urdnet.79} parent=0 // pred_check
    _
  $region7: #{feedback_urdnet.79} parent=0 // pred_check_branch
    %11 = sbr.rel (0) target = $region9
  $region8: #{feedback_urdnet.79} parent=0 // pred_region
    _
  $region9: #{feedback_urdnet.79} parent=0 // pred_fallthru
    _
  // Predicated region
  $region10: #{feedback_urdnet.79} parent=0 // pred_check
    _
  $region11: #{feedback_urdnet.79} parent=0 // pred_check_branch
    %13 = sbr.rel (0) target = $region13
  $region12: #{feedback_urdnet.79} parent=0 // pred_region
    _
  $region13: #{feedback_urdnet.79} parent=0 // pred_fallthru
    _
  %v15 = vld [vmem:[%s0] sm:$0xf]
  %v16 = vld [vmem:[%s0 + $0x4] sm:$0xf]
  %v17 = vld [vmem:[%s0 + $0x8] sm:$0xf]
  %v18 = vld [vmem:[%s0 + $0xc] sm:$0xf]
  %v19 = vld [vmem:[%s0 + $0x10] sm:$0xf]
  %v20 = vld [vmem:[%s0 + $0x14] sm:$0xf]
  %v21 = vld [vmem:[%s0 + $0x18] sm:$0xf]
  %v22 = vld [vmem:[%s0 + $0x1c] sm:$0xf]
  %v23 = vld [vmem:[%s0 + $0x20] sm:$0xf]
  %v24 = vld [vmem:[%s0 + $0x24] sm:$0xf]
  %v25 = vld [vmem:[%s0 + $0x28] sm:$0xf]
  %v26 = vld [vmem:[%s0 + $0x2c] sm:$0xf]
  %v27 = vld [vmem:[%s0 + $0x30] sm:$0xf]
  %v28 = vld [vmem:[%s0 + $0x34] sm:$0xf]
  %v29 = vld [vmem:[%s0 + $0x38] sm:$0xf]
  %v30 = vld [vmem:[%s0 + $0x3c] sm:$0xf]
  %v31 = vld [vmem:[%s1] sm:$0xf]
  %v32 = vld [vmem:[%s2] sm:$0x1]
  %v34 = vlaneseq
  %v35 = vshrl.u32 %v34, 7
  %v36 = vsub.s32 0, %v35
  %v37 = vrot.slane %v32, %v36
  %v55 = vunpack.c.l.b16 %v15
  %v56 = vunpack.c.l.b16 %v16
  %v57 = vunpack.c.l.b16 %v17
  %v58 = vunpack.c.l.b16 %v18
  %v59 = vunpack.c.l.b16 %v19
  %v60 = vunpack.c.l.b16 %v20
  %v61 = vunpack.c.l.b16 %v21
  %v62 = vunpack.c.l.b16 %v22
  %v63 = vunpack.c.l.b16 %v23
  %v64 = vunpack.c.l.b16 %v24
  %v65 = vunpack.c.l.b16 %v25
  %v66 = vunpack.c.l.b16 %v26
  %v67 = vunpack.c.l.b16 %v27
  %v68 = vunpack.c.l.b16 %v28
  %v69 = vunpack.c.l.b16 %v29
  %v70 = vunpack.c.l.b16 %v30
  %v71 = vpack.c.b16 %v56, %v55
  %v72 = vpack.c.b16 %v58, %v57
  %v73 = vpack.c.b16 %v60, %v59
  %v74 = vpack.c.b16 %v62, %v61
  %v75 = vpack.c.b16 %v64, %v63
  %v76 = vpack.c.b16 %v66, %v65
  %v77 = vpack.c.b16 %v68, %v67
  %v78 = vpack.c.b16 %v70, %v69
  %vm79 = vcmask 64512
  %v81 = vsel %vm79, %v71, 0
  %v84 = vsel %vm79, %v72, 0
  %v87 = vsel %vm79, %v73, 0
  %v90 = vsel %vm79, %v74, 0
  %v93 = vsel %vm79, %v75, 0
  %v96 = vsel %vm79, %v76, 0
  %v99 = vsel %vm79, %v77, 0
  %v102 = vsel %vm79, %v78, 0
  %vm104 = vcmask 1043456
  %v106 = vsel %vm104, %v31, 0
  %108 = vmatprep.subr.bf16.mxu0 0
  %109 = vmatpush1.bf16.msra.mxu0 %v106
  %110 = vmatprep.subr.bf16.mxu0 0
  %111 = vmatpush1.bf16.msra.mxu0 0
  %112 = vmatprep.subr.bf16.mxu0 0
  %113 = vmatpush1.bf16.msra.mxu0 0
  %114 = vmatprep.subr.bf16.mxu0 0
  %115 = vmatpush1.bf16.msra.mxu0 0
  %116 = vmatprep.subr.bf16.mxu0 0
  %117 = vmatpush1.bf16.msra.mxu0 0
  %118 = vmatprep.subr.bf16.mxu0 0
  %119 = vmatpush1.bf16.msra.mxu0 0
  %120 = vmatprep.subr.bf16.mxu0 0
  %121 = vmatpush1.bf16.msra.mxu0 0
  %122 = vmatprep.subr.bf16.mxu0 0
  %123 = vmatpush1.bf16.msra.mxu0 0
  %124 = vmatprep.subr.bf16.mxu0 0
  %125 = vmatpush1.bf16.msra.mxu0 0
  %126 = vmatprep.subr.bf16.mxu0 0
  %127 = vmatpush1.bf16.msra.mxu0 0
  %128 = vmatprep.subr.bf16.mxu0 0
  %129 = vmatpush1.bf16.msra.mxu0 0
  %130 = vmatprep.subr.bf16.mxu0 0
  %131 = vmatpush1.bf16.msra.mxu0 0
  %132 = vmatprep.subr.bf16.mxu0 0
  %133 = vmatpush1.bf16.msra.mxu0 0
  %134 = vmatprep.subr.bf16.mxu0 0
  %135 = vmatpush1.bf16.msra.mxu0 0
  %136 = vmatprep.subr.bf16.mxu0 0
  %137 = vmatpush1.bf16.msra.mxu0 0
  %138 = vmatprep.subr.bf16.mxu0 0
  %139 = vmatpush1.bf16.msra.mxu0 0
  %140 = vmatprep.mubr.bf16.mxu0 0
  %141 = vmatmul.mubr.bf16.gmra.mrb[0].mxu0 %v81
  %v142 = vpop.f32.mrb[0].mxu0
  %v143 = vadd.f32 %v37, %v142
  %v144 = vpop.f32.mrb[0].mxu0
  %v145 = vpop.f32.mrb[0].mxu0
  %v146 = vadd.f32 %v37, %v145
  %v147 = vpop.f32.mrb[0].mxu0
  %148 = vmatprep.mubr.bf16.mxu0 0
  %149 = vmatmul.mubr.bf16.gmra.mrb[0].mxu0 %v84
  %v150 = vpop.f32.mrb[0].mxu0
  %v151 = vadd.f32 %v37, %v150
  %v152 = vpop.f32.mrb[0].mxu0
  %v153 = vpop.f32.mrb[0].mxu0
  %v154 = vadd.f32 %v37, %v153
  %v155 = vpop.f32.mrb[0].mxu0
  %156 = vmatprep.mubr.bf16.mxu0 0
  %157 = vmatmul.mubr.bf16.gmra.mrb[0].mxu0 %v87
  %v158 = vpop.f32.mrb[0].mxu0
  %v159 = vadd.f32 %v37, %v158
  %v160 = vpop.f32.mrb[0].mxu0
  %v161 = vpop.f32.mrb[0].mxu0
  %v162 = vadd.f32 %v37, %v161
  %v163 = vpop.f32.mrb[0].mxu0
  %164 = vmatprep.mubr.bf16.mxu0 0
  %165 = vmatmul.mubr.bf16.gmra.mrb[0].mxu0 %v90
  %v166 = vpop.f32.mrb[0].mxu0
  %v167 = vadd.f32 %v37, %v166
  %v168 = vpop.f32.mrb[0].mxu0
  %v169 = vpop.f32.mrb[0].mxu0
  %v170 = vadd.f32 %v37, %v169
  %v171 = vpop.f32.mrb[0].mxu0
  %172 = vmatprep.mubr.bf16.mxu0 0
  %173 = vmatmul.mubr.bf16.gmra.mrb[0].mxu0 %v93
  %v174 = vpop.f32.mrb[0].mxu0
  %v175 = vadd.f32 %v37, %v174
  %v176 = vpop.f32.mrb[0].mxu0
  %v177 = vpop.f32.mrb[0].mxu0
  %v178 = vadd.f32 %v37, %v177
  %v179 = vpop.f32.mrb[0].mxu0
  %180 = vmatprep.mubr.bf16.mxu0 0
  %181 = vmatmul.mubr.bf16.gmra.mrb[0].mxu0 %v96
  %v182 = vpop.f32.mrb[0].mxu0
  %v183 = vadd.f32 %v37, %v182
  %v184 = vpop.f32.mrb[0].mxu0
  %v185 = vpop.f32.mrb[0].mxu0
  %v186 = vadd.f32 %v37, %v185
  %v187 = vpop.f32.mrb[0].mxu0
  %188 = vmatprep.mubr.bf16.mxu0 0
  %189 = vmatmul.mubr.bf16.gmra.mrb[0].mxu0 %v99
  %v190 = vpop.f32.mrb[0].mxu0
  %v191 = vadd.f32 %v37, %v190
  %v192 = vpop.f32.mrb[0].mxu0
  %v193 = vpop.f32.mrb[0].mxu0
  %v194 = vadd.f32 %v37, %v193
  %v195 = vpop.f32.mrb[0].mxu0
  %196 = vmatprep.mubr.bf16.mxu0 0
  %197 = vmatmul.mubr.bf16.gmra.mrb[0].mxu0 %v102
  %v198 = vpop.f32.mrb[0].mxu0
  %v199 = vadd.f32 %v37, %v198
  %v200 = vpop.f32.mrb[0].mxu0
  %v201 = vpop.f32.mrb[0].mxu0
  %v202 = vadd.f32 %v37, %v201
  %v203 = vpop.f32.mrb[0].mxu0
  %204 = vdwg.mxu0
  %205 = vst.msk [vmem:[%s3] sm:$0xff] %vm79, %v143
  %206 = vst.msk [vmem:[%s3 + $0x8] sm:$0xff] %vm79, %v146
  %207 = vst.msk [vmem:[%s3 + $0x10] sm:$0xff] %vm79, %v151
  %208 = vst.msk [vmem:[%s3 + $0x18] sm:$0xff] %vm79, %v154
  %209 = vst.msk [vmem:[%s3 + $0x20] sm:$0xff] %vm79, %v159
  %210 = vst.msk [vmem:[%s3 + $0x28] sm:$0xff] %vm79, %v162
  %211 = vst.msk [vmem:[%s3 + $0x30] sm:$0xff] %vm79, %v167
  %212 = vst.msk [vmem:[%s3 + $0x38] sm:$0xff] %vm79, %v170
  %213 = vst.msk [vmem:[%s3 + $0x40] sm:$0xff] %vm79, %v175
  %214 = vst.msk [vmem:[%s3 + $0x48] sm:$0xff] %vm79, %v178
  %215 = vst.msk [vmem:[%s3 + $0x50] sm:$0xff] %vm79, %v183
  %216 = vst.msk [vmem:[%s3 + $0x58] sm:$0xff] %vm79, %v186
  %217 = vst.msk [vmem:[%s3 + $0x60] sm:$0xff] %vm79, %v191
  %218 = vst.msk [vmem:[%s3 + $0x68] sm:$0xff] %vm79, %v194
  %219 = vst.msk [vmem:[%s3 + $0x70] sm:$0xff] %vm79, %v199
  %220 = vst.msk [vmem:[%s3 + $0x78] sm:$0xff] %vm79, %v202
  // Predicated region
  $region14: #{feedback_urdnet.79} parent=0 // pred_check
    _
  $region15: #{feedback_urdnet.79} parent=0 // pred_check_branch
    %222 = sbr.rel (0) target = $region17
  $region16: #{feedback_urdnet.79} parent=0 // pred_region
    _
  $region17: #{feedback_urdnet.79} parent=0 // pred_fallthru
    _
  // Predicated region
  $region18: #{feedback_urdnet.79} parent=0 // pred_check
    _
  $region19: #{feedback_urdnet.79} parent=0 // pred_check_branch
    %224 = sbr.rel (0) target = $region21
  $region20: #{feedback_urdnet.79} parent=0 // pred_region
    _
  $region21: #{feedback_urdnet.79} parent=0 // pred_fallthru
    _

// kernel: feedback_urdnet.104
$region0: #{feedback_urdnet.104}
  #allocation0 [shape = 'u32[]', space=smem, size = 0x4, offset = 0x4, fixed_abs, tag = 'smem constant byte address 0x4 - core index']
  #allocation1 [shape = 'u32[144,128]{1,0:T(1,128)}', space=vmem, size = 0x12000, scoped, tag = 'internal scratch']
  %s0 = inlined_call_operand.vmem [shape: bf16[128,72], index: 0, kind: input, shape index: {}]
  %s1 = inlined_call_operand.vmem [shape: bf16[72,32], index: 1, kind: input, shape index: {}]
  %s2 = inlined_call_operand.vmem [shape: f32[1,32], index: 2, kind: input, shape index: {}]
  %s3 = inlined_call_operand.vmem [shape: f32[128,32], index: 3, kind: output, shape index: {}]
  %s4 = sld [smem:[#allocation0]]
  $region22: #{feedback_urdnet.104} parent=0
    _
  %s6 = ssub.s32 1, %s4
  %s7 = scalar_select 0, %s6, %s4
  // Predicated region
  $region2: #{feedback_urdnet.104} parent=0 // pred_check
    _
  $region3: #{feedback_urdnet.104} parent=0 // pred_check_branch
    %9 = sbr.rel (0) target = $region5
  $region4: #{feedback_urdnet.104} parent=0 // pred_region
    _
  $region5: #{feedback_urdnet.104} parent=0 // pred_fallthru
    _
  // Predicated region
  $region6: #{feedback_urdnet.104} parent=0 // pred_check
    _
  $region7: #{feedback_urdnet.104} parent=0 // pred_check_branch
    %11 = sbr.rel (0) target = $region9
  $region8: #{feedback_urdnet.104} parent=0 // pred_region
    _
  $region9: #{feedback_urdnet.104} parent=0 // pred_fallthru
    _
  // Predicated region
  $region10: #{feedback_urdnet.104} parent=0 // pred_check
    _
  $region11: #{feedback_urdnet.104} parent=0 // pred_check_branch
    %13 = sbr.rel (0) target = $region13
  $region12: #{feedback_urdnet.104} parent=0 // pred_region
    _
  $region13: #{feedback_urdnet.104} parent=0 // pred_fallthru
    _
  %v15 = vld [vmem:[%s0] sm:$0xf]
  %v16 = vld [vmem:[%s0 + $0x4] sm:$0xf]
  %v17 = vld [vmem:[%s0 + $0x8] sm:$0xf]
  %v18 = vld [vmem:[%s0 + $0xc] sm:$0xf]
  %v19 = vld [vmem:[%s0 + $0x10] sm:$0xf]
  %v20 = vld [vmem:[%s0 + $0x14] sm:$0xf]
  %v21 = vld [vmem:[%s0 + $0x18] sm:$0xf]
  %v22 = vld [vmem:[%s0 + $0x1c] sm:$0xf]
  %v23 = vld [vmem:[%s0 + $0x20] sm:$0xf]
  %v24 = vld [vmem:[%s0 + $0x24] sm:$0xf]
  %v25 = vld [vmem:[%s0 + $0x28] sm:$0xf]
  %v26 = vld [vmem:[%s0 + $0x2c] sm:$0xf]
  %v27 = vld [vmem:[%s0 + $0x30] sm:$0xf]
  %v28 = vld [vmem:[%s0 + $0x34] sm:$0xf]
  %v29 = vld [vmem:[%s0 + $0x38] sm:$0xf]
  %v30 = vld [vmem:[%s0 + $0x3c] sm:$0xf]
  %v31 = vld [vmem:[%s1] sm:$0xf]
  %v32 = vld [vmem:[%s1 + $0x4] sm:$0xf]
  %v33 = vld [vmem:[%s1 + $0x8] sm:$0xf]
  %v34 = vld [vmem:[%s1 + $0xc] sm:$0xf]
  %v35 = vld [vmem:[%s1 + $0x10] sm:$0xf]
  %v36 = vld [vmem:[%s1 + $0x14] sm:$0xf]
  %v37 = vld [vmem:[%s1 + $0x18] sm:$0xf]
  %v38 = vld [vmem:[%s1 + $0x1c] sm:$0xf]
  %v39 = vld [vmem:[%s1 + $0x20] sm:$0xf]
  %v40 = vld [vmem:[%s2] sm:$0x1]
  %v42 = vlaneseq
  %v43 = vshrl.u32 %v42, 7
  %v44 = vsub.s32 0, %v43
  %v45 = vrot.slane %v40, %v44
  %v63 = vunpack.c.l.b16 %v15
  %v64 = vunpack.c.l.b16 %v16
  %v65 = vunpack.c.l.b16 %v17
  %v66 = vunpack.c.l.b16 %v18
  %v67 = vunpack.c.l.b16 %v19
  %v68 = vunpack.c.l.b16 %v20
  %v69 = vunpack.c.l.b16 %v21
  %v70 = vunpack.c.l.b16 %v22
  %v71 = vunpack.c.l.b16 %v23
  %v72 = vunpack.c.l.b16 %v24
  %v73 = vunpack.c.l.b16 %v25
  %v74 = vunpack.c.l.b16 %v26
  %v75 = vunpack.c.l.b16 %v27
  %v76 = vunpack.c.l.b16 %v28
  %v77 = vunpack.c.l.b16 %v29
  %v78 = vunpack.c.l.b16 %v30
  %v79 = vpack.c.b16 %v64, %v63
  %v80 = vpack.c.b16 %v66, %v65
  %v81 = vpack.c.b16 %v68, %v67
  %v82 = vpack.c.b16 %v70, %v69
  %v83 = vpack.c.b16 %v72, %v71
  %v84 = vpack.c.b16 %v74, %v73
  %v85 = vpack.c.b16 %v76, %v75
  %v86 = vpack.c.b16 %v78, %v77
  %v96 = vunpack.c.l.b16 %v31
  %v97 = vunpack.c.l.b16 %v32
  %v98 = vunpack.c.l.b16 %v33
  %v99 = vunpack.c.l.b16 %v34
  %v100 = vunpack.c.l.b16 %v35
  %v101 = vunpack.c.l.b16 %v36
  %v102 = vunpack.c.l.b16 %v37
  %v103 = vunpack.c.l.b16 %v38
  %v104 = vunpack.c.l.b16 %v39
  %v105 = vpack.c.b16 %v97, %v96
  %v106 = vpack.c.b16 %v99, %v98
  %v107 = vpack.c.b16 %v101, %v100
  %v108 = vpack.c.b16 %v103, %v102
  %v109 = vpack.c.b16 %v104, %v104
  %vm114 = vcmask 588800
  %v116 = vsel %vm114, %v79, 0
  %v119 = vsel %vm114, %v80, 0
  %v122 = vsel %vm114, %v81, 0
  %v125 = vsel %vm114, %v82, 0
  %v128 = vsel %vm114, %v83, 0
  %v131 = vsel %vm114, %v84, 0
  %v134 = vsel %vm114, %v85, 0
  %v137 = vsel %vm114, %v86, 0
  %vm139 = vcmask 1043456
  %v141 = vsel %vm139, %v109, 0
  %143 = vmatprep.subr.bf16.mxu0 0
  %144 = vmatpush1.bf16.msra.mxu0 %v105
  %145 = vmatprep.subr.bf16.mxu0 0
  %146 = vmatpush1.bf16.msra.mxu0 %v106
  %147 = vmatprep.subr.bf16.mxu0 0
  %148 = vmatpush1.bf16.msra.mxu0 %v107
  %149 = vmatprep.subr.bf16.mxu0 0
  %150 = vmatpush1.bf16.msra.mxu0 %v108
  %151 = vmatprep.subr.bf16.mxu0 0
  %152 = vmatpush1.bf16.msra.mxu0 %v141
  %153 = vmatprep.subr.bf16.mxu0 0
  %154 = vmatpush1.bf16.msra.mxu0 0
  %155 = vmatprep.subr.bf16.mxu0 0
  %156 = vmatpush1.bf16.msra.mxu0 0
  %157 = vmatprep.subr.bf16.mxu0 0
  %158 = vmatpush1.bf16.msra.mxu0 0
  %159 = vmatprep.subr.bf16.mxu0 0
  %160 = vmatpush1.bf16.msra.mxu0 0
  %161 = vmatprep.subr.bf16.mxu0 0
  %162 = vmatpush1.bf16.msra.mxu0 0
  %163 = vmatprep.subr.bf16.mxu0 0
  %164 = vmatpush1.bf16.msra.mxu0 0
  %165 = vmatprep.subr.bf16.mxu0 0
  %166 = vmatpush1.bf16.msra.mxu0 0
  %167 = vmatprep.subr.bf16.mxu0 0
  %168 = vmatpush1.bf16.msra.mxu0 0
  %169 = vmatprep.subr.bf16.mxu0 0
  %170 = vmatpush1.bf16.msra.mxu0 0
  %171 = vmatprep.subr.bf16.mxu0 0
  %172 = vmatpush1.bf16.msra.mxu0 0
  %173 = vmatprep.subr.bf16.mxu0 0
  %174 = vmatpush1.bf16.msra.mxu0 0
  %175 = vmatprep.mubr.bf16.mxu0 0
  %176 = vmatmul.mubr.bf16.gmra.mrb[0].mxu0 %v116
  %v177 = vpop.f32.mrb[0].mxu0
  %v178 = vadd.f32 %v45, %v177
  %v179 = vpop.f32.mrb[0].mxu0
  %v180 = vpop.f32.mrb[0].mxu0
  %v181 = vadd.f32 %v45, %v180
  %v182 = vpop.f32.mrb[0].mxu0
  %183 = vmatprep.mubr.bf16.mxu0 0
  %184 = vmatmul.mubr.bf16.gmra.mrb[0].mxu0 %v119
  %v185 = vpop.f32.mrb[0].mxu0
  %v186 = vadd.f32 %v45, %v185
  %v187 = vpop.f32.mrb[0].mxu0
  %v188 = vpop.f32.mrb[0].mxu0
  %v189 = vadd.f32 %v45, %v188
  %v190 = vpop.f32.mrb[0].mxu0
  %191 = vmatprep.mubr.bf16.mxu0 0
  %192 = vmatmul.mubr.bf16.gmra.mrb[0].mxu0 %v122
  %v193 = vpop.f32.mrb[0].mxu0
  %v194 = vadd.f32 %v45, %v193
  %v195 = vpop.f32.mrb[0].mxu0
  %v196 = vpop.f32.mrb[0].mxu0
  %v197 = vadd.f32 %v45, %v196
  %v198 = vpop.f32.mrb[0].mxu0
  %199 = vmatprep.mubr.bf16.mxu0 0
  %200 = vmatmul.mubr.bf16.gmra.mrb[0].mxu0 %v125
  %v201 = vpop.f32.mrb[0].mxu0
  %v202 = vadd.f32 %v45, %v201
  %v203 = vpop.f32.mrb[0].mxu0
  %v204 = vpop.f32.mrb[0].mxu0
  %v205 = vadd.f32 %v45, %v204
  %v206 = vpop.f32.mrb[0].mxu0
  %207 = vmatprep.mubr.bf16.mxu0 0
  %208 = vmatmul.mubr.bf16.gmra.mrb[0].mxu0 %v128
  %v209 = vpop.f32.mrb[0].mxu0
  %v210 = vadd.f32 %v45, %v209
  %v211 = vpop.f32.mrb[0].mxu0
  %v212 = vpop.f32.mrb[0].mxu0
  %v213 = vadd.f32 %v45, %v212
  %v214 = vpop.f32.mrb[0].mxu0
  %215 = vmatprep.mubr.bf16.mxu0 0
  %216 = vmatmul.mubr.bf16.gmra.mrb[0].mxu0 %v131
  %v217 = vpop.f32.mrb[0].mxu0
  %v218 = vadd.f32 %v45, %v217
  %v219 = vpop.f32.mrb[0].mxu0
  %v220 = vpop.f32.mrb[0].mxu0
  %v221 = vadd.f32 %v45, %v220
  %v222 = vpop.f32.mrb[0].mxu0
  %223 = vmatprep.mubr.bf16.mxu0 0
  %224 = vmatmul.mubr.bf16.gmra.mrb[0].mxu0 %v134
  %v225 = vpop.f32.mrb[0].mxu0
  %v226 = vadd.f32 %v45, %v225
  %v227 = vpop.f32.mrb[0].mxu0
  %v228 = vpop.f32.mrb[0].mxu0
  %v229 = vadd.f32 %v45, %v228
  %v230 = vpop.f32.mrb[0].mxu0
  %231 = vmatprep.mubr.bf16.mxu0 0
  %232 = vmatmul.mubr.bf16.gmra.mrb[0].mxu0 %v137
  %v233 = vpop.f32.mrb[0].mxu0
  %v234 = vadd.f32 %v45, %v233
  %v235 = vpop.f32.mrb[0].mxu0
  %v236 = vpop.f32.mrb[0].mxu0
  %v237 = vadd.f32 %v45, %v236
  %v238 = vpop.f32.mrb[0].mxu0
  %239 = vdwg.mxu0
  %vm240 = vcmask 261120
  %241 = vst.msk [vmem:[%s3] sm:$0xff] %vm240, %v178
  %242 = vst.msk [vmem:[%s3 + $0x8] sm:$0xff] %vm240, %v181
  %243 = vst.msk [vmem:[%s3 + $0x10] sm:$0xff] %vm240, %v186
  %244 = vst.msk [vmem:[%s3 + $0x18] sm:$0xff] %vm240, %v189
  %245 = vst.msk [vmem:[%s3 + $0x20] sm:$0xff] %vm240, %v194
  %246 = vst.msk [vmem:[%s3 + $0x28] sm:$0xff] %vm240, %v197
  %247 = vst.msk [vmem:[%s3 + $0x30] sm:$0xff] %vm240, %v202
  %248 = vst.msk [vmem:[%s3 + $0x38] sm:$0xff] %vm240, %v205
  %249 = vst.msk [vmem:[%s3 + $0x40] sm:$0xff] %vm240, %v210
  %250 = vst.msk [vmem:[%s3 + $0x48] sm:$0xff] %vm240, %v213
  %251 = vst.msk [vmem:[%s3 + $0x50] sm:$0xff] %vm240, %v218
  %252 = vst.msk [vmem:[%s3 + $0x58] sm:$0xff] %vm240, %v221
  %253 = vst.msk [vmem:[%s3 + $0x60] sm:$0xff] %vm240, %v226
  %254 = vst.msk [vmem:[%s3 + $0x68] sm:$0xff] %vm240, %v229
  %255 = vst.msk [vmem:[%s3 + $0x70] sm:$0xff] %vm240, %v234
  %256 = vst.msk [vmem:[%s3 + $0x78] sm:$0xff] %vm240, %v237
  // Predicated region
  $region14: #{feedback_urdnet.104} parent=0 // pred_check
    _
  $region15: #{feedback_urdnet.104} parent=0 // pred_check_branch
    %258 = sbr.rel (0) target = $region17
  $region16: #{feedback_urdnet.104} parent=0 // pred_region
    _
  $region17: #{feedback_urdnet.104} parent=0 // pred_fallthru
    _
  // Predicated region
  $region18: #{feedback_urdnet.104} parent=0 // pred_check
    _
  $region19: #{feedback_urdnet.104} parent=0 // pred_check_branch
    %260 = sbr.rel (0) target = $region21
  $region20: #{feedback_urdnet.104} parent=0 // pred_region
    _
  $region21: #{feedback_urdnet.104} parent=0 // pred_fallthru
    _

// kernel: feedback_urdnet.105
$region0: #{feedback_urdnet.105}
  #allocation0 [shape = 'u32[]', space=smem, size = 0x4, offset = 0x4, fixed_abs, tag = 'smem constant byte address 0x4 - core index']
  #allocation1 [shape = 'u32[144,128]{1,0:T(1,128)}', space=vmem, size = 0x12000, scoped, tag = 'internal scratch']
  #allocation2 [shape = 'f32[1,1]{1,0:T(1,128)S(1)}', space=vmem, size = 0x200, scoped, tag = 'scoped memory for feedback_urdnet.105']
  %s0 = inlined_call_operand.vmem [shape: bf16[512,72], index: 0, kind: input, shape index: {}]
  %s1 = inlined_call_operand.vmem [shape: bf16[72,1], index: 1, kind: input, shape index: {}]
  %s2 = inlined_call_operand.<no memory space> [shape: f32[1,1], index: 2, kind: input, shape index: {}]
  %s3 = inlined_call_operand.vmem [shape: f32[512,1], index: 3, kind: output, shape index: {}]
  %s4 = sld [smem:[#allocation0]]
  $region45: #{feedback_urdnet.105} parent=0
    _
  %s6 = ssub.s32 1, %s4
  %s7 = scalar_select 0, %s6, %s4
  %v8 = vstv %s2
  %9 = vst [vmem:[#allocation2] sm:$0x1] %v8
  loop: start=0, step=1, limit=6
  $region2: #{feedback_urdnet.105} parent=0 // loop_pre_header
    _
  $region3: #{feedback_urdnet.105} parent=0 // loop_header
    %s11 = sphi 0, %s15
    %p12 = scmp.ge.s32.totalorder %s11, 6
    %s21 = sphi 0, %s23
    %s24 = sphi 0, %s21
    %s25 = sphi 0, %s24
    %s41 = sphi 0, %s25
    %s45 = sphi 0, %s45
    %s47 = sphi 0, %s45
    %s48 = sphi 0, %s47
    %s62 = sphi 0, %s48
    %s66 = sphi 0, %s66
    %s68 = sphi 0, %s66
    %s69 = sphi 0, %s68
    %s83 = sphi 0, %s69
    %s89 = sphi 0, %s91
    %s92 = sphi 0, %s89
    %s93 = sphi 0, %s92
    %s109 = sphi 0, %s93
  $region4: #{feedback_urdnet.105} parent=0 // loop_header_branch
    %14 = sbr.rel (%p12) target = $region8
  $region5: #{feedback_urdnet.105} parent=0 // loop_body
    %s16 = ssub.s32 %s11, 1
    %s17 = ssub.s32 %s11, 2
    %s18 = sadd.s32 %s11, 1
    %s19 = ssub.s32 %s11, %s18
    %p20 = scmp.eq.s32.totalorder %s19, 0
    %s22 = sadd.s32 %s21, 1
    %s23 = scalar_select %p20, %s21, %s22
    %p26 = pneg %p20
    %p27 = scmp.eq.s32.totalorder %s11, 3
    %p28 = por %p26, %p27
    %p29 = scmp.ne.s32.totalorder %s21, %s24
    %p30 = scmp.eq.s32.totalorder %s11, 0
    %p31 = por %p29, %p30
    %p32 = scmp.ne.s32.totalorder %s21, %s24
    %p33 = scmp.eq.s32.totalorder %s16, 3
    %p34 = por %p32, %p33
    %p35 = scmp.ne.s32.totalorder %s24, %s25
    %p36 = scmp.eq.s32.totalorder %s16, 0
    %p37 = por %p35, %p36
    %p38 = scmp.ne.s32.totalorder %s24, %s25
    %p39 = scmp.eq.s32.totalorder %s17, 3
    %p40 = por %p38, %p39
    %p42 = scmp.ne.s32.totalorder %s25, %s41
    %p43 = scmp.eq.s32.totalorder %s17, 0
    %p44 = por %p42, %p43
    %s46 = sadd.s32 %s45, 1
    %p49 = scmp.eq.s32.totalorder %s11, 3
    %p50 = scmp.ne.s32.totalorder %s45, %s47
    %p51 = scmp.eq.s32.totalorder %s11, 0
    %p52 = por %p50, %p51
    %p53 = scmp.ne.s32.totalorder %s45, %s47
    %p54 = scmp.eq.s32.totalorder %s16, 3
    %p55 = por %p53, %p54
    %p56 = scmp.ne.s32.totalorder %s47, %s48
    %p57 = scmp.eq.s32.totalorder %s16, 0
    %p58 = por %p56, %p57
    %p59 = scmp.ne.s32.totalorder %s47, %s48
    %p60 = scmp.eq.s32.totalorder %s17, 3
    %p61 = por %p59, %p60
    %p63 = scmp.ne.s32.totalorder %s48, %s62
    %p64 = scmp.eq.s32.totalorder %s17, 0
    %p65 = por %p63, %p64
    %s67 = sadd.s32 %s66, 1
    %p70 = scmp.eq.s32.totalorder %s11, 3
    %p71 = scmp.ne.s32.totalorder %s66, %s68
    %p72 = scmp.eq.s32.totalorder %s11, 0
    %p73 = por %p71, %p72
    %p74 = scmp.ne.s32.totalorder %s66, %s68
    %p75 = scmp.eq.s32.totalorder %s16, 3
    %p76 = por %p74, %p75
    %p77 = scmp.ne.s32.totalorder %s68, %s69
    %p78 = scmp.eq.s32.totalorder %s16, 0
    %p79 = por %p77, %p78
    %p80 = scmp.ne.s32.totalorder %s68, %s69
    %p81 = scmp.eq.s32.totalorder %s17, 3
    %p82 = por %p80, %p81
    %p84 = scmp.ne.s32.totalorder %s69, %s83
    %p85 = scmp.eq.s32.totalorder %s17, 0
    %p86 = por %p84, %p85
    %s87 = ssub.s32 %s11, %s18
    %p88 = scmp.eq.s32.totalorder %s87, 0
    %s90 = sadd.s32 %s89, 1
    %s91 = scalar_select %p88, %s89, %s90
    %p94 = pneg %p88
    %p95 = scmp.eq.s32.totalorder %s11, 3
    %p96 = por %p94, %p95
    %p97 = scmp.ne.s32.totalorder %s89, %s92
    %p98 = scmp.eq.s32.totalorder %s11, 0
    %p99 = por %p97, %p98
    %p100 = scmp.ne.s32.totalorder %s89, %s92
    %p101 = scmp.eq.s32.totalorder %s16, 3
    %p102 = por %p100, %p101
    %p103 = scmp.ne.s32.totalorder %s92, %s93
    %p104 = scmp.eq.s32.totalorder %s16, 0
    %p105 = por %p103, %p104
    %p106 = scmp.ne.s32.totalorder %s92, %s93
    %p107 = scmp.eq.s32.totalorder %s17, 3
    %p108 = por %p106, %p107
    %p110 = scmp.ne.s32.totalorder %s93, %s109
    %p111 = scmp.eq.s32.totalorder %s17, 0
    %p112 = por %p110, %p111
    %p113 = scmp.le.s32.totalorder 1, %s11
    %p114 = scmp.lt.s32.totalorder %s11, 5
    %p115 = pnand %p113, %p114
    %p116 = pneg %p115
    // Predicated region
    $region9: #{feedback_urdnet.105} parent=5 // pred_check
      _
    $region10: #{feedback_urdnet.105} parent=5 // pred_check_branch
      %118 = sbr.rel (%p115) target = $region12
    $region11: #{feedback_urdnet.105} parent=5 // pred_region
      %s119 = ssub.s32 %s11, 1
      // Predicated region
      $region13: #{feedback_urdnet.105} parent=11 // pred_check
        %p120 = pneg %p58
      $region14: #{feedback_urdnet.105} parent=11 // pred_check_branch
        %122 = sbr.rel (%p120) target = $region16
      $region15: #{feedback_urdnet.105} parent=11 // pred_region
        _
      $region16: #{feedback_urdnet.105} parent=11 // pred_fallthru
        _
      // Predicated region
      $region17: #{feedback_urdnet.105} parent=11 // pred_check
        %p123 = pneg %p79
      $region18: #{feedback_urdnet.105} parent=11 // pred_check_branch
        %125 = sbr.rel (%p123) target = $region20
      $region19: #{feedback_urdnet.105} parent=11 // pred_region
        _
      $region20: #{feedback_urdnet.105} parent=11 // pred_fallthru
        _
    $region12: #{feedback_urdnet.105} parent=5 // pred_fallthru
      _
    %p126 = scmp.lt.s32.totalorder %s11, 4
    // Predicated region
    $region21: #{feedback_urdnet.105} parent=5 // pred_check
      %p127 = pneg %p126
    $region22: #{feedback_urdnet.105} parent=5 // pred_check_branch
      %129 = sbr.rel (%p127) target = $region24
    $region23: #{feedback_urdnet.105} parent=5 // pred_region
      // Predicated region
      $region25: #{feedback_urdnet.105} parent=23 // pred_check
        %p130 = pneg %p31
      $region26: #{feedback_urdnet.105} parent=23 // pred_check_branch
        %132 = sbr.rel (%p130) target = $region28
      $region27: #{feedback_urdnet.105} parent=23 // pred_region
        %s133 = smul.u32 16, %s11
        %p134 = scmp.lt.s32.totalorder %s133, 63
        %s135 = scalar_select %p134, %s133, 63
        %s136 = smul.addr %s135, 4
        %s137 = scalar_lea.vmem %s0, %s136
        %s138 = smul.u32 16, %s11
      $region28: #{feedback_urdnet.105} parent=23 // pred_fallthru
        _
    $region24: #{feedback_urdnet.105} parent=5 // pred_fallthru
      _
    %p139 = scmp.le.s32.totalorder 1, %s11
    %p140 = scmp.lt.s32.totalorder %s11, 5
    %p141 = pnand %p139, %p140
    %p142 = pneg %p141
    // Predicated region
    $region29: #{feedback_urdnet.105} parent=5 // pred_check
      _
    $region30: #{feedback_urdnet.105} parent=5 // pred_check_branch
      %144 = sbr.rel (%p141) target = $region32
    $region31: #{feedback_urdnet.105} parent=5 // pred_region
      %s145 = ssub.s32 %s11, 1
      %s146 = smul.u32 16, %s16
      %p147 = scmp.lt.s32.totalorder %s146, 63
      %s148 = scalar_select %p147, %s146, 63
      %s149 = smul.addr %s148, 4
      %s150 = scalar_lea.vmem %s0, %s149
      %p151 = pneg %p37
      %p152 = pneg %p34
      %p153 = pneg %p58
      %p154 = pneg %p55
      %p155 = pneg %p79
      %p156 = pneg %p76
      %p157 = pneg %p105
      %p158 = pneg %p102
      %s159 = smul.u32 16, %s16
      %p160 = scmp.lt.s32.totalorder %s159, 63
      %s161 = scalar_select %p160, %s159, 63
      %s162 = smul.addr %s161, 8
      %s163 = scalar_lea.vmem %s3, %s162
      %s164 = smul.u32 16, %s16
      %p165 = scmp.lt.s32.totalorder %s164, 63
      %s166 = scalar_select %p165, %s164, 63
      %s167 = smul.addr %s166, 4
      %s168 = scalar_lea.vmem %s0, %s167
      %s169 = smul.u32 16, %s16
      %s170 = smul.u32 16, %s16
      %p171 = scmp.lt.s32.totalorder %s170, 63
      %s172 = scalar_select %p171, %s170, 63
      %s173 = smul.addr %s172, 8
      %s174 = scalar_lea.vmem %s3, %s173
      %s175 = smul.u32 16, %s16
      %v177 = vld [vmem:[%s168] sm:$0xf]
      %v178 = vld [vmem:[%s168 + $0x4] sm:$0xf]
      %v179 = vld [vmem:[%s168 + $0x8] sm:$0xf]
      %v180 = vld [vmem:[%s168 + $0xc] sm:$0xf]
      %v181 = vld [vmem:[%s168 + $0x10] sm:$0xf]
      %v182 = vld [vmem:[%s168 + $0x14] sm:$0xf]
      %v183 = vld [vmem:[%s168 + $0x18] sm:$0xf]
      %v184 = vld [vmem:[%s168 + $0x1c] sm:$0xf]
      %v185 = vld [vmem:[%s168 + $0x20] sm:$0xf]
      %v186 = vld [vmem:[%s168 + $0x24] sm:$0xf]
      %v187 = vld [vmem:[%s168 + $0x28] sm:$0xf]
      %v188 = vld [vmem:[%s168 + $0x2c] sm:$0xf]
      %v189 = vld [vmem:[%s168 + $0x30] sm:$0xf]
      %v190 = vld [vmem:[%s168 + $0x34] sm:$0xf]
      %v191 = vld [vmem:[%s168 + $0x38] sm:$0xf]
      %v192 = vld [vmem:[%s168 + $0x3c] sm:$0xf]
      %v193 = vld [vmem:[%s1] sm:$0xf]
      %v194 = vld [vmem:[%s1 + $0x4] sm:$0xf]
      %v195 = vld [vmem:[%s1 + $0x8] sm:$0xf]
      %v196 = vld [vmem:[%s1 + $0xc] sm:$0xf]
      %v197 = vld [vmem:[%s1 + $0x10] sm:$0xf]
      %v198 = vld [vmem:[%s1 + $0x14] sm:$0xf]
      %v199 = vld [vmem:[%s1 + $0x18] sm:$0xf]
      %v200 = vld [vmem:[%s1 + $0x1c] sm:$0xf]
      %v201 = vld [vmem:[%s1 + $0x20] sm:$0xf]
      %v202 = vld [vmem:[#allocation2] sm:$0x1]
      %v204 = vlaneseq
      %v205 = vshrl.u32 %v204, 7
      %v206 = vsub.s32 0, %v205
      %v207 = vrot.slane %v202, %v206
      %v225 = vunpack.c.l.b16 %v177
      %v226 = vunpack.c.l.b16 %v178
      %v227 = vunpack.c.l.b16 %v179
      %v228 = vunpack.c.l.b16 %v180
      %v229 = vunpack.c.l.b16 %v181
      %v230 = vunpack.c.l.b16 %v182
      %v231 = vunpack.c.l.b16 %v183
      %v232 = vunpack.c.l.b16 %v184
      %v233 = vunpack.c.l.b16 %v185
      %v234 = vunpack.c.l.b16 %v186
      %v235 = vunpack.c.l.b16 %v187
      %v236 = vunpack.c.l.b16 %v188
      %v237 = vunpack.c.l.b16 %v189
      %v238 = vunpack.c.l.b16 %v190
      %v239 = vunpack.c.l.b16 %v191
      %v240 = vunpack.c.l.b16 %v192
      %v241 = vpack.c.b16 %v226, %v225
      %v242 = vpack.c.b16 %v228, %v227
      %v243 = vpack.c.b16 %v230, %v229
      %v244 = vpack.c.b16 %v232, %v231
      %v245 = vpack.c.b16 %v234, %v233
      %v246 = vpack.c.b16 %v236, %v235
      %v247 = vpack.c.b16 %v238, %v237
      %v248 = vpack.c.b16 %v240, %v239
      %v258 = vunpack.c.l.b16 %v193
      %v259 = vunpack.c.l.b16 %v194
      %v260 = vunpack.c.l.b16 %v195
      %v261 = vunpack.c.l.b16 %v196
      %v262 = vunpack.c.l.b16 %v197
      %v263 = vunpack.c.l.b16 %v198
      %v264 = vunpack.c.l.b16 %v199
      %v265 = vunpack.c.l.b16 %v200
      %v266 = vunpack.c.l.b16 %v201
      %v267 = vpack.c.b16 %v259, %v258
      %v268 = vpack.c.b16 %v261, %v260
      %v269 = vpack.c.b16 %v263, %v262
      %v270 = vpack.c.b16 %v265, %v264
      %v271 = vpack.c.b16 %v266, %v266
      %vm276 = vcmask 588800
      %v278 = vsel %vm276, %v241, 0
      %v281 = vsel %vm276, %v242, 0
      %v284 = vsel %vm276, %v243, 0
      %v287 = vsel %vm276, %v244, 0
      %v290 = vsel %vm276, %v245, 0
      %v293 = vsel %vm276, %v246, 0
      %v296 = vsel %vm276, %v247, 0
      %v299 = vsel %vm276, %v248, 0
      %vm301 = vcmask 1043456
      %v303 = vsel %vm301, %v271, 0
      %305 = vmatprep.subr.bf16.mxu0 0
      %306 = vmatpush1.bf16.msra.mxu0 %v267
      %307 = vmatprep.subr.bf16.mxu0 0
      %308 = vmatpush1.bf16.msra.mxu0 %v268
      %309 = vmatprep.subr.bf16.mxu0 0
      %310 = vmatpush1.bf16.msra.mxu0 %v269
      %311 = vmatprep.subr.bf16.mxu0 0
      %312 = vmatpush1.bf16.msra.mxu0 %v270
      %313 = vmatprep.subr.bf16.mxu0 0
      %314 = vmatpush1.bf16.msra.mxu0 %v303
      %315 = vmatprep.subr.bf16.mxu0 0
      %316 = vmatpush1.bf16.msra.mxu0 0
      %317 = vmatprep.subr.bf16.mxu0 0
      %318 = vmatpush1.bf16.msra.mxu0 0
      %319 = vmatprep.subr.bf16.mxu0 0
      %320 = vmatpush1.bf16.msra.mxu0 0
      %321 = vmatprep.subr.bf16.mxu0 0
      %322 = vmatpush1.bf16.msra.mxu0 0
      %323 = vmatprep.subr.bf16.mxu0 0
      %324 = vmatpush1.bf16.msra.mxu0 0
      %325 = vmatprep.subr.bf16.mxu0 0
      %326 = vmatpush1.bf16.msra.mxu0 0
      %327 = vmatprep.subr.bf16.mxu0 0
      %328 = vmatpush1.bf16.msra.mxu0 0
      %329 = vmatprep.subr.bf16.mxu0 0
      %330 = vmatpush1.bf16.msra.mxu0 0
      %331 = vmatprep.subr.bf16.mxu0 0
      %332 = vmatpush1.bf16.msra.mxu0 0
      %333 = vmatprep.subr.bf16.mxu0 0
      %334 = vmatpush1.bf16.msra.mxu0 0
      %335 = vmatprep.subr.bf16.mxu0 0
      %336 = vmatpush1.bf16.msra.mxu0 0
      %337 = vmatprep.mubr.bf16.mxu0 0
      %338 = vmatmul.mubr.bf16.gmra.mrb[0].mxu0 %v278
      %v339 = vpop.f32.mrb[0].mxu0
      %v340 = vadd.f32 %v207, %v339
      %v341 = vpop.f32.mrb[0].mxu0
      %v342 = vpop.f32.mrb[0].mxu0
      %v343 = vadd.f32 %v207, %v342
      %v344 = vpop.f32.mrb[0].mxu0
      %345 = vmatprep.mubr.bf16.mxu0 0
      %346 = vmatmul.mubr.bf16.gmra.mrb[0].mxu0 %v281
      %v347 = vpop.f32.mrb[0].mxu0
      %v348 = vadd.f32 %v207, %v347
      %v349 = vpop.f32.mrb[0].mxu0
      %v350 = vpop.f32.mrb[0].mxu0
      %v351 = vadd.f32 %v207, %v350
      %v352 = vpop.f32.mrb[0].mxu0
      %353 = vmatprep.mubr.bf16.mxu0 0
      %354 = vmatmul.mubr.bf16.gmra.mrb[0].mxu0 %v284
      %v355 = vpop.f32.mrb[0].mxu0
      %v356 = vadd.f32 %v207, %v355
      %v357 = vpop.f32.mrb[0].mxu0
      %v358 = vpop.f32.mrb[0].mxu0
      %v359 = vadd.f32 %v207, %v358
      %v360 = vpop.f32.mrb[0].mxu0
      %361 = vmatprep.mubr.bf16.mxu0 0
      %362 = vmatmul.mubr.bf16.gmra.mrb[0].mxu0 %v287
      %v363 = vpop.f32.mrb[0].mxu0
      %v364 = vadd.f32 %v207, %v363
      %v365 = vpop.f32.mrb[0].mxu0
      %v366 = vpop.f32.mrb[0].mxu0
      %v367 = vadd.f32 %v207, %v366
      %v368 = vpop.f32.mrb[0].mxu0
      %369 = vmatprep.mubr.bf16.mxu0 0
      %370 = vmatmul.mubr.bf16.gmra.mrb[0].mxu0 %v290
      %v371 = vpop.f32.mrb[0].mxu0
      %v372 = vadd.f32 %v207, %v371
      %v373 = vpop.f32.mrb[0].mxu0
      %v374 = vpop.f32.mrb[0].mxu0
      %v375 = vadd.f32 %v207, %v374
      %v376 = vpop.f32.mrb[0].mxu0
      %377 = vmatprep.mubr.bf16.mxu0 0
      %378 = vmatmul.mubr.bf16.gmra.mrb[0].mxu0 %v293
      %v379 = vpop.f32.mrb[0].mxu0
      %v380 = vadd.f32 %v207, %v379
      %v381 = vpop.f32.mrb[0].mxu0
      %v382 = vpop.f32.mrb[0].mxu0
      %v383 = vadd.f32 %v207, %v382
      %v384 = vpop.f32.mrb[0].mxu0
      %385 = vmatprep.mubr.bf16.mxu0 0
      %386 = vmatmul.mubr.bf16.gmra.mrb[0].mxu0 %v296
      %v387 = vpop.f32.mrb[0].mxu0
      %v388 = vadd.f32 %v207, %v387
      %v389 = vpop.f32.mrb[0].mxu0
      %v390 = vpop.f32.mrb[0].mxu0
      %v391 = vadd.f32 %v207, %v390
      %v392 = vpop.f32.mrb[0].mxu0
      %393 = vmatprep.mubr.bf16.mxu0 0
      %394 = vmatmul.mubr.bf16.gmra.mrb[0].mxu0 %v299
      %v395 = vpop.f32.mrb[0].mxu0
      %v396 = vadd.f32 %v207, %v395
      %v397 = vpop.f32.mrb[0].mxu0
      %v398 = vpop.f32.mrb[0].mxu0
      %v399 = vadd.f32 %v207, %v398
      %v400 = vpop.f32.mrb[0].mxu0
      %401 = vdwg.mxu0
      %vm402 = vcmask 7168
      %403 = vst.msk [vmem:[%s174] sm:$0xff] %vm402, %v340
      %404 = vst.msk [vmem:[%s174 + $0x8] sm:$0xff] %vm402, %v343
      %405 = vst.msk [vmem:[%s174 + $0x10] sm:$0xff] %vm402, %v348
      %406 = vst.msk [vmem:[%s174 + $0x18] sm:$0xff] %vm402, %v351
      %407 = vst.msk [vmem:[%s174 + $0x20] sm:$0xff] %vm402, %v356
      %408 = vst.msk [vmem:[%s174 + $0x28] sm:$0xff] %vm402, %v359
      %409 = vst.msk [vmem:[%s174 + $0x30] sm:$0xff] %vm402, %v364
      %410 = vst.msk [vmem:[%s174 + $0x38] sm:$0xff] %vm402, %v367
      %411 = vst.msk [vmem:[%s174 + $0x40] sm:$0xff] %vm402, %v372
      %412 = vst.msk [vmem:[%s174 + $0x48] sm:$0xff] %vm402, %v375
      %413 = vst.msk [vmem:[%s174 + $0x50] sm:$0xff] %vm402, %v380
      %414 = vst.msk [vmem:[%s174 + $0x58] sm:$0xff] %vm402, %v383
      %415 = vst.msk [vmem:[%s174 + $0x60] sm:$0xff] %vm402, %v388
      %416 = vst.msk [vmem:[%s174 + $0x68] sm:$0xff] %vm402, %v391
      %417 = vst.msk [vmem:[%s174 + $0x70] sm:$0xff] %vm402, %v396
      %418 = vst.msk [vmem:[%s174 + $0x78] sm:$0xff] %vm402, %v399
      %s419 = smul.u32 16, %s16
      %p420 = scmp.lt.s32.totalorder %s419, 63
      %s421 = scalar_select %p420, %s419, 63
      %s422 = smul.addr %s421, 8
      %s423 = scalar_lea.vmem %s3, %s422
      // Predicated region
      $region33: #{feedback_urdnet.105} parent=31 // pred_check
        %p424 = pneg %p102
      $region34: #{feedback_urdnet.105} parent=31 // pred_check_branch
        %426 = sbr.rel (%p424) target = $region36
      $region35: #{feedback_urdnet.105} parent=31 // pred_region
        %s427 = smul.u32 16, %s16
      $region36: #{feedback_urdnet.105} parent=31 // pred_fallthru
        _
    $region32: #{feedback_urdnet.105} parent=5 // pred_fallthru
      _
    %p428 = scmp.le.s32.totalorder 2, %s11
    // Predicated region
    $region37: #{feedback_urdnet.105} parent=5 // pred_check
      %p429 = pneg %p428
    $region38: #{feedback_urdnet.105} parent=5 // pred_check_branch
      %431 = sbr.rel (%p429) target = $region40
    $region39: #{feedback_urdnet.105} parent=5 // pred_region
      %s432 = ssub.s32 %s11, 2
      // Predicated region
      $region41: #{feedback_urdnet.105} parent=39 // pred_check
        %p433 = pneg %p108
      $region42: #{feedback_urdnet.105} parent=39 // pred_check_branch
        %435 = sbr.rel (%p433) target = $region44
      $region43: #{feedback_urdnet.105} parent=39 // pred_region
        %s436 = smul.u32 16, %s17
        %p437 = scmp.lt.s32.totalorder %s436, 63
        %s438 = scalar_select %p437, %s436, 63
        %s439 = smul.addr %s438, 8
        %s440 = scalar_lea.vmem %s3, %s439
      $region44: #{feedback_urdnet.105} parent=39 // pred_fallthru
        _
    $region40: #{feedback_urdnet.105} parent=5 // pred_fallthru
      _
  $region6: #{feedback_urdnet.105} parent=0 // loop_footer
    %s15 = sadd.s32 1, %s11
  $region7: #{feedback_urdnet.105} parent=0 // loop_footer_branch
    %10 = sbr.rel target = $region3
  $region8: #{feedback_urdnet.105} parent=0 // loop_exit
    _

</llo_original>
